<compile_context>
chip_gen: v6e
topology: v6e:2x2x1
jax: 0.10.0
libtpu: 0.0.40
codegen_flags: <defaults>
</compile_context>

<pallas_src>
import functools

import numpy as np
import jax
import jax.numpy as jnp
from jax import lax
from jax.experimental import pallas as pl
from jax.experimental.pallas import tpu as pltpu

BN_EPS = 1e-5
BN_SCALE = float(1.0 / np.sqrt(1.0 + BN_EPS))   # BatchNorm2d(affine=False), eval


def _pick_tile(dim, candidates):
    for c in candidates:
        if dim % c == 0:
            return c
    return dim


# ----------------------------- Pallas kernels ------------------------------

def _matmul_tri_kernel(a_ref, b_ref, o_ref, *, power, inv_real_c):
    """bf16 MXU matmul (single K step) with a fused Triangle(power) epilogue.

    The N tile always holds the full channel axis, so the per-position channel
    mean can be computed in-tile.  Padded output lanes (zero weight columns)
    contribute 0 to the sum; inv_real_c divides by the number of REAL channels.
    """
    h = jnp.dot(a_ref[...], b_ref[...], preferred_element_type=jnp.float32)
    m = jnp.sum(h, axis=-1, keepdims=True) * inv_real_c
    t = jnp.maximum(h - m, 0.0)
    if power != 1.0:
        t = t ** power
    o_ref[...] = t.astype(o_ref.dtype)


def matmul_triangle(a, b, *, power, real_c):
    """(M, K) @ (K, N) -> Triangle(power) -> (M, N) bf16.  N = full channels."""
    M, K = a.shape
    K2, N = b.shape
    assert K == K2
    tm = _pick_tile(M, (1024, 512, 256, 128, 64, 32, 16, 8))
    kern = functools.partial(_matmul_tri_kernel, power=float(power),
                             inv_real_c=1.0 / float(real_c))
    return pl.pallas_call(
        kern,
        out_shape=jax.ShapeDtypeStruct((M, N), jnp.bfloat16),
        grid=(M // tm,),
        in_specs=[pl.BlockSpec((tm, K), lambda i: (i, 0)),
                  pl.BlockSpec((K, N), lambda i: (0, 0))],
        out_specs=pl.BlockSpec((tm, N), lambda i: (i, 0)),
        compiler_params=pltpu.CompilerParams(
            dimension_semantics=("parallel",)),
    )(a, b)


def _block_kernel(x_ref, wdw_ref, wpw_ref, o_ref, t_ref, *, power, inv_real_c):
    """Fused block: depthwise 3x3 (stride 1, pad 1) -> 1x1 conv (MXU) -> Triangle.

      x_ref:   (1, H, W, Cin)   bf16 pooled activations
      wdw_ref: (3, 3, Cin)      f32 depthwise weights (BN folded; padded lanes 0)
      wpw_ref: (Cin, Cout)      bf16 pointwise weights (BN folded; padded rows 0)
      o_ref:   (1, H, W, Cout)  bf16
      t_ref:   (H+2, W+16, Cin) f32 scratch; the depthwise input lives at
               [1:H+1, 8:8+W, :] (sublane-aligned store) and the zero border
               plays the role of the conv's spatial zero padding.

    Correctness invariant: padded channel lanes of x may hold Triangle garbage
    from the previous block; wdw/wpw padded lanes/rows are exactly zero, so
    those lanes never leak into real outputs.
    """
    H = o_ref.shape[1]
    W = o_ref.shape[2]
    c_out = o_ref.shape[3]

    t_ref[...] = jnp.zeros_like(t_ref)
    t_ref[1:H + 1, 8:8 + W, :] = x_ref[0].astype(jnp.float32)

    w = wdw_ref[...].astype(jnp.float32)
    # Three W-shifted slabs: one aligned + two sublane-offset loads; the
    # remaining taps only slide along the leading H axis (free vreg selects).
    s0 = t_ref[:, 7:7 + W, :]        # dj = -1
    s1 = t_ref[:, 8:8 + W, :]        # dj =  0
    s2 = t_ref[:, 9:9 + W, :]        # dj = +1
    acc0 = s0[0:H] * w[0, 0, :] + s0[1:H + 1] * w[1, 0, :] + s0[2:H + 2] * w[2, 0, :]
    acc1 = s1[0:H] * w[0, 1, :] + s1[1:H + 1] * w[1, 1, :] + s1[2:H + 2] * w[2, 1, :]
    acc2 = s2[0:H] * w[0, 2, :] + s2[1:H + 1] * w[1, 2, :] + s2[2:H + 2] * w[2, 2, :]
    dw = acc0 + acc1 + acc2                                   # (H, W, Cin) f32

    # 1x1 conv = matmul over channels (reshape in f32 keeps the (8,128) layout).
    a = dw.reshape(H * W, dw.shape[-1]).astype(jnp.bfloat16)
    h = jnp.dot(a, wpw_ref[...], preferred_element_type=jnp.float32)   # (H*W, Cout)

    # Triangle(power): mean over the (all-real) output channels.
    m = jnp.sum(h, axis=-1, keepdims=True) * inv_real_c
    t = jnp.maximum(h - m, 0.0)
    if power != 1.0:
        t = t ** power
    o_ref[0] = t.reshape(H, W, c_out).astype(o_ref.dtype)


def block_dw_pw_tri(x, w_dw, w_pw, *, power, real_c):
    """Apply the fused depthwise+pointwise+Triangle block per batch sample."""
    B, H, W, c_in = x.shape
    c_out = w_pw.shape[1]
    kern = functools.partial(_block_kernel, power=float(power),
                             inv_real_c=1.0 / float(real_c))
    return pl.pallas_call(
        kern,
        out_shape=jax.ShapeDtypeStruct((B, H, W, c_out), jnp.bfloat16),
        grid=(B,),
        in_specs=[pl.BlockSpec((1, H, W, c_in), lambda b: (b, 0, 0, 0)),
                  pl.BlockSpec((3, 3, c_in), lambda b: (0, 0, 0)),
                  pl.BlockSpec((c_in, c_out), lambda b: (0, 0))],
        out_specs=pl.BlockSpec((1, H, W, c_out), lambda b: (b, 0, 0, 0)),
        scratch_shapes=[pltpu.VMEM((H + 2, W + 16, c_in), jnp.float32)],
        compiler_params=pltpu.CompilerParams(
            dimension_semantics=("parallel",)),
    )(x, w_dw, w_pw)


def _head_fc_kernel(a_ref, w_ref, b_ref, o_ref):
    """fc1 as a K-streamed matmul: one (1536, 128) weight slab per grid step
    (spatial position), accumulated into the VMEM-resident output; bias folded
    into the final step."""
    s = pl.program_id(0)

    @pl.when(s == 0)
    def _():
        o_ref[...] = jnp.zeros_like(o_ref)

    o_ref[...] += jnp.dot(a_ref[0], w_ref[0], preferred_element_type=jnp.float32)

    @pl.when(s == pl.num_programs(0) - 1)
    def _():
        o_ref[...] += b_ref[...]


def head_fc(a, w_head, bias):
    """a: (S, B, C) bf16; w_head: (S, C, 128) bf16; bias: (1, 128) f32."""
    S, B, C = a.shape
    return pl.pallas_call(
        _head_fc_kernel,
        out_shape=jax.ShapeDtypeStruct((B, 128), jnp.float32),
        grid=(S,),
        in_specs=[pl.BlockSpec((1, B, C), lambda s: (s, 0, 0)),
                  pl.BlockSpec((1, C, 128), lambda s: (s, 0, 0)),
                  pl.BlockSpec((1, 128), lambda s: (0, 0))],
        out_specs=pl.BlockSpec((B, 128), lambda s: (0, 0)),
        compiler_params=pltpu.CompilerParams(
            dimension_semantics=("arbitrary",)),
    )(a, w_head, bias)


# --------------------------------- glue ------------------------------------

# TODO(synk): fold the stride-2 max/avg pooling into the adjacent Pallas
# kernels once a robust sublane-stride-2 compaction lowering is available;
# kept as tiny bf16 XLA reduce_window ops for now.
def _maxpool(x, k, s, p):
    # NHWC; PyTorch MaxPool2d pads with -inf.
    return lax.reduce_window(x, jnp.array(-jnp.inf, x.dtype), lax.max,
                             (1, k, k, 1), (1, s, s, 1),
                             ((0, 0), (p, p), (p, p), (0, 0)))


def _avgpool2(x):
    s = lax.reduce_window(x.astype(jnp.float32), 0.0, lax.add,
                          (1, 2, 2, 1), (1, 2, 2, 1), "VALID")
    return (s * 0.25).astype(jnp.bfloat16)


def _l2n(w):
    # torch F.normalize over dims (1,2,3) of an OIHW weight (w_nrm=True).
    n = jnp.sqrt(jnp.sum(w * w, axis=(1, 2, 3), keepdims=True))
    return w / jnp.maximum(n, 1e-12)


def init_params(key):
    """Random init matching the module, with all static preprocessing folded:
    L2 weight normalization, BatchNorm eval scale, layout transposes, channel
    / lane padding (padded lanes/rows are EXACTLY zero -- correctness relies
    on it), fc column permutation, bf16 storage for MXU weights."""
    ks = jax.random.split(key, 7)
    p = {}

    # conv1: 5x5, 3 -> 96 (bn1 folded).  The im2col weight matrix is built
    # with the SAME primitive that extracts the activation patches, so the
    # patch feature ordering matches by construction.
    w1 = _l2n(jax.random.normal(ks[0], (96, 3, 5, 5), jnp.float32)) * BN_SCALE
    w1m = lax.conv_general_dilated_patches(
        jnp.transpose(w1, (0, 2, 3, 1)), (5, 5), (1, 1), "VALID",
        dimension_numbers=("NHWC", "HWIO", "NHWC")).reshape(96, 75)
    p["w1"] = jnp.pad(jnp.transpose(w1m), ((0, 0), (0, 32))).astype(jnp.bfloat16)

    # conv2 (depthwise 3x3, 96 ch, bn2 folded); (3,3,C), lanes padded 96->128
    # with zeros (kills Triangle leakage in the padded channels).
    w2d = _l2n(jax.random.normal(ks[1], (96, 1, 3, 3), jnp.float32)) * BN_SCALE
    p["w2_dw"] = jnp.pad(jnp.transpose(w2d[:, 0], (1, 2, 0)),
                         ((0, 0), (0, 0), (0, 32)))

    # conv_point2 (1x1, 96 -> 384, bn_point2 folded); (Cin,Cout), K rows padded
    # 96->128 with zeros.
    w2p = _l2n(jax.random.normal(ks[2], (384, 96, 1, 1), jnp.float32)) * BN_SCALE
    p["w2_pw"] = jnp.pad(jnp.transpose(w2p[:, :, 0, 0]),
                         ((0, 32), (0, 0))).astype(jnp.bfloat16)

    # conv3 (depthwise 3x3, 384 ch, bn3 folded)
    w3d = _l2n(jax.random.normal(ks[3], (384, 1, 3, 3), jnp.float32)) * BN_SCALE
    p["w3_dw"] = jnp.transpose(w3d[:, 0], (1, 2, 0))

    # conv_point3 (1x1, 384 -> 1536, bn_point3 folded)
    w3p = _l2n(jax.random.normal(ks[4], (1536, 384, 1, 1), jnp.float32)) * BN_SCALE
    p["w3_pw"] = jnp.transpose(w3p[:, :, 0, 0]).astype(jnp.bfloat16)

    # fc1: the module explicitly sets weight = 0.1105 * rand(10, 24576) (bias
    # keeps the default Linear uniform init).  Original NCHW flatten index is
    # c*16 + s; stored per NHWC spatial position s as (16, 1536, 128) with the
    # 10 real output columns padded to 128 lanes.
    fcw = 0.11048543456039805 * jax.random.uniform(ks[5], (10, 24576), jnp.float32)
    w_head = jnp.transpose(fcw.reshape(10, 1536, 16), (2, 1, 0))   # (16,1536,10)
    p["fc_w"] = jnp.pad(w_head, ((0, 0), (0, 0), (0, 118))).astype(jnp.bfloat16)

    bound = 1.0 / np.sqrt(24576.0)
    b = jax.random.uniform(ks[6], (10,), jnp.float32, -bound, bound)
    p["fc_b"] = jnp.pad(b, (0, 118)).reshape(1, 128)
    return p


@jax.jit
def net_depthwise_forward(x_nchw, params):
    B = x_nchw.shape[0]
    x = jnp.transpose(x_nchw, (0, 2, 3, 1)).astype(jnp.bfloat16)   # -> NHWC bf16
    B, H0, W0, _ = x.shape

    # block 1: (bn1 folded) conv1 5x5 + Triangle(0.7), then MaxPool(4,2,1)
    patches = lax.conv_general_dilated_patches(
        x, (5, 5), (1, 1), ((2, 2), (2, 2)),
        dimension_numbers=("NHWC", "HWIO", "NHWC"))        # (B,32,32,75) bf16
    y = matmul_triangle(patches.reshape(B * H0 * W0, 75), params["w1"],
                        power=0.7, real_c=96)              # (B*1024,128) bf16
    y = _maxpool(y.reshape(B, H0, W0, 128), 4, 2, 1)       # (B,16,16,128)

    # block 2: (bn2) dw3x3 + (bn_point2) 1x1 128->384 + Triangle(1.4), MaxPool
    y = block_dw_pw_tri(y, params["w2_dw"], params["w2_pw"],
                        power=1.4, real_c=384)             # (B,16,16,384) bf16
    y = _maxpool(y, 4, 2, 1)                               # (B,8,8,384)

    # block 3: (bn3) dw3x3 + (bn_point3) 1x1 384->1536 + Triangle(1.0), AvgPool
    y = block_dw_pw_tri(y, params["w3_dw"], params["w3_pw"],
                        power=1.0, real_c=1536)            # (B,8,8,1536) bf16
    y = _avgpool2(y)                                       # (B,4,4,1536) bf16

    # head: flatten (NCHW order baked into fc_w), Dropout=identity (eval),
    # fc1 streamed over the 16 spatial positions with the bias folded in.
    Bp, Hp, Wp, C = y.shape
    a = jnp.transpose(y.reshape(Bp, Hp * Wp, C), (1, 0, 2))   # (16, B, 1536)
    logits = head_fc(a, params["fc_w"], params["fc_b"])       # (B, 128) f32
    return logits[:, :10]


if __name__ == "__main__":
    key = jax.random.PRNGKey(0)
    kp, kx = jax.random.split(key)
    params = init_params(kp)
    # CIFAR-like input (fc1 in_features=24576 implies 32x32 spatial, 3 channels).
    x = jax.random.normal(kx, (2, 3, 32, 32), jnp.float32)

    out = net_depthwise_forward(x, params)
    out = jax.block_until_ready(out)
    assert out.shape == (2, 10), out.shape
    assert bool(jnp.all(jnp.isfinite(out)))
    print("KERNEL_OK")
</pallas_src>

<mosaic_0001>
module attributes {stable_mosaic.version = 11 : i64} {
  func.func @_matmul_tri_kernel(%arg0: i32, %arg1: memref<1024x75xbf16, #tpu.memory_space<vmem>>, %arg2: memref<75x128xbf16, #tpu.memory_space<vmem>>, %arg3: memref<1024x128xbf16, #tpu.memory_space<vmem>>) attributes {dimension_semantics = [#tpu.dimension_semantics<parallel>], iteration_bounds = array<i64: 2>, scalar_prefetch = 0 : i64, scratch_operands = 0 : i64, tpu.core_type = #tpu.core_type<tc>, window_params = [{transform_indices = @transform_0, window_bounds = array<i64: 1024, 75>}, {pipeline_mode = #tpu.pipeline_mode<synchronous>, transform_indices = @transform_1, window_bounds = array<i64: 75, 128>}, {transform_indices = @transform_2, window_bounds = array<i64: 1024, 128>}]} {
    %c0 = arith.constant 0 : index
    %c0_0 = arith.constant 0 : index
    %0 = vector.load %arg1[%c0, %c0_0] : memref<1024x75xbf16, #tpu.memory_space<vmem>>, vector<1024x75xbf16>
    %c0_1 = arith.constant 0 : index
    %c0_2 = arith.constant 0 : index
    %1 = vector.load %arg2[%c0_1, %c0_2] : memref<75x128xbf16, #tpu.memory_space<vmem>>, vector<75x128xbf16>
    %cst = arith.constant dense<0.000000e+00> : vector<1024x128xf32>
    %2 = tpu.matmul %0, %1, %cst {dimension_numbers = #tpu.dot_dimension_numbers<[1], [0], [0], [1], [0, 0, 1, 1], [], []>} : vector<1024x75xbf16>, vector<75x128xbf16>, vector<1024x128xf32> -> vector<1024x128xf32>
    %cst_3 = arith.constant dense<0.000000e+00> : vector<1024xf32>
    %3 = vector.multi_reduction <add>, %2, %cst_3 [1] : vector<1024x128xf32> to vector<1024xf32>
    %4 = vector.shape_cast %3 : vector<1024xf32> to vector<1024x1xf32>
    %cst_4 = arith.constant 0.010416667 : f32
    %5 = vector.broadcast %cst_4 : f32 to vector<1024x1xf32>
    %6 = arith.mulf %4, %5 : vector<1024x1xf32>
    %7 = vector.broadcast %6 : vector<1024x1xf32> to vector<1024x128xf32>
    %8 = arith.subf %2, %7 : vector<1024x128xf32>
    %cst_5 = arith.constant 0.000000e+00 : f32
    %9 = vector.broadcast %cst_5 : f32 to vector<1024x128xf32>
    %10 = arith.maximumf %8, %9 : vector<1024x128xf32>
    %cst_6 = arith.constant 0.699999988 : f32
    %11 = vector.broadcast %cst_6 : f32 to vector<1024x128xf32>
    %12 = math.powf %10, %11 : vector<1024x128xf32>
    %13 = arith.truncf %12 : vector<1024x128xf32> to vector<1024x128xbf16>
    %c0_7 = arith.constant 0 : index
    %c0_8 = arith.constant 0 : index
    %14 = vector.load %arg3[%c0_7, %c0_8] : memref<1024x128xbf16, #tpu.memory_space<vmem>>, vector<1024x128xbf16>
    tpu.vector_store %arg3[%c0_7, %c0_8], %13 {strides = array<i32>} : memref<1024x128xbf16, #tpu.memory_space<vmem>>, vector<1024x128xbf16>,
    return
  }
  func.func @transform_0(%arg0: i32) -> (i32, i32) {
    %c0_i32 = arith.constant 0 : i32
    %c0_i32_0 = arith.constant 0 : i32
    return %arg0, %c0_i32 : i32, i32
  }
  func.func @transform_1(%arg0: i32) -> (i32, i32) {
    %c0_i32 = arith.constant 0 : i32
    %c0_i32_0 = arith.constant 0 : i32
    %c0_i32_1 = arith.constant 0 : i32
    return %c0_i32, %c0_i32_0 : i32, i32
  }
  func.func @transform_2(%arg0: i32) -> (i32, i32) {
    %c0_i32 = arith.constant 0 : i32
    %c0_i32_0 = arith.constant 0 : i32
    return %arg0, %c0_i32 : i32, i32
  }
}

module attributes {stable_mosaic.version = 11 : i64} {
  func.func @_block_kernel(%arg0: i32, %arg1: memref<1x16x16x128xbf16, #tpu.memory_space<vmem>>, %arg2: memref<3x3x128xf32, #tpu.memory_space<vmem>>, %arg3: memref<128x384xbf16, #tpu.memory_space<vmem>>, %arg4: memref<1x16x16x384xbf16, #tpu.memory_space<vmem>>, %arg5: memref<18x32x128xf32, #tpu.memory_space<vmem>>) attributes {dimension_semantics = [#tpu.dimension_semantics<parallel>], iteration_bounds = array<i64: 2>, scalar_prefetch = 0 : i64, scratch_operands = 1 : i64, tpu.core_type = #tpu.core_type<tc>, window_params = [{transform_indices = @transform_0, window_bounds = array<i64: 1, 16, 16, 128>}, {pipeline_mode = #tpu.pipeline_mode<synchronous>, transform_indices = @transform_1, window_bounds = array<i64: 3, 3, 128>}, {pipeline_mode = #tpu.pipeline_mode<synchronous>, transform_indices = @transform_2, window_bounds = array<i64: 128, 384>}, {transform_indices = @transform_3, window_bounds = array<i64: 1, 16, 16, 384>}]} {
    %cst = arith.constant 0.000000e+00 : f32
    %0 = vector.broadcast %cst : f32 to vector<18x32x128xf32>
    %c0 = arith.constant 0 : index
    %c0_0 = arith.constant 0 : index
    %c0_1 = arith.constant 0 : index
    %1 = vector.load %arg5[%c0, %c0_0, %c0_1] : memref<18x32x128xf32, #tpu.memory_space<vmem>>, vector<18x32x128xf32>
    tpu.vector_store %arg5[%c0, %c0_0, %c0_1], %0 {strides = array<i32>} : memref<18x32x128xf32, #tpu.memory_space<vmem>>, vector<18x32x128xf32>,
    %c0_2 = arith.constant 0 : index
    %c0_3 = arith.constant 0 : index
    %c0_4 = arith.constant 0 : index
    %c0_5 = arith.constant 0 : index
    %2 = vector.load %arg1[%c0_2, %c0_3, %c0_4, %c0_5] : memref<1x16x16x128xbf16, #tpu.memory_space<vmem>>, vector<1x16x16x128xbf16>
    %3 = vector.shape_cast %2 : vector<1x16x16x128xbf16> to vector<16x16x128xbf16>
    %4 = arith.extf %3 : vector<16x16x128xbf16> to vector<16x16x128xf32>
    %c1 = arith.constant 1 : index
    %c8 = arith.constant 8 : index
    %c0_6 = arith.constant 0 : index
    %5 = vector.load %arg5[%c1, %c8, %c0_6] : memref<18x32x128xf32, #tpu.memory_space<vmem>>, vector<16x16x128xf32>
    tpu.vector_store %arg5[%c1, %c8, %c0_6], %4 {strides = array<i32>} : memref<18x32x128xf32, #tpu.memory_space<vmem>>, vector<16x16x128xf32>,
    %c0_7 = arith.constant 0 : index
    %c0_8 = arith.constant 0 : index
    %c0_9 = arith.constant 0 : index
    %6 = vector.load %arg2[%c0_7, %c0_8, %c0_9] : memref<3x3x128xf32, #tpu.memory_space<vmem>>, vector<3x3x128xf32>
    %c0_10 = arith.constant 0 : index
    %c7 = arith.constant 7 : index
    %c0_11 = arith.constant 0 : index
    %7 = vector.load %arg5[%c0_10, %c7, %c0_11] : memref<18x32x128xf32, #tpu.memory_space<vmem>>, vector<18x16x128xf32>
    %c0_12 = arith.constant 0 : index
    %c8_13 = arith.constant 8 : index
    %c0_14 = arith.constant 0 : index
    %8 = vector.load %arg5[%c0_12, %c8_13, %c0_14] : memref<18x32x128xf32, #tpu.memory_space<vmem>>, vector<18x16x128xf32>
    %c0_15 = arith.constant 0 : index
    %c9 = arith.constant 9 : index
    %c0_16 = arith.constant 0 : index
    %9 = vector.load %arg5[%c0_15, %c9, %c0_16] : memref<18x32x128xf32, #tpu.memory_space<vmem>>, vector<18x16x128xf32>
    %10 = vector.extract_strided_slice %7 {offsets = [0, 0, 0], sizes = [16, 16, 128], strides = [1, 1, 1]} : vector<18x16x128xf32> to vector<16x16x128xf32>
    %11 = vector.extract_strided_slice %6 {offsets = [0, 0, 0], sizes = [1, 1, 128], strides = [1, 1, 1]} : vector<3x3x128xf32> to vector<1x1x128xf32>
    %12 = vector.shape_cast %11 : vector<1x1x128xf32> to vector<128xf32>
    %13 = vector.shape_cast %12 : vector<128xf32> to vector<1x1x128xf32>
    %14 = vector.broadcast %13 : vector<1x1x128xf32> to vector<16x16x128xf32>
    %15 = arith.mulf %10, %14 : vector<16x16x128xf32>
    %16 = vector.extract_strided_slice %7 {offsets = [1, 0, 0], sizes = [16, 16, 128], strides = [1, 1, 1]} : vector<18x16x128xf32> to vector<16x16x128xf32>
    %17 = vector.extract_strided_slice %6 {offsets = [1, 0, 0], sizes = [1, 1, 128], strides = [1, 1, 1]} : vector<3x3x128xf32> to vector<1x1x128xf32>
    %18 = vector.shape_cast %17 : vector<1x1x128xf32> to vector<128xf32>
    %19 = vector.shape_cast %18 : vector<128xf32> to vector<1x1x128xf32>
    %20 = vector.broadcast %19 : vector<1x1x128xf32> to vector<16x16x128xf32>
    %21 = arith.mulf %16, %20 : vector<16x16x128xf32>
    %22 = arith.addf %15, %21 : vector<16x16x128xf32>
    %23 = vector.extract_strided_slice %7 {offsets = [2, 0, 0], sizes = [16, 16, 128], strides = [1, 1, 1]} : vector<18x16x128xf32> to vector<16x16x128xf32>
    %24 = vector.extract_strided_slice %6 {offsets = [2, 0, 0], sizes = [1, 1, 128], strides = [1, 1, 1]} : vector<3x3x128xf32> to vector<1x1x128xf32>
    %25 = vector.shape_cast %24 : vector<1x1x128xf32> to vector<128xf32>
    %26 = vector.shape_cast %25 : vector<128xf32> to vector<1x1x128xf32>
    %27 = vector.broadcast %26 : vector<1x1x128xf32> to vector<16x16x128xf32>
    %28 = arith.mulf %23, %27 : vector<16x16x128xf32>
    %29 = arith.addf %22, %28 : vector<16x16x128xf32>
    %30 = vector.extract_strided_slice %8 {offsets = [0, 0, 0], sizes = [16, 16, 128], strides = [1, 1, 1]} : vector<18x16x128xf32> to vector<16x16x128xf32>
    %31 = vector.extract_strided_slice %6 {offsets = [0, 1, 0], sizes = [1, 1, 128], strides = [1, 1, 1]} : vector<3x3x128xf32> to vector<1x1x128xf32>
    %32 = vector.shape_cast %31 : vector<1x1x128xf32> to vector<128xf32>
    %33 = vector.shape_cast %32 : vector<128xf32> to vector<1x1x128xf32>
    %34 = vector.broadcast %33 : vector<1x1x128xf32> to vector<16x16x128xf32>
    %35 = arith.mulf %30, %34 : vector<16x16x128xf32>
    %36 = vector.extract_strided_slice %8 {offsets = [1, 0, 0], sizes = [16, 16, 128], strides = [1, 1, 1]} : vector<18x16x128xf32> to vector<16x16x128xf32>
    %37 = vector.extract_strided_slice %6 {offsets = [1, 1, 0], sizes = [1, 1, 128], strides = [1, 1, 1]} : vector<3x3x128xf32> to vector<1x1x128xf32>
    %38 = vector.shape_cast %37 : vector<1x1x128xf32> to vector<128xf32>
    %39 = vector.shape_cast %38 : vector<128xf32> to vector<1x1x128xf32>
    %40 = vector.broadcast %39 : vector<1x1x128xf32> to vector<16x16x128xf32>
    %41 = arith.mulf %36, %40 : vector<16x16x128xf32>
    %42 = arith.addf %35, %41 : vector<16x16x128xf32>
    %43 = vector.extract_strided_slice %8 {offsets = [2, 0, 0], sizes = [16, 16, 128], strides = [1, 1, 1]} : vector<18x16x128xf32> to vector<16x16x128xf32>
    %44 = vector.extract_strided_slice %6 {offsets = [2, 1, 0], sizes = [1, 1, 128], strides = [1, 1, 1]} : vector<3x3x128xf32> to vector<1x1x128xf32>
    %45 = vector.shape_cast %44 : vector<1x1x128xf32> to vector<128xf32>
    %46 = vector.shape_cast %45 : vector<128xf32> to vector<1x1x128xf32>
    %47 = vector.broadcast %46 : vector<1x1x128xf32> to vector<16x16x128xf32>
    %48 = arith.mulf %43, %47 : vector<16x16x128xf32>
    %49 = arith.addf %42, %48 : vector<16x16x128xf32>
    %50 = vector.extract_strided_slice %9 {offsets = [0, 0, 0], sizes = [16, 16, 128], strides = [1, 1, 1]} : vector<18x16x128xf32> to vector<16x16x128xf32>
    %51 = vector.extract_strided_slice %6 {offsets = [0, 2, 0], sizes = [1, 1, 128], strides = [1, 1, 1]} : vector<3x3x128xf32> to vector<1x1x128xf32>
    %52 = vector.shape_cast %51 : vector<1x1x128xf32> to vector<128xf32>
    %53 = vector.shape_cast %52 : vector<128xf32> to vector<1x1x128xf32>
    %54 = vector.broadcast %53 : vector<1x1x128xf32> to vector<16x16x128xf32>
    %55 = arith.mulf %50, %54 : vector<16x16x128xf32>
    %56 = vector.extract_strided_slice %9 {offsets = [1, 0, 0], sizes = [16, 16, 128], strides = [1, 1, 1]} : vector<18x16x128xf32> to vector<16x16x128xf32>
    %57 = vector.extract_strided_slice %6 {offsets = [1, 2, 0], sizes = [1, 1, 128], strides = [1, 1, 1]} : vector<3x3x128xf32> to vector<1x1x128xf32>
    %58 = vector.shape_cast %57 : vector<1x1x128xf32> to vector<128xf32>
    %59 = vector.shape_cast %58 : vector<128xf32> to vector<1x1x128xf32>
    %60 = vector.broadcast %59 : vector<1x1x128xf32> to vector<16x16x128xf32>
    %61 = arith.mulf %56, %60 : vector<16x16x128xf32>
    %62 = arith.addf %55, %61 : vector<16x16x128xf32>
    %63 = vector.extract_strided_slice %9 {offsets = [2, 0, 0], sizes = [16, 16, 128], strides = [1, 1, 1]} : vector<18x16x128xf32> to vector<16x16x128xf32>
    %64 = vector.extract_strided_slice %6 {offsets = [2, 2, 0], sizes = [1, 1, 128], strides = [1, 1, 1]} : vector<3x3x128xf32> to vector<1x1x128xf32>
    %65 = vector.shape_cast %64 : vector<1x1x128xf32> to vector<128xf32>
    %66 = vector.shape_cast %65 : vector<128xf32> to vector<1x1x128xf32>
    %67 = vector.broadcast %66 : vector<1x1x128xf32> to vector<16x16x128xf32>
    %68 = arith.mulf %63, %67 : vector<16x16x128xf32>
    %69 = arith.addf %62, %68 : vector<16x16x128xf32>
    %70 = arith.addf %29, %49 : vector<16x16x128xf32>
    %71 = arith.addf %70, %69 : vector<16x16x128xf32>
    %72 = vector.shape_cast %71 : vector<16x16x128xf32> to vector<256x128xf32>
    %73 = arith.truncf %72 : vector<256x128xf32> to vector<256x128xbf16>
    %c0_17 = arith.constant 0 : index
    %c0_18 = arith.constant 0 : index
    %74 = vector.load %arg3[%c0_17, %c0_18] : memref<128x384xbf16, #tpu.memory_space<vmem>>, vector<128x384xbf16>
    %cst_19 = arith.constant dense<0.000000e+00> : vector<256x384xf32>
    %75 = tpu.matmul %73, %74, %cst_19 {dimension_numbers = #tpu.dot_dimension_numbers<[1], [0], [0], [1], [0, 0, 1, 1], [], []>} : vector<256x128xbf16>, vector<128x384xbf16>, vector<256x384xf32> -> vector<256x384xf32>
    %cst_20 = arith.constant dense<0.000000e+00> : vector<256xf32>
    %76 = vector.multi_reduction <add>, %75, %cst_20 [1] : vector<256x384xf32> to vector<256xf32>
    %77 = vector.shape_cast %76 : vector<256xf32> to vector<256x1xf32>
    %cst_21 = arith.constant 0.00260416674 : f32
    %78 = vector.broadcast %cst_21 : f32 to vector<256x1xf32>
    %79 = arith.mulf %77, %78 : vector<256x1xf32>
    %80 = vector.broadcast %79 : vector<256x1xf32> to vector<256x384xf32>
    %81 = arith.subf %75, %80 : vector<256x384xf32>
    %cst_22 = arith.constant 0.000000e+00 : f32
    %82 = vector.broadcast %cst_22 : f32 to vector<256x384xf32>
    %83 = arith.maximumf %81, %82 : vector<256x384xf32>
    %cst_23 = arith.constant 1.400000e+00 : f32
    %84 = vector.broadcast %cst_23 : f32 to vector<256x384xf32>
    %85 = math.powf %83, %84 : vector<256x384xf32>
    %86 = vector.shape_cast %85 : vector<256x384xf32> to vector<16x16x384xf32>
    %87 = arith.truncf %86 : vector<16x16x384xf32> to vector<16x16x384xbf16>
    %c0_24 = arith.constant 0 : index
    %c0_25 = arith.constant 0 : index
    %c0_26 = arith.constant 0 : index
    %c0_27 = arith.constant 0 : index
    %88 = vector.load %arg4[%c0_24, %c0_25, %c0_26, %c0_27] : memref<1x16x16x384xbf16, #tpu.memory_space<vmem>>, vector<1x16x16x384xbf16>
    %89 = vector.shape_cast %88 : vector<1x16x16x384xbf16> to vector<16x16x384xbf16>
    %90 = vector.shape_cast %87 : vector<16x16x384xbf16> to vector<1x16x16x384xbf16>
    tpu.vector_store %arg4[%c0_24, %c0_25, %c0_26, %c0_27], %90 {strides = array<i32>} : memref<1x16x16x384xbf16, #tpu.memory_space<vmem>>, vector<1x16x16x384xbf16>,
    return
  }
  func.func @transform_0(%arg0: i32) -> (i32, i32, i32, i32) {
    %c0_i32 = arith.constant 0 : i32
    %c0_i32_0 = arith.constant 0 : i32
    %c0_i32_1 = arith.constant 0 : i32
    %c0_i32_2 = arith.constant 0 : i32
    return %arg0, %c0_i32, %c0_i32_0, %c0_i32_1 : i32, i32, i32, i32
  }
  func.func @transform_1(%arg0: i32) -> (i32, i32, i32) {
    %c0_i32 = arith.constant 0 : i32
    %c0_i32_0 = arith.constant 0 : i32
    %c0_i32_1 = arith.constant 0 : i32
    %c0_i32_2 = arith.constant 0 : i32
    return %c0_i32, %c0_i32_0, %c0_i32_1 : i32, i32, i32
  }
  func.func @transform_2(%arg0: i32) -> (i32, i32) {
    %c0_i32 = arith.constant 0 : i32
    %c0_i32_0 = arith.constant 0 : i32
    %c0_i32_1 = arith.constant 0 : i32
    return %c0_i32, %c0_i32_0 : i32, i32
  }
  func.func @transform_3(%arg0: i32) -> (i32, i32, i32, i32) {
    %c0_i32 = arith.constant 0 : i32
    %c0_i32_0 = arith.constant 0 : i32
    %c0_i32_1 = arith.constant 0 : i32
    %c0_i32_2 = arith.constant 0 : i32
    return %arg0, %c0_i32, %c0_i32_0, %c0_i32_1 : i32, i32, i32, i32
  }
}

module attributes {stable_mosaic.version = 11 : i64} {
  func.func @_block_kernel(%arg0: i32, %arg1: memref<1x8x8x384xbf16, #tpu.memory_space<vmem>>, %arg2: memref<3x3x384xf32, #tpu.memory_space<vmem>>, %arg3: memref<384x1536xbf16, #tpu.memory_space<vmem>>, %arg4: memref<1x8x8x1536xbf16, #tpu.memory_space<vmem>>, %arg5: memref<10x24x384xf32, #tpu.memory_space<vmem>>) attributes {dimension_semantics = [#tpu.dimension_semantics<parallel>], iteration_bounds = array<i64: 2>, scalar_prefetch = 0 : i64, scratch_operands = 1 : i64, tpu.core_type = #tpu.core_type<tc>, window_params = [{transform_indices = @transform_0, window_bounds = array<i64: 1, 8, 8, 384>}, {pipeline_mode = #tpu.pipeline_mode<synchronous>, transform_indices = @transform_1, window_bounds = array<i64: 3, 3, 384>}, {pipeline_mode = #tpu.pipeline_mode<synchronous>, transform_indices = @transform_2, window_bounds = array<i64: 384, 1536>}, {transform_indices = @transform_3, window_bounds = array<i64: 1, 8, 8, 1536>}]} {
    %cst = arith.constant 0.000000e+00 : f32
    %0 = vector.broadcast %cst : f32 to vector<10x24x384xf32>
    %c0 = arith.constant 0 : index
    %c0_0 = arith.constant 0 : index
    %c0_1 = arith.constant 0 : index
    %1 = vector.load %arg5[%c0, %c0_0, %c0_1] : memref<10x24x384xf32, #tpu.memory_space<vmem>>, vector<10x24x384xf32>
    tpu.vector_store %arg5[%c0, %c0_0, %c0_1], %0 {strides = array<i32>} : memref<10x24x384xf32, #tpu.memory_space<vmem>>, vector<10x24x384xf32>,
    %c0_2 = arith.constant 0 : index
    %c0_3 = arith.constant 0 : index
    %c0_4 = arith.constant 0 : index
    %c0_5 = arith.constant 0 : index
    %2 = vector.load %arg1[%c0_2, %c0_3, %c0_4, %c0_5] : memref<1x8x8x384xbf16, #tpu.memory_space<vmem>>, vector<1x8x8x384xbf16>
    %3 = vector.shape_cast %2 : vector<1x8x8x384xbf16> to vector<8x8x384xbf16>
    %4 = arith.extf %3 : vector<8x8x384xbf16> to vector<8x8x384xf32>
    %c1 = arith.constant 1 : index
    %c8 = arith.constant 8 : index
    %c0_6 = arith.constant 0 : index
    %5 = vector.load %arg5[%c1, %c8, %c0_6] : memref<10x24x384xf32, #tpu.memory_space<vmem>>, vector<8x8x384xf32>
    tpu.vector_store %arg5[%c1, %c8, %c0_6], %4 {strides = array<i32>} : memref<10x24x384xf32, #tpu.memory_space<vmem>>, vector<8x8x384xf32>,
    %c0_7 = arith.constant 0 : index
    %c0_8 = arith.constant 0 : index
    %c0_9 = arith.constant 0 : index
    %6 = vector.load %arg2[%c0_7, %c0_8, %c0_9] : memref<3x3x384xf32, #tpu.memory_space<vmem>>, vector<3x3x384xf32>
    %c0_10 = arith.constant 0 : index
    %c7 = arith.constant 7 : index
    %c0_11 = arith.constant 0 : index
    %7 = vector.load %arg5[%c0_10, %c7, %c0_11] : memref<10x24x384xf32, #tpu.memory_space<vmem>>, vector<10x8x384xf32>
    %c0_12 = arith.constant 0 : index
    %c8_13 = arith.constant 8 : index
    %c0_14 = arith.constant 0 : index
    %8 = vector.load %arg5[%c0_12, %c8_13, %c0_14] : memref<10x24x384xf32, #tpu.memory_space<vmem>>, vector<10x8x384xf32>
    %c0_15 = arith.constant 0 : index
    %c9 = arith.constant 9 : index
    %c0_16 = arith.constant 0 : index
    %9 = vector.load %arg5[%c0_15, %c9, %c0_16] : memref<10x24x384xf32, #tpu.memory_space<vmem>>, vector<10x8x384xf32>
    %10 = vector.extract_strided_slice %7 {offsets = [0, 0, 0], sizes = [8, 8, 384], strides = [1, 1, 1]} : vector<10x8x384xf32> to vector<8x8x384xf32>
    %11 = vector.extract_strided_slice %6 {offsets = [0, 0, 0], sizes = [1, 1, 384], strides = [1, 1, 1]} : vector<3x3x384xf32> to vector<1x1x384xf32>
    %12 = vector.shape_cast %11 : vector<1x1x384xf32> to vector<384xf32>
    %13 = vector.shape_cast %12 : vector<384xf32> to vector<1x1x384xf32>
    %14 = vector.broadcast %13 : vector<1x1x384xf32> to vector<8x8x384xf32>
    %15 = arith.mulf %10, %14 : vector<8x8x384xf32>
    %16 = vector.extract_strided_slice %7 {offsets = [1, 0, 0], sizes = [8, 8, 384], strides = [1, 1, 1]} : vector<10x8x384xf32> to vector<8x8x384xf32>
    %17 = vector.extract_strided_slice %6 {offsets = [1, 0, 0], sizes = [1, 1, 384], strides = [1, 1, 1]} : vector<3x3x384xf32> to vector<1x1x384xf32>
    %18 = vector.shape_cast %17 : vector<1x1x384xf32> to vector<384xf32>
    %19 = vector.shape_cast %18 : vector<384xf32> to vector<1x1x384xf32>
    %20 = vector.broadcast %19 : vector<1x1x384xf32> to vector<8x8x384xf32>
    %21 = arith.mulf %16, %20 : vector<8x8x384xf32>
    %22 = arith.addf %15, %21 : vector<8x8x384xf32>
    %23 = vector.extract_strided_slice %7 {offsets = [2, 0, 0], sizes = [8, 8, 384], strides = [1, 1, 1]} : vector<10x8x384xf32> to vector<8x8x384xf32>
    %24 = vector.extract_strided_slice %6 {offsets = [2, 0, 0], sizes = [1, 1, 384], strides = [1, 1, 1]} : vector<3x3x384xf32> to vector<1x1x384xf32>
    %25 = vector.shape_cast %24 : vector<1x1x384xf32> to vector<384xf32>
    %26 = vector.shape_cast %25 : vector<384xf32> to vector<1x1x384xf32>
    %27 = vector.broadcast %26 : vector<1x1x384xf32> to vector<8x8x384xf32>
    %28 = arith.mulf %23, %27 : vector<8x8x384xf32>
    %29 = arith.addf %22, %28 : vector<8x8x384xf32>
    %30 = vector.extract_strided_slice %8 {offsets = [0, 0, 0], sizes = [8, 8, 384], strides = [1, 1, 1]} : vector<10x8x384xf32> to vector<8x8x384xf32>
    %31 = vector.extract_strided_slice %6 {offsets = [0, 1, 0], sizes = [1, 1, 384], strides = [1, 1, 1]} : vector<3x3x384xf32> to vector<1x1x384xf32>
    %32 = vector.shape_cast %31 : vector<1x1x384xf32> to vector<384xf32>
    %33 = vector.shape_cast %32 : vector<384xf32> to vector<1x1x384xf32>
    %34 = vector.broadcast %33 : vector<1x1x384xf32> to vector<8x8x384xf32>
    %35 = arith.mulf %30, %34 : vector<8x8x384xf32>
    %36 = vector.extract_strided_slice %8 {offsets = [1, 0, 0], sizes = [8, 8, 384], strides = [1, 1, 1]} : vector<10x8x384xf32> to vector<8x8x384xf32>
    %37 = vector.extract_strided_slice %6 {offsets = [1, 1, 0], sizes = [1, 1, 384], strides = [1, 1, 1]} : vector<3x3x384xf32> to vector<1x1x384xf32>
    %38 = vector.shape_cast %37 : vector<1x1x384xf32> to vector<384xf32>
    %39 = vector.shape_cast %38 : vector<384xf32> to vector<1x1x384xf32>
    %40 = vector.broadcast %39 : vector<1x1x384xf32> to vector<8x8x384xf32>
    %41 = arith.mulf %36, %40 : vector<8x8x384xf32>
    %42 = arith.addf %35, %41 : vector<8x8x384xf32>
    %43 = vector.extract_strided_slice %8 {offsets = [2, 0, 0], sizes = [8, 8, 384], strides = [1, 1, 1]} : vector<10x8x384xf32> to vector<8x8x384xf32>
    %44 = vector.extract_strided_slice %6 {offsets = [2, 1, 0], sizes = [1, 1, 384], strides = [1, 1, 1]} : vector<3x3x384xf32> to vector<1x1x384xf32>
    %45 = vector.shape_cast %44 : vector<1x1x384xf32> to vector<384xf32>
    %46 = vector.shape_cast %45 : vector<384xf32> to vector<1x1x384xf32>
    %47 = vector.broadcast %46 : vector<1x1x384xf32> to vector<8x8x384xf32>
    %48 = arith.mulf %43, %47 : vector<8x8x384xf32>
    %49 = arith.addf %42, %48 : vector<8x8x384xf32>
    %50 = vector.extract_strided_slice %9 {offsets = [0, 0, 0], sizes = [8, 8, 384], strides = [1, 1, 1]} : vector<10x8x384xf32> to vector<8x8x384xf32>
    %51 = vector.extract_strided_slice %6 {offsets = [0, 2, 0], sizes = [1, 1, 384], strides = [1, 1, 1]} : vector<3x3x384xf32> to vector<1x1x384xf32>
    %52 = vector.shape_cast %51 : vector<1x1x384xf32> to vector<384xf32>
    %53 = vector.shape_cast %52 : vector<384xf32> to vector<1x1x384xf32>
    %54 = vector.broadcast %53 : vector<1x1x384xf32> to vector<8x8x384xf32>
    %55 = arith.mulf %50, %54 : vector<8x8x384xf32>
    %56 = vector.extract_strided_slice %9 {offsets = [1, 0, 0], sizes = [8, 8, 384], strides = [1, 1, 1]} : vector<10x8x384xf32> to vector<8x8x384xf32>
    %57 = vector.extract_strided_slice %6 {offsets = [1, 2, 0], sizes = [1, 1, 384], strides = [1, 1, 1]} : vector<3x3x384xf32> to vector<1x1x384xf32>
    %58 = vector.shape_cast %57 : vector<1x1x384xf32> to vector<384xf32>
    %59 = vector.shape_cast %58 : vector<384xf32> to vector<1x1x384xf32>
    %60 = vector.broadcast %59 : vector<1x1x384xf32> to vector<8x8x384xf32>
    %61 = arith.mulf %56, %60 : vector<8x8x384xf32>
    %62 = arith.addf %55, %61 : vector<8x8x384xf32>
    %63 = vector.extract_strided_slice %9 {offsets = [2, 0, 0], sizes = [8, 8, 384], strides = [1, 1, 1]} : vector<10x8x384xf32> to vector<8x8x384xf32>
    %64 = vector.extract_strided_slice %6 {offsets = [2, 2, 0], sizes = [1, 1, 384], strides = [1, 1, 1]} : vector<3x3x384xf32> to vector<1x1x384xf32>
    %65 = vector.shape_cast %64 : vector<1x1x384xf32> to vector<384xf32>
    %66 = vector.shape_cast %65 : vector<384xf32> to vector<1x1x384xf32>
    %67 = vector.broadcast %66 : vector<1x1x384xf32> to vector<8x8x384xf32>
    %68 = arith.mulf %63, %67 : vector<8x8x384xf32>
    %69 = arith.addf %62, %68 : vector<8x8x384xf32>
    %70 = arith.addf %29, %49 : vector<8x8x384xf32>
    %71 = arith.addf %70, %69 : vector<8x8x384xf32>
    %72 = vector.shape_cast %71 : vector<8x8x384xf32> to vector<64x384xf32>
    %73 = arith.truncf %72 : vector<64x384xf32> to vector<64x384xbf16>
    %c0_17 = arith.constant 0 : index
    %c0_18 = arith.constant 0 : index
    %74 = vector.load %arg3[%c0_17, %c0_18] : memref<384x1536xbf16, #tpu.memory_space<vmem>>, vector<384x1536xbf16>
    %cst_19 = arith.constant dense<0.000000e+00> : vector<64x1536xf32>
    %75 = tpu.matmul %73, %74, %cst_19 {dimension_numbers = #tpu.dot_dimension_numbers<[1], [0], [0], [1], [0, 0, 1, 1], [], []>} : vector<64x384xbf16>, vector<384x1536xbf16>, vector<64x1536xf32> -> vector<64x1536xf32>
    %cst_20 = arith.constant dense<0.000000e+00> : vector<64xf32>
    %76 = vector.multi_reduction <add>, %75, %cst_20 [1] : vector<64x1536xf32> to vector<64xf32>
    %77 = vector.shape_cast %76 : vector<64xf32> to vector<64x1xf32>
    %cst_21 = arith.constant 6.51041686E-4 : f32
    %78 = vector.broadcast %cst_21 : f32 to vector<64x1xf32>
    %79 = arith.mulf %77, %78 : vector<64x1xf32>
    %80 = vector.broadcast %79 : vector<64x1xf32> to vector<64x1536xf32>
    %81 = arith.subf %75, %80 : vector<64x1536xf32>
    %cst_22 = arith.constant 0.000000e+00 : f32
    %82 = vector.broadcast %cst_22 : f32 to vector<64x1536xf32>
    %83 = arith.maximumf %81, %82 : vector<64x1536xf32>
    %84 = vector.shape_cast %83 : vector<64x1536xf32> to vector<8x8x1536xf32>
    %85 = arith.truncf %84 : vector<8x8x1536xf32> to vector<8x8x1536xbf16>
    %c0_23 = arith.constant 0 : index
    %c0_24 = arith.constant 0 : index
    %c0_25 = arith.constant 0 : index
    %c0_26 = arith.constant 0 : index
    %86 = vector.load %arg4[%c0_23, %c0_24, %c0_25, %c0_26] : memref<1x8x8x1536xbf16, #tpu.memory_space<vmem>>, vector<1x8x8x1536xbf16>
    %87 = vector.shape_cast %86 : vector<1x8x8x1536xbf16> to vector<8x8x1536xbf16>
    %88 = vector.shape_cast %85 : vector<8x8x1536xbf16> to vector<1x8x8x1536xbf16>
    tpu.vector_store %arg4[%c0_23, %c0_24, %c0_25, %c0_26], %88 {strides = array<i32>} : memref<1x8x8x1536xbf16, #tpu.memory_space<vmem>>, vector<1x8x8x1536xbf16>,
    return
  }
  func.func @transform_0(%arg0: i32) -> (i32, i32, i32, i32) {
    %c0_i32 = arith.constant 0 : i32
    %c0_i32_0 = arith.constant 0 : i32
    %c0_i32_1 = arith.constant 0 : i32
    %c0_i32_2 = arith.constant 0 : i32
    return %arg0, %c0_i32, %c0_i32_0, %c0_i32_1 : i32, i32, i32, i32
  }
  func.func @transform_1(%arg0: i32) -> (i32, i32, i32) {
    %c0_i32 = arith.constant 0 : i32
    %c0_i32_0 = arith.constant 0 : i32
    %c0_i32_1 = arith.constant 0 : i32
    %c0_i32_2 = arith.constant 0 : i32
    return %c0_i32, %c0_i32_0, %c0_i32_1 : i32, i32, i32
  }
  func.func @transform_2(%arg0: i32) -> (i32, i32) {
    %c0_i32 = arith.constant 0 : i32
    %c0_i32_0 = arith.constant 0 : i32
    %c0_i32_1 = arith.constant 0 : i32
    return %c0_i32, %c0_i32_0 : i32, i32
  }
  func.func @transform_3(%arg0: i32) -> (i32, i32, i32, i32) {
    %c0_i32 = arith.constant 0 : i32
    %c0_i32_0 = arith.constant 0 : i32
    %c0_i32_1 = arith.constant 0 : i32
    %c0_i32_2 = arith.constant 0 : i32
    return %arg0, %c0_i32, %c0_i32_0, %c0_i32_1 : i32, i32, i32, i32
  }
}

module attributes {stable_mosaic.version = 11 : i64} {
  func.func @_head_fc_kernel(%arg0: i32, %arg1: memref<1x2x1536xbf16, #tpu.memory_space<vmem>>, %arg2: memref<1x1536x128xbf16, #tpu.memory_space<vmem>>, %arg3: memref<1x128xf32, #tpu.memory_space<vmem>>, %arg4: memref<2x128xf32, #tpu.memory_space<vmem>>) attributes {dimension_semantics = [#tpu.dimension_semantics<arbitrary>], iteration_bounds = array<i64: 16>, scalar_prefetch = 0 : i64, scratch_operands = 0 : i64, tpu.core_type = #tpu.core_type<tc>, window_params = [{transform_indices = @transform_0, window_bounds = array<i64: 1, 2, 1536>}, {transform_indices = @transform_1, window_bounds = array<i64: 1, 1536, 128>}, {pipeline_mode = #tpu.pipeline_mode<synchronous>, transform_indices = @transform_2, window_bounds = array<i64: 1, 128>}, {pipeline_mode = #tpu.pipeline_mode<synchronous>, transform_indices = @transform_3, window_bounds = array<i64: 2, 128>}]} {
    %c0_i32 = arith.constant 0 : i32
    %0 = arith.cmpi eq, %arg0, %c0_i32 : i32
    %1 = arith.extui %0 : i1 to i32
    %c0_i32_0 = arith.constant 0 : i32
    %2 = arith.cmpi ne, %1, %c0_i32_0 : i32
    scf.if %2 {
      %cst_11 = arith.constant 0.000000e+00 : f32
      %14 = vector.broadcast %cst_11 : f32 to vector<2x128xf32>
      %c0_12 = arith.constant 0 : index
      %c0_13 = arith.constant 0 : index
      %15 = vector.load %arg4[%c0_12, %c0_13] : memref<2x128xf32, #tpu.memory_space<vmem>>, vector<2x128xf32>
      tpu.vector_store %arg4[%c0_12, %c0_13], %14 {strides = array<i32>} : memref<2x128xf32, #tpu.memory_space<vmem>>, vector<2x128xf32>,
    } else {
    }
    %c0 = arith.constant 0 : index
    %c0_1 = arith.constant 0 : index
    %3 = vector.load %arg4[%c0, %c0_1] : memref<2x128xf32, #tpu.memory_space<vmem>>, vector<2x128xf32>
    %c0_2 = arith.constant 0 : index
    %c0_3 = arith.constant 0 : index
    %c0_4 = arith.constant 0 : index
    %4 = vector.load %arg1[%c0_2, %c0_3, %c0_4] : memref<1x2x1536xbf16, #tpu.memory_space<vmem>>, vector<1x2x1536xbf16>
    %5 = vector.shape_cast %4 : vector<1x2x1536xbf16> to vector<2x1536xbf16>
    %c0_5 = arith.constant 0 : index
    %c0_6 = arith.constant 0 : index
    %c0_7 = arith.constant 0 : index
    %6 = vector.load %arg2[%c0_5, %c0_6, %c0_7] : memref<1x1536x128xbf16, #tpu.memory_space<vmem>>, vector<1x1536x128xbf16>
    %7 = vector.shape_cast %6 : vector<1x1536x128xbf16> to vector<1536x128xbf16>
    %cst = arith.constant dense<0.000000e+00> : vector<2x128xf32>
    %8 = tpu.matmul %5, %7, %cst {dimension_numbers = #tpu.dot_dimension_numbers<[1], [0], [0], [1], [0, 0, 1, 1], [], []>} : vector<2x1536xbf16>, vector<1536x128xbf16>, vector<2x128xf32> -> vector<2x128xf32>
    %9 = arith.addf %3, %8 : vector<2x128xf32>
    %c0_8 = arith.constant 0 : index
    %c0_9 = arith.constant 0 : index
    %10 = vector.load %arg4[%c0_8, %c0_9] : memref<2x128xf32, #tpu.memory_space<vmem>>, vector<2x128xf32>
    tpu.vector_store %arg4[%c0_8, %c0_9], %9 {strides = array<i32>} : memref<2x128xf32, #tpu.memory_space<vmem>>, vector<2x128xf32>,
    %c15_i32 = arith.constant 15 : i32
    %11 = arith.cmpi eq, %arg0, %c15_i32 : i32
    %12 = arith.extui %11 : i1 to i32
    %c0_i32_10 = arith.constant 0 : i32
    %13 = arith.cmpi ne, %12, %c0_i32_10 : i32
    scf.if %13 {
      %c0_11 = arith.constant 0 : index
      %c0_12 = arith.constant 0 : index
      %14 = vector.load %arg4[%c0_11, %c0_12] : memref<2x128xf32, #tpu.memory_space<vmem>>, vector<2x128xf32>
      %c0_13 = arith.constant 0 : index
      %c0_14 = arith.constant 0 : index
      %15 = vector.load %arg3[%c0_13, %c0_14] : memref<1x128xf32, #tpu.memory_space<vmem>>, vector<1x128xf32>
      %16 = vector.broadcast %15 : vector<1x128xf32> to vector<2x128xf32>
      %17 = arith.addf %14, %16 : vector<2x128xf32>
      %c0_15 = arith.constant 0 : index
      %c0_16 = arith.constant 0 : index
      %18 = vector.load %arg4[%c0_15, %c0_16] : memref<2x128xf32, #tpu.memory_space<vmem>>, vector<2x128xf32>
      tpu.vector_store %arg4[%c0_15, %c0_16], %17 {strides = array<i32>} : memref<2x128xf32, #tpu.memory_space<vmem>>, vector<2x128xf32>,
    } else {
    }
    return
  }
  func.func @transform_0(%arg0: i32) -> (i32, i32, i32) {
    %c0_i32 = arith.constant 0 : i32
    %c0_i32_0 = arith.constant 0 : i32
    %c0_i32_1 = arith.constant 0 : i32
    return %arg0, %c0_i32, %c0_i32_0 : i32, i32, i32
  }
  func.func @transform_1(%arg0: i32) -> (i32, i32, i32) {
    %c0_i32 = arith.constant 0 : i32
    %c0_i32_0 = arith.constant 0 : i32
    %c0_i32_1 = arith.constant 0 : i32
    return %arg0, %c0_i32, %c0_i32_0 : i32, i32, i32
  }
  func.func @transform_2(%arg0: i32) -> (i32, i32) {
    %c0_i32 = arith.constant 0 : i32
    %c0_i32_0 = arith.constant 0 : i32
    %c0_i32_1 = arith.constant 0 : i32
    return %c0_i32, %c0_i32_0 : i32, i32
  }
  func.func @transform_3(%arg0: i32) -> (i32, i32) {
    %c0_i32 = arith.constant 0 : i32
    %c0_i32_0 = arith.constant 0 : i32
    %c0_i32_1 = arith.constant 0 : i32
    return %c0_i32, %c0_i32_0 : i32, i32
  }
}

</mosaic_0001>

<llo_original>
// kernel: net_depthwise_forward.4
$region0: #{net_depthwise_forward.4}
  #allocation0 [shape = 'u32[]', space=smem, size = 0x4, offset = 0x4, fixed_abs, tag = 'smem constant byte address 0x4 - core index']
  #allocation1 [shape = 'u32[144,128]{1,0:T(1,128)}', space=vmem, size = 0x12000, scoped, tag = 'internal scratch']
  %s0 = inlined_call_operand.vmem [shape: bf16[2048,75], index: 0, kind: input, shape index: {}]
  %s1 = inlined_call_operand.hbm [shape: bf16[75,128], index: 1, kind: input, shape index: {}]
  %s2 = inlined_call_operand.vmem [shape: bf16[2048,128], index: 2, kind: output, shape index: {}]
  %s3 = sld [smem:[#allocation0]]
  $region45: #{net_depthwise_forward.4} parent=0
    _
  %s5 = ssub.s32 1, %s3
  %s6 = scalar_select 0, %s5, %s3
  $region1: #{net_depthwise_forward.4} parent=0
    #allocation2 [shape = 'u8[20480]{0}', space=vmem, size = 0x5000, scoped, tag = 'input window, operand 1, single buffered']
    #allocation3 [shape = 's32[2]{0}', space=sflag, size = 0x8, scoped, tag = 'scoped memory for net_depthwise_forward.4']
    %7 = vsyncpa [#allocation3], 0
    loop: start=0, step=1, limit=4
    $region2: #{net_depthwise_forward.4} parent=1 // loop_pre_header
      _
    $region3: #{net_depthwise_forward.4} parent=1 // loop_header
      %s9 = sphi 0, %s13
      %p10 = scmp.ge.s32.totalorder %s9, 4
      %s19 = sphi 0, %s21
      %s22 = sphi 0, %s19
      %s23 = sphi 0, %s22
      %s39 = sphi 0, %s23
      %s43 = sphi 0, %s43
      %s45 = sphi 0, %s43
      %s46 = sphi 0, %s45
      %s60 = sphi 0, %s46
      %s66 = sphi 0, %s68
      %s69 = sphi 0, %s66
      %s70 = sphi 0, %s69
      %s86 = sphi 0, %s70
    $region4: #{net_depthwise_forward.4} parent=1 // loop_header_branch
      %12 = sbr.rel (%p10) target = $region8
    $region5: #{net_depthwise_forward.4} parent=1 // loop_body
      %s14 = ssub.s32 %s9, 1
      %s15 = ssub.s32 %s9, 2
      %s16 = sadd.s32 %s9, 1
      %s17 = ssub.s32 %s9, %s16
      %p18 = scmp.eq.s32.totalorder %s17, 0
      %s20 = sadd.s32 %s19, 1
      %s21 = scalar_select %p18, %s19, %s20
      %p24 = pneg %p18
      %p25 = scmp.eq.s32.totalorder %s9, 1
      %p26 = por %p24, %p25
      %p27 = scmp.ne.s32.totalorder %s19, %s22
      %p28 = scmp.eq.s32.totalorder %s9, 0
      %p29 = por %p27, %p28
      %p30 = scmp.ne.s32.totalorder %s19, %s22
      %p31 = scmp.eq.s32.totalorder %s14, 1
      %p32 = por %p30, %p31
      %p33 = scmp.ne.s32.totalorder %s22, %s23
      %p34 = scmp.eq.s32.totalorder %s14, 0
      %p35 = por %p33, %p34
      %p36 = scmp.ne.s32.totalorder %s22, %s23
      %p37 = scmp.eq.s32.totalorder %s15, 1
      %p38 = por %p36, %p37
      %p40 = scmp.ne.s32.totalorder %s23, %s39
      %p41 = scmp.eq.s32.totalorder %s15, 0
      %p42 = por %p40, %p41
      %s44 = sadd.s32 %s43, 1
      %p47 = scmp.eq.s32.totalorder %s9, 1
      %p48 = scmp.ne.s32.totalorder %s43, %s45
      %p49 = scmp.eq.s32.totalorder %s9, 0
      %p50 = por %p48, %p49
      %p51 = scmp.ne.s32.totalorder %s43, %s45
      %p52 = scmp.eq.s32.totalorder %s14, 1
      %p53 = por %p51, %p52
      %p54 = scmp.ne.s32.totalorder %s45, %s46
      %p55 = scmp.eq.s32.totalorder %s14, 0
      %p56 = por %p54, %p55
      %p57 = scmp.ne.s32.totalorder %s45, %s46
      %p58 = scmp.eq.s32.totalorder %s15, 1
      %p59 = por %p57, %p58
      %p61 = scmp.ne.s32.totalorder %s46, %s60
      %p62 = scmp.eq.s32.totalorder %s15, 0
      %p63 = por %p61, %p62
      %s64 = ssub.s32 %s9, %s16
      %p65 = scmp.eq.s32.totalorder %s64, 0
      %s67 = sadd.s32 %s66, 1
      %s68 = scalar_select %p65, %s66, %s67
      %p71 = pneg %p65
      %p72 = scmp.eq.s32.totalorder %s9, 1
      %p73 = por %p71, %p72
      %p74 = scmp.ne.s32.totalorder %s66, %s69
      %p75 = scmp.eq.s32.totalorder %s9, 0
      %p76 = por %p74, %p75
      %p77 = scmp.ne.s32.totalorder %s66, %s69
      %p78 = scmp.eq.s32.totalorder %s14, 1
      %p79 = por %p77, %p78
      %p80 = scmp.ne.s32.totalorder %s69, %s70
      %p81 = scmp.eq.s32.totalorder %s14, 0
      %p82 = por %p80, %p81
      %p83 = scmp.ne.s32.totalorder %s69, %s70
      %p84 = scmp.eq.s32.totalorder %s15, 1
      %p85 = por %p83, %p84
      %p87 = scmp.ne.s32.totalorder %s70, %s86
      %p88 = scmp.eq.s32.totalorder %s15, 0
      %p89 = por %p87, %p88
      %p90 = scmp.le.s32.totalorder 1, %s9
      %p91 = scmp.lt.s32.totalorder %s9, 3
      %p92 = pnand %p90, %p91
      %p93 = pneg %p92
      // Predicated region
      $region9: #{net_depthwise_forward.4} parent=5 // pred_check
        _
      $region10: #{net_depthwise_forward.4} parent=5 // pred_check_branch
        %95 = sbr.rel (%p92) target = $region12
      $region11: #{net_depthwise_forward.4} parent=5 // pred_region
        %s96 = ssub.s32 %s9, 1
        // Predicated region
        $region13: #{net_depthwise_forward.4} parent=11 // pred_check
          %p97 = pneg %p56
        $region14: #{net_depthwise_forward.4} parent=11 // pred_check_branch
          %99 = sbr.rel (%p97) target = $region16
        $region15: #{net_depthwise_forward.4} parent=11 // pred_region
          %s101 = ssub.s32 640, 640
          %102 = vsyncadd [#allocation3], %s101
          %s103 = sshll.u32 [#allocation2], 4
          %s104 = int_to_ptr.vmem [resolvable:$true] %s103
          %109 = dma.hbm_to_vmem [thread:$0]  %s1, 640, %s104, [#allocation3], 64, 64, 4
        $region16: #{net_depthwise_forward.4} parent=11 // pred_fallthru
          _
      $region12: #{net_depthwise_forward.4} parent=5 // pred_fallthru
        _
      %p110 = scmp.lt.s32.totalorder %s9, 2
      // Predicated region
      $region17: #{net_depthwise_forward.4} parent=5 // pred_check
        %p111 = pneg %p110
      $region18: #{net_depthwise_forward.4} parent=5 // pred_check_branch
        %113 = sbr.rel (%p111) target = $region20
      $region19: #{net_depthwise_forward.4} parent=5 // pred_region
        // Predicated region
        $region21: #{net_depthwise_forward.4} parent=19 // pred_check
          %p114 = pneg %p29
        $region22: #{net_depthwise_forward.4} parent=19 // pred_check_branch
          %116 = sbr.rel (%p114) target = $region24
        $region23: #{net_depthwise_forward.4} parent=19 // pred_region
          %s117 = smul.u32 128, %s9
          %p118 = scmp.lt.s32.totalorder %s117, 255
          %s119 = scalar_select %p118, %s117, 255
          %s120 = smul.addr %s119, 4
          %s121 = scalar_lea.vmem %s0, %s120
          %s122 = smul.u32 128, %s9
        $region24: #{net_depthwise_forward.4} parent=19 // pred_fallthru
          _
      $region20: #{net_depthwise_forward.4} parent=5 // pred_fallthru
        _
      %p123 = scmp.le.s32.totalorder 1, %s9
      %p124 = scmp.lt.s32.totalorder %s9, 3
      %p125 = pnand %p123, %p124
      %p126 = pneg %p125
      // Predicated region
      $region25: #{net_depthwise_forward.4} parent=5 // pred_check
        _
      $region26: #{net_depthwise_forward.4} parent=5 // pred_check_branch
        %128 = sbr.rel (%p125) target = $region28
      $region27: #{net_depthwise_forward.4} parent=5 // pred_region
        %s129 = ssub.s32 %s9, 1
        // Predicated region
        $region29: #{net_depthwise_forward.4} parent=27 // pred_check
          %p130 = pneg %p56
        $region30: #{net_depthwise_forward.4} parent=27 // pred_check_branch
          %132 = sbr.rel (%p130) target = $region32
        $region31: #{net_depthwise_forward.4} parent=27 // pred_region
          %133 = dma.done [#allocation3], 640
        $region32: #{net_depthwise_forward.4} parent=27 // pred_fallthru
          _
        %s134 = smul.u32 128, %s14
        %p135 = scmp.lt.s32.totalorder %s134, 255
        %s136 = scalar_select %p135, %s134, 255
        %s137 = smul.addr %s136, 4
        %s138 = scalar_lea.vmem %s0, %s137
        %p139 = pneg %p35
        %p140 = pneg %p32
        %p141 = pneg %p56
        %p142 = pneg %p53
        %p143 = pneg %p82
        %p144 = pneg %p79
        %s145 = smul.u32 128, %s14
        %p146 = scmp.lt.s32.totalorder %s145, 255
        %s147 = scalar_select %p146, %s145, 255
        %s148 = smul.addr %s147, 4
        %s149 = scalar_lea.vmem %s2, %s148
        %s150 = smul.u32 128, %s14
        %p151 = scmp.lt.s32.totalorder %s150, 255
        %s152 = scalar_select %p151, %s150, 255
        %s153 = smul.addr %s152, 4
        %s154 = scalar_lea.vmem %s0, %s153
        %s155 = smul.u32 128, %s14
        %s156 = smul.u32 128, %s14
        %p157 = scmp.lt.s32.totalorder %s156, 255
        %s158 = scalar_select %p157, %s156, 255
        %s159 = smul.addr %s158, 4
        %s160 = scalar_lea.vmem %s2, %s159
        %s161 = smul.u32 128, %s14
        %v163 = vld [vmem:[%s154] sm:$0xf]
        %v164 = vld [vmem:[%s154 + $0x4] sm:$0xf]
        %v165 = vld [vmem:[%s154 + $0x8] sm:$0xf]
        %v166 = vld [vmem:[%s154 + $0xc] sm:$0xf]
        %v167 = vld [vmem:[%s154 + $0x10] sm:$0xf]
        %v168 = vld [vmem:[%s154 + $0x14] sm:$0xf]
        %v169 = vld [vmem:[%s154 + $0x18] sm:$0xf]
        %v170 = vld [vmem:[%s154 + $0x1c] sm:$0xf]
        %v171 = vld [vmem:[%s154 + $0x20] sm:$0xf]
        %v172 = vld [vmem:[%s154 + $0x24] sm:$0xf]
        %v173 = vld [vmem:[%s154 + $0x28] sm:$0xf]
        %v174 = vld [vmem:[%s154 + $0x2c] sm:$0xf]
        %v175 = vld [vmem:[%s154 + $0x30] sm:$0xf]
        %v176 = vld [vmem:[%s154 + $0x34] sm:$0xf]
        %v177 = vld [vmem:[%s154 + $0x38] sm:$0xf]
        %v178 = vld [vmem:[%s154 + $0x3c] sm:$0xf]
        %v179 = vld [vmem:[%s154 + $0x40] sm:$0xf]
        %v180 = vld [vmem:[%s154 + $0x44] sm:$0xf]
        %v181 = vld [vmem:[%s154 + $0x48] sm:$0xf]
        %v182 = vld [vmem:[%s154 + $0x4c] sm:$0xf]
        %v183 = vld [vmem:[%s154 + $0x50] sm:$0xf]
        %v184 = vld [vmem:[%s154 + $0x54] sm:$0xf]
        %v185 = vld [vmem:[%s154 + $0x58] sm:$0xf]
        %v186 = vld [vmem:[%s154 + $0x5c] sm:$0xf]
        %v187 = vld [vmem:[%s154 + $0x60] sm:$0xf]
        %v188 = vld [vmem:[%s154 + $0x64] sm:$0xf]
        %v189 = vld [vmem:[%s154 + $0x68] sm:$0xf]
        %v190 = vld [vmem:[%s154 + $0x6c] sm:$0xf]
        %v191 = vld [vmem:[%s154 + $0x70] sm:$0xf]
        %v192 = vld [vmem:[%s154 + $0x74] sm:$0xf]
        %v193 = vld [vmem:[%s154 + $0x78] sm:$0xf]
        %v194 = vld [vmem:[%s154 + $0x7c] sm:$0xf]
        %v195 = vld [vmem:[%s154 + $0x80] sm:$0xf]
        %v196 = vld [vmem:[%s154 + $0x84] sm:$0xf]
        %v197 = vld [vmem:[%s154 + $0x88] sm:$0xf]
        %v198 = vld [vmem:[%s154 + $0x8c] sm:$0xf]
        %v199 = vld [vmem:[%s154 + $0x90] sm:$0xf]
        %v200 = vld [vmem:[%s154 + $0x94] sm:$0xf]
        %v201 = vld [vmem:[%s154 + $0x98] sm:$0xf]
        %v202 = vld [vmem:[%s154 + $0x9c] sm:$0xf]
        %v203 = vld [vmem:[%s154 + $0xa0] sm:$0xf]
        %v204 = vld [vmem:[%s154 + $0xa4] sm:$0xf]
        %v205 = vld [vmem:[%s154 + $0xa8] sm:$0xf]
        %v206 = vld [vmem:[%s154 + $0xac] sm:$0xf]
        %v207 = vld [vmem:[%s154 + $0xb0] sm:$0xf]
        %v208 = vld [vmem:[%s154 + $0xb4] sm:$0xf]
        %v209 = vld [vmem:[%s154 + $0xb8] sm:$0xf]
        %v210 = vld [vmem:[%s154 + $0xbc] sm:$0xf]
        %v211 = vld [vmem:[%s154 + $0xc0] sm:$0xf]
        %v212 = vld [vmem:[%s154 + $0xc4] sm:$0xf]
        %v213 = vld [vmem:[%s154 + $0xc8] sm:$0xf]
        %v214 = vld [vmem:[%s154 + $0xcc] sm:$0xf]
        %v215 = vld [vmem:[%s154 + $0xd0] sm:$0xf]
        %v216 = vld [vmem:[%s154 + $0xd4] sm:$0xf]
        %v217 = vld [vmem:[%s154 + $0xd8] sm:$0xf]
        %v218 = vld [vmem:[%s154 + $0xdc] sm:$0xf]
        %v219 = vld [vmem:[%s154 + $0xe0] sm:$0xf]
        %v220 = vld [vmem:[%s154 + $0xe4] sm:$0xf]
        %v221 = vld [vmem:[%s154 + $0xe8] sm:$0xf]
        %v222 = vld [vmem:[%s154 + $0xec] sm:$0xf]
        %v223 = vld [vmem:[%s154 + $0xf0] sm:$0xf]
        %v224 = vld [vmem:[%s154 + $0xf4] sm:$0xf]
        %v225 = vld [vmem:[%s154 + $0xf8] sm:$0xf]
        %v226 = vld [vmem:[%s154 + $0xfc] sm:$0xf]
        %v227 = vld [vmem:[%s154 + $0x100] sm:$0xf]
        %v228 = vld [vmem:[%s154 + $0x104] sm:$0xf]
        %v229 = vld [vmem:[%s154 + $0x108] sm:$0xf]
        %v230 = vld [vmem:[%s154 + $0x10c] sm:$0xf]
        %v231 = vld [vmem:[%s154 + $0x110] sm:$0xf]
        %v232 = vld [vmem:[%s154 + $0x114] sm:$0xf]
        %v233 = vld [vmem:[%s154 + $0x118] sm:$0xf]
        %v234 = vld [vmem:[%s154 + $0x11c] sm:$0xf]
        %v235 = vld [vmem:[%s154 + $0x120] sm:$0xf]
        %v236 = vld [vmem:[%s154 + $0x124] sm:$0xf]
        %v237 = vld [vmem:[%s154 + $0x128] sm:$0xf]
        %v238 = vld [vmem:[%s154 + $0x12c] sm:$0xf]
        %v239 = vld [vmem:[%s154 + $0x130] sm:$0xf]
        %v240 = vld [vmem:[%s154 + $0x134] sm:$0xf]
        %v241 = vld [vmem:[%s154 + $0x138] sm:$0xf]
        %v242 = vld [vmem:[%s154 + $0x13c] sm:$0xf]
        %v243 = vld [vmem:[%s154 + $0x140] sm:$0xf]
        %v244 = vld [vmem:[%s154 + $0x144] sm:$0xf]
        %v245 = vld [vmem:[%s154 + $0x148] sm:$0xf]
        %v246 = vld [vmem:[%s154 + $0x14c] sm:$0xf]
        %v247 = vld [vmem:[%s154 + $0x150] sm:$0xf]
        %v248 = vld [vmem:[%s154 + $0x154] sm:$0xf]
        %v249 = vld [vmem:[%s154 + $0x158] sm:$0xf]
        %v250 = vld [vmem:[%s154 + $0x15c] sm:$0xf]
        %v251 = vld [vmem:[%s154 + $0x160] sm:$0xf]
        %v252 = vld [vmem:[%s154 + $0x164] sm:$0xf]
        %v253 = vld [vmem:[%s154 + $0x168] sm:$0xf]
        %v254 = vld [vmem:[%s154 + $0x16c] sm:$0xf]
        %v255 = vld [vmem:[%s154 + $0x170] sm:$0xf]
        %v256 = vld [vmem:[%s154 + $0x174] sm:$0xf]
        %v257 = vld [vmem:[%s154 + $0x178] sm:$0xf]
        %v258 = vld [vmem:[%s154 + $0x17c] sm:$0xf]
        %v259 = vld [vmem:[%s154 + $0x180] sm:$0xf]
        %v260 = vld [vmem:[%s154 + $0x184] sm:$0xf]
        %v261 = vld [vmem:[%s154 + $0x188] sm:$0xf]
        %v262 = vld [vmem:[%s154 + $0x18c] sm:$0xf]
        %v263 = vld [vmem:[%s154 + $0x190] sm:$0xf]
        %v264 = vld [vmem:[%s154 + $0x194] sm:$0xf]
        %v265 = vld [vmem:[%s154 + $0x198] sm:$0xf]
        %v266 = vld [vmem:[%s154 + $0x19c] sm:$0xf]
        %v267 = vld [vmem:[%s154 + $0x1a0] sm:$0xf]
        %v268 = vld [vmem:[%s154 + $0x1a4] sm:$0xf]
        %v269 = vld [vmem:[%s154 + $0x1a8] sm:$0xf]
        %v270 = vld [vmem:[%s154 + $0x1ac] sm:$0xf]
        %v271 = vld [vmem:[%s154 + $0x1b0] sm:$0xf]
        %v272 = vld [vmem:[%s154 + $0x1b4] sm:$0xf]
        %v273 = vld [vmem:[%s154 + $0x1b8] sm:$0xf]
        %v274 = vld [vmem:[%s154 + $0x1bc] sm:$0xf]
        %v275 = vld [vmem:[%s154 + $0x1c0] sm:$0xf]
        %v276 = vld [vmem:[%s154 + $0x1c4] sm:$0xf]
        %v277 = vld [vmem:[%s154 + $0x1c8] sm:$0xf]
        %v278 = vld [vmem:[%s154 + $0x1cc] sm:$0xf]
        %v279 = vld [vmem:[%s154 + $0x1d0] sm:$0xf]
        %v280 = vld [vmem:[%s154 + $0x1d4] sm:$0xf]
        %v281 = vld [vmem:[%s154 + $0x1d8] sm:$0xf]
        %v282 = vld [vmem:[%s154 + $0x1dc] sm:$0xf]
        %v283 = vld [vmem:[%s154 + $0x1e0] sm:$0xf]
        %v284 = vld [vmem:[%s154 + $0x1e4] sm:$0xf]
        %v285 = vld [vmem:[%s154 + $0x1e8] sm:$0xf]
        %v286 = vld [vmem:[%s154 + $0x1ec] sm:$0xf]
        %v287 = vld [vmem:[%s154 + $0x1f0] sm:$0xf]
        %v288 = vld [vmem:[%s154 + $0x1f4] sm:$0xf]
        %v289 = vld [vmem:[%s154 + $0x1f8] sm:$0xf]
        %v290 = vld [vmem:[%s154 + $0x1fc] sm:$0xf]
        %v291 = vld [vmem:[#allocation2] sm:$0xf]
        %v292 = vld [vmem:[#allocation2 + $0x4] sm:$0xf]
        %v293 = vld [vmem:[#allocation2 + $0x8] sm:$0xf]
        %v294 = vld [vmem:[#allocation2 + $0xc] sm:$0xf]
        %v295 = vld [vmem:[#allocation2 + $0x10] sm:$0xf]
        %v296 = vld [vmem:[#allocation2 + $0x14] sm:$0xf]
        %v297 = vld [vmem:[#allocation2 + $0x18] sm:$0xf]
        %v298 = vld [vmem:[#allocation2 + $0x1c] sm:$0xf]
        %v299 = vld [vmem:[#allocation2 + $0x20] sm:$0xf]
        %v300 = vld [vmem:[#allocation2 + $0x24] sm:$0x3]
        %v429 = vunpack.c.l.b16 %v163
        %v430 = vunpack.c.l.b16 %v164
        %v431 = vunpack.c.l.b16 %v165
        %v432 = vunpack.c.l.b16 %v166
        %v433 = vunpack.c.l.b16 %v167
        %v434 = vunpack.c.l.b16 %v168
        %v435 = vunpack.c.l.b16 %v169
        %v436 = vunpack.c.l.b16 %v170
        %v437 = vunpack.c.l.b16 %v171
        %v438 = vunpack.c.l.b16 %v172
        %v439 = vunpack.c.l.b16 %v173
        %v440 = vunpack.c.l.b16 %v174
        %v441 = vunpack.c.l.b16 %v175
        %v442 = vunpack.c.l.b16 %v176
        %v443 = vunpack.c.l.b16 %v177
        %v444 = vunpack.c.l.b16 %v178
        %v445 = vunpack.c.l.b16 %v179
        %v446 = vunpack.c.l.b16 %v180
        %v447 = vunpack.c.l.b16 %v181
        %v448 = vunpack.c.l.b16 %v182
        %v449 = vunpack.c.l.b16 %v183
        %v450 = vunpack.c.l.b16 %v184
        %v451 = vunpack.c.l.b16 %v185
        %v452 = vunpack.c.l.b16 %v186
        %v453 = vunpack.c.l.b16 %v187
        %v454 = vunpack.c.l.b16 %v188
        %v455 = vunpack.c.l.b16 %v189
        %v456 = vunpack.c.l.b16 %v190
        %v457 = vunpack.c.l.b16 %v191
        %v458 = vunpack.c.l.b16 %v192
        %v459 = vunpack.c.l.b16 %v193
        %v460 = vunpack.c.l.b16 %v194
        %v461 = vunpack.c.l.b16 %v195
        %v462 = vunpack.c.l.b16 %v196
        %v463 = vunpack.c.l.b16 %v197
        %v464 = vunpack.c.l.b16 %v198
        %v465 = vunpack.c.l.b16 %v199
        %v466 = vunpack.c.l.b16 %v200
        %v467 = vunpack.c.l.b16 %v201
        %v468 = vunpack.c.l.b16 %v202
        %v469 = vunpack.c.l.b16 %v203
        %v470 = vunpack.c.l.b16 %v204
        %v471 = vunpack.c.l.b16 %v205
        %v472 = vunpack.c.l.b16 %v206
        %v473 = vunpack.c.l.b16 %v207
        %v474 = vunpack.c.l.b16 %v208
        %v475 = vunpack.c.l.b16 %v209
        %v476 = vunpack.c.l.b16 %v210
        %v477 = vunpack.c.l.b16 %v211
        %v478 = vunpack.c.l.b16 %v212
        %v479 = vunpack.c.l.b16 %v213
        %v480 = vunpack.c.l.b16 %v214
        %v481 = vunpack.c.l.b16 %v215
        %v482 = vunpack.c.l.b16 %v216
        %v483 = vunpack.c.l.b16 %v217
        %v484 = vunpack.c.l.b16 %v218
        %v485 = vunpack.c.l.b16 %v219
        %v486 = vunpack.c.l.b16 %v220
        %v487 = vunpack.c.l.b16 %v221
        %v488 = vunpack.c.l.b16 %v222
        %v489 = vunpack.c.l.b16 %v223
        %v490 = vunpack.c.l.b16 %v224
        %v491 = vunpack.c.l.b16 %v225
        %v492 = vunpack.c.l.b16 %v226
        %v493 = vunpack.c.l.b16 %v227
        %v494 = vunpack.c.l.b16 %v228
        %v495 = vunpack.c.l.b16 %v229
        %v496 = vunpack.c.l.b16 %v230
        %v497 = vunpack.c.l.b16 %v231
        %v498 = vunpack.c.l.b16 %v232
        %v499 = vunpack.c.l.b16 %v233
        %v500 = vunpack.c.l.b16 %v234
        %v501 = vunpack.c.l.b16 %v235
        %v502 = vunpack.c.l.b16 %v236
        %v503 = vunpack.c.l.b16 %v237
        %v504 = vunpack.c.l.b16 %v238
        %v505 = vunpack.c.l.b16 %v239
        %v506 = vunpack.c.l.b16 %v240
        %v507 = vunpack.c.l.b16 %v241
        %v508 = vunpack.c.l.b16 %v242
        %v509 = vunpack.c.l.b16 %v243
        %v510 = vunpack.c.l.b16 %v244
        %v511 = vunpack.c.l.b16 %v245
        %v512 = vunpack.c.l.b16 %v246
        %v513 = vunpack.c.l.b16 %v247
        %v514 = vunpack.c.l.b16 %v248
        %v515 = vunpack.c.l.b16 %v249
        %v516 = vunpack.c.l.b16 %v250
        %v517 = vunpack.c.l.b16 %v251
        %v518 = vunpack.c.l.b16 %v252
        %v519 = vunpack.c.l.b16 %v253
        %v520 = vunpack.c.l.b16 %v254
        %v521 = vunpack.c.l.b16 %v255
        %v522 = vunpack.c.l.b16 %v256
        %v523 = vunpack.c.l.b16 %v257
        %v524 = vunpack.c.l.b16 %v258
        %v525 = vunpack.c.l.b16 %v259
        %v526 = vunpack.c.l.b16 %v260
        %v527 = vunpack.c.l.b16 %v261
        %v528 = vunpack.c.l.b16 %v262
        %v529 = vunpack.c.l.b16 %v263
        %v530 = vunpack.c.l.b16 %v264
        %v531 = vunpack.c.l.b16 %v265
        %v532 = vunpack.c.l.b16 %v266
        %v533 = vunpack.c.l.b16 %v267
        %v534 = vunpack.c.l.b16 %v268
        %v535 = vunpack.c.l.b16 %v269
        %v536 = vunpack.c.l.b16 %v270
        %v537 = vunpack.c.l.b16 %v271
        %v538 = vunpack.c.l.b16 %v272
        %v539 = vunpack.c.l.b16 %v273
        %v540 = vunpack.c.l.b16 %v274
        %v541 = vunpack.c.l.b16 %v275
        %v542 = vunpack.c.l.b16 %v276
        %v543 = vunpack.c.l.b16 %v277
        %v544 = vunpack.c.l.b16 %v278
        %v545 = vunpack.c.l.b16 %v279
        %v546 = vunpack.c.l.b16 %v280
        %v547 = vunpack.c.l.b16 %v281
        %v548 = vunpack.c.l.b16 %v282
        %v549 = vunpack.c.l.b16 %v283
        %v550 = vunpack.c.l.b16 %v284
        %v551 = vunpack.c.l.b16 %v285
        %v552 = vunpack.c.l.b16 %v286
        %v553 = vunpack.c.l.b16 %v287
        %v554 = vunpack.c.l.b16 %v288
        %v555 = vunpack.c.l.b16 %v289
        %v556 = vunpack.c.l.b16 %v290
        %v557 = vpack.c.b16 %v430, %v429
        %v558 = vpack.c.b16 %v432, %v431
        %v559 = vpack.c.b16 %v434, %v433
        %v560 = vpack.c.b16 %v436, %v435
        %v561 = vpack.c.b16 %v438, %v437
        %v562 = vpack.c.b16 %v440, %v439
        %v563 = vpack.c.b16 %v442, %v441
        %v564 = vpack.c.b16 %v444, %v443
        %v565 = vpack.c.b16 %v446, %v445
        %v566 = vpack.c.b16 %v448, %v447
        %v567 = vpack.c.b16 %v450, %v449
        %v568 = vpack.c.b16 %v452, %v451
        %v569 = vpack.c.b16 %v454, %v453
        %v570 = vpack.c.b16 %v456, %v455
        %v571 = vpack.c.b16 %v458, %v457
        %v572 = vpack.c.b16 %v460, %v459
        %v573 = vpack.c.b16 %v462, %v461
        %v574 = vpack.c.b16 %v464, %v463
        %v575 = vpack.c.b16 %v466, %v465
        %v576 = vpack.c.b16 %v468, %v467
        %v577 = vpack.c.b16 %v470, %v469
        %v578 = vpack.c.b16 %v472, %v471
        %v579 = vpack.c.b16 %v474, %v473
        %v580 = vpack.c.b16 %v476, %v475
        %v581 = vpack.c.b16 %v478, %v477
        %v582 = vpack.c.b16 %v480, %v479
        %v583 = vpack.c.b16 %v482, %v481
        %v584 = vpack.c.b16 %v484, %v483
        %v585 = vpack.c.b16 %v486, %v485
        %v586 = vpack.c.b16 %v488, %v487
        %v587 = vpack.c.b16 %v490, %v489
        %v588 = vpack.c.b16 %v492, %v491
        %v589 = vpack.c.b16 %v494, %v493
        %v590 = vpack.c.b16 %v496, %v495
        %v591 = vpack.c.b16 %v498, %v497
        %v592 = vpack.c.b16 %v500, %v499
        %v593 = vpack.c.b16 %v502, %v501
        %v594 = vpack.c.b16 %v504, %v503
        %v595 = vpack.c.b16 %v506, %v505
        %v596 = vpack.c.b16 %v508, %v507
        %v597 = vpack.c.b16 %v510, %v509
        %v598 = vpack.c.b16 %v512, %v511
        %v599 = vpack.c.b16 %v514, %v513
        %v600 = vpack.c.b16 %v516, %v515
        %v601 = vpack.c.b16 %v518, %v517
        %v602 = vpack.c.b16 %v520, %v519
        %v603 = vpack.c.b16 %v522, %v521
        %v604 = vpack.c.b16 %v524, %v523
        %v605 = vpack.c.b16 %v526, %v525
        %v606 = vpack.c.b16 %v528, %v527
        %v607 = vpack.c.b16 %v530, %v529
        %v608 = vpack.c.b16 %v532, %v531
        %v609 = vpack.c.b16 %v534, %v533
        %v610 = vpack.c.b16 %v536, %v535
        %v611 = vpack.c.b16 %v538, %v537
        %v612 = vpack.c.b16 %v540, %v539
        %v613 = vpack.c.b16 %v542, %v541
        %v614 = vpack.c.b16 %v544, %v543
        %v615 = vpack.c.b16 %v546, %v545
        %v616 = vpack.c.b16 %v548, %v547
        %v617 = vpack.c.b16 %v550, %v549
        %v618 = vpack.c.b16 %v552, %v551
        %v619 = vpack.c.b16 %v554, %v553
        %v620 = vpack.c.b16 %v556, %v555
        %v631 = vunpack.c.l.b16 %v291
        %v632 = vunpack.c.l.b16 %v292
        %v633 = vunpack.c.l.b16 %v293
        %v634 = vunpack.c.l.b16 %v294
        %v635 = vunpack.c.l.b16 %v295
        %v636 = vunpack.c.l.b16 %v296
        %v637 = vunpack.c.l.b16 %v297
        %v638 = vunpack.c.l.b16 %v298
        %v639 = vunpack.c.l.b16 %v299
        %v640 = vunpack.c.l.b16 %v300
        %v641 = vpack.c.b16 %v632, %v631
        %v642 = vpack.c.b16 %v634, %v633
        %v643 = vpack.c.b16 %v636, %v635
        %v644 = vpack.c.b16 %v638, %v637
        %v645 = vpack.c.b16 %v640, %v639
        %vm650 = vcmask 613376
        %v652 = vsel %vm650, %v557, 0
        %v655 = vsel %vm650, %v558, 0
        %v658 = vsel %vm650, %v559, 0
        %v661 = vsel %vm650, %v560, 0
        %v664 = vsel %vm650, %v561, 0
        %v667 = vsel %vm650, %v562, 0
        %v670 = vsel %vm650, %v563, 0
        %v673 = vsel %vm650, %v564, 0
        %v676 = vsel %vm650, %v565, 0
        %v679 = vsel %vm650, %v566, 0
        %v682 = vsel %vm650, %v567, 0
        %v685 = vsel %vm650, %v568, 0
        %v688 = vsel %vm650, %v569, 0
        %v691 = vsel %vm650, %v570, 0
        %v694 = vsel %vm650, %v571, 0
        %v697 = vsel %vm650, %v572, 0
        %v700 = vsel %vm650, %v573, 0
        %v703 = vsel %vm650, %v574, 0
        %v706 = vsel %vm650, %v575, 0
        %v709 = vsel %vm650, %v576, 0
        %v712 = vsel %vm650, %v577, 0
        %v715 = vsel %vm650, %v578, 0
        %v718 = vsel %vm650, %v579, 0
        %v721 = vsel %vm650, %v580, 0
        %v724 = vsel %vm650, %v581, 0
        %v727 = vsel %vm650, %v582, 0
        %v730 = vsel %vm650, %v583, 0
        %v733 = vsel %vm650, %v584, 0
        %v736 = vsel %vm650, %v585, 0
        %v739 = vsel %vm650, %v586, 0
        %v742 = vsel %vm650, %v587, 0
        %v745 = vsel %vm650, %v588, 0
        %v748 = vsel %vm650, %v589, 0
        %v751 = vsel %vm650, %v590, 0
        %v754 = vsel %vm650, %v591, 0
        %v757 = vsel %vm650, %v592, 0
        %v760 = vsel %vm650, %v593, 0
        %v763 = vsel %vm650, %v594, 0
        %v766 = vsel %vm650, %v595, 0
        %v769 = vsel %vm650, %v596, 0
        %v772 = vsel %vm650, %v597, 0
        %v775 = vsel %vm650, %v598, 0
        %v778 = vsel %vm650, %v599, 0
        %v781 = vsel %vm650, %v600, 0
        %v784 = vsel %vm650, %v601, 0
        %v787 = vsel %vm650, %v602, 0
        %v790 = vsel %vm650, %v603, 0
        %v793 = vsel %vm650, %v604, 0
        %v796 = vsel %vm650, %v605, 0
        %v799 = vsel %vm650, %v606, 0
        %v802 = vsel %vm650, %v607, 0
        %v805 = vsel %vm650, %v608, 0
        %v808 = vsel %vm650, %v609, 0
        %v811 = vsel %vm650, %v610, 0
        %v814 = vsel %vm650, %v611, 0
        %v817 = vsel %vm650, %v612, 0
        %v820 = vsel %vm650, %v613, 0
        %v823 = vsel %vm650, %v614, 0
        %v826 = vsel %vm650, %v615, 0
        %v829 = vsel %vm650, %v616, 0
        %v832 = vsel %vm650, %v617, 0
        %v835 = vsel %vm650, %v618, 0
        %v838 = vsel %vm650, %v619, 0
        %v841 = vsel %vm650, %v620, 0
        %vm843 = vcmask 1044480
        %vm844 = vcmask 1045504
        %v845 = vsel %vm843, 4294967295, 65535
        %v846 = vsel %vm844, %v845, 0
        %v848 = vand.u32 %v645, %v846
        %850 = vmatprep.subr.bf16.mxu0 0
        %851 = vmatpush1.bf16.msra.mxu0 0
        %852 = vmatprep.subr.bf16.mxu0 0
        %853 = vmatpush1.bf16.msra.mxu0 0
        %854 = vmatprep.subr.bf16.mxu0 0
        %855 = vmatpush1.bf16.msra.mxu0 0
        %856 = vmatprep.subr.bf16.mxu0 0
        %857 = vmatpush1.bf16.msra.mxu0 %v848
        %858 = vmatprep.subr.bf16.mxu0 0
        %859 = vmatpush1.bf16.msra.mxu0 %v644
        %860 = vmatprep.subr.bf16.mxu0 0
        %861 = vmatpush1.bf16.msra.mxu0 %v643
        %862 = vmatprep.subr.bf16.mxu0 0
        %863 = vmatpush1.bf16.msra.mxu0 %v642
        %864 = vmatprep.subr.bf16.mxu0 0
        %865 = vmatpush1.bf16.msra.mxu0 %v641
        %866 = vmatprep.subr.bf16.mxu0 0
        %867 = vmatpush2.bf16.msra.mxu0 0
        %868 = vmatprep.subr.bf16.mxu0 0
        %869 = vmatpush2.bf16.msra.mxu0 0
        %870 = vmatprep.subr.bf16.mxu0 0
        %871 = vmatpush2.bf16.msra.mxu0 0
        %872 = vmatprep.subr.bf16.mxu0 0
        %873 = vmatpush2.bf16.msra.mxu0 0
        %874 = vmatprep.subr.bf16.mxu0 0
        %875 = vmatpush2.bf16.msra.mxu0 0
        %876 = vmatprep.subr.bf16.mxu0 0
        %877 = vmatpush2.bf16.msra.mxu0 0
        %878 = vmatprep.subr.bf16.mxu0 0
        %879 = vmatpush2.bf16.msra.mxu0 0
        %880 = vmatprep.subr.bf16.mxu0 0
        %881 = vmatpush2.bf16.msra.mxu0 0
        %882 = vmatprep.mubr.bf16.mxu0 0
        %883 = vmatmul.mubr.bf16.gmra.mxu0 %v652
        %v884 = vpop.f32.mrf.mxu0
        %v885 = vadd.f32 0.0, %v884
        %v886 = vpop.f32.mrf.mxu0
        %v887 = vpop.f32.mrf.mxu0
        %v888 = vadd.f32 0.0, %v887
        %v889 = vpop.f32.mrf.mxu0
        %890 = vmatprep.mubr.bf16.mxu0 0
        %891 = vmatmul.mubr.bf16.gmra.mxu0 %v655
        %v892 = vpop.f32.mrf.mxu0
        %v893 = vadd.f32 0.0, %v892
        %v894 = vpop.f32.mrf.mxu0
        %v895 = vpop.f32.mrf.mxu0
        %v896 = vadd.f32 0.0, %v895
        %v897 = vpop.f32.mrf.mxu0
        %898 = vmatprep.mubr.bf16.mxu0 0
        %899 = vmatmul.mubr.bf16.gmra.mxu0 %v658
        %v900 = vpop.f32.mrf.mxu0
        %v901 = vadd.f32 0.0, %v900
        %v902 = vpop.f32.mrf.mxu0
        %v903 = vpop.f32.mrf.mxu0
        %v904 = vadd.f32 0.0, %v903
        %v905 = vpop.f32.mrf.mxu0
        %906 = vmatprep.mubr.bf16.mxu0 0
        %907 = vmatmul.mubr.bf16.gmra.mxu0 %v661
        %v908 = vpop.f32.mrf.mxu0
        %v909 = vadd.f32 0.0, %v908
        %v910 = vpop.f32.mrf.mxu0
        %v911 = vpop.f32.mrf.mxu0
        %v912 = vadd.f32 0.0, %v911
        %v913 = vpop.f32.mrf.mxu0
        %914 = vmatprep.mubr.bf16.mxu0 0
        %915 = vmatmul.mubr.bf16.gmra.mxu0 %v664
        %v916 = vpop.f32.mrf.mxu0
        %v917 = vadd.f32 0.0, %v916
        %v918 = vpop.f32.mrf.mxu0
        %v919 = vpop.f32.mrf.mxu0
        %v920 = vadd.f32 0.0, %v919
        %v921 = vpop.f32.mrf.mxu0
        %922 = vmatprep.mubr.bf16.mxu0 0
        %923 = vmatmul.mubr.bf16.gmra.mxu0 %v667
        %v924 = vpop.f32.mrf.mxu0
        %v925 = vadd.f32 0.0, %v924
        %v926 = vpop.f32.mrf.mxu0
        %v927 = vpop.f32.mrf.mxu0
        %v928 = vadd.f32 0.0, %v927
        %v929 = vpop.f32.mrf.mxu0
        %930 = vmatprep.mubr.bf16.mxu0 0
        %931 = vmatmul.mubr.bf16.gmra.mxu0 %v670
        %v932 = vpop.f32.mrf.mxu0
        %v933 = vadd.f32 0.0, %v932
        %v934 = vpop.f32.mrf.mxu0
        %v935 = vpop.f32.mrf.mxu0
        %v936 = vadd.f32 0.0, %v935
        %v937 = vpop.f32.mrf.mxu0
        %938 = vmatprep.mubr.bf16.mxu0 0
        %939 = vmatmul.mubr.bf16.gmra.mxu0 %v673
        %v940 = vpop.f32.mrf.mxu0
        %v941 = vadd.f32 0.0, %v940
        %v942 = vpop.f32.mrf.mxu0
        %v943 = vpop.f32.mrf.mxu0
        %v944 = vadd.f32 0.0, %v943
        %v945 = vpop.f32.mrf.mxu0
        %946 = vmatprep.mubr.bf16.mxu0 0
        %947 = vmatmul.mubr.bf16.gmra.mxu0 %v676
        %v948 = vpop.f32.mrf.mxu0
        %v949 = vadd.f32 0.0, %v948
        %v950 = vpop.f32.mrf.mxu0
        %v951 = vpop.f32.mrf.mxu0
        %v952 = vadd.f32 0.0, %v951
        %v953 = vpop.f32.mrf.mxu0
        %954 = vmatprep.mubr.bf16.mxu0 0
        %955 = vmatmul.mubr.bf16.gmra.mxu0 %v679
        %v956 = vpop.f32.mrf.mxu0
        %v957 = vadd.f32 0.0, %v956
        %v958 = vpop.f32.mrf.mxu0
        %v959 = vpop.f32.mrf.mxu0
        %v960 = vadd.f32 0.0, %v959
        %v961 = vpop.f32.mrf.mxu0
        %962 = vmatprep.mubr.bf16.mxu0 0
        %963 = vmatmul.mubr.bf16.gmra.mxu0 %v682
        %v964 = vpop.f32.mrf.mxu0
        %v965 = vadd.f32 0.0, %v964
        %v966 = vpop.f32.mrf.mxu0
        %v967 = vpop.f32.mrf.mxu0
        %v968 = vadd.f32 0.0, %v967
        %v969 = vpop.f32.mrf.mxu0
        %970 = vmatprep.mubr.bf16.mxu0 0
        %971 = vmatmul.mubr.bf16.gmra.mxu0 %v685
        %v972 = vpop.f32.mrf.mxu0
        %v973 = vadd.f32 0.0, %v972
        %v974 = vpop.f32.mrf.mxu0
        %v975 = vpop.f32.mrf.mxu0
        %v976 = vadd.f32 0.0, %v975
        %v977 = vpop.f32.mrf.mxu0
        %978 = vmatprep.mubr.bf16.mxu0 0
        %979 = vmatmul.mubr.bf16.gmra.mxu0 %v688
        %v980 = vpop.f32.mrf.mxu0
        %v981 = vadd.f32 0.0, %v980
        %v982 = vpop.f32.mrf.mxu0
        %v983 = vpop.f32.mrf.mxu0
        %v984 = vadd.f32 0.0, %v983
        %v985 = vpop.f32.mrf.mxu0
        %986 = vmatprep.mubr.bf16.mxu0 0
        %987 = vmatmul.mubr.bf16.gmra.mxu0 %v691
        %v988 = vpop.f32.mrf.mxu0
        %v989 = vadd.f32 0.0, %v988
        %v990 = vpop.f32.mrf.mxu0
        %v991 = vpop.f32.mrf.mxu0
        %v992 = vadd.f32 0.0, %v991
        %v993 = vpop.f32.mrf.mxu0
        %994 = vmatprep.mubr.bf16.mxu0 0
        %995 = vmatmul.mubr.bf16.gmra.mxu0 %v694
        %v996 = vpop.f32.mrf.mxu0
        %v997 = vadd.f32 0.0, %v996
        %v998 = vpop.f32.mrf.mxu0
        %v999 = vpop.f32.mrf.mxu0
        %v1000 = vadd.f32 0.0, %v999
        %v1001 = vpop.f32.mrf.mxu0
        %1002 = vmatprep.mubr.bf16.mxu0 0
        %1003 = vmatmul.mubr.bf16.gmra.mxu0 %v697
        %v1004 = vpop.f32.mrf.mxu0
        %v1005 = vadd.f32 0.0, %v1004
        %v1006 = vpop.f32.mrf.mxu0
        %v1007 = vpop.f32.mrf.mxu0
        %v1008 = vadd.f32 0.0, %v1007
        %v1009 = vpop.f32.mrf.mxu0
        %1010 = vmatprep.mubr.bf16.mxu0 0
        %1011 = vmatmul.mubr.bf16.gmra.mxu0 %v700
        %v1012 = vpop.f32.mrf.mxu0
        %v1013 = vadd.f32 0.0, %v1012
        %v1014 = vpop.f32.mrf.mxu0
        %v1015 = vpop.f32.mrf.mxu0
        %v1016 = vadd.f32 0.0, %v1015
        %v1017 = vpop.f32.mrf.mxu0
        %1018 = vmatprep.mubr.bf16.mxu0 0
        %1019 = vmatmul.mubr.bf16.gmra.mxu0 %v703
        %v1020 = vpop.f32.mrf.mxu0
        %v1021 = vadd.f32 0.0, %v1020
        %v1022 = vpop.f32.mrf.mxu0
        %v1023 = vpop.f32.mrf.mxu0
        %v1024 = vadd.f32 0.0, %v1023
        %v1025 = vpop.f32.mrf.mxu0
        %1026 = vmatprep.mubr.bf16.mxu0 0
        %1027 = vmatmul.mubr.bf16.gmra.mxu0 %v706
        %v1028 = vpop.f32.mrf.mxu0
        %v1029 = vadd.f32 0.0, %v1028
        %v1030 = vpop.f32.mrf.mxu0
        %v1031 = vpop.f32.mrf.mxu0
        %v1032 = vadd.f32 0.0, %v1031
        %v1033 = vpop.f32.mrf.mxu0
        %1034 = vmatprep.mubr.bf16.mxu0 0
        %1035 = vmatmul.mubr.bf16.gmra.mxu0 %v709
        %v1036 = vpop.f32.mrf.mxu0
        %v1037 = vadd.f32 0.0, %v1036
        %v1038 = vpop.f32.mrf.mxu0
        %v1039 = vpop.f32.mrf.mxu0
        %v1040 = vadd.f32 0.0, %v1039
        %v1041 = vpop.f32.mrf.mxu0
        %1042 = vmatprep.mubr.bf16.mxu0 0
        %1043 = vmatmul.mubr.bf16.gmra.mxu0 %v712
        %v1044 = vpop.f32.mrf.mxu0
        %v1045 = vadd.f32 0.0, %v1044
        %v1046 = vpop.f32.mrf.mxu0
        %v1047 = vpop.f32.mrf.mxu0
        %v1048 = vadd.f32 0.0, %v1047
        %v1049 = vpop.f32.mrf.mxu0
        %1050 = vmatprep.mubr.bf16.mxu0 0
        %1051 = vmatmul.mubr.bf16.gmra.mxu0 %v715
        %v1052 = vpop.f32.mrf.mxu0
        %v1053 = vadd.f32 0.0, %v1052
        %v1054 = vpop.f32.mrf.mxu0
        %v1055 = vpop.f32.mrf.mxu0
        %v1056 = vadd.f32 0.0, %v1055
        %v1057 = vpop.f32.mrf.mxu0
        %1058 = vmatprep.mubr.bf16.mxu0 0
        %1059 = vmatmul.mubr.bf16.gmra.mxu0 %v718
        %v1060 = vpop.f32.mrf.mxu0
        %v1061 = vadd.f32 0.0, %v1060
        %v1062 = vpop.f32.mrf.mxu0
        %v1063 = vpop.f32.mrf.mxu0
        %v1064 = vadd.f32 0.0, %v1063
        %v1065 = vpop.f32.mrf.mxu0
        %1066 = vmatprep.mubr.bf16.mxu0 0
        %1067 = vmatmul.mubr.bf16.gmra.mxu0 %v721
        %v1068 = vpop.f32.mrf.mxu0
        %v1069 = vadd.f32 0.0, %v1068
        %v1070 = vpop.f32.mrf.mxu0
        %v1071 = vpop.f32.mrf.mxu0
        %v1072 = vadd.f32 0.0, %v1071
        %v1073 = vpop.f32.mrf.mxu0
        %1074 = vmatprep.mubr.bf16.mxu0 0
        %1075 = vmatmul.mubr.bf16.gmra.mxu0 %v724
        %v1076 = vpop.f32.mrf.mxu0
        %v1077 = vadd.f32 0.0, %v1076
        %v1078 = vpop.f32.mrf.mxu0
        %v1079 = vpop.f32.mrf.mxu0
        %v1080 = vadd.f32 0.0, %v1079
        %v1081 = vpop.f32.mrf.mxu0
        %1082 = vmatprep.mubr.bf16.mxu0 0
        %1083 = vmatmul.mubr.bf16.gmra.mxu0 %v727
        %v1084 = vpop.f32.mrf.mxu0
        %v1085 = vadd.f32 0.0, %v1084
        %v1086 = vpop.f32.mrf.mxu0
        %v1087 = vpop.f32.mrf.mxu0
        %v1088 = vadd.f32 0.0, %v1087
        %v1089 = vpop.f32.mrf.mxu0
        %1090 = vmatprep.mubr.bf16.mxu0 0
        %1091 = vmatmul.mubr.bf16.gmra.mxu0 %v730
        %v1092 = vpop.f32.mrf.mxu0
        %v1093 = vadd.f32 0.0, %v1092
        %v1094 = vpop.f32.mrf.mxu0
        %v1095 = vpop.f32.mrf.mxu0
        %v1096 = vadd.f32 0.0, %v1095
        %v1097 = vpop.f32.mrf.mxu0
        %1098 = vmatprep.mubr.bf16.mxu0 0
        %1099 = vmatmul.mubr.bf16.gmra.mxu0 %v733
        %v1100 = vpop.f32.mrf.mxu0
        %v1101 = vadd.f32 0.0, %v1100
        %v1102 = vpop.f32.mrf.mxu0
        %v1103 = vpop.f32.mrf.mxu0
        %v1104 = vadd.f32 0.0, %v1103
        %v1105 = vpop.f32.mrf.mxu0
        %1106 = vmatprep.mubr.bf16.mxu0 0
        %1107 = vmatmul.mubr.bf16.gmra.mxu0 %v736
        %v1108 = vpop.f32.mrf.mxu0
        %v1109 = vadd.f32 0.0, %v1108
        %v1110 = vpop.f32.mrf.mxu0
        %v1111 = vpop.f32.mrf.mxu0
        %v1112 = vadd.f32 0.0, %v1111
        %v1113 = vpop.f32.mrf.mxu0
        %1114 = vmatprep.mubr.bf16.mxu0 0
        %1115 = vmatmul.mubr.bf16.gmra.mxu0 %v739
        %v1116 = vpop.f32.mrf.mxu0
        %v1117 = vadd.f32 0.0, %v1116
        %v1118 = vpop.f32.mrf.mxu0
        %v1119 = vpop.f32.mrf.mxu0
        %v1120 = vadd.f32 0.0, %v1119
        %v1121 = vpop.f32.mrf.mxu0
        %1122 = vmatprep.mubr.bf16.mxu0 0
        %1123 = vmatmul.mubr.bf16.gmra.mxu0 %v742
        %v1124 = vpop.f32.mrf.mxu0
        %v1125 = vadd.f32 0.0, %v1124
        %v1126 = vpop.f32.mrf.mxu0
        %v1127 = vpop.f32.mrf.mxu0
        %v1128 = vadd.f32 0.0, %v1127
        %v1129 = vpop.f32.mrf.mxu0
        %1130 = vmatprep.mubr.bf16.mxu0 0
        %1131 = vmatmul.mubr.bf16.gmra.mxu0 %v745
        %v1132 = vpop.f32.mrf.mxu0
        %v1133 = vadd.f32 0.0, %v1132
        %v1134 = vpop.f32.mrf.mxu0
        %v1135 = vpop.f32.mrf.mxu0
        %v1136 = vadd.f32 0.0, %v1135
        %v1137 = vpop.f32.mrf.mxu0
        %1138 = vmatprep.mubr.bf16.mxu0 0
        %1139 = vmatmul.mubr.bf16.gmra.mxu0 %v748
        %v1140 = vpop.f32.mrf.mxu0
        %v1141 = vadd.f32 0.0, %v1140
        %v1142 = vpop.f32.mrf.mxu0
        %v1143 = vpop.f32.mrf.mxu0
        %v1144 = vadd.f32 0.0, %v1143
        %v1145 = vpop.f32.mrf.mxu0
        %1146 = vmatprep.mubr.bf16.mxu0 0
        %1147 = vmatmul.mubr.bf16.gmra.mxu0 %v751
        %v1148 = vpop.f32.mrf.mxu0
        %v1149 = vadd.f32 0.0, %v1148
        %v1150 = vpop.f32.mrf.mxu0
        %v1151 = vpop.f32.mrf.mxu0
        %v1152 = vadd.f32 0.0, %v1151
        %v1153 = vpop.f32.mrf.mxu0
        %1154 = vmatprep.mubr.bf16.mxu0 0
        %1155 = vmatmul.mubr.bf16.gmra.mxu0 %v754
        %v1156 = vpop.f32.mrf.mxu0
        %v1157 = vadd.f32 0.0, %v1156
        %v1158 = vpop.f32.mrf.mxu0
        %v1159 = vpop.f32.mrf.mxu0
        %v1160 = vadd.f32 0.0, %v1159
        %v1161 = vpop.f32.mrf.mxu0
        %1162 = vmatprep.mubr.bf16.mxu0 0
        %1163 = vmatmul.mubr.bf16.gmra.mxu0 %v757
        %v1164 = vpop.f32.mrf.mxu0
        %v1165 = vadd.f32 0.0, %v1164
        %v1166 = vpop.f32.mrf.mxu0
        %v1167 = vpop.f32.mrf.mxu0
        %v1168 = vadd.f32 0.0, %v1167
        %v1169 = vpop.f32.mrf.mxu0
        %1170 = vmatprep.mubr.bf16.mxu0 0
        %1171 = vmatmul.mubr.bf16.gmra.mxu0 %v760
        %v1172 = vpop.f32.mrf.mxu0
        %v1173 = vadd.f32 0.0, %v1172
        %v1174 = vpop.f32.mrf.mxu0
        %v1175 = vpop.f32.mrf.mxu0
        %v1176 = vadd.f32 0.0, %v1175
        %v1177 = vpop.f32.mrf.mxu0
        %1178 = vmatprep.mubr.bf16.mxu0 0
        %1179 = vmatmul.mubr.bf16.gmra.mxu0 %v763
        %v1180 = vpop.f32.mrf.mxu0
        %v1181 = vadd.f32 0.0, %v1180
        %v1182 = vpop.f32.mrf.mxu0
        %v1183 = vpop.f32.mrf.mxu0
        %v1184 = vadd.f32 0.0, %v1183
        %v1185 = vpop.f32.mrf.mxu0
        %1186 = vmatprep.mubr.bf16.mxu0 0
        %1187 = vmatmul.mubr.bf16.gmra.mxu0 %v766
        %v1188 = vpop.f32.mrf.mxu0
        %v1189 = vadd.f32 0.0, %v1188
        %v1190 = vpop.f32.mrf.mxu0
        %v1191 = vpop.f32.mrf.mxu0
        %v1192 = vadd.f32 0.0, %v1191
        %v1193 = vpop.f32.mrf.mxu0
        %1194 = vmatprep.mubr.bf16.mxu0 0
        %1195 = vmatmul.mubr.bf16.gmra.mxu0 %v769
        %v1196 = vpop.f32.mrf.mxu0
        %v1197 = vadd.f32 0.0, %v1196
        %v1198 = vpop.f32.mrf.mxu0
        %v1199 = vpop.f32.mrf.mxu0
        %v1200 = vadd.f32 0.0, %v1199
        %v1201 = vpop.f32.mrf.mxu0
        %1202 = vmatprep.mubr.bf16.mxu0 0
        %1203 = vmatmul.mubr.bf16.gmra.mxu0 %v772
        %v1204 = vpop.f32.mrf.mxu0
        %v1205 = vadd.f32 0.0, %v1204
        %v1206 = vpop.f32.mrf.mxu0
        %v1207 = vpop.f32.mrf.mxu0
        %v1208 = vadd.f32 0.0, %v1207
        %v1209 = vpop.f32.mrf.mxu0
        %1210 = vmatprep.mubr.bf16.mxu0 0
        %1211 = vmatmul.mubr.bf16.gmra.mxu0 %v775
        %v1212 = vpop.f32.mrf.mxu0
        %v1213 = vadd.f32 0.0, %v1212
        %v1214 = vpop.f32.mrf.mxu0
        %v1215 = vpop.f32.mrf.mxu0
        %v1216 = vadd.f32 0.0, %v1215
        %v1217 = vpop.f32.mrf.mxu0
        %1218 = vmatprep.mubr.bf16.mxu0 0
        %1219 = vmatmul.mubr.bf16.gmra.mxu0 %v778
        %v1220 = vpop.f32.mrf.mxu0
        %v1221 = vadd.f32 0.0, %v1220
        %v1222 = vpop.f32.mrf.mxu0
        %v1223 = vpop.f32.mrf.mxu0
        %v1224 = vadd.f32 0.0, %v1223
        %v1225 = vpop.f32.mrf.mxu0
        %1226 = vmatprep.mubr.bf16.mxu0 0
        %1227 = vmatmul.mubr.bf16.gmra.mxu0 %v781
        %v1228 = vpop.f32.mrf.mxu0
        %v1229 = vadd.f32 0.0, %v1228
        %v1230 = vpop.f32.mrf.mxu0
        %v1231 = vpop.f32.mrf.mxu0
        %v1232 = vadd.f32 0.0, %v1231
        %v1233 = vpop.f32.mrf.mxu0
        %1234 = vmatprep.mubr.bf16.mxu0 0
        %1235 = vmatmul.mubr.bf16.gmra.mxu0 %v784
        %v1236 = vpop.f32.mrf.mxu0
        %v1237 = vadd.f32 0.0, %v1236
        %v1238 = vpop.f32.mrf.mxu0
        %v1239 = vpop.f32.mrf.mxu0
        %v1240 = vadd.f32 0.0, %v1239
        %v1241 = vpop.f32.mrf.mxu0
        %1242 = vmatprep.mubr.bf16.mxu0 0
        %1243 = vmatmul.mubr.bf16.gmra.mxu0 %v787
        %v1244 = vpop.f32.mrf.mxu0
        %v1245 = vadd.f32 0.0, %v1244
        %v1246 = vpop.f32.mrf.mxu0
        %v1247 = vpop.f32.mrf.mxu0
        %v1248 = vadd.f32 0.0, %v1247
        %v1249 = vpop.f32.mrf.mxu0
        %1250 = vmatprep.mubr.bf16.mxu0 0
        %1251 = vmatmul.mubr.bf16.gmra.mxu0 %v790
        %v1252 = vpop.f32.mrf.mxu0
        %v1253 = vadd.f32 0.0, %v1252
        %v1254 = vpop.f32.mrf.mxu0
        %v1255 = vpop.f32.mrf.mxu0
        %v1256 = vadd.f32 0.0, %v1255
        %v1257 = vpop.f32.mrf.mxu0
        %1258 = vmatprep.mubr.bf16.mxu0 0
        %1259 = vmatmul.mubr.bf16.gmra.mxu0 %v793
        %v1260 = vpop.f32.mrf.mxu0
        %v1261 = vadd.f32 0.0, %v1260
        %v1262 = vpop.f32.mrf.mxu0
        %v1263 = vpop.f32.mrf.mxu0
        %v1264 = vadd.f32 0.0, %v1263
        %v1265 = vpop.f32.mrf.mxu0
        %1266 = vmatprep.mubr.bf16.mxu0 0
        %1267 = vmatmul.mubr.bf16.gmra.mxu0 %v796
        %v1268 = vpop.f32.mrf.mxu0
        %v1269 = vadd.f32 0.0, %v1268
        %v1270 = vpop.f32.mrf.mxu0
        %v1271 = vpop.f32.mrf.mxu0
        %v1272 = vadd.f32 0.0, %v1271
        %v1273 = vpop.f32.mrf.mxu0
        %1274 = vmatprep.mubr.bf16.mxu0 0
        %1275 = vmatmul.mubr.bf16.gmra.mxu0 %v799
        %v1276 = vpop.f32.mrf.mxu0
        %v1277 = vadd.f32 0.0, %v1276
        %v1278 = vpop.f32.mrf.mxu0
        %v1279 = vpop.f32.mrf.mxu0
        %v1280 = vadd.f32 0.0, %v1279
        %v1281 = vpop.f32.mrf.mxu0
        %1282 = vmatprep.mubr.bf16.mxu0 0
        %1283 = vmatmul.mubr.bf16.gmra.mxu0 %v802
        %v1284 = vpop.f32.mrf.mxu0
        %v1285 = vadd.f32 0.0, %v1284
        %v1286 = vpop.f32.mrf.mxu0
        %v1287 = vpop.f32.mrf.mxu0
        %v1288 = vadd.f32 0.0, %v1287
        %v1289 = vpop.f32.mrf.mxu0
        %1290 = vmatprep.mubr.bf16.mxu0 0
        %1291 = vmatmul.mubr.bf16.gmra.mxu0 %v805
        %v1292 = vpop.f32.mrf.mxu0
        %v1293 = vadd.f32 0.0, %v1292
        %v1294 = vpop.f32.mrf.mxu0
        %v1295 = vpop.f32.mrf.mxu0
        %v1296 = vadd.f32 0.0, %v1295
        %v1297 = vpop.f32.mrf.mxu0
        %1298 = vmatprep.mubr.bf16.mxu0 0
        %1299 = vmatmul.mubr.bf16.gmra.mxu0 %v808
        %v1300 = vpop.f32.mrf.mxu0
        %v1301 = vadd.f32 0.0, %v1300
        %v1302 = vpop.f32.mrf.mxu0
        %v1303 = vpop.f32.mrf.mxu0
        %v1304 = vadd.f32 0.0, %v1303
        %v1305 = vpop.f32.mrf.mxu0
        %1306 = vmatprep.mubr.bf16.mxu0 0
        %1307 = vmatmul.mubr.bf16.gmra.mxu0 %v811
        %v1308 = vpop.f32.mrf.mxu0
        %v1309 = vadd.f32 0.0, %v1308
        %v1310 = vpop.f32.mrf.mxu0
        %v1311 = vpop.f32.mrf.mxu0
        %v1312 = vadd.f32 0.0, %v1311
        %v1313 = vpop.f32.mrf.mxu0
        %1314 = vmatprep.mubr.bf16.mxu0 0
        %1315 = vmatmul.mubr.bf16.gmra.mxu0 %v814
        %v1316 = vpop.f32.mrf.mxu0
        %v1317 = vadd.f32 0.0, %v1316
        %v1318 = vpop.f32.mrf.mxu0
        %v1319 = vpop.f32.mrf.mxu0
        %v1320 = vadd.f32 0.0, %v1319
        %v1321 = vpop.f32.mrf.mxu0
        %1322 = vmatprep.mubr.bf16.mxu0 0
        %1323 = vmatmul.mubr.bf16.gmra.mxu0 %v817
        %v1324 = vpop.f32.mrf.mxu0
        %v1325 = vadd.f32 0.0, %v1324
        %v1326 = vpop.f32.mrf.mxu0
        %v1327 = vpop.f32.mrf.mxu0
        %v1328 = vadd.f32 0.0, %v1327
        %v1329 = vpop.f32.mrf.mxu0
        %1330 = vmatprep.mubr.bf16.mxu0 0
        %1331 = vmatmul.mubr.bf16.gmra.mxu0 %v820
        %v1332 = vpop.f32.mrf.mxu0
        %v1333 = vadd.f32 0.0, %v1332
        %v1334 = vpop.f32.mrf.mxu0
        %v1335 = vpop.f32.mrf.mxu0
        %v1336 = vadd.f32 0.0, %v1335
        %v1337 = vpop.f32.mrf.mxu0
        %1338 = vmatprep.mubr.bf16.mxu0 0
        %1339 = vmatmul.mubr.bf16.gmra.mxu0 %v823
        %v1340 = vpop.f32.mrf.mxu0
        %v1341 = vadd.f32 0.0, %v1340
        %v1342 = vpop.f32.mrf.mxu0
        %v1343 = vpop.f32.mrf.mxu0
        %v1344 = vadd.f32 0.0, %v1343
        %v1345 = vpop.f32.mrf.mxu0
        %1346 = vmatprep.mubr.bf16.mxu0 0
        %1347 = vmatmul.mubr.bf16.gmra.mxu0 %v826
        %v1348 = vpop.f32.mrf.mxu0
        %v1349 = vadd.f32 0.0, %v1348
        %v1350 = vpop.f32.mrf.mxu0
        %v1351 = vpop.f32.mrf.mxu0
        %v1352 = vadd.f32 0.0, %v1351
        %v1353 = vpop.f32.mrf.mxu0
        %1354 = vmatprep.mubr.bf16.mxu0 0
        %1355 = vmatmul.mubr.bf16.gmra.mxu0 %v829
        %v1356 = vpop.f32.mrf.mxu0
        %v1357 = vadd.f32 0.0, %v1356
        %v1358 = vpop.f32.mrf.mxu0
        %v1359 = vpop.f32.mrf.mxu0
        %v1360 = vadd.f32 0.0, %v1359
        %v1361 = vpop.f32.mrf.mxu0
        %1362 = vmatprep.mubr.bf16.mxu0 0
        %1363 = vmatmul.mubr.bf16.gmra.mxu0 %v832
        %v1364 = vpop.f32.mrf.mxu0
        %v1365 = vadd.f32 0.0, %v1364
        %v1366 = vpop.f32.mrf.mxu0
        %v1367 = vpop.f32.mrf.mxu0
        %v1368 = vadd.f32 0.0, %v1367
        %v1369 = vpop.f32.mrf.mxu0
        %1370 = vmatprep.mubr.bf16.mxu0 0
        %1371 = vmatmul.mubr.bf16.gmra.mxu0 %v835
        %v1372 = vpop.f32.mrf.mxu0
        %v1373 = vadd.f32 0.0, %v1372
        %v1374 = vpop.f32.mrf.mxu0
        %v1375 = vpop.f32.mrf.mxu0
        %v1376 = vadd.f32 0.0, %v1375
        %v1377 = vpop.f32.mrf.mxu0
        %1378 = vmatprep.mubr.bf16.mxu0 0
        %1379 = vmatmul.mubr.bf16.gmra.mxu0 %v838
        %v1380 = vpop.f32.mrf.mxu0
        %v1381 = vadd.f32 0.0, %v1380
        %v1382 = vpop.f32.mrf.mxu0
        %v1383 = vpop.f32.mrf.mxu0
        %v1384 = vadd.f32 0.0, %v1383
        %v1385 = vpop.f32.mrf.mxu0
        %1386 = vmatprep.mubr.bf16.mxu0 0
        %1387 = vmatmul.mubr.bf16.gmra.mxu0 %v841
        %v1388 = vpop.f32.mrf.mxu0
        %v1389 = vadd.f32 0.0, %v1388
        %v1390 = vpop.f32.mrf.mxu0
        %v1391 = vpop.f32.mrf.mxu0
        %v1392 = vadd.f32 0.0, %v1391
        %v1393 = vpop.f32.mrf.mxu0
        %1394 = vdwg.mxu0
        %1395 = vadd.xlane.f32.xlu0 %v885
        %v1396 = vpop.xlane.xlu0 %1395
        %1397 = vadd.xlane.f32.xlu0 %v888
        %v1398 = vpop.xlane.xlu0 %1397
        %1399 = vadd.xlane.f32.xlu0 %v893
        %v1400 = vpop.xlane.xlu0 %1399
        %1401 = vadd.xlane.f32.xlu0 %v896
        %v1402 = vpop.xlane.xlu0 %1401
        %1403 = vadd.xlane.f32.xlu0 %v901
        %v1404 = vpop.xlane.xlu0 %1403
        %1405 = vadd.xlane.f32.xlu0 %v904
        %v1406 = vpop.xlane.xlu0 %1405
        %1407 = vadd.xlane.f32.xlu0 %v909
        %v1408 = vpop.xlane.xlu0 %1407
        %1409 = vadd.xlane.f32.xlu0 %v912
        %v1410 = vpop.xlane.xlu0 %1409
        %1411 = vadd.xlane.f32.xlu0 %v917
        %v1412 = vpop.xlane.xlu0 %1411
        %1413 = vadd.xlane.f32.xlu0 %v920
        %v1414 = vpop.xlane.xlu0 %1413
        %1415 = vadd.xlane.f32.xlu0 %v925
        %v1416 = vpop.xlane.xlu0 %1415
        %1417 = vadd.xlane.f32.xlu0 %v928
        %v1418 = vpop.xlane.xlu0 %1417
        %1419 = vadd.xlane.f32.xlu0 %v933
        %v1420 = vpop.xlane.xlu0 %1419
        %1421 = vadd.xlane.f32.xlu0 %v936
        %v1422 = vpop.xlane.xlu0 %1421
        %1423 = vadd.xlane.f32.xlu0 %v941
        %v1424 = vpop.xlane.xlu0 %1423
        %1425 = vadd.xlane.f32.xlu0 %v944
        %v1426 = vpop.xlane.xlu0 %1425
        %1427 = vadd.xlane.f32.xlu0 %v949
        %v1428 = vpop.xlane.xlu0 %1427
        %1429 = vadd.xlane.f32.xlu0 %v952
        %v1430 = vpop.xlane.xlu0 %1429
        %1431 = vadd.xlane.f32.xlu0 %v957
        %v1432 = vpop.xlane.xlu0 %1431
        %1433 = vadd.xlane.f32.xlu0 %v960
        %v1434 = vpop.xlane.xlu0 %1433
        %1435 = vadd.xlane.f32.xlu0 %v965
        %v1436 = vpop.xlane.xlu0 %1435
        %1437 = vadd.xlane.f32.xlu0 %v968
        %v1438 = vpop.xlane.xlu0 %1437
        %1439 = vadd.xlane.f32.xlu0 %v973
        %v1440 = vpop.xlane.xlu0 %1439
        %1441 = vadd.xlane.f32.xlu0 %v976
        %v1442 = vpop.xlane.xlu0 %1441
        %1443 = vadd.xlane.f32.xlu0 %v981
        %v1444 = vpop.xlane.xlu0 %1443
        %1445 = vadd.xlane.f32.xlu0 %v984
        %v1446 = vpop.xlane.xlu0 %1445
        %1447 = vadd.xlane.f32.xlu0 %v989
        %v1448 = vpop.xlane.xlu0 %1447
        %1449 = vadd.xlane.f32.xlu0 %v992
        %v1450 = vpop.xlane.xlu0 %1449
        %1451 = vadd.xlane.f32.xlu0 %v997
        %v1452 = vpop.xlane.xlu0 %1451
        %1453 = vadd.xlane.f32.xlu0 %v1000
        %v1454 = vpop.xlane.xlu0 %1453
        %1455 = vadd.xlane.f32.xlu0 %v1005
        %v1456 = vpop.xlane.xlu0 %1455
        %1457 = vadd.xlane.f32.xlu0 %v1008
        %v1458 = vpop.xlane.xlu0 %1457
        %1459 = vadd.xlane.f32.xlu0 %v1013
        %v1460 = vpop.xlane.xlu0 %1459
        %1461 = vadd.xlane.f32.xlu0 %v1016
        %v1462 = vpop.xlane.xlu0 %1461
        %1463 = vadd.xlane.f32.xlu0 %v1021
        %v1464 = vpop.xlane.xlu0 %1463
        %1465 = vadd.xlane.f32.xlu0 %v1024
        %v1466 = vpop.xlane.xlu0 %1465
        %1467 = vadd.xlane.f32.xlu0 %v1029
        %v1468 = vpop.xlane.xlu0 %1467
        %1469 = vadd.xlane.f32.xlu0 %v1032
        %v1470 = vpop.xlane.xlu0 %1469
        %1471 = vadd.xlane.f32.xlu0 %v1037
        %v1472 = vpop.xlane.xlu0 %1471
        %1473 = vadd.xlane.f32.xlu0 %v1040
        %v1474 = vpop.xlane.xlu0 %1473
        %1475 = vadd.xlane.f32.xlu0 %v1045
        %v1476 = vpop.xlane.xlu0 %1475
        %1477 = vadd.xlane.f32.xlu0 %v1048
        %v1478 = vpop.xlane.xlu0 %1477
        %1479 = vadd.xlane.f32.xlu0 %v1053
        %v1480 = vpop.xlane.xlu0 %1479
        %1481 = vadd.xlane.f32.xlu0 %v1056
        %v1482 = vpop.xlane.xlu0 %1481
        %1483 = vadd.xlane.f32.xlu0 %v1061
        %v1484 = vpop.xlane.xlu0 %1483
        %1485 = vadd.xlane.f32.xlu0 %v1064
        %v1486 = vpop.xlane.xlu0 %1485
        %1487 = vadd.xlane.f32.xlu0 %v1069
        %v1488 = vpop.xlane.xlu0 %1487
        %1489 = vadd.xlane.f32.xlu0 %v1072
        %v1490 = vpop.xlane.xlu0 %1489
        %1491 = vadd.xlane.f32.xlu0 %v1077
        %v1492 = vpop.xlane.xlu0 %1491
        %1493 = vadd.xlane.f32.xlu0 %v1080
        %v1494 = vpop.xlane.xlu0 %1493
        %1495 = vadd.xlane.f32.xlu0 %v1085
        %v1496 = vpop.xlane.xlu0 %1495
        %1497 = vadd.xlane.f32.xlu0 %v1088
        %v1498 = vpop.xlane.xlu0 %1497
        %1499 = vadd.xlane.f32.xlu0 %v1093
        %v1500 = vpop.xlane.xlu0 %1499
        %1501 = vadd.xlane.f32.xlu0 %v1096
        %v1502 = vpop.xlane.xlu0 %1501
        %1503 = vadd.xlane.f32.xlu0 %v1101
        %v1504 = vpop.xlane.xlu0 %1503
        %1505 = vadd.xlane.f32.xlu0 %v1104
        %v1506 = vpop.xlane.xlu0 %1505
        %1507 = vadd.xlane.f32.xlu0 %v1109
        %v1508 = vpop.xlane.xlu0 %1507
        %1509 = vadd.xlane.f32.xlu0 %v1112
        %v1510 = vpop.xlane.xlu0 %1509
        %1511 = vadd.xlane.f32.xlu0 %v1117
        %v1512 = vpop.xlane.xlu0 %1511
        %1513 = vadd.xlane.f32.xlu0 %v1120
        %v1514 = vpop.xlane.xlu0 %1513
        %1515 = vadd.xlane.f32.xlu0 %v1125
        %v1516 = vpop.xlane.xlu0 %1515
        %1517 = vadd.xlane.f32.xlu0 %v1128
        %v1518 = vpop.xlane.xlu0 %1517
        %1519 = vadd.xlane.f32.xlu0 %v1133
        %v1520 = vpop.xlane.xlu0 %1519
        %1521 = vadd.xlane.f32.xlu0 %v1136
        %v1522 = vpop.xlane.xlu0 %1521
        %1523 = vadd.xlane.f32.xlu0 %v1141
        %v1524 = vpop.xlane.xlu0 %1523
        %1525 = vadd.xlane.f32.xlu0 %v1144
        %v1526 = vpop.xlane.xlu0 %1525
        %1527 = vadd.xlane.f32.xlu0 %v1149
        %v1528 = vpop.xlane.xlu0 %1527
        %1529 = vadd.xlane.f32.xlu0 %v1152
        %v1530 = vpop.xlane.xlu0 %1529
        %1531 = vadd.xlane.f32.xlu0 %v1157
        %v1532 = vpop.xlane.xlu0 %1531
        %1533 = vadd.xlane.f32.xlu0 %v1160
        %v1534 = vpop.xlane.xlu0 %1533
        %1535 = vadd.xlane.f32.xlu0 %v1165
        %v1536 = vpop.xlane.xlu0 %1535
        %1537 = vadd.xlane.f32.xlu0 %v1168
        %v1538 = vpop.xlane.xlu0 %1537
        %1539 = vadd.xlane.f32.xlu0 %v1173
        %v1540 = vpop.xlane.xlu0 %1539
        %1541 = vadd.xlane.f32.xlu0 %v1176
        %v1542 = vpop.xlane.xlu0 %1541
        %1543 = vadd.xlane.f32.xlu0 %v1181
        %v1544 = vpop.xlane.xlu0 %1543
        %1545 = vadd.xlane.f32.xlu0 %v1184
        %v1546 = vpop.xlane.xlu0 %1545
        %1547 = vadd.xlane.f32.xlu0 %v1189
        %v1548 = vpop.xlane.xlu0 %1547
        %1549 = vadd.xlane.f32.xlu0 %v1192
        %v1550 = vpop.xlane.xlu0 %1549
        %1551 = vadd.xlane.f32.xlu0 %v1197
        %v1552 = vpop.xlane.xlu0 %1551
        %1553 = vadd.xlane.f32.xlu0 %v1200
        %v1554 = vpop.xlane.xlu0 %1553
        %1555 = vadd.xlane.f32.xlu0 %v1205
        %v1556 = vpop.xlane.xlu0 %1555
        %1557 = vadd.xlane.f32.xlu0 %v1208
        %v1558 = vpop.xlane.xlu0 %1557
        %1559 = vadd.xlane.f32.xlu0 %v1213
        %v1560 = vpop.xlane.xlu0 %1559
        %1561 = vadd.xlane.f32.xlu0 %v1216
        %v1562 = vpop.xlane.xlu0 %1561
        %1563 = vadd.xlane.f32.xlu0 %v1221
        %v1564 = vpop.xlane.xlu0 %1563
        %1565 = vadd.xlane.f32.xlu0 %v1224
        %v1566 = vpop.xlane.xlu0 %1565
        %1567 = vadd.xlane.f32.xlu0 %v1229
        %v1568 = vpop.xlane.xlu0 %1567
        %1569 = vadd.xlane.f32.xlu0 %v1232
        %v1570 = vpop.xlane.xlu0 %1569
        %1571 = vadd.xlane.f32.xlu0 %v1237
        %v1572 = vpop.xlane.xlu0 %1571
        %1573 = vadd.xlane.f32.xlu0 %v1240
        %v1574 = vpop.xlane.xlu0 %1573
        %1575 = vadd.xlane.f32.xlu0 %v1245
        %v1576 = vpop.xlane.xlu0 %1575
        %1577 = vadd.xlane.f32.xlu0 %v1248
        %v1578 = vpop.xlane.xlu0 %1577
        %1579 = vadd.xlane.f32.xlu0 %v1253
        %v1580 = vpop.xlane.xlu0 %1579
        %1581 = vadd.xlane.f32.xlu0 %v1256
        %v1582 = vpop.xlane.xlu0 %1581
        %1583 = vadd.xlane.f32.xlu0 %v1261
        %v1584 = vpop.xlane.xlu0 %1583
        %1585 = vadd.xlane.f32.xlu0 %v1264
        %v1586 = vpop.xlane.xlu0 %1585
        %1587 = vadd.xlane.f32.xlu0 %v1269
        %v1588 = vpop.xlane.xlu0 %1587
        %1589 = vadd.xlane.f32.xlu0 %v1272
        %v1590 = vpop.xlane.xlu0 %1589
        %1591 = vadd.xlane.f32.xlu0 %v1277
        %v1592 = vpop.xlane.xlu0 %1591
        %1593 = vadd.xlane.f32.xlu0 %v1280
        %v1594 = vpop.xlane.xlu0 %1593
        %1595 = vadd.xlane.f32.xlu0 %v1285
        %v1596 = vpop.xlane.xlu0 %1595
        %1597 = vadd.xlane.f32.xlu0 %v1288
        %v1598 = vpop.xlane.xlu0 %1597
        %1599 = vadd.xlane.f32.xlu0 %v1293
        %v1600 = vpop.xlane.xlu0 %1599
        %1601 = vadd.xlane.f32.xlu0 %v1296
        %v1602 = vpop.xlane.xlu0 %1601
        %1603 = vadd.xlane.f32.xlu0 %v1301
        %v1604 = vpop.xlane.xlu0 %1603
        %1605 = vadd.xlane.f32.xlu0 %v1304
        %v1606 = vpop.xlane.xlu0 %1605
        %1607 = vadd.xlane.f32.xlu0 %v1309
        %v1608 = vpop.xlane.xlu0 %1607
        %1609 = vadd.xlane.f32.xlu0 %v1312
        %v1610 = vpop.xlane.xlu0 %1609
        %1611 = vadd.xlane.f32.xlu0 %v1317
        %v1612 = vpop.xlane.xlu0 %1611
        %1613 = vadd.xlane.f32.xlu0 %v1320
        %v1614 = vpop.xlane.xlu0 %1613
        %1615 = vadd.xlane.f32.xlu0 %v1325
        %v1616 = vpop.xlane.xlu0 %1615
        %1617 = vadd.xlane.f32.xlu0 %v1328
        %v1618 = vpop.xlane.xlu0 %1617
        %1619 = vadd.xlane.f32.xlu0 %v1333
        %v1620 = vpop.xlane.xlu0 %1619
        %1621 = vadd.xlane.f32.xlu0 %v1336
        %v1622 = vpop.xlane.xlu0 %1621
        %1623 = vadd.xlane.f32.xlu0 %v1341
        %v1624 = vpop.xlane.xlu0 %1623
        %1625 = vadd.xlane.f32.xlu0 %v1344
        %v1626 = vpop.xlane.xlu0 %1625
        %1627 = vadd.xlane.f32.xlu0 %v1349
        %v1628 = vpop.xlane.xlu0 %1627
        %1629 = vadd.xlane.f32.xlu0 %v1352
        %v1630 = vpop.xlane.xlu0 %1629
        %1631 = vadd.xlane.f32.xlu0 %v1357
        %v1632 = vpop.xlane.xlu0 %1631
        %1633 = vadd.xlane.f32.xlu0 %v1360
        %v1634 = vpop.xlane.xlu0 %1633
        %1635 = vadd.xlane.f32.xlu0 %v1365
        %v1636 = vpop.xlane.xlu0 %1635
        %1637 = vadd.xlane.f32.xlu0 %v1368
        %v1638 = vpop.xlane.xlu0 %1637
        %1639 = vadd.xlane.f32.xlu0 %v1373
        %v1640 = vpop.xlane.xlu0 %1639
        %1641 = vadd.xlane.f32.xlu0 %v1376
        %v1642 = vpop.xlane.xlu0 %1641
        %1643 = vadd.xlane.f32.xlu0 %v1381
        %v1644 = vpop.xlane.xlu0 %1643
        %1645 = vadd.xlane.f32.xlu0 %v1384
        %v1646 = vpop.xlane.xlu0 %1645
        %1647 = vadd.xlane.f32.xlu0 %v1389
        %v1648 = vpop.xlane.xlu0 %1647
        %1649 = vadd.xlane.f32.xlu0 %v1392
        %v1650 = vpop.xlane.xlu0 %1649
        %v1651 = vmul.f32 %v1396, 0.010416667
        %v1652 = vmul.f32 %v1398, 0.010416667
        %v1653 = vmul.f32 %v1400, 0.010416667
        %v1654 = vmul.f32 %v1402, 0.010416667
        %v1655 = vmul.f32 %v1404, 0.010416667
        %v1656 = vmul.f32 %v1406, 0.010416667
        %v1657 = vmul.f32 %v1408, 0.010416667
        %v1658 = vmul.f32 %v1410, 0.010416667
        %v1659 = vmul.f32 %v1412, 0.010416667
        %v1660 = vmul.f32 %v1414, 0.010416667
        %v1661 = vmul.f32 %v1416, 0.010416667
        %v1662 = vmul.f32 %v1418, 0.010416667
        %v1663 = vmul.f32 %v1420, 0.010416667
        %v1664 = vmul.f32 %v1422, 0.010416667
        %v1665 = vmul.f32 %v1424, 0.010416667
        %v1666 = vmul.f32 %v1426, 0.010416667
        %v1667 = vmul.f32 %v1428, 0.010416667
        %v1668 = vmul.f32 %v1430, 0.010416667
        %v1669 = vmul.f32 %v1432, 0.010416667
        %v1670 = vmul.f32 %v1434, 0.010416667
        %v1671 = vmul.f32 %v1436, 0.010416667
        %v1672 = vmul.f32 %v1438, 0.010416667
        %v1673 = vmul.f32 %v1440, 0.010416667
        %v1674 = vmul.f32 %v1442, 0.010416667
        %v1675 = vmul.f32 %v1444, 0.010416667
        %v1676 = vmul.f32 %v1446, 0.010416667
        %v1677 = vmul.f32 %v1448, 0.010416667
        %v1678 = vmul.f32 %v1450, 0.010416667
        %v1679 = vmul.f32 %v1452, 0.010416667
        %v1680 = vmul.f32 %v1454, 0.010416667
        %v1681 = vmul.f32 %v1456, 0.010416667
        %v1682 = vmul.f32 %v1458, 0.010416667
        %v1683 = vmul.f32 %v1460, 0.010416667
        %v1684 = vmul.f32 %v1462, 0.010416667
        %v1685 = vmul.f32 %v1464, 0.010416667
        %v1686 = vmul.f32 %v1466, 0.010416667
        %v1687 = vmul.f32 %v1468, 0.010416667
        %v1688 = vmul.f32 %v1470, 0.010416667
        %v1689 = vmul.f32 %v1472, 0.010416667
        %v1690 = vmul.f32 %v1474, 0.010416667
        %v1691 = vmul.f32 %v1476, 0.010416667
        %v1692 = vmul.f32 %v1478, 0.010416667
        %v1693 = vmul.f32 %v1480, 0.010416667
        %v1694 = vmul.f32 %v1482, 0.010416667
        %v1695 = vmul.f32 %v1484, 0.010416667
        %v1696 = vmul.f32 %v1486, 0.010416667
        %v1697 = vmul.f32 %v1488, 0.010416667
        %v1698 = vmul.f32 %v1490, 0.010416667
        %v1699 = vmul.f32 %v1492, 0.010416667
        %v1700 = vmul.f32 %v1494, 0.010416667
        %v1701 = vmul.f32 %v1496, 0.010416667
        %v1702 = vmul.f32 %v1498, 0.010416667
        %v1703 = vmul.f32 %v1500, 0.010416667
        %v1704 = vmul.f32 %v1502, 0.010416667
        %v1705 = vmul.f32 %v1504, 0.010416667
        %v1706 = vmul.f32 %v1506, 0.010416667
        %v1707 = vmul.f32 %v1508, 0.010416667
        %v1708 = vmul.f32 %v1510, 0.010416667
        %v1709 = vmul.f32 %v1512, 0.010416667
        %v1710 = vmul.f32 %v1514, 0.010416667
        %v1711 = vmul.f32 %v1516, 0.010416667
        %v1712 = vmul.f32 %v1518, 0.010416667
        %v1713 = vmul.f32 %v1520, 0.010416667
        %v1714 = vmul.f32 %v1522, 0.010416667
        %v1715 = vmul.f32 %v1524, 0.010416667
        %v1716 = vmul.f32 %v1526, 0.010416667
        %v1717 = vmul.f32 %v1528, 0.010416667
        %v1718 = vmul.f32 %v1530, 0.010416667
        %v1719 = vmul.f32 %v1532, 0.010416667
        %v1720 = vmul.f32 %v1534, 0.010416667
        %v1721 = vmul.f32 %v1536, 0.010416667
        %v1722 = vmul.f32 %v1538, 0.010416667
        %v1723 = vmul.f32 %v1540, 0.010416667
        %v1724 = vmul.f32 %v1542, 0.010416667
        %v1725 = vmul.f32 %v1544, 0.010416667
        %v1726 = vmul.f32 %v1546, 0.010416667
        %v1727 = vmul.f32 %v1548, 0.010416667
        %v1728 = vmul.f32 %v1550, 0.010416667
        %v1729 = vmul.f32 %v1552, 0.010416667
        %v1730 = vmul.f32 %v1554, 0.010416667
        %v1731 = vmul.f32 %v1556, 0.010416667
        %v1732 = vmul.f32 %v1558, 0.010416667
        %v1733 = vmul.f32 %v1560, 0.010416667
        %v1734 = vmul.f32 %v1562, 0.010416667
        %v1735 = vmul.f32 %v1564, 0.010416667
        %v1736 = vmul.f32 %v1566, 0.010416667
        %v1737 = vmul.f32 %v1568, 0.010416667
        %v1738 = vmul.f32 %v1570, 0.010416667
        %v1739 = vmul.f32 %v1572, 0.010416667
        %v1740 = vmul.f32 %v1574, 0.010416667
        %v1741 = vmul.f32 %v1576, 0.010416667
        %v1742 = vmul.f32 %v1578, 0.010416667
        %v1743 = vmul.f32 %v1580, 0.010416667
        %v1744 = vmul.f32 %v1582, 0.010416667
        %v1745 = vmul.f32 %v1584, 0.010416667
        %v1746 = vmul.f32 %v1586, 0.010416667
        %v1747 = vmul.f32 %v1588, 0.010416667
        %v1748 = vmul.f32 %v1590, 0.010416667
        %v1749 = vmul.f32 %v1592, 0.010416667
        %v1750 = vmul.f32 %v1594, 0.010416667
        %v1751 = vmul.f32 %v1596, 0.010416667
        %v1752 = vmul.f32 %v1598, 0.010416667
        %v1753 = vmul.f32 %v1600, 0.010416667
        %v1754 = vmul.f32 %v1602, 0.010416667
        %v1755 = vmul.f32 %v1604, 0.010416667
        %v1756 = vmul.f32 %v1606, 0.010416667
        %v1757 = vmul.f32 %v1608, 0.010416667
        %v1758 = vmul.f32 %v1610, 0.010416667
        %v1759 = vmul.f32 %v1612, 0.010416667
        %v1760 = vmul.f32 %v1614, 0.010416667
        %v1761 = vmul.f32 %v1616, 0.010416667
        %v1762 = vmul.f32 %v1618, 0.010416667
        %v1763 = vmul.f32 %v1620, 0.010416667
        %v1764 = vmul.f32 %v1622, 0.010416667
        %v1765 = vmul.f32 %v1624, 0.010416667
        %v1766 = vmul.f32 %v1626, 0.010416667
        %v1767 = vmul.f32 %v1628, 0.010416667
        %v1768 = vmul.f32 %v1630, 0.010416667
        %v1769 = vmul.f32 %v1632, 0.010416667
        %v1770 = vmul.f32 %v1634, 0.010416667
        %v1771 = vmul.f32 %v1636, 0.010416667
        %v1772 = vmul.f32 %v1638, 0.010416667
        %v1773 = vmul.f32 %v1640, 0.010416667
        %v1774 = vmul.f32 %v1642, 0.010416667
        %v1775 = vmul.f32 %v1644, 0.010416667
        %v1776 = vmul.f32 %v1646, 0.010416667
        %v1777 = vmul.f32 %v1648, 0.010416667
        %v1778 = vmul.f32 %v1650, 0.010416667
        %v1779 = vsub.f32 %v885, %v1651
        %v1780 = vsub.f32 %v888, %v1652
        %v1781 = vsub.f32 %v893, %v1653
        %v1782 = vsub.f32 %v896, %v1654
        %v1783 = vsub.f32 %v901, %v1655
        %v1784 = vsub.f32 %v904, %v1656
        %v1785 = vsub.f32 %v909, %v1657
        %v1786 = vsub.f32 %v912, %v1658
        %v1787 = vsub.f32 %v917, %v1659
        %v1788 = vsub.f32 %v920, %v1660
        %v1789 = vsub.f32 %v925, %v1661
        %v1790 = vsub.f32 %v928, %v1662
        %v1791 = vsub.f32 %v933, %v1663
        %v1792 = vsub.f32 %v936, %v1664
        %v1793 = vsub.f32 %v941, %v1665
        %v1794 = vsub.f32 %v944, %v1666
        %v1795 = vsub.f32 %v949, %v1667
        %v1796 = vsub.f32 %v952, %v1668
        %v1797 = vsub.f32 %v957, %v1669
        %v1798 = vsub.f32 %v960, %v1670
        %v1799 = vsub.f32 %v965, %v1671
        %v1800 = vsub.f32 %v968, %v1672
        %v1801 = vsub.f32 %v973, %v1673
        %v1802 = vsub.f32 %v976, %v1674
        %v1803 = vsub.f32 %v981, %v1675
        %v1804 = vsub.f32 %v984, %v1676
        %v1805 = vsub.f32 %v989, %v1677
        %v1806 = vsub.f32 %v992, %v1678
        %v1807 = vsub.f32 %v997, %v1679
        %v1808 = vsub.f32 %v1000, %v1680
        %v1809 = vsub.f32 %v1005, %v1681
        %v1810 = vsub.f32 %v1008, %v1682
        %v1811 = vsub.f32 %v1013, %v1683
        %v1812 = vsub.f32 %v1016, %v1684
        %v1813 = vsub.f32 %v1021, %v1685
        %v1814 = vsub.f32 %v1024, %v1686
        %v1815 = vsub.f32 %v1029, %v1687
        %v1816 = vsub.f32 %v1032, %v1688
        %v1817 = vsub.f32 %v1037, %v1689
        %v1818 = vsub.f32 %v1040, %v1690
        %v1819 = vsub.f32 %v1045, %v1691
        %v1820 = vsub.f32 %v1048, %v1692
        %v1821 = vsub.f32 %v1053, %v1693
        %v1822 = vsub.f32 %v1056, %v1694
        %v1823 = vsub.f32 %v1061, %v1695
        %v1824 = vsub.f32 %v1064, %v1696
        %v1825 = vsub.f32 %v1069, %v1697
        %v1826 = vsub.f32 %v1072, %v1698
        %v1827 = vsub.f32 %v1077, %v1699
        %v1828 = vsub.f32 %v1080, %v1700
        %v1829 = vsub.f32 %v1085, %v1701
        %v1830 = vsub.f32 %v1088, %v1702
        %v1831 = vsub.f32 %v1093, %v1703
        %v1832 = vsub.f32 %v1096, %v1704
        %v1833 = vsub.f32 %v1101, %v1705
        %v1834 = vsub.f32 %v1104, %v1706
        %v1835 = vsub.f32 %v1109, %v1707
        %v1836 = vsub.f32 %v1112, %v1708
        %v1837 = vsub.f32 %v1117, %v1709
        %v1838 = vsub.f32 %v1120, %v1710
        %v1839 = vsub.f32 %v1125, %v1711
        %v1840 = vsub.f32 %v1128, %v1712
        %v1841 = vsub.f32 %v1133, %v1713
        %v1842 = vsub.f32 %v1136, %v1714
        %v1843 = vsub.f32 %v1141, %v1715
        %v1844 = vsub.f32 %v1144, %v1716
        %v1845 = vsub.f32 %v1149, %v1717
        %v1846 = vsub.f32 %v1152, %v1718
        %v1847 = vsub.f32 %v1157, %v1719
        %v1848 = vsub.f32 %v1160, %v1720
        %v1849 = vsub.f32 %v1165, %v1721
        %v1850 = vsub.f32 %v1168, %v1722
        %v1851 = vsub.f32 %v1173, %v1723
        %v1852 = vsub.f32 %v1176, %v1724
        %v1853 = vsub.f32 %v1181, %v1725
        %v1854 = vsub.f32 %v1184, %v1726
        %v1855 = vsub.f32 %v1189, %v1727
        %v1856 = vsub.f32 %v1192, %v1728
        %v1857 = vsub.f32 %v1197, %v1729
        %v1858 = vsub.f32 %v1200, %v1730
        %v1859 = vsub.f32 %v1205, %v1731
        %v1860 = vsub.f32 %v1208, %v1732
        %v1861 = vsub.f32 %v1213, %v1733
        %v1862 = vsub.f32 %v1216, %v1734
        %v1863 = vsub.f32 %v1221, %v1735
        %v1864 = vsub.f32 %v1224, %v1736
        %v1865 = vsub.f32 %v1229, %v1737
        %v1866 = vsub.f32 %v1232, %v1738
        %v1867 = vsub.f32 %v1237, %v1739
        %v1868 = vsub.f32 %v1240, %v1740
        %v1869 = vsub.f32 %v1245, %v1741
        %v1870 = vsub.f32 %v1248, %v1742
        %v1871 = vsub.f32 %v1253, %v1743
        %v1872 = vsub.f32 %v1256, %v1744
        %v1873 = vsub.f32 %v1261, %v1745
        %v1874 = vsub.f32 %v1264, %v1746
        %v1875 = vsub.f32 %v1269, %v1747
        %v1876 = vsub.f32 %v1272, %v1748
        %v1877 = vsub.f32 %v1277, %v1749
        %v1878 = vsub.f32 %v1280, %v1750
        %v1879 = vsub.f32 %v1285, %v1751
        %v1880 = vsub.f32 %v1288, %v1752
        %v1881 = vsub.f32 %v1293, %v1753
        %v1882 = vsub.f32 %v1296, %v1754
        %v1883 = vsub.f32 %v1301, %v1755
        %v1884 = vsub.f32 %v1304, %v1756
        %v1885 = vsub.f32 %v1309, %v1757
        %v1886 = vsub.f32 %v1312, %v1758
        %v1887 = vsub.f32 %v1317, %v1759
        %v1888 = vsub.f32 %v1320, %v1760
        %v1889 = vsub.f32 %v1325, %v1761
        %v1890 = vsub.f32 %v1328, %v1762
        %v1891 = vsub.f32 %v1333, %v1763
        %v1892 = vsub.f32 %v1336, %v1764
        %v1893 = vsub.f32 %v1341, %v1765
        %v1894 = vsub.f32 %v1344, %v1766
        %v1895 = vsub.f32 %v1349, %v1767
        %v1896 = vsub.f32 %v1352, %v1768
        %v1897 = vsub.f32 %v1357, %v1769
        %v1898 = vsub.f32 %v1360, %v1770
        %v1899 = vsub.f32 %v1365, %v1771
        %v1900 = vsub.f32 %v1368, %v1772
        %v1901 = vsub.f32 %v1373, %v1773
        %v1902 = vsub.f32 %v1376, %v1774
        %v1903 = vsub.f32 %v1381, %v1775
        %v1904 = vsub.f32 %v1384, %v1776
        %v1905 = vsub.f32 %v1389, %v1777
        %v1906 = vsub.f32 %v1392, %v1778
        %v1907 = vmax.f32 %v1779, 0.0
        %v1908 = vmax.f32 %v1780, 0.0
        %v1909 = vmax.f32 %v1781, 0.0
        %v1910 = vmax.f32 %v1782, 0.0
        %v1911 = vmax.f32 %v1783, 0.0
        %v1912 = vmax.f32 %v1784, 0.0
        %v1913 = vmax.f32 %v1785, 0.0
        %v1914 = vmax.f32 %v1786, 0.0
        %v1915 = vmax.f32 %v1787, 0.0
        %v1916 = vmax.f32 %v1788, 0.0
        %v1917 = vmax.f32 %v1789, 0.0
        %v1918 = vmax.f32 %v1790, 0.0
        %v1919 = vmax.f32 %v1791, 0.0
        %v1920 = vmax.f32 %v1792, 0.0
        %v1921 = vmax.f32 %v1793, 0.0
        %v1922 = vmax.f32 %v1794, 0.0
        %v1923 = vmax.f32 %v1795, 0.0
        %v1924 = vmax.f32 %v1796, 0.0
        %v1925 = vmax.f32 %v1797, 0.0
        %v1926 = vmax.f32 %v1798, 0.0
        %v1927 = vmax.f32 %v1799, 0.0
        %v1928 = vmax.f32 %v1800, 0.0
        %v1929 = vmax.f32 %v1801, 0.0
        %v1930 = vmax.f32 %v1802, 0.0
        %v1931 = vmax.f32 %v1803, 0.0
        %v1932 = vmax.f32 %v1804, 0.0
        %v1933 = vmax.f32 %v1805, 0.0
        %v1934 = vmax.f32 %v1806, 0.0
        %v1935 = vmax.f32 %v1807, 0.0
        %v1936 = vmax.f32 %v1808, 0.0
        %v1937 = vmax.f32 %v1809, 0.0
        %v1938 = vmax.f32 %v1810, 0.0
        %v1939 = vmax.f32 %v1811, 0.0
        %v1940 = vmax.f32 %v1812, 0.0
        %v1941 = vmax.f32 %v1813, 0.0
        %v1942 = vmax.f32 %v1814, 0.0
        %v1943 = vmax.f32 %v1815, 0.0
        %v1944 = vmax.f32 %v1816, 0.0
        %v1945 = vmax.f32 %v1817, 0.0
        %v1946 = vmax.f32 %v1818, 0.0
        %v1947 = vmax.f32 %v1819, 0.0
        %v1948 = vmax.f32 %v1820, 0.0
        %v1949 = vmax.f32 %v1821, 0.0
        %v1950 = vmax.f32 %v1822, 0.0
        %v1951 = vmax.f32 %v1823, 0.0
        %v1952 = vmax.f32 %v1824, 0.0
        %v1953 = vmax.f32 %v1825, 0.0
        %v1954 = vmax.f32 %v1826, 0.0
        %v1955 = vmax.f32 %v1827, 0.0
        %v1956 = vmax.f32 %v1828, 0.0
        %v1957 = vmax.f32 %v1829, 0.0
        %v1958 = vmax.f32 %v1830, 0.0
        %v1959 = vmax.f32 %v1831, 0.0
        %v1960 = vmax.f32 %v1832, 0.0
        %v1961 = vmax.f32 %v1833, 0.0
        %v1962 = vmax.f32 %v1834, 0.0
        %v1963 = vmax.f32 %v1835, 0.0
        %v1964 = vmax.f32 %v1836, 0.0
        %v1965 = vmax.f32 %v1837, 0.0
        %v1966 = vmax.f32 %v1838, 0.0
        %v1967 = vmax.f32 %v1839, 0.0
        %v1968 = vmax.f32 %v1840, 0.0
        %v1969 = vmax.f32 %v1841, 0.0
        %v1970 = vmax.f32 %v1842, 0.0
        %v1971 = vmax.f32 %v1843, 0.0
        %v1972 = vmax.f32 %v1844, 0.0
        %v1973 = vmax.f32 %v1845, 0.0
        %v1974 = vmax.f32 %v1846, 0.0
        %v1975 = vmax.f32 %v1847, 0.0
        %v1976 = vmax.f32 %v1848, 0.0
        %v1977 = vmax.f32 %v1849, 0.0
        %v1978 = vmax.f32 %v1850, 0.0
        %v1979 = vmax.f32 %v1851, 0.0
        %v1980 = vmax.f32 %v1852, 0.0
        %v1981 = vmax.f32 %v1853, 0.0
        %v1982 = vmax.f32 %v1854, 0.0
        %v1983 = vmax.f32 %v1855, 0.0
        %v1984 = vmax.f32 %v1856, 0.0
        %v1985 = vmax.f32 %v1857, 0.0
        %v1986 = vmax.f32 %v1858, 0.0
        %v1987 = vmax.f32 %v1859, 0.0
        %v1988 = vmax.f32 %v1860, 0.0
        %v1989 = vmax.f32 %v1861, 0.0
        %v1990 = vmax.f32 %v1862, 0.0
        %v1991 = vmax.f32 %v1863, 0.0
        %v1992 = vmax.f32 %v1864, 0.0
        %v1993 = vmax.f32 %v1865, 0.0
        %v1994 = vmax.f32 %v1866, 0.0
        %v1995 = vmax.f32 %v1867, 0.0
        %v1996 = vmax.f32 %v1868, 0.0
        %v1997 = vmax.f32 %v1869, 0.0
        %v1998 = vmax.f32 %v1870, 0.0
        %v1999 = vmax.f32 %v1871, 0.0
        %v2000 = vmax.f32 %v1872, 0.0
        %v2001 = vmax.f32 %v1873, 0.0
        %v2002 = vmax.f32 %v1874, 0.0
        %v2003 = vmax.f32 %v1875, 0.0
        %v2004 = vmax.f32 %v1876, 0.0
        %v2005 = vmax.f32 %v1877, 0.0
        %v2006 = vmax.f32 %v1878, 0.0
        %v2007 = vmax.f32 %v1879, 0.0
        %v2008 = vmax.f32 %v1880, 0.0
        %v2009 = vmax.f32 %v1881, 0.0
        %v2010 = vmax.f32 %v1882, 0.0
        %v2011 = vmax.f32 %v1883, 0.0
        %v2012 = vmax.f32 %v1884, 0.0
        %v2013 = vmax.f32 %v1885, 0.0
        %v2014 = vmax.f32 %v1886, 0.0
        %v2015 = vmax.f32 %v1887, 0.0
        %v2016 = vmax.f32 %v1888, 0.0
        %v2017 = vmax.f32 %v1889, 0.0
        %v2018 = vmax.f32 %v1890, 0.0
        %v2019 = vmax.f32 %v1891, 0.0
        %v2020 = vmax.f32 %v1892, 0.0
        %v2021 = vmax.f32 %v1893, 0.0
        %v2022 = vmax.f32 %v1894, 0.0
        %v2023 = vmax.f32 %v1895, 0.0
        %v2024 = vmax.f32 %v1896, 0.0
        %v2025 = vmax.f32 %v1897, 0.0
        %v2026 = vmax.f32 %v1898, 0.0
        %v2027 = vmax.f32 %v1899, 0.0
        %v2028 = vmax.f32 %v1900, 0.0
        %v2029 = vmax.f32 %v1901, 0.0
        %v2030 = vmax.f32 %v1902, 0.0
        %v2031 = vmax.f32 %v1903, 0.0
        %v2032 = vmax.f32 %v1904, 0.0
        %v2033 = vmax.f32 %v1905, 0.0
        %v2034 = vmax.f32 %v1906, 0.0
        %v2035 = vpow.f32 %v1907, 0.7
        %v2036 = vpow.f32 %v1908, 0.7
        %v2037 = vpow.f32 %v1909, 0.7
        %v2038 = vpow.f32 %v1910, 0.7
        %v2039 = vpow.f32 %v1911, 0.7
        %v2040 = vpow.f32 %v1912, 0.7
        %v2041 = vpow.f32 %v1913, 0.7
        %v2042 = vpow.f32 %v1914, 0.7
        %v2043 = vpow.f32 %v1915, 0.7
        %v2044 = vpow.f32 %v1916, 0.7
        %v2045 = vpow.f32 %v1917, 0.7
        %v2046 = vpow.f32 %v1918, 0.7
        %v2047 = vpow.f32 %v1919, 0.7
        %v2048 = vpow.f32 %v1920, 0.7
        %v2049 = vpow.f32 %v1921, 0.7
        %v2050 = vpow.f32 %v1922, 0.7
        %v2051 = vpow.f32 %v1923, 0.7
        %v2052 = vpow.f32 %v1924, 0.7
        %v2053 = vpow.f32 %v1925, 0.7
        %v2054 = vpow.f32 %v1926, 0.7
        %v2055 = vpow.f32 %v1927, 0.7
        %v2056 = vpow.f32 %v1928, 0.7
        %v2057 = vpow.f32 %v1929, 0.7
        %v2058 = vpow.f32 %v1930, 0.7
        %v2059 = vpow.f32 %v1931, 0.7
        %v2060 = vpow.f32 %v1932, 0.7
        %v2061 = vpow.f32 %v1933, 0.7
        %v2062 = vpow.f32 %v1934, 0.7
        %v2063 = vpow.f32 %v1935, 0.7
        %v2064 = vpow.f32 %v1936, 0.7
        %v2065 = vpow.f32 %v1937, 0.7
        %v2066 = vpow.f32 %v1938, 0.7
        %v2067 = vpow.f32 %v1939, 0.7
        %v2068 = vpow.f32 %v1940, 0.7
        %v2069 = vpow.f32 %v1941, 0.7
        %v2070 = vpow.f32 %v1942, 0.7
        %v2071 = vpow.f32 %v1943, 0.7
        %v2072 = vpow.f32 %v1944, 0.7
        %v2073 = vpow.f32 %v1945, 0.7
        %v2074 = vpow.f32 %v1946, 0.7
        %v2075 = vpow.f32 %v1947, 0.7
        %v2076 = vpow.f32 %v1948, 0.7
        %v2077 = vpow.f32 %v1949, 0.7
        %v2078 = vpow.f32 %v1950, 0.7
        %v2079 = vpow.f32 %v1951, 0.7
        %v2080 = vpow.f32 %v1952, 0.7
        %v2081 = vpow.f32 %v1953, 0.7
        %v2082 = vpow.f32 %v1954, 0.7
        %v2083 = vpow.f32 %v1955, 0.7
        %v2084 = vpow.f32 %v1956, 0.7
        %v2085 = vpow.f32 %v1957, 0.7
        %v2086 = vpow.f32 %v1958, 0.7
        %v2087 = vpow.f32 %v1959, 0.7
        %v2088 = vpow.f32 %v1960, 0.7
        %v2089 = vpow.f32 %v1961, 0.7
        %v2090 = vpow.f32 %v1962, 0.7
        %v2091 = vpow.f32 %v1963, 0.7
        %v2092 = vpow.f32 %v1964, 0.7
        %v2093 = vpow.f32 %v1965, 0.7
        %v2094 = vpow.f32 %v1966, 0.7
        %v2095 = vpow.f32 %v1967, 0.7
        %v2096 = vpow.f32 %v1968, 0.7
        %v2097 = vpow.f32 %v1969, 0.7
        %v2098 = vpow.f32 %v1970, 0.7
        %v2099 = vpow.f32 %v1971, 0.7
        %v2100 = vpow.f32 %v1972, 0.7
        %v2101 = vpow.f32 %v1973, 0.7
        %v2102 = vpow.f32 %v1974, 0.7
        %v2103 = vpow.f32 %v1975, 0.7
        %v2104 = vpow.f32 %v1976, 0.7
        %v2105 = vpow.f32 %v1977, 0.7
        %v2106 = vpow.f32 %v1978, 0.7
        %v2107 = vpow.f32 %v1979, 0.7
        %v2108 = vpow.f32 %v1980, 0.7
        %v2109 = vpow.f32 %v1981, 0.7
        %v2110 = vpow.f32 %v1982, 0.7
        %v2111 = vpow.f32 %v1983, 0.7
        %v2112 = vpow.f32 %v1984, 0.7
        %v2113 = vpow.f32 %v1985, 0.7
        %v2114 = vpow.f32 %v1986, 0.7
        %v2115 = vpow.f32 %v1987, 0.7
        %v2116 = vpow.f32 %v1988, 0.7
        %v2117 = vpow.f32 %v1989, 0.7
        %v2118 = vpow.f32 %v1990, 0.7
        %v2119 = vpow.f32 %v1991, 0.7
        %v2120 = vpow.f32 %v1992, 0.7
        %v2121 = vpow.f32 %v1993, 0.7
        %v2122 = vpow.f32 %v1994, 0.7
        %v2123 = vpow.f32 %v1995, 0.7
        %v2124 = vpow.f32 %v1996, 0.7
        %v2125 = vpow.f32 %v1997, 0.7
        %v2126 = vpow.f32 %v1998, 0.7
        %v2127 = vpow.f32 %v1999, 0.7
        %v2128 = vpow.f32 %v2000, 0.7
        %v2129 = vpow.f32 %v2001, 0.7
        %v2130 = vpow.f32 %v2002, 0.7
        %v2131 = vpow.f32 %v2003, 0.7
        %v2132 = vpow.f32 %v2004, 0.7
        %v2133 = vpow.f32 %v2005, 0.7
        %v2134 = vpow.f32 %v2006, 0.7
        %v2135 = vpow.f32 %v2007, 0.7
        %v2136 = vpow.f32 %v2008, 0.7
        %v2137 = vpow.f32 %v2009, 0.7
        %v2138 = vpow.f32 %v2010, 0.7
        %v2139 = vpow.f32 %v2011, 0.7
        %v2140 = vpow.f32 %v2012, 0.7
        %v2141 = vpow.f32 %v2013, 0.7
        %v2142 = vpow.f32 %v2014, 0.7
        %v2143 = vpow.f32 %v2015, 0.7
        %v2144 = vpow.f32 %v2016, 0.7
        %v2145 = vpow.f32 %v2017, 0.7
        %v2146 = vpow.f32 %v2018, 0.7
        %v2147 = vpow.f32 %v2019, 0.7
        %v2148 = vpow.f32 %v2020, 0.7
        %v2149 = vpow.f32 %v2021, 0.7
        %v2150 = vpow.f32 %v2022, 0.7
        %v2151 = vpow.f32 %v2023, 0.7
        %v2152 = vpow.f32 %v2024, 0.7
        %v2153 = vpow.f32 %v2025, 0.7
        %v2154 = vpow.f32 %v2026, 0.7
        %v2155 = vpow.f32 %v2027, 0.7
        %v2156 = vpow.f32 %v2028, 0.7
        %v2157 = vpow.f32 %v2029, 0.7
        %v2158 = vpow.f32 %v2030, 0.7
        %v2159 = vpow.f32 %v2031, 0.7
        %v2160 = vpow.f32 %v2032, 0.7
        %v2161 = vpow.f32 %v2033, 0.7
        %v2162 = vpow.f32 %v2034, 0.7
        %v2163 = vpack.c.bf16 %v2036, %v2035
        %v2164 = vpack.c.bf16 %v2038, %v2037
        %v2165 = vpack.c.bf16 %v2040, %v2039
        %v2166 = vpack.c.bf16 %v2042, %v2041
        %v2167 = vpack.c.bf16 %v2044, %v2043
        %v2168 = vpack.c.bf16 %v2046, %v2045
        %v2169 = vpack.c.bf16 %v2048, %v2047
        %v2170 = vpack.c.bf16 %v2050, %v2049
        %v2171 = vpack.c.bf16 %v2052, %v2051
        %v2172 = vpack.c.bf16 %v2054, %v2053
        %v2173 = vpack.c.bf16 %v2056, %v2055
        %v2174 = vpack.c.bf16 %v2058, %v2057
        %v2175 = vpack.c.bf16 %v2060, %v2059
        %v2176 = vpack.c.bf16 %v2062, %v2061
        %v2177 = vpack.c.bf16 %v2064, %v2063
        %v2178 = vpack.c.bf16 %v2066, %v2065
        %v2179 = vpack.c.bf16 %v2068, %v2067
        %v2180 = vpack.c.bf16 %v2070, %v2069
        %v2181 = vpack.c.bf16 %v2072, %v2071
        %v2182 = vpack.c.bf16 %v2074, %v2073
        %v2183 = vpack.c.bf16 %v2076, %v2075
        %v2184 = vpack.c.bf16 %v2078, %v2077
        %v2185 = vpack.c.bf16 %v2080, %v2079
        %v2186 = vpack.c.bf16 %v2082, %v2081
        %v2187 = vpack.c.bf16 %v2084, %v2083
        %v2188 = vpack.c.bf16 %v2086, %v2085
        %v2189 = vpack.c.bf16 %v2088, %v2087
        %v2190 = vpack.c.bf16 %v2090, %v2089
        %v2191 = vpack.c.bf16 %v2092, %v2091
        %v2192 = vpack.c.bf16 %v2094, %v2093
        %v2193 = vpack.c.bf16 %v2096, %v2095
        %v2194 = vpack.c.bf16 %v2098, %v2097
        %v2195 = vpack.c.bf16 %v2100, %v2099
        %v2196 = vpack.c.bf16 %v2102, %v2101
        %v2197 = vpack.c.bf16 %v2104, %v2103
        %v2198 = vpack.c.bf16 %v2106, %v2105
        %v2199 = vpack.c.bf16 %v2108, %v2107
        %v2200 = vpack.c.bf16 %v2110, %v2109
        %v2201 = vpack.c.bf16 %v2112, %v2111
        %v2202 = vpack.c.bf16 %v2114, %v2113
        %v2203 = vpack.c.bf16 %v2116, %v2115
        %v2204 = vpack.c.bf16 %v2118, %v2117
        %v2205 = vpack.c.bf16 %v2120, %v2119
        %v2206 = vpack.c.bf16 %v2122, %v2121
        %v2207 = vpack.c.bf16 %v2124, %v2123
        %v2208 = vpack.c.bf16 %v2126, %v2125
        %v2209 = vpack.c.bf16 %v2128, %v2127
        %v2210 = vpack.c.bf16 %v2130, %v2129
        %v2211 = vpack.c.bf16 %v2132, %v2131
        %v2212 = vpack.c.bf16 %v2134, %v2133
        %v2213 = vpack.c.bf16 %v2136, %v2135
        %v2214 = vpack.c.bf16 %v2138, %v2137
        %v2215 = vpack.c.bf16 %v2140, %v2139
        %v2216 = vpack.c.bf16 %v2142, %v2141
        %v2217 = vpack.c.bf16 %v2144, %v2143
        %v2218 = vpack.c.bf16 %v2146, %v2145
        %v2219 = vpack.c.bf16 %v2148, %v2147
        %v2220 = vpack.c.bf16 %v2150, %v2149
        %v2221 = vpack.c.bf16 %v2152, %v2151
        %v2222 = vpack.c.bf16 %v2154, %v2153
        %v2223 = vpack.c.bf16 %v2156, %v2155
        %v2224 = vpack.c.bf16 %v2158, %v2157
        %v2225 = vpack.c.bf16 %v2160, %v2159
        %v2226 = vpack.c.bf16 %v2162, %v2161
        %v2291 = vunpack.c.l.b16 %v2163
        %v2292 = vunpack.c.h.b16 %v2163
        %v2293 = vunpack.c.l.b16 %v2164
        %v2294 = vunpack.c.h.b16 %v2164
        %v2295 = vunpack.c.l.b16 %v2165
        %v2296 = vunpack.c.h.b16 %v2165
        %v2297 = vunpack.c.l.b16 %v2166
        %v2298 = vunpack.c.h.b16 %v2166
        %v2299 = vunpack.c.l.b16 %v2167
        %v2300 = vunpack.c.h.b16 %v2167
        %v2301 = vunpack.c.l.b16 %v2168
        %v2302 = vunpack.c.h.b16 %v2168
        %v2303 = vunpack.c.l.b16 %v2169
        %v2304 = vunpack.c.h.b16 %v2169
        %v2305 = vunpack.c.l.b16 %v2170
        %v2306 = vunpack.c.h.b16 %v2170
        %v2307 = vunpack.c.l.b16 %v2171
        %v2308 = vunpack.c.h.b16 %v2171
        %v2309 = vunpack.c.l.b16 %v2172
        %v2310 = vunpack.c.h.b16 %v2172
        %v2311 = vunpack.c.l.b16 %v2173
        %v2312 = vunpack.c.h.b16 %v2173
        %v2313 = vunpack.c.l.b16 %v2174
        %v2314 = vunpack.c.h.b16 %v2174
        %v2315 = vunpack.c.l.b16 %v2175
        %v2316 = vunpack.c.h.b16 %v2175
        %v2317 = vunpack.c.l.b16 %v2176
        %v2318 = vunpack.c.h.b16 %v2176
        %v2319 = vunpack.c.l.b16 %v2177
        %v2320 = vunpack.c.h.b16 %v2177
        %v2321 = vunpack.c.l.b16 %v2178
        %v2322 = vunpack.c.h.b16 %v2178
        %v2323 = vunpack.c.l.b16 %v2179
        %v2324 = vunpack.c.h.b16 %v2179
        %v2325 = vunpack.c.l.b16 %v2180
        %v2326 = vunpack.c.h.b16 %v2180
        %v2327 = vunpack.c.l.b16 %v2181
        %v2328 = vunpack.c.h.b16 %v2181
        %v2329 = vunpack.c.l.b16 %v2182
        %v2330 = vunpack.c.h.b16 %v2182
        %v2331 = vunpack.c.l.b16 %v2183
        %v2332 = vunpack.c.h.b16 %v2183
        %v2333 = vunpack.c.l.b16 %v2184
        %v2334 = vunpack.c.h.b16 %v2184
        %v2335 = vunpack.c.l.b16 %v2185
        %v2336 = vunpack.c.h.b16 %v2185
        %v2337 = vunpack.c.l.b16 %v2186
        %v2338 = vunpack.c.h.b16 %v2186
        %v2339 = vunpack.c.l.b16 %v2187
        %v2340 = vunpack.c.h.b16 %v2187
        %v2341 = vunpack.c.l.b16 %v2188
        %v2342 = vunpack.c.h.b16 %v2188
        %v2343 = vunpack.c.l.b16 %v2189
        %v2344 = vunpack.c.h.b16 %v2189
        %v2345 = vunpack.c.l.b16 %v2190
        %v2346 = vunpack.c.h.b16 %v2190
        %v2347 = vunpack.c.l.b16 %v2191
        %v2348 = vunpack.c.h.b16 %v2191
        %v2349 = vunpack.c.l.b16 %v2192
        %v2350 = vunpack.c.h.b16 %v2192
        %v2351 = vunpack.c.l.b16 %v2193
        %v2352 = vunpack.c.h.b16 %v2193
        %v2353 = vunpack.c.l.b16 %v2194
        %v2354 = vunpack.c.h.b16 %v2194
        %v2355 = vunpack.c.l.b16 %v2195
        %v2356 = vunpack.c.h.b16 %v2195
        %v2357 = vunpack.c.l.b16 %v2196
        %v2358 = vunpack.c.h.b16 %v2196
        %v2359 = vunpack.c.l.b16 %v2197
        %v2360 = vunpack.c.h.b16 %v2197
        %v2361 = vunpack.c.l.b16 %v2198
        %v2362 = vunpack.c.h.b16 %v2198
        %v2363 = vunpack.c.l.b16 %v2199
        %v2364 = vunpack.c.h.b16 %v2199
        %v2365 = vunpack.c.l.b16 %v2200
        %v2366 = vunpack.c.h.b16 %v2200
        %v2367 = vunpack.c.l.b16 %v2201
        %v2368 = vunpack.c.h.b16 %v2201
        %v2369 = vunpack.c.l.b16 %v2202
        %v2370 = vunpack.c.h.b16 %v2202
        %v2371 = vunpack.c.l.b16 %v2203
        %v2372 = vunpack.c.h.b16 %v2203
        %v2373 = vunpack.c.l.b16 %v2204
        %v2374 = vunpack.c.h.b16 %v2204
        %v2375 = vunpack.c.l.b16 %v2205
        %v2376 = vunpack.c.h.b16 %v2205
        %v2377 = vunpack.c.l.b16 %v2206
        %v2378 = vunpack.c.h.b16 %v2206
        %v2379 = vunpack.c.l.b16 %v2207
        %v2380 = vunpack.c.h.b16 %v2207
        %v2381 = vunpack.c.l.b16 %v2208
        %v2382 = vunpack.c.h.b16 %v2208
        %v2383 = vunpack.c.l.b16 %v2209
        %v2384 = vunpack.c.h.b16 %v2209
        %v2385 = vunpack.c.l.b16 %v2210
        %v2386 = vunpack.c.h.b16 %v2210
        %v2387 = vunpack.c.l.b16 %v2211
        %v2388 = vunpack.c.h.b16 %v2211
        %v2389 = vunpack.c.l.b16 %v2212
        %v2390 = vunpack.c.h.b16 %v2212
        %v2391 = vunpack.c.l.b16 %v2213
        %v2392 = vunpack.c.h.b16 %v2213
        %v2393 = vunpack.c.l.b16 %v2214
        %v2394 = vunpack.c.h.b16 %v2214
        %v2395 = vunpack.c.l.b16 %v2215
        %v2396 = vunpack.c.h.b16 %v2215
        %v2397 = vunpack.c.l.b16 %v2216
        %v2398 = vunpack.c.h.b16 %v2216
        %v2399 = vunpack.c.l.b16 %v2217
        %v2400 = vunpack.c.h.b16 %v2217
        %v2401 = vunpack.c.l.b16 %v2218
        %v2402 = vunpack.c.h.b16 %v2218
        %v2403 = vunpack.c.l.b16 %v2219
        %v2404 = vunpack.c.h.b16 %v2219
        %v2405 = vunpack.c.l.b16 %v2220
        %v2406 = vunpack.c.h.b16 %v2220
        %v2407 = vunpack.c.l.b16 %v2221
        %v2408 = vunpack.c.h.b16 %v2221
        %v2409 = vunpack.c.l.b16 %v2222
        %v2410 = vunpack.c.h.b16 %v2222
        %v2411 = vunpack.c.l.b16 %v2223
        %v2412 = vunpack.c.h.b16 %v2223
        %v2413 = vunpack.c.l.b16 %v2224
        %v2414 = vunpack.c.h.b16 %v2224
        %v2415 = vunpack.c.l.b16 %v2225
        %v2416 = vunpack.c.h.b16 %v2225
        %v2417 = vunpack.c.l.b16 %v2226
        %v2418 = vunpack.c.h.b16 %v2226
        %v2419 = vpack.c.b16 %v2291, %v2291
        %v2420 = vpack.c.b16 %v2292, %v2292
        %v2421 = vpack.c.b16 %v2293, %v2293
        %v2422 = vpack.c.b16 %v2294, %v2294
        %v2423 = vpack.c.b16 %v2295, %v2295
        %v2424 = vpack.c.b16 %v2296, %v2296
        %v2425 = vpack.c.b16 %v2297, %v2297
        %v2426 = vpack.c.b16 %v2298, %v2298
        %v2427 = vpack.c.b16 %v2299, %v2299
        %v2428 = vpack.c.b16 %v2300, %v2300
        %v2429 = vpack.c.b16 %v2301, %v2301
        %v2430 = vpack.c.b16 %v2302, %v2302
        %v2431 = vpack.c.b16 %v2303, %v2303
        %v2432 = vpack.c.b16 %v2304, %v2304
        %v2433 = vpack.c.b16 %v2305, %v2305
        %v2434 = vpack.c.b16 %v2306, %v2306
        %v2435 = vpack.c.b16 %v2307, %v2307
        %v2436 = vpack.c.b16 %v2308, %v2308
        %v2437 = vpack.c.b16 %v2309, %v2309
        %v2438 = vpack.c.b16 %v2310, %v2310
        %v2439 = vpack.c.b16 %v2311, %v2311
        %v2440 = vpack.c.b16 %v2312, %v2312
        %v2441 = vpack.c.b16 %v2313, %v2313
        %v2442 = vpack.c.b16 %v2314, %v2314
        %v2443 = vpack.c.b16 %v2315, %v2315
        %v2444 = vpack.c.b16 %v2316, %v2316
        %v2445 = vpack.c.b16 %v2317, %v2317
        %v2446 = vpack.c.b16 %v2318, %v2318
        %v2447 = vpack.c.b16 %v2319, %v2319
        %v2448 = vpack.c.b16 %v2320, %v2320
        %v2449 = vpack.c.b16 %v2321, %v2321
        %v2450 = vpack.c.b16 %v2322, %v2322
        %v2451 = vpack.c.b16 %v2323, %v2323
        %v2452 = vpack.c.b16 %v2324, %v2324
        %v2453 = vpack.c.b16 %v2325, %v2325
        %v2454 = vpack.c.b16 %v2326, %v2326
        %v2455 = vpack.c.b16 %v2327, %v2327
        %v2456 = vpack.c.b16 %v2328, %v2328
        %v2457 = vpack.c.b16 %v2329, %v2329
        %v2458 = vpack.c.b16 %v2330, %v2330
        %v2459 = vpack.c.b16 %v2331, %v2331
        %v2460 = vpack.c.b16 %v2332, %v2332
        %v2461 = vpack.c.b16 %v2333, %v2333
        %v2462 = vpack.c.b16 %v2334, %v2334
        %v2463 = vpack.c.b16 %v2335, %v2335
        %v2464 = vpack.c.b16 %v2336, %v2336
        %v2465 = vpack.c.b16 %v2337, %v2337
        %v2466 = vpack.c.b16 %v2338, %v2338
        %v2467 = vpack.c.b16 %v2339, %v2339
        %v2468 = vpack.c.b16 %v2340, %v2340
        %v2469 = vpack.c.b16 %v2341, %v2341
        %v2470 = vpack.c.b16 %v2342, %v2342
        %v2471 = vpack.c.b16 %v2343, %v2343
        %v2472 = vpack.c.b16 %v2344, %v2344
        %v2473 = vpack.c.b16 %v2345, %v2345
        %v2474 = vpack.c.b16 %v2346, %v2346
        %v2475 = vpack.c.b16 %v2347, %v2347
        %v2476 = vpack.c.b16 %v2348, %v2348
        %v2477 = vpack.c.b16 %v2349, %v2349
        %v2478 = vpack.c.b16 %v2350, %v2350
        %v2479 = vpack.c.b16 %v2351, %v2351
        %v2480 = vpack.c.b16 %v2352, %v2352
        %v2481 = vpack.c.b16 %v2353, %v2353
        %v2482 = vpack.c.b16 %v2354, %v2354
        %v2483 = vpack.c.b16 %v2355, %v2355
        %v2484 = vpack.c.b16 %v2356, %v2356
        %v2485 = vpack.c.b16 %v2357, %v2357
        %v2486 = vpack.c.b16 %v2358, %v2358
        %v2487 = vpack.c.b16 %v2359, %v2359
        %v2488 = vpack.c.b16 %v2360, %v2360
        %v2489 = vpack.c.b16 %v2361, %v2361
        %v2490 = vpack.c.b16 %v2362, %v2362
        %v2491 = vpack.c.b16 %v2363, %v2363
        %v2492 = vpack.c.b16 %v2364, %v2364
        %v2493 = vpack.c.b16 %v2365, %v2365
        %v2494 = vpack.c.b16 %v2366, %v2366
        %v2495 = vpack.c.b16 %v2367, %v2367
        %v2496 = vpack.c.b16 %v2368, %v2368
        %v2497 = vpack.c.b16 %v2369, %v2369
        %v2498 = vpack.c.b16 %v2370, %v2370
        %v2499 = vpack.c.b16 %v2371, %v2371
        %v2500 = vpack.c.b16 %v2372, %v2372
        %v2501 = vpack.c.b16 %v2373, %v2373
        %v2502 = vpack.c.b16 %v2374, %v2374
        %v2503 = vpack.c.b16 %v2375, %v2375
        %v2504 = vpack.c.b16 %v2376, %v2376
        %v2505 = vpack.c.b16 %v2377, %v2377
        %v2506 = vpack.c.b16 %v2378, %v2378
        %v2507 = vpack.c.b16 %v2379, %v2379
        %v2508 = vpack.c.b16 %v2380, %v2380
        %v2509 = vpack.c.b16 %v2381, %v2381
        %v2510 = vpack.c.b16 %v2382, %v2382
        %v2511 = vpack.c.b16 %v2383, %v2383
        %v2512 = vpack.c.b16 %v2384, %v2384
        %v2513 = vpack.c.b16 %v2385, %v2385
        %v2514 = vpack.c.b16 %v2386, %v2386
        %v2515 = vpack.c.b16 %v2387, %v2387
        %v2516 = vpack.c.b16 %v2388, %v2388
        %v2517 = vpack.c.b16 %v2389, %v2389
        %v2518 = vpack.c.b16 %v2390, %v2390
        %v2519 = vpack.c.b16 %v2391, %v2391
        %v2520 = vpack.c.b16 %v2392, %v2392
        %v2521 = vpack.c.b16 %v2393, %v2393
        %v2522 = vpack.c.b16 %v2394, %v2394
        %v2523 = vpack.c.b16 %v2395, %v2395
        %v2524 = vpack.c.b16 %v2396, %v2396
        %v2525 = vpack.c.b16 %v2397, %v2397
        %v2526 = vpack.c.b16 %v2398, %v2398
        %v2527 = vpack.c.b16 %v2399, %v2399
        %v2528 = vpack.c.b16 %v2400, %v2400
        %v2529 = vpack.c.b16 %v2401, %v2401
        %v2530 = vpack.c.b16 %v2402, %v2402
        %v2531 = vpack.c.b16 %v2403, %v2403
        %v2532 = vpack.c.b16 %v2404, %v2404
        %v2533 = vpack.c.b16 %v2405, %v2405
        %v2534 = vpack.c.b16 %v2406, %v2406
        %v2535 = vpack.c.b16 %v2407, %v2407
        %v2536 = vpack.c.b16 %v2408, %v2408
        %v2537 = vpack.c.b16 %v2409, %v2409
        %v2538 = vpack.c.b16 %v2410, %v2410
        %v2539 = vpack.c.b16 %v2411, %v2411
        %v2540 = vpack.c.b16 %v2412, %v2412
        %v2541 = vpack.c.b16 %v2413, %v2413
        %v2542 = vpack.c.b16 %v2414, %v2414
        %v2543 = vpack.c.b16 %v2415, %v2415
        %v2544 = vpack.c.b16 %v2416, %v2416
        %v2545 = vpack.c.b16 %v2417, %v2417
        %v2546 = vpack.c.b16 %v2418, %v2418
        %2675 = vst [vmem:[%s160] sm:$0xf] %v2419
        %2676 = vst [vmem:[%s160 + $0x4] sm:$0xf] %v2420
        %2677 = vst [vmem:[%s160 + $0x8] sm:$0xf] %v2421
        %2678 = vst [vmem:[%s160 + $0xc] sm:$0xf] %v2422
        %2679 = vst [vmem:[%s160 + $0x10] sm:$0xf] %v2423
        %2680 = vst [vmem:[%s160 + $0x14] sm:$0xf] %v2424
        %2681 = vst [vmem:[%s160 + $0x18] sm:$0xf] %v2425
        %2682 = vst [vmem:[%s160 + $0x1c] sm:$0xf] %v2426
        %2683 = vst [vmem:[%s160 + $0x20] sm:$0xf] %v2427
        %2684 = vst [vmem:[%s160 + $0x24] sm:$0xf] %v2428
        %2685 = vst [vmem:[%s160 + $0x28] sm:$0xf] %v2429
        %2686 = vst [vmem:[%s160 + $0x2c] sm:$0xf] %v2430
        %2687 = vst [vmem:[%s160 + $0x30] sm:$0xf] %v2431
        %2688 = vst [vmem:[%s160 + $0x34] sm:$0xf] %v2432
        %2689 = vst [vmem:[%s160 + $0x38] sm:$0xf] %v2433
        %2690 = vst [vmem:[%s160 + $0x3c] sm:$0xf] %v2434
        %2691 = vst [vmem:[%s160 + $0x40] sm:$0xf] %v2435
        %2692 = vst [vmem:[%s160 + $0x44] sm:$0xf] %v2436
        %2693 = vst [vmem:[%s160 + $0x48] sm:$0xf] %v2437
        %2694 = vst [vmem:[%s160 + $0x4c] sm:$0xf] %v2438
        %2695 = vst [vmem:[%s160 + $0x50] sm:$0xf] %v2439
        %2696 = vst [vmem:[%s160 + $0x54] sm:$0xf] %v2440
        %2697 = vst [vmem:[%s160 + $0x58] sm:$0xf] %v2441
        %2698 = vst [vmem:[%s160 + $0x5c] sm:$0xf] %v2442
        %2699 = vst [vmem:[%s160 + $0x60] sm:$0xf] %v2443
        %2700 = vst [vmem:[%s160 + $0x64] sm:$0xf] %v2444
        %2701 = vst [vmem:[%s160 + $0x68] sm:$0xf] %v2445
        %2702 = vst [vmem:[%s160 + $0x6c] sm:$0xf] %v2446
        %2703 = vst [vmem:[%s160 + $0x70] sm:$0xf] %v2447
        %2704 = vst [vmem:[%s160 + $0x74] sm:$0xf] %v2448
        %2705 = vst [vmem:[%s160 + $0x78] sm:$0xf] %v2449
        %2706 = vst [vmem:[%s160 + $0x7c] sm:$0xf] %v2450
        %2707 = vst [vmem:[%s160 + $0x80] sm:$0xf] %v2451
        %2708 = vst [vmem:[%s160 + $0x84] sm:$0xf] %v2452
        %2709 = vst [vmem:[%s160 + $0x88] sm:$0xf] %v2453
        %2710 = vst [vmem:[%s160 + $0x8c] sm:$0xf] %v2454
        %2711 = vst [vmem:[%s160 + $0x90] sm:$0xf] %v2455
        %2712 = vst [vmem:[%s160 + $0x94] sm:$0xf] %v2456
        %2713 = vst [vmem:[%s160 + $0x98] sm:$0xf] %v2457
        %2714 = vst [vmem:[%s160 + $0x9c] sm:$0xf] %v2458
        %2715 = vst [vmem:[%s160 + $0xa0] sm:$0xf] %v2459
        %2716 = vst [vmem:[%s160 + $0xa4] sm:$0xf] %v2460
        %2717 = vst [vmem:[%s160 + $0xa8] sm:$0xf] %v2461
        %2718 = vst [vmem:[%s160 + $0xac] sm:$0xf] %v2462
        %2719 = vst [vmem:[%s160 + $0xb0] sm:$0xf] %v2463
        %2720 = vst [vmem:[%s160 + $0xb4] sm:$0xf] %v2464
        %2721 = vst [vmem:[%s160 + $0xb8] sm:$0xf] %v2465
        %2722 = vst [vmem:[%s160 + $0xbc] sm:$0xf] %v2466
        %2723 = vst [vmem:[%s160 + $0xc0] sm:$0xf] %v2467
        %2724 = vst [vmem:[%s160 + $0xc4] sm:$0xf] %v2468
        %2725 = vst [vmem:[%s160 + $0xc8] sm:$0xf] %v2469
        %2726 = vst [vmem:[%s160 + $0xcc] sm:$0xf] %v2470
        %2727 = vst [vmem:[%s160 + $0xd0] sm:$0xf] %v2471
        %2728 = vst [vmem:[%s160 + $0xd4] sm:$0xf] %v2472
        %2729 = vst [vmem:[%s160 + $0xd8] sm:$0xf] %v2473
        %2730 = vst [vmem:[%s160 + $0xdc] sm:$0xf] %v2474
        %2731 = vst [vmem:[%s160 + $0xe0] sm:$0xf] %v2475
        %2732 = vst [vmem:[%s160 + $0xe4] sm:$0xf] %v2476
        %2733 = vst [vmem:[%s160 + $0xe8] sm:$0xf] %v2477
        %2734 = vst [vmem:[%s160 + $0xec] sm:$0xf] %v2478
        %2735 = vst [vmem:[%s160 + $0xf0] sm:$0xf] %v2479
        %2736 = vst [vmem:[%s160 + $0xf4] sm:$0xf] %v2480
        %2737 = vst [vmem:[%s160 + $0xf8] sm:$0xf] %v2481
        %2738 = vst [vmem:[%s160 + $0xfc] sm:$0xf] %v2482
        %2739 = vst [vmem:[%s160 + $0x100] sm:$0xf] %v2483
        %2740 = vst [vmem:[%s160 + $0x104] sm:$0xf] %v2484
        %2741 = vst [vmem:[%s160 + $0x108] sm:$0xf] %v2485
        %2742 = vst [vmem:[%s160 + $0x10c] sm:$0xf] %v2486
        %2743 = vst [vmem:[%s160 + $0x110] sm:$0xf] %v2487
        %2744 = vst [vmem:[%s160 + $0x114] sm:$0xf] %v2488
        %2745 = vst [vmem:[%s160 + $0x118] sm:$0xf] %v2489
        %2746 = vst [vmem:[%s160 + $0x11c] sm:$0xf] %v2490
        %2747 = vst [vmem:[%s160 + $0x120] sm:$0xf] %v2491
        %2748 = vst [vmem:[%s160 + $0x124] sm:$0xf] %v2492
        %2749 = vst [vmem:[%s160 + $0x128] sm:$0xf] %v2493
        %2750 = vst [vmem:[%s160 + $0x12c] sm:$0xf] %v2494
        %2751 = vst [vmem:[%s160 + $0x130] sm:$0xf] %v2495
        %2752 = vst [vmem:[%s160 + $0x134] sm:$0xf] %v2496
        %2753 = vst [vmem:[%s160 + $0x138] sm:$0xf] %v2497
        %2754 = vst [vmem:[%s160 + $0x13c] sm:$0xf] %v2498
        %2755 = vst [vmem:[%s160 + $0x140] sm:$0xf] %v2499
        %2756 = vst [vmem:[%s160 + $0x144] sm:$0xf] %v2500
        %2757 = vst [vmem:[%s160 + $0x148] sm:$0xf] %v2501
        %2758 = vst [vmem:[%s160 + $0x14c] sm:$0xf] %v2502
        %2759 = vst [vmem:[%s160 + $0x150] sm:$0xf] %v2503
        %2760 = vst [vmem:[%s160 + $0x154] sm:$0xf] %v2504
        %2761 = vst [vmem:[%s160 + $0x158] sm:$0xf] %v2505
        %2762 = vst [vmem:[%s160 + $0x15c] sm:$0xf] %v2506
        %2763 = vst [vmem:[%s160 + $0x160] sm:$0xf] %v2507
        %2764 = vst [vmem:[%s160 + $0x164] sm:$0xf] %v2508
        %2765 = vst [vmem:[%s160 + $0x168] sm:$0xf] %v2509
        %2766 = vst [vmem:[%s160 + $0x16c] sm:$0xf] %v2510
        %2767 = vst [vmem:[%s160 + $0x170] sm:$0xf] %v2511
        %2768 = vst [vmem:[%s160 + $0x174] sm:$0xf] %v2512
        %2769 = vst [vmem:[%s160 + $0x178] sm:$0xf] %v2513
        %2770 = vst [vmem:[%s160 + $0x17c] sm:$0xf] %v2514
        %2771 = vst [vmem:[%s160 + $0x180] sm:$0xf] %v2515
        %2772 = vst [vmem:[%s160 + $0x184] sm:$0xf] %v2516
        %2773 = vst [vmem:[%s160 + $0x188] sm:$0xf] %v2517
        %2774 = vst [vmem:[%s160 + $0x18c] sm:$0xf] %v2518
        %2775 = vst [vmem:[%s160 + $0x190] sm:$0xf] %v2519
        %2776 = vst [vmem:[%s160 + $0x194] sm:$0xf] %v2520
        %2777 = vst [vmem:[%s160 + $0x198] sm:$0xf] %v2521
        %2778 = vst [vmem:[%s160 + $0x19c] sm:$0xf] %v2522
        %2779 = vst [vmem:[%s160 + $0x1a0] sm:$0xf] %v2523
        %2780 = vst [vmem:[%s160 + $0x1a4] sm:$0xf] %v2524
        %2781 = vst [vmem:[%s160 + $0x1a8] sm:$0xf] %v2525
        %2782 = vst [vmem:[%s160 + $0x1ac] sm:$0xf] %v2526
        %2783 = vst [vmem:[%s160 + $0x1b0] sm:$0xf] %v2527
        %2784 = vst [vmem:[%s160 + $0x1b4] sm:$0xf] %v2528
        %2785 = vst [vmem:[%s160 + $0x1b8] sm:$0xf] %v2529
        %2786 = vst [vmem:[%s160 + $0x1bc] sm:$0xf] %v2530
        %2787 = vst [vmem:[%s160 + $0x1c0] sm:$0xf] %v2531
        %2788 = vst [vmem:[%s160 + $0x1c4] sm:$0xf] %v2532
        %2789 = vst [vmem:[%s160 + $0x1c8] sm:$0xf] %v2533
        %2790 = vst [vmem:[%s160 + $0x1cc] sm:$0xf] %v2534
        %2791 = vst [vmem:[%s160 + $0x1d0] sm:$0xf] %v2535
        %2792 = vst [vmem:[%s160 + $0x1d4] sm:$0xf] %v2536
        %2793 = vst [vmem:[%s160 + $0x1d8] sm:$0xf] %v2537
        %2794 = vst [vmem:[%s160 + $0x1dc] sm:$0xf] %v2538
        %2795 = vst [vmem:[%s160 + $0x1e0] sm:$0xf] %v2539
        %2796 = vst [vmem:[%s160 + $0x1e4] sm:$0xf] %v2540
        %2797 = vst [vmem:[%s160 + $0x1e8] sm:$0xf] %v2541
        %2798 = vst [vmem:[%s160 + $0x1ec] sm:$0xf] %v2542
        %2799 = vst [vmem:[%s160 + $0x1f0] sm:$0xf] %v2543
        %2800 = vst [vmem:[%s160 + $0x1f4] sm:$0xf] %v2544
        %2801 = vst [vmem:[%s160 + $0x1f8] sm:$0xf] %v2545
        %2802 = vst [vmem:[%s160 + $0x1fc] sm:$0xf] %v2546
        %s2803 = smul.u32 128, %s14
        %p2804 = scmp.lt.s32.totalorder %s2803, 255
        %s2805 = scalar_select %p2804, %s2803, 255
        %s2806 = smul.addr %s2805, 4
        %s2807 = scalar_lea.vmem %s2, %s2806
        // Predicated region
        $region33: #{net_depthwise_forward.4} parent=27 // pred_check
          %p2808 = pneg %p79
        $region34: #{net_depthwise_forward.4} parent=27 // pred_check_branch
          %2810 = sbr.rel (%p2808) target = $region36
        $region35: #{net_depthwise_forward.4} parent=27 // pred_region
          %s2811 = smul.u32 128, %s14
        $region36: #{net_depthwise_forward.4} parent=27 // pred_fallthru
          _
      $region28: #{net_depthwise_forward.4} parent=5 // pred_fallthru
        _
      %p2812 = scmp.le.s32.totalorder 2, %s9
      // Predicated region
      $region37: #{net_depthwise_forward.4} parent=5 // pred_check
        %p2813 = pneg %p2812
      $region38: #{net_depthwise_forward.4} parent=5 // pred_check_branch
        %2815 = sbr.rel (%p2813) target = $region40
      $region39: #{net_depthwise_forward.4} parent=5 // pred_region
        %s2816 = ssub.s32 %s9, 2
        // Predicated region
        $region41: #{net_depthwise_forward.4} parent=39 // pred_check
          %p2817 = pneg %p85
        $region42: #{net_depthwise_forward.4} parent=39 // pred_check_branch
          %2819 = sbr.rel (%p2817) target = $region44
        $region43: #{net_depthwise_forward.4} parent=39 // pred_region
          %s2820 = smul.u32 128, %s15
          %p2821 = scmp.lt.s32.totalorder %s2820, 255
          %s2822 = scalar_select %p2821, %s2820, 255
          %s2823 = smul.addr %s2822, 4
          %s2824 = scalar_lea.vmem %s2, %s2823
        $region44: #{net_depthwise_forward.4} parent=39 // pred_fallthru
          _
      $region40: #{net_depthwise_forward.4} parent=5 // pred_fallthru
        _
    $region6: #{net_depthwise_forward.4} parent=1 // loop_footer
      %s13 = sadd.s32 1, %s9
    $region7: #{net_depthwise_forward.4} parent=1 // loop_footer_branch
      %8 = sbr.rel target = $region3
    $region8: #{net_depthwise_forward.4} parent=1 // loop_exit
      _
    %2825 = vsyncpa [#allocation3], 1
    %s2826 = scalar_lea.sflag [#allocation3], 1
    %2827 = vsyncpa %s2826, 1

// kernel: net_depthwise_forward.5
$region0: #{net_depthwise_forward.5}
  #allocation0 [shape = 'u32[]', space=smem, size = 0x4, offset = 0x4, fixed_abs, tag = 'smem constant byte address 0x4 - core index']
  #allocation1 [shape = 'u32[144,128]{1,0:T(1,128)}', space=vmem, size = 0x12000, scoped, tag = 'internal scratch']
  #allocation2 [shape = 'f32[18,32,128]{2,1,0:T(8,128)}', space=vmem, size = 0x48000, scoped, tag = 'scratch operand']
  %s0 = inlined_call_operand.vmem [shape: bf16[2,16,16,128], index: 0, kind: input, shape index: {}]
  %s1 = inlined_call_operand.vmem [shape: f32[3,3,128], index: 1, kind: input, shape index: {}]
  %s2 = inlined_call_operand.vmem [shape: bf16[128,384], index: 2, kind: input, shape index: {}]
  %s3 = inlined_call_operand.vmem [shape: bf16[2,16,16,384], index: 3, kind: output, shape index: {}]
  %s4 = sld [smem:[#allocation0]]
  $region45: #{net_depthwise_forward.5} parent=0
    _
  %s6 = ssub.s32 1, %s4
  %s7 = scalar_select 0, %s6, %s4
  loop: start=0, step=1, limit=4
  $region2: #{net_depthwise_forward.5} parent=0 // loop_pre_header
    _
  $region3: #{net_depthwise_forward.5} parent=0 // loop_header
    %s9 = sphi 0, %s13
    %p10 = scmp.ge.s32.totalorder %s9, 4
    %s19 = sphi 0, %s21
    %s22 = sphi 0, %s19
    %s23 = sphi 0, %s22
    %s39 = sphi 0, %s23
    %s43 = sphi 0, %s43
    %s45 = sphi 0, %s43
    %s46 = sphi 0, %s45
    %s60 = sphi 0, %s46
    %s64 = sphi 0, %s64
    %s66 = sphi 0, %s64
    %s67 = sphi 0, %s66
    %s81 = sphi 0, %s67
    %s87 = sphi 0, %s89
    %s90 = sphi 0, %s87
    %s91 = sphi 0, %s90
    %s107 = sphi 0, %s91
  $region4: #{net_depthwise_forward.5} parent=0 // loop_header_branch
    %12 = sbr.rel (%p10) target = $region8
  $region5: #{net_depthwise_forward.5} parent=0 // loop_body
    %s14 = ssub.s32 %s9, 1
    %s15 = ssub.s32 %s9, 2
    %s16 = sadd.s32 %s9, 1
    %s17 = ssub.s32 %s9, %s16
    %p18 = scmp.eq.s32.totalorder %s17, 0
    %s20 = sadd.s32 %s19, 1
    %s21 = scalar_select %p18, %s19, %s20
    %p24 = pneg %p18
    %p25 = scmp.eq.s32.totalorder %s9, 1
    %p26 = por %p24, %p25
    %p27 = scmp.ne.s32.totalorder %s19, %s22
    %p28 = scmp.eq.s32.totalorder %s9, 0
    %p29 = por %p27, %p28
    %p30 = scmp.ne.s32.totalorder %s19, %s22
    %p31 = scmp.eq.s32.totalorder %s14, 1
    %p32 = por %p30, %p31
    %p33 = scmp.ne.s32.totalorder %s22, %s23
    %p34 = scmp.eq.s32.totalorder %s14, 0
    %p35 = por %p33, %p34
    %p36 = scmp.ne.s32.totalorder %s22, %s23
    %p37 = scmp.eq.s32.totalorder %s15, 1
    %p38 = por %p36, %p37
    %p40 = scmp.ne.s32.totalorder %s23, %s39
    %p41 = scmp.eq.s32.totalorder %s15, 0
    %p42 = por %p40, %p41
    %s44 = sadd.s32 %s43, 1
    %p47 = scmp.eq.s32.totalorder %s9, 1
    %p48 = scmp.ne.s32.totalorder %s43, %s45
    %p49 = scmp.eq.s32.totalorder %s9, 0
    %p50 = por %p48, %p49
    %p51 = scmp.ne.s32.totalorder %s43, %s45
    %p52 = scmp.eq.s32.totalorder %s14, 1
    %p53 = por %p51, %p52
    %p54 = scmp.ne.s32.totalorder %s45, %s46
    %p55 = scmp.eq.s32.totalorder %s14, 0
    %p56 = por %p54, %p55
    %p57 = scmp.ne.s32.totalorder %s45, %s46
    %p58 = scmp.eq.s32.totalorder %s15, 1
    %p59 = por %p57, %p58
    %p61 = scmp.ne.s32.totalorder %s46, %s60
    %p62 = scmp.eq.s32.totalorder %s15, 0
    %p63 = por %p61, %p62
    %s65 = sadd.s32 %s64, 1
    %p68 = scmp.eq.s32.totalorder %s9, 1
    %p69 = scmp.ne.s32.totalorder %s64, %s66
    %p70 = scmp.eq.s32.totalorder %s9, 0
    %p71 = por %p69, %p70
    %p72 = scmp.ne.s32.totalorder %s64, %s66
    %p73 = scmp.eq.s32.totalorder %s14, 1
    %p74 = por %p72, %p73
    %p75 = scmp.ne.s32.totalorder %s66, %s67
    %p76 = scmp.eq.s32.totalorder %s14, 0
    %p77 = por %p75, %p76
    %p78 = scmp.ne.s32.totalorder %s66, %s67
    %p79 = scmp.eq.s32.totalorder %s15, 1
    %p80 = por %p78, %p79
    %p82 = scmp.ne.s32.totalorder %s67, %s81
    %p83 = scmp.eq.s32.totalorder %s15, 0
    %p84 = por %p82, %p83
    %s85 = ssub.s32 %s9, %s16
    %p86 = scmp.eq.s32.totalorder %s85, 0
    %s88 = sadd.s32 %s87, 1
    %s89 = scalar_select %p86, %s87, %s88
    %p92 = pneg %p86
    %p93 = scmp.eq.s32.totalorder %s9, 1
    %p94 = por %p92, %p93
    %p95 = scmp.ne.s32.totalorder %s87, %s90
    %p96 = scmp.eq.s32.totalorder %s9, 0
    %p97 = por %p95, %p96
    %p98 = scmp.ne.s32.totalorder %s87, %s90
    %p99 = scmp.eq.s32.totalorder %s14, 1
    %p100 = por %p98, %p99
    %p101 = scmp.ne.s32.totalorder %s90, %s91
    %p102 = scmp.eq.s32.totalorder %s14, 0
    %p103 = por %p101, %p102
    %p104 = scmp.ne.s32.totalorder %s90, %s91
    %p105 = scmp.eq.s32.totalorder %s15, 1
    %p106 = por %p104, %p105
    %p108 = scmp.ne.s32.totalorder %s91, %s107
    %p109 = scmp.eq.s32.totalorder %s15, 0
    %p110 = por %p108, %p109
    %p111 = scmp.le.s32.totalorder 1, %s9
    %p112 = scmp.lt.s32.totalorder %s9, 3
    %p113 = pnand %p111, %p112
    %p114 = pneg %p113
    // Predicated region
    $region9: #{net_depthwise_forward.5} parent=5 // pred_check
      _
    $region10: #{net_depthwise_forward.5} parent=5 // pred_check_branch
      %116 = sbr.rel (%p113) target = $region12
    $region11: #{net_depthwise_forward.5} parent=5 // pred_region
      %s117 = ssub.s32 %s9, 1
      // Predicated region
      $region13: #{net_depthwise_forward.5} parent=11 // pred_check
        %p118 = pneg %p56
      $region14: #{net_depthwise_forward.5} parent=11 // pred_check_branch
        %120 = sbr.rel (%p118) target = $region16
      $region15: #{net_depthwise_forward.5} parent=11 // pred_region
        _
      $region16: #{net_depthwise_forward.5} parent=11 // pred_fallthru
        _
      // Predicated region
      $region17: #{net_depthwise_forward.5} parent=11 // pred_check
        %p121 = pneg %p77
      $region18: #{net_depthwise_forward.5} parent=11 // pred_check_branch
        %123 = sbr.rel (%p121) target = $region20
      $region19: #{net_depthwise_forward.5} parent=11 // pred_region
        _
      $region20: #{net_depthwise_forward.5} parent=11 // pred_fallthru
        _
    $region12: #{net_depthwise_forward.5} parent=5 // pred_fallthru
      _
    %p124 = scmp.lt.s32.totalorder %s9, 2
    // Predicated region
    $region21: #{net_depthwise_forward.5} parent=5 // pred_check
      %p125 = pneg %p124
    $region22: #{net_depthwise_forward.5} parent=5 // pred_check_branch
      %127 = sbr.rel (%p125) target = $region24
    $region23: #{net_depthwise_forward.5} parent=5 // pred_region
      // Predicated region
      $region25: #{net_depthwise_forward.5} parent=23 // pred_check
        %p128 = pneg %p29
      $region26: #{net_depthwise_forward.5} parent=23 // pred_check_branch
        %130 = sbr.rel (%p128) target = $region28
      $region27: #{net_depthwise_forward.5} parent=23 // pred_region
        %p131 = scmp.lt.s32.totalorder %s9, 1
        %s132 = scalar_select %p131, %s9, 1
        %s133 = smul.addr %s132, 32
        %s134 = smul.addr %s133, 4
        %s135 = scalar_lea.vmem %s0, %s134
      $region28: #{net_depthwise_forward.5} parent=23 // pred_fallthru
        _
    $region24: #{net_depthwise_forward.5} parent=5 // pred_fallthru
      _
    %p136 = scmp.le.s32.totalorder 1, %s9
    %p137 = scmp.lt.s32.totalorder %s9, 3
    %p138 = pnand %p136, %p137
    %p139 = pneg %p138
    // Predicated region
    $region29: #{net_depthwise_forward.5} parent=5 // pred_check
      _
    $region30: #{net_depthwise_forward.5} parent=5 // pred_check_branch
      %141 = sbr.rel (%p138) target = $region32
    $region31: #{net_depthwise_forward.5} parent=5 // pred_region
      %s142 = ssub.s32 %s9, 1
      %p143 = scmp.lt.s32.totalorder %s14, 1
      %s144 = scalar_select %p143, %s14, 1
      %s145 = smul.addr %s144, 32
      %s146 = smul.addr %s145, 4
      %s147 = scalar_lea.vmem %s0, %s146
      %p148 = pneg %p35
      %p149 = pneg %p32
      %p150 = pneg %p56
      %p151 = pneg %p53
      %p152 = pneg %p77
      %p153 = pneg %p74
      %p154 = pneg %p103
      %p155 = pneg %p100
      %p156 = scmp.lt.s32.totalorder %s14, 1
      %s157 = scalar_select %p156, %s14, 1
      %s158 = smul.addr %s157, 96
      %s159 = smul.addr %s158, 4
      %s160 = scalar_lea.vmem %s3, %s159
      %p161 = scmp.lt.s32.totalorder %s14, 1
      %s162 = scalar_select %p161, %s14, 1
      %s163 = smul.addr %s162, 32
      %s164 = smul.addr %s163, 4
      %s165 = scalar_lea.vmem %s0, %s164
      %p166 = scmp.lt.s32.totalorder %s14, 1
      %s167 = scalar_select %p166, %s14, 1
      %s168 = smul.addr %s167, 96
      %s169 = smul.addr %s168, 4
      %s170 = scalar_lea.vmem %s3, %s169
      %172 = vst [vmem:[#allocation2] sm:$0xff] 0.0
      %173 = vst [vmem:[#allocation2 + $0x8] sm:$0xff] 0.0
      %174 = vst [vmem:[#allocation2 + $0x10] sm:$0xff] 0.0
      %175 = vst [vmem:[#allocation2 + $0x18] sm:$0xff] 0.0
      %176 = vst [vmem:[#allocation2 + $0x20] sm:$0xff] 0.0
      %177 = vst [vmem:[#allocation2 + $0x28] sm:$0xff] 0.0
      %178 = vst [vmem:[#allocation2 + $0x30] sm:$0xff] 0.0
      %179 = vst [vmem:[#allocation2 + $0x38] sm:$0xff] 0.0
      %180 = vst [vmem:[#allocation2 + $0x40] sm:$0xff] 0.0
      %181 = vst [vmem:[#allocation2 + $0x48] sm:$0xff] 0.0
      %182 = vst [vmem:[#allocation2 + $0x50] sm:$0xff] 0.0
      %183 = vst [vmem:[#allocation2 + $0x58] sm:$0xff] 0.0
      %184 = vst [vmem:[#allocation2 + $0x60] sm:$0xff] 0.0
      %185 = vst [vmem:[#allocation2 + $0x68] sm:$0xff] 0.0
      %186 = vst [vmem:[#allocation2 + $0x70] sm:$0xff] 0.0
      %187 = vst [vmem:[#allocation2 + $0x78] sm:$0xff] 0.0
      %188 = vst [vmem:[#allocation2 + $0x80] sm:$0xff] 0.0
      %189 = vst [vmem:[#allocation2 + $0x88] sm:$0xff] 0.0
      %190 = vst [vmem:[#allocation2 + $0x90] sm:$0xff] 0.0
      %191 = vst [vmem:[#allocation2 + $0x98] sm:$0xff] 0.0
      %192 = vst [vmem:[#allocation2 + $0xa0] sm:$0xff] 0.0
      %193 = vst [vmem:[#allocation2 + $0xa8] sm:$0xff] 0.0
      %194 = vst [vmem:[#allocation2 + $0xb0] sm:$0xff] 0.0
      %195 = vst [vmem:[#allocation2 + $0xb8] sm:$0xff] 0.0
      %196 = vst [vmem:[#allocation2 + $0xc0] sm:$0xff] 0.0
      %197 = vst [vmem:[#allocation2 + $0xc8] sm:$0xff] 0.0
      %198 = vst [vmem:[#allocation2 + $0xd0] sm:$0xff] 0.0
      %199 = vst [vmem:[#allocation2 + $0xd8] sm:$0xff] 0.0
      %200 = vst [vmem:[#allocation2 + $0xe0] sm:$0xff] 0.0
      %201 = vst [vmem:[#allocation2 + $0xe8] sm:$0xff] 0.0
      %202 = vst [vmem:[#allocation2 + $0xf0] sm:$0xff] 0.0
      %203 = vst [vmem:[#allocation2 + $0xf8] sm:$0xff] 0.0
      %204 = vst [vmem:[#allocation2 + $0x100] sm:$0xff] 0.0
      %205 = vst [vmem:[#allocation2 + $0x108] sm:$0xff] 0.0
      %206 = vst [vmem:[#allocation2 + $0x110] sm:$0xff] 0.0
      %207 = vst [vmem:[#allocation2 + $0x118] sm:$0xff] 0.0
      %208 = vst [vmem:[#allocation2 + $0x120] sm:$0xff] 0.0
      %209 = vst [vmem:[#allocation2 + $0x128] sm:$0xff] 0.0
      %210 = vst [vmem:[#allocation2 + $0x130] sm:$0xff] 0.0
      %211 = vst [vmem:[#allocation2 + $0x138] sm:$0xff] 0.0
      %212 = vst [vmem:[#allocation2 + $0x140] sm:$0xff] 0.0
      %213 = vst [vmem:[#allocation2 + $0x148] sm:$0xff] 0.0
      %214 = vst [vmem:[#allocation2 + $0x150] sm:$0xff] 0.0
      %215 = vst [vmem:[#allocation2 + $0x158] sm:$0xff] 0.0
      %216 = vst [vmem:[#allocation2 + $0x160] sm:$0xff] 0.0
      %217 = vst [vmem:[#allocation2 + $0x168] sm:$0xff] 0.0
      %218 = vst [vmem:[#allocation2 + $0x170] sm:$0xff] 0.0
      %219 = vst [vmem:[#allocation2 + $0x178] sm:$0xff] 0.0
      %220 = vst [vmem:[#allocation2 + $0x180] sm:$0xff] 0.0
      %221 = vst [vmem:[#allocation2 + $0x188] sm:$0xff] 0.0
      %222 = vst [vmem:[#allocation2 + $0x190] sm:$0xff] 0.0
      %223 = vst [vmem:[#allocation2 + $0x198] sm:$0xff] 0.0
      %224 = vst [vmem:[#allocation2 + $0x1a0] sm:$0xff] 0.0
      %225 = vst [vmem:[#allocation2 + $0x1a8] sm:$0xff] 0.0
      %226 = vst [vmem:[#allocation2 + $0x1b0] sm:$0xff] 0.0
      %227 = vst [vmem:[#allocation2 + $0x1b8] sm:$0xff] 0.0
      %228 = vst [vmem:[#allocation2 + $0x1c0] sm:$0xff] 0.0
      %229 = vst [vmem:[#allocation2 + $0x1c8] sm:$0xff] 0.0
      %230 = vst [vmem:[#allocation2 + $0x1d0] sm:$0xff] 0.0
      %231 = vst [vmem:[#allocation2 + $0x1d8] sm:$0xff] 0.0
      %232 = vst [vmem:[#allocation2 + $0x1e0] sm:$0xff] 0.0
      %233 = vst [vmem:[#allocation2 + $0x1e8] sm:$0xff] 0.0
      %234 = vst [vmem:[#allocation2 + $0x1f0] sm:$0xff] 0.0
      %235 = vst [vmem:[#allocation2 + $0x1f8] sm:$0xff] 0.0
      %236 = vst [vmem:[#allocation2 + $0x200] sm:$0xff] 0.0
      %237 = vst [vmem:[#allocation2 + $0x208] sm:$0xff] 0.0
      %238 = vst [vmem:[#allocation2 + $0x210] sm:$0xff] 0.0
      %239 = vst [vmem:[#allocation2 + $0x218] sm:$0xff] 0.0
      %240 = vst [vmem:[#allocation2 + $0x220] sm:$0xff] 0.0
      %241 = vst [vmem:[#allocation2 + $0x228] sm:$0xff] 0.0
      %242 = vst [vmem:[#allocation2 + $0x230] sm:$0xff] 0.0
      %243 = vst [vmem:[#allocation2 + $0x238] sm:$0xff] 0.0
      %v244 = vld [vmem:[%s165] sm:$0xf]
      %v245 = vld [vmem:[%s165 + $0x4] sm:$0xf]
      %v246 = vld [vmem:[%s165 + $0x8] sm:$0xf]
      %v247 = vld [vmem:[%s165 + $0xc] sm:$0xf]
      %v248 = vld [vmem:[%s165 + $0x10] sm:$0xf]
      %v249 = vld [vmem:[%s165 + $0x14] sm:$0xf]
      %v250 = vld [vmem:[%s165 + $0x18] sm:$0xf]
      %v251 = vld [vmem:[%s165 + $0x1c] sm:$0xf]
      %v252 = vld [vmem:[%s165 + $0x20] sm:$0xf]
      %v253 = vld [vmem:[%s165 + $0x24] sm:$0xf]
      %v254 = vld [vmem:[%s165 + $0x28] sm:$0xf]
      %v255 = vld [vmem:[%s165 + $0x2c] sm:$0xf]
      %v256 = vld [vmem:[%s165 + $0x30] sm:$0xf]
      %v257 = vld [vmem:[%s165 + $0x34] sm:$0xf]
      %v258 = vld [vmem:[%s165 + $0x38] sm:$0xf]
      %v259 = vld [vmem:[%s165 + $0x3c] sm:$0xf]
      %v260 = vld [vmem:[%s165 + $0x40] sm:$0xf]
      %v261 = vld [vmem:[%s165 + $0x44] sm:$0xf]
      %v262 = vld [vmem:[%s165 + $0x48] sm:$0xf]
      %v263 = vld [vmem:[%s165 + $0x4c] sm:$0xf]
      %v264 = vld [vmem:[%s165 + $0x50] sm:$0xf]
      %v265 = vld [vmem:[%s165 + $0x54] sm:$0xf]
      %v266 = vld [vmem:[%s165 + $0x58] sm:$0xf]
      %v267 = vld [vmem:[%s165 + $0x5c] sm:$0xf]
      %v268 = vld [vmem:[%s165 + $0x60] sm:$0xf]
      %v269 = vld [vmem:[%s165 + $0x64] sm:$0xf]
      %v270 = vld [vmem:[%s165 + $0x68] sm:$0xf]
      %v271 = vld [vmem:[%s165 + $0x6c] sm:$0xf]
      %v272 = vld [vmem:[%s165 + $0x70] sm:$0xf]
      %v273 = vld [vmem:[%s165 + $0x74] sm:$0xf]
      %v274 = vld [vmem:[%s165 + $0x78] sm:$0xf]
      %v275 = vld [vmem:[%s165 + $0x7c] sm:$0xf]
      %v276 = vunpack.c.l.bf16 %v244
      %v277 = vunpack.c.l.bf16 %v245
      %v278 = vunpack.c.l.bf16 %v246
      %v279 = vunpack.c.l.bf16 %v247
      %v280 = vunpack.c.l.bf16 %v248
      %v281 = vunpack.c.l.bf16 %v249
      %v282 = vunpack.c.l.bf16 %v250
      %v283 = vunpack.c.l.bf16 %v251
      %v284 = vunpack.c.l.bf16 %v252
      %v285 = vunpack.c.l.bf16 %v253
      %v286 = vunpack.c.l.bf16 %v254
      %v287 = vunpack.c.l.bf16 %v255
      %v288 = vunpack.c.l.bf16 %v256
      %v289 = vunpack.c.l.bf16 %v257
      %v290 = vunpack.c.l.bf16 %v258
      %v291 = vunpack.c.l.bf16 %v259
      %v292 = vunpack.c.l.bf16 %v260
      %v293 = vunpack.c.l.bf16 %v261
      %v294 = vunpack.c.l.bf16 %v262
      %v295 = vunpack.c.l.bf16 %v263
      %v296 = vunpack.c.l.bf16 %v264
      %v297 = vunpack.c.l.bf16 %v265
      %v298 = vunpack.c.l.bf16 %v266
      %v299 = vunpack.c.l.bf16 %v267
      %v300 = vunpack.c.l.bf16 %v268
      %v301 = vunpack.c.l.bf16 %v269
      %v302 = vunpack.c.l.bf16 %v270
      %v303 = vunpack.c.l.bf16 %v271
      %v304 = vunpack.c.l.bf16 %v272
      %v305 = vunpack.c.l.bf16 %v273
      %v306 = vunpack.c.l.bf16 %v274
      %v307 = vunpack.c.l.bf16 %v275
      %s308 = scalar_lea.vmem [#allocation2], 32
      %309 = vst [vmem:[%s308 + $0x8] sm:$0xff] %v276
      %310 = vst [vmem:[%s308 + $0x10] sm:$0xff] %v277
      %311 = vst [vmem:[%s308 + $0x28] sm:$0xff] %v278
      %312 = vst [vmem:[%s308 + $0x30] sm:$0xff] %v279
      %313 = vst [vmem:[%s308 + $0x48] sm:$0xff] %v280
      %314 = vst [vmem:[%s308 + $0x50] sm:$0xff] %v281
      %315 = vst [vmem:[%s308 + $0x68] sm:$0xff] %v282
      %316 = vst [vmem:[%s308 + $0x70] sm:$0xff] %v283
      %317 = vst [vmem:[%s308 + $0x88] sm:$0xff] %v284
      %318 = vst [vmem:[%s308 + $0x90] sm:$0xff] %v285
      %319 = vst [vmem:[%s308 + $0xa8] sm:$0xff] %v286
      %320 = vst [vmem:[%s308 + $0xb0] sm:$0xff] %v287
      %321 = vst [vmem:[%s308 + $0xc8] sm:$0xff] %v288
      %322 = vst [vmem:[%s308 + $0xd0] sm:$0xff] %v289
      %323 = vst [vmem:[%s308 + $0xe8] sm:$0xff] %v290
      %324 = vst [vmem:[%s308 + $0xf0] sm:$0xff] %v291
      %325 = vst [vmem:[%s308 + $0x108] sm:$0xff] %v292
      %326 = vst [vmem:[%s308 + $0x110] sm:$0xff] %v293
      %327 = vst [vmem:[%s308 + $0x128] sm:$0xff] %v294
      %328 = vst [vmem:[%s308 + $0x130] sm:$0xff] %v295
      %329 = vst [vmem:[%s308 + $0x148] sm:$0xff] %v296
      %330 = vst [vmem:[%s308 + $0x150] sm:$0xff] %v297
      %331 = vst [vmem:[%s308 + $0x168] sm:$0xff] %v298
      %332 = vst [vmem:[%s308 + $0x170] sm:$0xff] %v299
      %333 = vst [vmem:[%s308 + $0x188] sm:$0xff] %v300
      %334 = vst [vmem:[%s308 + $0x190] sm:$0xff] %v301
      %335 = vst [vmem:[%s308 + $0x1a8] sm:$0xff] %v302
      %336 = vst [vmem:[%s308 + $0x1b0] sm:$0xff] %v303
      %337 = vst [vmem:[%s308 + $0x1c8] sm:$0xff] %v304
      %338 = vst [vmem:[%s308 + $0x1d0] sm:$0xff] %v305
      %339 = vst [vmem:[%s308 + $0x1e8] sm:$0xff] %v306
      %340 = vst [vmem:[%s308 + $0x1f0] sm:$0xff] %v307
      %v341 = vld [vmem:[%s1] sm:$0x7]
      %v342 = vld [vmem:[%s1 + $0x4] sm:$0x7]
      %v343 = vld [vmem:[%s1 + $0x8] sm:$0x7]
      %v344 = vld [vmem:[#allocation2 + $0x7] sm:$0xff]
      %v345 = vld [vmem:[#allocation2 + $0xf] sm:$0xff]
      %v346 = vld [vmem:[#allocation2 + $0x27] sm:$0xff]
      %v347 = vld [vmem:[#allocation2 + $0x2f] sm:$0xff]
      %v348 = vld [vmem:[#allocation2 + $0x47] sm:$0xff]
      %v349 = vld [vmem:[#allocation2 + $0x4f] sm:$0xff]
      %v350 = vld [vmem:[#allocation2 + $0x67] sm:$0xff]
      %v351 = vld [vmem:[#allocation2 + $0x6f] sm:$0xff]
      %v352 = vld [vmem:[#allocation2 + $0x87] sm:$0xff]
      %v353 = vld [vmem:[#allocation2 + $0x8f] sm:$0xff]
      %v354 = vld [vmem:[#allocation2 + $0xa7] sm:$0xff]
      %v355 = vld [vmem:[#allocation2 + $0xaf] sm:$0xff]
      %v356 = vld [vmem:[#allocation2 + $0xc7] sm:$0xff]
      %v357 = vld [vmem:[#allocation2 + $0xcf] sm:$0xff]
      %v358 = vld [vmem:[#allocation2 + $0xe7] sm:$0xff]
      %v359 = vld [vmem:[#allocation2 + $0xef] sm:$0xff]
      %v360 = vld [vmem:[#allocation2 + $0x107] sm:$0xff]
      %v361 = vld [vmem:[#allocation2 + $0x10f] sm:$0xff]
      %v362 = vld [vmem:[#allocation2 + $0x127] sm:$0xff]
      %v363 = vld [vmem:[#allocation2 + $0x12f] sm:$0xff]
      %v364 = vld [vmem:[#allocation2 + $0x147] sm:$0xff]
      %v365 = vld [vmem:[#allocation2 + $0x14f] sm:$0xff]
      %v366 = vld [vmem:[#allocation2 + $0x167] sm:$0xff]
      %v367 = vld [vmem:[#allocation2 + $0x16f] sm:$0xff]
      %v368 = vld [vmem:[#allocation2 + $0x187] sm:$0xff]
      %v369 = vld [vmem:[#allocation2 + $0x18f] sm:$0xff]
      %v370 = vld [vmem:[#allocation2 + $0x1a7] sm:$0xff]
      %v371 = vld [vmem:[#allocation2 + $0x1af] sm:$0xff]
      %v372 = vld [vmem:[#allocation2 + $0x1c7] sm:$0xff]
      %v373 = vld [vmem:[#allocation2 + $0x1cf] sm:$0xff]
      %v374 = vld [vmem:[#allocation2 + $0x1e7] sm:$0xff]
      %v375 = vld [vmem:[#allocation2 + $0x1ef] sm:$0xff]
      %v376 = vld [vmem:[#allocation2 + $0x207] sm:$0xff]
      %v377 = vld [vmem:[#allocation2 + $0x20f] sm:$0xff]
      %v378 = vld [vmem:[#allocation2 + $0x227] sm:$0xff]
      %v379 = vld [vmem:[#allocation2 + $0x22f] sm:$0xff]
      %v380 = vld [vmem:[#allocation2 + $0x8] sm:$0xff]
      %v381 = vld [vmem:[#allocation2 + $0x10] sm:$0xff]
      %v382 = vld [vmem:[#allocation2 + $0x28] sm:$0xff]
      %v383 = vld [vmem:[#allocation2 + $0x30] sm:$0xff]
      %v384 = vld [vmem:[#allocation2 + $0x48] sm:$0xff]
      %v385 = vld [vmem:[#allocation2 + $0x50] sm:$0xff]
      %v386 = vld [vmem:[#allocation2 + $0x68] sm:$0xff]
      %v387 = vld [vmem:[#allocation2 + $0x70] sm:$0xff]
      %v388 = vld [vmem:[#allocation2 + $0x88] sm:$0xff]
      %v389 = vld [vmem:[#allocation2 + $0x90] sm:$0xff]
      %v390 = vld [vmem:[#allocation2 + $0xa8] sm:$0xff]
      %v391 = vld [vmem:[#allocation2 + $0xb0] sm:$0xff]
      %v392 = vld [vmem:[#allocation2 + $0xc8] sm:$0xff]
      %v393 = vld [vmem:[#allocation2 + $0xd0] sm:$0xff]
      %v394 = vld [vmem:[#allocation2 + $0xe8] sm:$0xff]
      %v395 = vld [vmem:[#allocation2 + $0xf0] sm:$0xff]
      %v396 = vld [vmem:[#allocation2 + $0x108] sm:$0xff]
      %v397 = vld [vmem:[#allocation2 + $0x110] sm:$0xff]
      %v398 = vld [vmem:[#allocation2 + $0x128] sm:$0xff]
      %v399 = vld [vmem:[#allocation2 + $0x130] sm:$0xff]
      %v400 = vld [vmem:[#allocation2 + $0x148] sm:$0xff]
      %v401 = vld [vmem:[#allocation2 + $0x150] sm:$0xff]
      %v402 = vld [vmem:[#allocation2 + $0x168] sm:$0xff]
      %v403 = vld [vmem:[#allocation2 + $0x170] sm:$0xff]
      %v404 = vld [vmem:[#allocation2 + $0x188] sm:$0xff]
      %v405 = vld [vmem:[#allocation2 + $0x190] sm:$0xff]
      %v406 = vld [vmem:[#allocation2 + $0x1a8] sm:$0xff]
      %v407 = vld [vmem:[#allocation2 + $0x1b0] sm:$0xff]
      %v408 = vld [vmem:[#allocation2 + $0x1c8] sm:$0xff]
      %v409 = vld [vmem:[#allocation2 + $0x1d0] sm:$0xff]
      %v410 = vld [vmem:[#allocation2 + $0x1e8] sm:$0xff]
      %v411 = vld [vmem:[#allocation2 + $0x1f0] sm:$0xff]
      %v412 = vld [vmem:[#allocation2 + $0x208] sm:$0xff]
      %v413 = vld [vmem:[#allocation2 + $0x210] sm:$0xff]
      %v414 = vld [vmem:[#allocation2 + $0x228] sm:$0xff]
      %v415 = vld [vmem:[#allocation2 + $0x230] sm:$0xff]
      %v416 = vld [vmem:[#allocation2 + $0x9] sm:$0xff]
      %v417 = vld [vmem:[#allocation2 + $0x11] sm:$0xff]
      %v418 = vld [vmem:[#allocation2 + $0x29] sm:$0xff]
      %v419 = vld [vmem:[#allocation2 + $0x31] sm:$0xff]
      %v420 = vld [vmem:[#allocation2 + $0x49] sm:$0xff]
      %v421 = vld [vmem:[#allocation2 + $0x51] sm:$0xff]
      %v422 = vld [vmem:[#allocation2 + $0x69] sm:$0xff]
      %v423 = vld [vmem:[#allocation2 + $0x71] sm:$0xff]
      %v424 = vld [vmem:[#allocation2 + $0x89] sm:$0xff]
      %v425 = vld [vmem:[#allocation2 + $0x91] sm:$0xff]
      %v426 = vld [vmem:[#allocation2 + $0xa9] sm:$0xff]
      %v427 = vld [vmem:[#allocation2 + $0xb1] sm:$0xff]
      %v428 = vld [vmem:[#allocation2 + $0xc9] sm:$0xff]
      %v429 = vld [vmem:[#allocation2 + $0xd1] sm:$0xff]
      %v430 = vld [vmem:[#allocation2 + $0xe9] sm:$0xff]
      %v431 = vld [vmem:[#allocation2 + $0xf1] sm:$0xff]
      %v432 = vld [vmem:[#allocation2 + $0x109] sm:$0xff]
      %v433 = vld [vmem:[#allocation2 + $0x111] sm:$0xff]
      %v434 = vld [vmem:[#allocation2 + $0x129] sm:$0xff]
      %v435 = vld [vmem:[#allocation2 + $0x131] sm:$0xff]
      %v436 = vld [vmem:[#allocation2 + $0x149] sm:$0xff]
      %v437 = vld [vmem:[#allocation2 + $0x151] sm:$0xff]
      %v438 = vld [vmem:[#allocation2 + $0x169] sm:$0xff]
      %v439 = vld [vmem:[#allocation2 + $0x171] sm:$0xff]
      %v440 = vld [vmem:[#allocation2 + $0x189] sm:$0xff]
      %v441 = vld [vmem:[#allocation2 + $0x191] sm:$0xff]
      %v442 = vld [vmem:[#allocation2 + $0x1a9] sm:$0xff]
      %v443 = vld [vmem:[#allocation2 + $0x1b1] sm:$0xff]
      %v444 = vld [vmem:[#allocation2 + $0x1c9] sm:$0xff]
      %v445 = vld [vmem:[#allocation2 + $0x1d1] sm:$0xff]
      %v446 = vld [vmem:[#allocation2 + $0x1e9] sm:$0xff]
      %v447 = vld [vmem:[#allocation2 + $0x1f1] sm:$0xff]
      %v448 = vld [vmem:[#allocation2 + $0x209] sm:$0xff]
      %v449 = vld [vmem:[#allocation2 + $0x211] sm:$0xff]
      %v450 = vld [vmem:[#allocation2 + $0x229] sm:$0xff]
      %v451 = vld [vmem:[#allocation2 + $0x231] sm:$0xff]
      %v452 = vlaneseq
      %v453 = vshrl.u32 %v452, 7
      %v454 = vsub.s32 0, %v453
      %v455 = vrot.slane %v341, %v454
      %v456 = vmul.f32 %v344, %v455
      %v457 = vmul.f32 %v345, %v455
      %v458 = vmul.f32 %v346, %v455
      %v459 = vmul.f32 %v347, %v455
      %v460 = vmul.f32 %v348, %v455
      %v461 = vmul.f32 %v349, %v455
      %v462 = vmul.f32 %v350, %v455
      %v463 = vmul.f32 %v351, %v455
      %v464 = vmul.f32 %v352, %v455
      %v465 = vmul.f32 %v353, %v455
      %v466 = vmul.f32 %v354, %v455
      %v467 = vmul.f32 %v355, %v455
      %v468 = vmul.f32 %v356, %v455
      %v469 = vmul.f32 %v357, %v455
      %v470 = vmul.f32 %v358, %v455
      %v471 = vmul.f32 %v359, %v455
      %v472 = vmul.f32 %v360, %v455
      %v473 = vmul.f32 %v361, %v455
      %v474 = vmul.f32 %v362, %v455
      %v475 = vmul.f32 %v363, %v455
      %v476 = vmul.f32 %v364, %v455
      %v477 = vmul.f32 %v365, %v455
      %v478 = vmul.f32 %v366, %v455
      %v479 = vmul.f32 %v367, %v455
      %v480 = vmul.f32 %v368, %v455
      %v481 = vmul.f32 %v369, %v455
      %v482 = vmul.f32 %v370, %v455
      %v483 = vmul.f32 %v371, %v455
      %v484 = vmul.f32 %v372, %v455
      %v485 = vmul.f32 %v373, %v455
      %v486 = vmul.f32 %v374, %v455
      %v487 = vmul.f32 %v375, %v455
      %v488 = vlaneseq
      %v489 = vshrl.u32 %v488, 7
      %v490 = vsub.s32 0, %v489
      %v491 = vrot.slane %v342, %v490
      %v492 = vmul.f32 %v346, %v491
      %v493 = vmul.f32 %v347, %v491
      %v494 = vmul.f32 %v348, %v491
      %v495 = vmul.f32 %v349, %v491
      %v496 = vmul.f32 %v350, %v491
      %v497 = vmul.f32 %v351, %v491
      %v498 = vmul.f32 %v352, %v491
      %v499 = vmul.f32 %v353, %v491
      %v500 = vmul.f32 %v354, %v491
      %v501 = vmul.f32 %v355, %v491
      %v502 = vmul.f32 %v356, %v491
      %v503 = vmul.f32 %v357, %v491
      %v504 = vmul.f32 %v358, %v491
      %v505 = vmul.f32 %v359, %v491
      %v506 = vmul.f32 %v360, %v491
      %v507 = vmul.f32 %v361, %v491
      %v508 = vmul.f32 %v362, %v491
      %v509 = vmul.f32 %v363, %v491
      %v510 = vmul.f32 %v364, %v491
      %v511 = vmul.f32 %v365, %v491
      %v512 = vmul.f32 %v366, %v491
      %v513 = vmul.f32 %v367, %v491
      %v514 = vmul.f32 %v368, %v491
      %v515 = vmul.f32 %v369, %v491
      %v516 = vmul.f32 %v370, %v491
      %v517 = vmul.f32 %v371, %v491
      %v518 = vmul.f32 %v372, %v491
      %v519 = vmul.f32 %v373, %v491
      %v520 = vmul.f32 %v374, %v491
      %v521 = vmul.f32 %v375, %v491
      %v522 = vmul.f32 %v376, %v491
      %v523 = vmul.f32 %v377, %v491
      %v524 = vadd.f32 %v456, %v492
      %v525 = vadd.f32 %v457, %v493
      %v526 = vadd.f32 %v458, %v494
      %v527 = vadd.f32 %v459, %v495
      %v528 = vadd.f32 %v460, %v496
      %v529 = vadd.f32 %v461, %v497
      %v530 = vadd.f32 %v462, %v498
      %v531 = vadd.f32 %v463, %v499
      %v532 = vadd.f32 %v464, %v500
      %v533 = vadd.f32 %v465, %v501
      %v534 = vadd.f32 %v466, %v502
      %v535 = vadd.f32 %v467, %v503
      %v536 = vadd.f32 %v468, %v504
      %v537 = vadd.f32 %v469, %v505
      %v538 = vadd.f32 %v470, %v506
      %v539 = vadd.f32 %v471, %v507
      %v540 = vadd.f32 %v472, %v508
      %v541 = vadd.f32 %v473, %v509
      %v542 = vadd.f32 %v474, %v510
      %v543 = vadd.f32 %v475, %v511
      %v544 = vadd.f32 %v476, %v512
      %v545 = vadd.f32 %v477, %v513
      %v546 = vadd.f32 %v478, %v514
      %v547 = vadd.f32 %v479, %v515
      %v548 = vadd.f32 %v480, %v516
      %v549 = vadd.f32 %v481, %v517
      %v550 = vadd.f32 %v482, %v518
      %v551 = vadd.f32 %v483, %v519
      %v552 = vadd.f32 %v484, %v520
      %v553 = vadd.f32 %v485, %v521
      %v554 = vadd.f32 %v486, %v522
      %v555 = vadd.f32 %v487, %v523
      %v556 = vlaneseq
      %v557 = vshrl.u32 %v556, 7
      %v558 = vsub.s32 0, %v557
      %v559 = vrot.slane %v343, %v558
      %v560 = vmul.f32 %v348, %v559
      %v561 = vmul.f32 %v349, %v559
      %v562 = vmul.f32 %v350, %v559
      %v563 = vmul.f32 %v351, %v559
      %v564 = vmul.f32 %v352, %v559
      %v565 = vmul.f32 %v353, %v559
      %v566 = vmul.f32 %v354, %v559
      %v567 = vmul.f32 %v355, %v559
      %v568 = vmul.f32 %v356, %v559
      %v569 = vmul.f32 %v357, %v559
      %v570 = vmul.f32 %v358, %v559
      %v571 = vmul.f32 %v359, %v559
      %v572 = vmul.f32 %v360, %v559
      %v573 = vmul.f32 %v361, %v559
      %v574 = vmul.f32 %v362, %v559
      %v575 = vmul.f32 %v363, %v559
      %v576 = vmul.f32 %v364, %v559
      %v577 = vmul.f32 %v365, %v559
      %v578 = vmul.f32 %v366, %v559
      %v579 = vmul.f32 %v367, %v559
      %v580 = vmul.f32 %v368, %v559
      %v581 = vmul.f32 %v369, %v559
      %v582 = vmul.f32 %v370, %v559
      %v583 = vmul.f32 %v371, %v559
      %v584 = vmul.f32 %v372, %v559
      %v585 = vmul.f32 %v373, %v559
      %v586 = vmul.f32 %v374, %v559
      %v587 = vmul.f32 %v375, %v559
      %v588 = vmul.f32 %v376, %v559
      %v589 = vmul.f32 %v377, %v559
      %v590 = vmul.f32 %v378, %v559
      %v591 = vmul.f32 %v379, %v559
      %v592 = vadd.f32 %v524, %v560
      %v593 = vadd.f32 %v525, %v561
      %v594 = vadd.f32 %v526, %v562
      %v595 = vadd.f32 %v527, %v563
      %v596 = vadd.f32 %v528, %v564
      %v597 = vadd.f32 %v529, %v565
      %v598 = vadd.f32 %v530, %v566
      %v599 = vadd.f32 %v531, %v567
      %v600 = vadd.f32 %v532, %v568
      %v601 = vadd.f32 %v533, %v569
      %v602 = vadd.f32 %v534, %v570
      %v603 = vadd.f32 %v535, %v571
      %v604 = vadd.f32 %v536, %v572
      %v605 = vadd.f32 %v537, %v573
      %v606 = vadd.f32 %v538, %v574
      %v607 = vadd.f32 %v539, %v575
      %v608 = vadd.f32 %v540, %v576
      %v609 = vadd.f32 %v541, %v577
      %v610 = vadd.f32 %v542, %v578
      %v611 = vadd.f32 %v543, %v579
      %v612 = vadd.f32 %v544, %v580
      %v613 = vadd.f32 %v545, %v581
      %v614 = vadd.f32 %v546, %v582
      %v615 = vadd.f32 %v547, %v583
      %v616 = vadd.f32 %v548, %v584
      %v617 = vadd.f32 %v549, %v585
      %v618 = vadd.f32 %v550, %v586
      %v619 = vadd.f32 %v551, %v587
      %v620 = vadd.f32 %v552, %v588
      %v621 = vadd.f32 %v553, %v589
      %v622 = vadd.f32 %v554, %v590
      %v623 = vadd.f32 %v555, %v591
      %v624 = vlaneseq
      %v625 = vshrl.u32 %v624, 7
      %v626 = vsub.s32 1, %v625
      %v627 = vrot.slane %v341, %v626
      %v628 = vmul.f32 %v380, %v627
      %v629 = vmul.f32 %v381, %v627
      %v630 = vmul.f32 %v382, %v627
      %v631 = vmul.f32 %v383, %v627
      %v632 = vmul.f32 %v384, %v627
      %v633 = vmul.f32 %v385, %v627
      %v634 = vmul.f32 %v386, %v627
      %v635 = vmul.f32 %v387, %v627
      %v636 = vmul.f32 %v388, %v627
      %v637 = vmul.f32 %v389, %v627
      %v638 = vmul.f32 %v390, %v627
      %v639 = vmul.f32 %v391, %v627
      %v640 = vmul.f32 %v392, %v627
      %v641 = vmul.f32 %v393, %v627
      %v642 = vmul.f32 %v394, %v627
      %v643 = vmul.f32 %v395, %v627
      %v644 = vmul.f32 %v396, %v627
      %v645 = vmul.f32 %v397, %v627
      %v646 = vmul.f32 %v398, %v627
      %v647 = vmul.f32 %v399, %v627
      %v648 = vmul.f32 %v400, %v627
      %v649 = vmul.f32 %v401, %v627
      %v650 = vmul.f32 %v402, %v627
      %v651 = vmul.f32 %v403, %v627
      %v652 = vmul.f32 %v404, %v627
      %v653 = vmul.f32 %v405, %v627
      %v654 = vmul.f32 %v406, %v627
      %v655 = vmul.f32 %v407, %v627
      %v656 = vmul.f32 %v408, %v627
      %v657 = vmul.f32 %v409, %v627
      %v658 = vmul.f32 %v410, %v627
      %v659 = vmul.f32 %v411, %v627
      %v660 = vlaneseq
      %v661 = vshrl.u32 %v660, 7
      %v662 = vsub.s32 1, %v661
      %v663 = vrot.slane %v342, %v662
      %v664 = vmul.f32 %v382, %v663
      %v665 = vmul.f32 %v383, %v663
      %v666 = vmul.f32 %v384, %v663
      %v667 = vmul.f32 %v385, %v663
      %v668 = vmul.f32 %v386, %v663
      %v669 = vmul.f32 %v387, %v663
      %v670 = vmul.f32 %v388, %v663
      %v671 = vmul.f32 %v389, %v663
      %v672 = vmul.f32 %v390, %v663
      %v673 = vmul.f32 %v391, %v663
      %v674 = vmul.f32 %v392, %v663
      %v675 = vmul.f32 %v393, %v663
      %v676 = vmul.f32 %v394, %v663
      %v677 = vmul.f32 %v395, %v663
      %v678 = vmul.f32 %v396, %v663
      %v679 = vmul.f32 %v397, %v663
      %v680 = vmul.f32 %v398, %v663
      %v681 = vmul.f32 %v399, %v663
      %v682 = vmul.f32 %v400, %v663
      %v683 = vmul.f32 %v401, %v663
      %v684 = vmul.f32 %v402, %v663
      %v685 = vmul.f32 %v403, %v663
      %v686 = vmul.f32 %v404, %v663
      %v687 = vmul.f32 %v405, %v663
      %v688 = vmul.f32 %v406, %v663
      %v689 = vmul.f32 %v407, %v663
      %v690 = vmul.f32 %v408, %v663
      %v691 = vmul.f32 %v409, %v663
      %v692 = vmul.f32 %v410, %v663
      %v693 = vmul.f32 %v411, %v663
      %v694 = vmul.f32 %v412, %v663
      %v695 = vmul.f32 %v413, %v663
      %v696 = vadd.f32 %v628, %v664
      %v697 = vadd.f32 %v629, %v665
      %v698 = vadd.f32 %v630, %v666
      %v699 = vadd.f32 %v631, %v667
      %v700 = vadd.f32 %v632, %v668
      %v701 = vadd.f32 %v633, %v669
      %v702 = vadd.f32 %v634, %v670
      %v703 = vadd.f32 %v635, %v671
      %v704 = vadd.f32 %v636, %v672
      %v705 = vadd.f32 %v637, %v673
      %v706 = vadd.f32 %v638, %v674
      %v707 = vadd.f32 %v639, %v675
      %v708 = vadd.f32 %v640, %v676
      %v709 = vadd.f32 %v641, %v677
      %v710 = vadd.f32 %v642, %v678
      %v711 = vadd.f32 %v643, %v679
      %v712 = vadd.f32 %v644, %v680
      %v713 = vadd.f32 %v645, %v681
      %v714 = vadd.f32 %v646, %v682
      %v715 = vadd.f32 %v647, %v683
      %v716 = vadd.f32 %v648, %v684
      %v717 = vadd.f32 %v649, %v685
      %v718 = vadd.f32 %v650, %v686
      %v719 = vadd.f32 %v651, %v687
      %v720 = vadd.f32 %v652, %v688
      %v721 = vadd.f32 %v653, %v689
      %v722 = vadd.f32 %v654, %v690
      %v723 = vadd.f32 %v655, %v691
      %v724 = vadd.f32 %v656, %v692
      %v725 = vadd.f32 %v657, %v693
      %v726 = vadd.f32 %v658, %v694
      %v727 = vadd.f32 %v659, %v695
      %v728 = vlaneseq
      %v729 = vshrl.u32 %v728, 7
      %v730 = vsub.s32 1, %v729
      %v731 = vrot.slane %v343, %v730
      %v732 = vmul.f32 %v384, %v731
      %v733 = vmul.f32 %v385, %v731
      %v734 = vmul.f32 %v386, %v731
      %v735 = vmul.f32 %v387, %v731
      %v736 = vmul.f32 %v388, %v731
      %v737 = vmul.f32 %v389, %v731
      %v738 = vmul.f32 %v390, %v731
      %v739 = vmul.f32 %v391, %v731
      %v740 = vmul.f32 %v392, %v731
      %v741 = vmul.f32 %v393, %v731
      %v742 = vmul.f32 %v394, %v731
      %v743 = vmul.f32 %v395, %v731
      %v744 = vmul.f32 %v396, %v731
      %v745 = vmul.f32 %v397, %v731
      %v746 = vmul.f32 %v398, %v731
      %v747 = vmul.f32 %v399, %v731
      %v748 = vmul.f32 %v400, %v731
      %v749 = vmul.f32 %v401, %v731
      %v750 = vmul.f32 %v402, %v731
      %v751 = vmul.f32 %v403, %v731
      %v752 = vmul.f32 %v404, %v731
      %v753 = vmul.f32 %v405, %v731
      %v754 = vmul.f32 %v406, %v731
      %v755 = vmul.f32 %v407, %v731
      %v756 = vmul.f32 %v408, %v731
      %v757 = vmul.f32 %v409, %v731
      %v758 = vmul.f32 %v410, %v731
      %v759 = vmul.f32 %v411, %v731
      %v760 = vmul.f32 %v412, %v731
      %v761 = vmul.f32 %v413, %v731
      %v762 = vmul.f32 %v414, %v731
      %v763 = vmul.f32 %v415, %v731
      %v764 = vadd.f32 %v696, %v732
      %v765 = vadd.f32 %v697, %v733
      %v766 = vadd.f32 %v698, %v734
      %v767 = vadd.f32 %v699, %v735
      %v768 = vadd.f32 %v700, %v736
      %v769 = vadd.f32 %v701, %v737
      %v770 = vadd.f32 %v702, %v738
      %v771 = vadd.f32 %v703, %v739
      %v772 = vadd.f32 %v704, %v740
      %v773 = vadd.f32 %v705, %v741
      %v774 = vadd.f32 %v706, %v742
      %v775 = vadd.f32 %v707, %v743
      %v776 = vadd.f32 %v708, %v744
      %v777 = vadd.f32 %v709, %v745
      %v778 = vadd.f32 %v710, %v746
      %v779 = vadd.f32 %v711, %v747
      %v780 = vadd.f32 %v712, %v748
      %v781 = vadd.f32 %v713, %v749
      %v782 = vadd.f32 %v714, %v750
      %v783 = vadd.f32 %v715, %v751
      %v784 = vadd.f32 %v716, %v752
      %v785 = vadd.f32 %v717, %v753
      %v786 = vadd.f32 %v718, %v754
      %v787 = vadd.f32 %v719, %v755
      %v788 = vadd.f32 %v720, %v756
      %v789 = vadd.f32 %v721, %v757
      %v790 = vadd.f32 %v722, %v758
      %v791 = vadd.f32 %v723, %v759
      %v792 = vadd.f32 %v724, %v760
      %v793 = vadd.f32 %v725, %v761
      %v794 = vadd.f32 %v726, %v762
      %v795 = vadd.f32 %v727, %v763
      %v796 = vlaneseq
      %v797 = vshrl.u32 %v796, 7
      %v798 = vsub.s32 2, %v797
      %v799 = vrot.slane %v341, %v798
      %v800 = vmul.f32 %v416, %v799
      %v801 = vmul.f32 %v417, %v799
      %v802 = vmul.f32 %v418, %v799
      %v803 = vmul.f32 %v419, %v799
      %v804 = vmul.f32 %v420, %v799
      %v805 = vmul.f32 %v421, %v799
      %v806 = vmul.f32 %v422, %v799
      %v807 = vmul.f32 %v423, %v799
      %v808 = vmul.f32 %v424, %v799
      %v809 = vmul.f32 %v425, %v799
      %v810 = vmul.f32 %v426, %v799
      %v811 = vmul.f32 %v427, %v799
      %v812 = vmul.f32 %v428, %v799
      %v813 = vmul.f32 %v429, %v799
      %v814 = vmul.f32 %v430, %v799
      %v815 = vmul.f32 %v431, %v799
      %v816 = vmul.f32 %v432, %v799
      %v817 = vmul.f32 %v433, %v799
      %v818 = vmul.f32 %v434, %v799
      %v819 = vmul.f32 %v435, %v799
      %v820 = vmul.f32 %v436, %v799
      %v821 = vmul.f32 %v437, %v799
      %v822 = vmul.f32 %v438, %v799
      %v823 = vmul.f32 %v439, %v799
      %v824 = vmul.f32 %v440, %v799
      %v825 = vmul.f32 %v441, %v799
      %v826 = vmul.f32 %v442, %v799
      %v827 = vmul.f32 %v443, %v799
      %v828 = vmul.f32 %v444, %v799
      %v829 = vmul.f32 %v445, %v799
      %v830 = vmul.f32 %v446, %v799
      %v831 = vmul.f32 %v447, %v799
      %v832 = vlaneseq
      %v833 = vshrl.u32 %v832, 7
      %v834 = vsub.s32 2, %v833
      %v835 = vrot.slane %v342, %v834
      %v836 = vmul.f32 %v418, %v835
      %v837 = vmul.f32 %v419, %v835
      %v838 = vmul.f32 %v420, %v835
      %v839 = vmul.f32 %v421, %v835
      %v840 = vmul.f32 %v422, %v835
      %v841 = vmul.f32 %v423, %v835
      %v842 = vmul.f32 %v424, %v835
      %v843 = vmul.f32 %v425, %v835
      %v844 = vmul.f32 %v426, %v835
      %v845 = vmul.f32 %v427, %v835
      %v846 = vmul.f32 %v428, %v835
      %v847 = vmul.f32 %v429, %v835
      %v848 = vmul.f32 %v430, %v835
      %v849 = vmul.f32 %v431, %v835
      %v850 = vmul.f32 %v432, %v835
      %v851 = vmul.f32 %v433, %v835
      %v852 = vmul.f32 %v434, %v835
      %v853 = vmul.f32 %v435, %v835
      %v854 = vmul.f32 %v436, %v835
      %v855 = vmul.f32 %v437, %v835
      %v856 = vmul.f32 %v438, %v835
      %v857 = vmul.f32 %v439, %v835
      %v858 = vmul.f32 %v440, %v835
      %v859 = vmul.f32 %v441, %v835
      %v860 = vmul.f32 %v442, %v835
      %v861 = vmul.f32 %v443, %v835
      %v862 = vmul.f32 %v444, %v835
      %v863 = vmul.f32 %v445, %v835
      %v864 = vmul.f32 %v446, %v835
      %v865 = vmul.f32 %v447, %v835
      %v866 = vmul.f32 %v448, %v835
      %v867 = vmul.f32 %v449, %v835
      %v868 = vadd.f32 %v800, %v836
      %v869 = vadd.f32 %v801, %v837
      %v870 = vadd.f32 %v802, %v838
      %v871 = vadd.f32 %v803, %v839
      %v872 = vadd.f32 %v804, %v840
      %v873 = vadd.f32 %v805, %v841
      %v874 = vadd.f32 %v806, %v842
      %v875 = vadd.f32 %v807, %v843
      %v876 = vadd.f32 %v808, %v844
      %v877 = vadd.f32 %v809, %v845
      %v878 = vadd.f32 %v810, %v846
      %v879 = vadd.f32 %v811, %v847
      %v880 = vadd.f32 %v812, %v848
      %v881 = vadd.f32 %v813, %v849
      %v882 = vadd.f32 %v814, %v850
      %v883 = vadd.f32 %v815, %v851
      %v884 = vadd.f32 %v816, %v852
      %v885 = vadd.f32 %v817, %v853
      %v886 = vadd.f32 %v818, %v854
      %v887 = vadd.f32 %v819, %v855
      %v888 = vadd.f32 %v820, %v856
      %v889 = vadd.f32 %v821, %v857
      %v890 = vadd.f32 %v822, %v858
      %v891 = vadd.f32 %v823, %v859
      %v892 = vadd.f32 %v824, %v860
      %v893 = vadd.f32 %v825, %v861
      %v894 = vadd.f32 %v826, %v862
      %v895 = vadd.f32 %v827, %v863
      %v896 = vadd.f32 %v828, %v864
      %v897 = vadd.f32 %v829, %v865
      %v898 = vadd.f32 %v830, %v866
      %v899 = vadd.f32 %v831, %v867
      %v900 = vlaneseq
      %v901 = vshrl.u32 %v900, 7
      %v902 = vsub.s32 2, %v901
      %v903 = vrot.slane %v343, %v902
      %v904 = vmul.f32 %v420, %v903
      %v905 = vmul.f32 %v421, %v903
      %v906 = vmul.f32 %v422, %v903
      %v907 = vmul.f32 %v423, %v903
      %v908 = vmul.f32 %v424, %v903
      %v909 = vmul.f32 %v425, %v903
      %v910 = vmul.f32 %v426, %v903
      %v911 = vmul.f32 %v427, %v903
      %v912 = vmul.f32 %v428, %v903
      %v913 = vmul.f32 %v429, %v903
      %v914 = vmul.f32 %v430, %v903
      %v915 = vmul.f32 %v431, %v903
      %v916 = vmul.f32 %v432, %v903
      %v917 = vmul.f32 %v433, %v903
      %v918 = vmul.f32 %v434, %v903
      %v919 = vmul.f32 %v435, %v903
      %v920 = vmul.f32 %v436, %v903
      %v921 = vmul.f32 %v437, %v903
      %v922 = vmul.f32 %v438, %v903
      %v923 = vmul.f32 %v439, %v903
      %v924 = vmul.f32 %v440, %v903
      %v925 = vmul.f32 %v441, %v903
      %v926 = vmul.f32 %v442, %v903
      %v927 = vmul.f32 %v443, %v903
      %v928 = vmul.f32 %v444, %v903
      %v929 = vmul.f32 %v445, %v903
      %v930 = vmul.f32 %v446, %v903
      %v931 = vmul.f32 %v447, %v903
      %v932 = vmul.f32 %v448, %v903
      %v933 = vmul.f32 %v449, %v903
      %v934 = vmul.f32 %v450, %v903
      %v935 = vmul.f32 %v451, %v903
      %v936 = vadd.f32 %v868, %v904
      %v937 = vadd.f32 %v869, %v905
      %v938 = vadd.f32 %v870, %v906
      %v939 = vadd.f32 %v871, %v907
      %v940 = vadd.f32 %v872, %v908
      %v941 = vadd.f32 %v873, %v909
      %v942 = vadd.f32 %v874, %v910
      %v943 = vadd.f32 %v875, %v911
      %v944 = vadd.f32 %v876, %v912
      %v945 = vadd.f32 %v877, %v913
      %v946 = vadd.f32 %v878, %v914
      %v947 = vadd.f32 %v879, %v915
      %v948 = vadd.f32 %v880, %v916
      %v949 = vadd.f32 %v881, %v917
      %v950 = vadd.f32 %v882, %v918
      %v951 = vadd.f32 %v883, %v919
      %v952 = vadd.f32 %v884, %v920
      %v953 = vadd.f32 %v885, %v921
      %v954 = vadd.f32 %v886, %v922
      %v955 = vadd.f32 %v887, %v923
      %v956 = vadd.f32 %v888, %v924
      %v957 = vadd.f32 %v889, %v925
      %v958 = vadd.f32 %v890, %v926
      %v959 = vadd.f32 %v891, %v927
      %v960 = vadd.f32 %v892, %v928
      %v961 = vadd.f32 %v893, %v929
      %v962 = vadd.f32 %v894, %v930
      %v963 = vadd.f32 %v895, %v931
      %v964 = vadd.f32 %v896, %v932
      %v965 = vadd.f32 %v897, %v933
      %v966 = vadd.f32 %v898, %v934
      %v967 = vadd.f32 %v899, %v935
      %v968 = vadd.f32 %v592, %v764
      %v969 = vadd.f32 %v593, %v765
      %v970 = vadd.f32 %v594, %v766
      %v971 = vadd.f32 %v595, %v767
      %v972 = vadd.f32 %v596, %v768
      %v973 = vadd.f32 %v597, %v769
      %v974 = vadd.f32 %v598, %v770
      %v975 = vadd.f32 %v599, %v771
      %v976 = vadd.f32 %v600, %v772
      %v977 = vadd.f32 %v601, %v773
      %v978 = vadd.f32 %v602, %v774
      %v979 = vadd.f32 %v603, %v775
      %v980 = vadd.f32 %v604, %v776
      %v981 = vadd.f32 %v605, %v777
      %v982 = vadd.f32 %v606, %v778
      %v983 = vadd.f32 %v607, %v779
      %v984 = vadd.f32 %v608, %v780
      %v985 = vadd.f32 %v609, %v781
      %v986 = vadd.f32 %v610, %v782
      %v987 = vadd.f32 %v611, %v783
      %v988 = vadd.f32 %v612, %v784
      %v989 = vadd.f32 %v613, %v785
      %v990 = vadd.f32 %v614, %v786
      %v991 = vadd.f32 %v615, %v787
      %v992 = vadd.f32 %v616, %v788
      %v993 = vadd.f32 %v617, %v789
      %v994 = vadd.f32 %v618, %v790
      %v995 = vadd.f32 %v619, %v791
      %v996 = vadd.f32 %v620, %v792
      %v997 = vadd.f32 %v621, %v793
      %v998 = vadd.f32 %v622, %v794
      %v999 = vadd.f32 %v623, %v795
      %v1000 = vadd.f32 %v968, %v936
      %v1001 = vadd.f32 %v969, %v937
      %v1002 = vadd.f32 %v970, %v938
      %v1003 = vadd.f32 %v971, %v939
      %v1004 = vadd.f32 %v972, %v940
      %v1005 = vadd.f32 %v973, %v941
      %v1006 = vadd.f32 %v974, %v942
      %v1007 = vadd.f32 %v975, %v943
      %v1008 = vadd.f32 %v976, %v944
      %v1009 = vadd.f32 %v977, %v945
      %v1010 = vadd.f32 %v978, %v946
      %v1011 = vadd.f32 %v979, %v947
      %v1012 = vadd.f32 %v980, %v948
      %v1013 = vadd.f32 %v981, %v949
      %v1014 = vadd.f32 %v982, %v950
      %v1015 = vadd.f32 %v983, %v951
      %v1016 = vadd.f32 %v984, %v952
      %v1017 = vadd.f32 %v985, %v953
      %v1018 = vadd.f32 %v986, %v954
      %v1019 = vadd.f32 %v987, %v955
      %v1020 = vadd.f32 %v988, %v956
      %v1021 = vadd.f32 %v989, %v957
      %v1022 = vadd.f32 %v990, %v958
      %v1023 = vadd.f32 %v991, %v959
      %v1024 = vadd.f32 %v992, %v960
      %v1025 = vadd.f32 %v993, %v961
      %v1026 = vadd.f32 %v994, %v962
      %v1027 = vadd.f32 %v995, %v963
      %v1028 = vadd.f32 %v996, %v964
      %v1029 = vadd.f32 %v997, %v965
      %v1030 = vadd.f32 %v998, %v966
      %v1031 = vadd.f32 %v999, %v967
      %v1032 = vpack.c.bf16 %v1001, %v1000
      %v1033 = vpack.c.bf16 %v1003, %v1002
      %v1034 = vpack.c.bf16 %v1005, %v1004
      %v1035 = vpack.c.bf16 %v1007, %v1006
      %v1036 = vpack.c.bf16 %v1009, %v1008
      %v1037 = vpack.c.bf16 %v1011, %v1010
      %v1038 = vpack.c.bf16 %v1013, %v1012
      %v1039 = vpack.c.bf16 %v1015, %v1014
      %v1040 = vpack.c.bf16 %v1017, %v1016
      %v1041 = vpack.c.bf16 %v1019, %v1018
      %v1042 = vpack.c.bf16 %v1021, %v1020
      %v1043 = vpack.c.bf16 %v1023, %v1022
      %v1044 = vpack.c.bf16 %v1025, %v1024
      %v1045 = vpack.c.bf16 %v1027, %v1026
      %v1046 = vpack.c.bf16 %v1029, %v1028
      %v1047 = vpack.c.bf16 %v1031, %v1030
      %v1048 = vld [vmem:[%s2] sm:$0xff]
      %v1049 = vld [vmem:[%s2 + $0x8] sm:$0xf]
      %v1050 = vld [vmem:[%s2 + $0xc] sm:$0xff]
      %v1051 = vld [vmem:[%s2 + $0x14] sm:$0xf]
      %v1052 = vld [vmem:[%s2 + $0x18] sm:$0xff]
      %v1053 = vld [vmem:[%s2 + $0x20] sm:$0xf]
      %v1054 = vld [vmem:[%s2 + $0x24] sm:$0xff]
      %v1055 = vld [vmem:[%s2 + $0x2c] sm:$0xf]
      %v1056 = vld [vmem:[%s2 + $0x30] sm:$0xff]
      %v1057 = vld [vmem:[%s2 + $0x38] sm:$0xf]
      %v1058 = vld [vmem:[%s2 + $0x3c] sm:$0xff]
      %v1059 = vld [vmem:[%s2 + $0x44] sm:$0xf]
      %v1060 = vld [vmem:[%s2 + $0x48] sm:$0xff]
      %v1061 = vld [vmem:[%s2 + $0x50] sm:$0xf]
      %v1062 = vld [vmem:[%s2 + $0x54] sm:$0xff]
      %v1063 = vld [vmem:[%s2 + $0x5c] sm:$0xf]
      %v1064 = vld [vmem:[%s2 + $0x60] sm:$0xff]
      %v1065 = vld [vmem:[%s2 + $0x68] sm:$0xf]
      %v1066 = vld [vmem:[%s2 + $0x6c] sm:$0xff]
      %v1067 = vld [vmem:[%s2 + $0x74] sm:$0xf]
      %v1068 = vld [vmem:[%s2 + $0x78] sm:$0xff]
      %v1069 = vld [vmem:[%s2 + $0x80] sm:$0xf]
      %v1070 = vld [vmem:[%s2 + $0x84] sm:$0xff]
      %v1071 = vld [vmem:[%s2 + $0x8c] sm:$0xf]
      %v1072 = vld [vmem:[%s2 + $0x90] sm:$0xff]
      %v1073 = vld [vmem:[%s2 + $0x98] sm:$0xf]
      %v1074 = vld [vmem:[%s2 + $0x9c] sm:$0xff]
      %v1075 = vld [vmem:[%s2 + $0xa4] sm:$0xf]
      %v1076 = vld [vmem:[%s2 + $0xa8] sm:$0xff]
      %v1077 = vld [vmem:[%s2 + $0xb0] sm:$0xf]
      %v1078 = vld [vmem:[%s2 + $0xb4] sm:$0xff]
      %v1079 = vld [vmem:[%s2 + $0xbc] sm:$0xf]
      %v1112 = vunpack.c.l.b16 %v1048
      %v1113 = vunpack.c.h.b16 %v1048
      %v1114 = vunpack.c.l.b16 %v1049
      %v1115 = vunpack.c.l.b16 %v1050
      %v1116 = vunpack.c.h.b16 %v1050
      %v1117 = vunpack.c.l.b16 %v1051
      %v1118 = vunpack.c.l.b16 %v1052
      %v1119 = vunpack.c.h.b16 %v1052
      %v1120 = vunpack.c.l.b16 %v1053
      %v1121 = vunpack.c.l.b16 %v1054
      %v1122 = vunpack.c.h.b16 %v1054
      %v1123 = vunpack.c.l.b16 %v1055
      %v1124 = vunpack.c.l.b16 %v1056
      %v1125 = vunpack.c.h.b16 %v1056
      %v1126 = vunpack.c.l.b16 %v1057
      %v1127 = vunpack.c.l.b16 %v1058
      %v1128 = vunpack.c.h.b16 %v1058
      %v1129 = vunpack.c.l.b16 %v1059
      %v1130 = vunpack.c.l.b16 %v1060
      %v1131 = vunpack.c.h.b16 %v1060
      %v1132 = vunpack.c.l.b16 %v1061
      %v1133 = vunpack.c.l.b16 %v1062
      %v1134 = vunpack.c.h.b16 %v1062
      %v1135 = vunpack.c.l.b16 %v1063
      %v1136 = vunpack.c.l.b16 %v1064
      %v1137 = vunpack.c.h.b16 %v1064
      %v1138 = vunpack.c.l.b16 %v1065
      %v1139 = vunpack.c.l.b16 %v1066
      %v1140 = vunpack.c.h.b16 %v1066
      %v1141 = vunpack.c.l.b16 %v1067
      %v1142 = vunpack.c.l.b16 %v1068
      %v1143 = vunpack.c.h.b16 %v1068
      %v1144 = vunpack.c.l.b16 %v1069
      %v1145 = vunpack.c.l.b16 %v1070
      %v1146 = vunpack.c.h.b16 %v1070
      %v1147 = vunpack.c.l.b16 %v1071
      %v1148 = vunpack.c.l.b16 %v1072
      %v1149 = vunpack.c.h.b16 %v1072
      %v1150 = vunpack.c.l.b16 %v1073
      %v1151 = vunpack.c.l.b16 %v1074
      %v1152 = vunpack.c.h.b16 %v1074
      %v1153 = vunpack.c.l.b16 %v1075
      %v1154 = vunpack.c.l.b16 %v1076
      %v1155 = vunpack.c.h.b16 %v1076
      %v1156 = vunpack.c.l.b16 %v1077
      %v1157 = vunpack.c.l.b16 %v1078
      %v1158 = vunpack.c.h.b16 %v1078
      %v1159 = vunpack.c.l.b16 %v1079
      %v1160 = vpack.c.b16 %v1115, %v1112
      %v1161 = vpack.c.b16 %v1116, %v1113
      %v1162 = vpack.c.b16 %v1117, %v1114
      %v1163 = vpack.c.b16 %v1121, %v1118
      %v1164 = vpack.c.b16 %v1122, %v1119
      %v1165 = vpack.c.b16 %v1123, %v1120
      %v1166 = vpack.c.b16 %v1127, %v1124
      %v1167 = vpack.c.b16 %v1128, %v1125
      %v1168 = vpack.c.b16 %v1129, %v1126
      %v1169 = vpack.c.b16 %v1133, %v1130
      %v1170 = vpack.c.b16 %v1134, %v1131
      %v1171 = vpack.c.b16 %v1135, %v1132
      %v1172 = vpack.c.b16 %v1139, %v1136
      %v1173 = vpack.c.b16 %v1140, %v1137
      %v1174 = vpack.c.b16 %v1141, %v1138
      %v1175 = vpack.c.b16 %v1145, %v1142
      %v1176 = vpack.c.b16 %v1146, %v1143
      %v1177 = vpack.c.b16 %v1147, %v1144
      %v1178 = vpack.c.b16 %v1151, %v1148
      %v1179 = vpack.c.b16 %v1152, %v1149
      %v1180 = vpack.c.b16 %v1153, %v1150
      %v1181 = vpack.c.b16 %v1157, %v1154
      %v1182 = vpack.c.b16 %v1158, %v1155
      %v1183 = vpack.c.b16 %v1159, %v1156
      %1208 = vmatprep.subr.bf16.mxu0 %v1182
      %1209 = vmatpush1.bf16.msra.mxu0 %v1181
      %1210 = vmatprep.subr.bf16.mxu0 %v1179
      %1211 = vmatpush1.bf16.msra.mxu0 %v1178
      %1212 = vmatprep.subr.bf16.mxu0 %v1176
      %1213 = vmatpush1.bf16.msra.mxu0 %v1175
      %1214 = vmatprep.subr.bf16.mxu0 %v1173
      %1215 = vmatpush1.bf16.msra.mxu0 %v1172
      %1216 = vmatprep.subr.bf16.mxu0 %v1170
      %1217 = vmatpush1.bf16.msra.mxu0 %v1169
      %1218 = vmatprep.subr.bf16.mxu0 %v1167
      %1219 = vmatpush1.bf16.msra.mxu0 %v1166
      %1220 = vmatprep.subr.bf16.mxu0 %v1164
      %1221 = vmatpush1.bf16.msra.mxu0 %v1163
      %1222 = vmatprep.subr.bf16.mxu0 %v1161
      %1223 = vmatpush1.bf16.msra.mxu0 %v1160
      %1224 = vmatprep.subr.bf16.mxu0 0
      %1225 = vmatpush2.bf16.msra.mxu0 0
      %1226 = vmatprep.subr.bf16.mxu0 0
      %1227 = vmatpush2.bf16.msra.mxu0 0
      %1228 = vmatprep.subr.bf16.mxu0 0
      %1229 = vmatpush2.bf16.msra.mxu0 0
      %1230 = vmatprep.subr.bf16.mxu0 0
      %1231 = vmatpush2.bf16.msra.mxu0 0
      %1232 = vmatprep.subr.bf16.mxu0 0
      %1233 = vmatpush2.bf16.msra.mxu0 0
      %1234 = vmatprep.subr.bf16.mxu0 0
      %1235 = vmatpush2.bf16.msra.mxu0 0
      %1236 = vmatprep.subr.bf16.mxu0 0
      %1237 = vmatpush2.bf16.msra.mxu0 0
      %1238 = vmatprep.subr.bf16.mxu0 0
      %1239 = vmatpush2.bf16.msra.mxu0 0
      %1240 = vmatprep.mubr.bf16.mxu0 0
      %1241 = vmatmul.mubr.bf16.gmra.mxu0 %v1032
      %v1242 = vpop.f32.mrf.mxu0
      %v1243 = vadd.f32 0.0, %v1242
      %v1244 = vpop.f32.mrf.mxu0
      %v1245 = vadd.f32 0.0, %v1244
      %v1246 = vpop.f32.mrf.mxu0
      %v1247 = vadd.f32 0.0, %v1246
      %v1248 = vpop.f32.mrf.mxu0
      %v1249 = vadd.f32 0.0, %v1248
      %1250 = vmatprep.mubr.bf16.mxu0 0
      %1251 = vmatmul.mubr.bf16.gmra.mxu0 %v1033
      %v1252 = vpop.f32.mrf.mxu0
      %v1253 = vadd.f32 0.0, %v1252
      %v1254 = vpop.f32.mrf.mxu0
      %v1255 = vadd.f32 0.0, %v1254
      %v1256 = vpop.f32.mrf.mxu0
      %v1257 = vadd.f32 0.0, %v1256
      %v1258 = vpop.f32.mrf.mxu0
      %v1259 = vadd.f32 0.0, %v1258
      %1260 = vmatprep.mubr.bf16.mxu0 0
      %1261 = vmatmul.mubr.bf16.gmra.mxu0 %v1034
      %v1262 = vpop.f32.mrf.mxu0
      %v1263 = vadd.f32 0.0, %v1262
      %v1264 = vpop.f32.mrf.mxu0
      %v1265 = vadd.f32 0.0, %v1264
      %v1266 = vpop.f32.mrf.mxu0
      %v1267 = vadd.f32 0.0, %v1266
      %v1268 = vpop.f32.mrf.mxu0
      %v1269 = vadd.f32 0.0, %v1268
      %1270 = vmatprep.mubr.bf16.mxu0 0
      %1271 = vmatmul.mubr.bf16.gmra.mxu0 %v1035
      %v1272 = vpop.f32.mrf.mxu0
      %v1273 = vadd.f32 0.0, %v1272
      %v1274 = vpop.f32.mrf.mxu0
      %v1275 = vadd.f32 0.0, %v1274
      %v1276 = vpop.f32.mrf.mxu0
      %v1277 = vadd.f32 0.0, %v1276
      %v1278 = vpop.f32.mrf.mxu0
      %v1279 = vadd.f32 0.0, %v1278
      %1280 = vmatprep.mubr.bf16.mxu0 0
      %1281 = vmatmul.mubr.bf16.gmra.mxu0 %v1036
      %v1282 = vpop.f32.mrf.mxu0
      %v1283 = vadd.f32 0.0, %v1282
      %v1284 = vpop.f32.mrf.mxu0
      %v1285 = vadd.f32 0.0, %v1284
      %v1286 = vpop.f32.mrf.mxu0
      %v1287 = vadd.f32 0.0, %v1286
      %v1288 = vpop.f32.mrf.mxu0
      %v1289 = vadd.f32 0.0, %v1288
      %1290 = vmatprep.mubr.bf16.mxu0 0
      %1291 = vmatmul.mubr.bf16.gmra.mxu0 %v1037
      %v1292 = vpop.f32.mrf.mxu0
      %v1293 = vadd.f32 0.0, %v1292
      %v1294 = vpop.f32.mrf.mxu0
      %v1295 = vadd.f32 0.0, %v1294
      %v1296 = vpop.f32.mrf.mxu0
      %v1297 = vadd.f32 0.0, %v1296
      %v1298 = vpop.f32.mrf.mxu0
      %v1299 = vadd.f32 0.0, %v1298
      %1300 = vmatprep.mubr.bf16.mxu0 0
      %1301 = vmatmul.mubr.bf16.gmra.mxu0 %v1038
      %v1302 = vpop.f32.mrf.mxu0
      %v1303 = vadd.f32 0.0, %v1302
      %v1304 = vpop.f32.mrf.mxu0
      %v1305 = vadd.f32 0.0, %v1304
      %v1306 = vpop.f32.mrf.mxu0
      %v1307 = vadd.f32 0.0, %v1306
      %v1308 = vpop.f32.mrf.mxu0
      %v1309 = vadd.f32 0.0, %v1308
      %1310 = vmatprep.mubr.bf16.mxu0 0
      %1311 = vmatmul.mubr.bf16.gmra.mxu0 %v1039
      %v1312 = vpop.f32.mrf.mxu0
      %v1313 = vadd.f32 0.0, %v1312
      %v1314 = vpop.f32.mrf.mxu0
      %v1315 = vadd.f32 0.0, %v1314
      %v1316 = vpop.f32.mrf.mxu0
      %v1317 = vadd.f32 0.0, %v1316
      %v1318 = vpop.f32.mrf.mxu0
      %v1319 = vadd.f32 0.0, %v1318
      %1320 = vmatprep.mubr.bf16.mxu0 0
      %1321 = vmatmul.mubr.bf16.gmra.mxu0 %v1040
      %v1322 = vpop.f32.mrf.mxu0
      %v1323 = vadd.f32 0.0, %v1322
      %v1324 = vpop.f32.mrf.mxu0
      %v1325 = vadd.f32 0.0, %v1324
      %v1326 = vpop.f32.mrf.mxu0
      %v1327 = vadd.f32 0.0, %v1326
      %v1328 = vpop.f32.mrf.mxu0
      %v1329 = vadd.f32 0.0, %v1328
      %1330 = vmatprep.mubr.bf16.mxu0 0
      %1331 = vmatmul.mubr.bf16.gmra.mxu0 %v1041
      %v1332 = vpop.f32.mrf.mxu0
      %v1333 = vadd.f32 0.0, %v1332
      %v1334 = vpop.f32.mrf.mxu0
      %v1335 = vadd.f32 0.0, %v1334
      %v1336 = vpop.f32.mrf.mxu0
      %v1337 = vadd.f32 0.0, %v1336
      %v1338 = vpop.f32.mrf.mxu0
      %v1339 = vadd.f32 0.0, %v1338
      %1340 = vmatprep.mubr.bf16.mxu0 0
      %1341 = vmatmul.mubr.bf16.gmra.mxu0 %v1042
      %v1342 = vpop.f32.mrf.mxu0
      %v1343 = vadd.f32 0.0, %v1342
      %v1344 = vpop.f32.mrf.mxu0
      %v1345 = vadd.f32 0.0, %v1344
      %v1346 = vpop.f32.mrf.mxu0
      %v1347 = vadd.f32 0.0, %v1346
      %v1348 = vpop.f32.mrf.mxu0
      %v1349 = vadd.f32 0.0, %v1348
      %1350 = vmatprep.mubr.bf16.mxu0 0
      %1351 = vmatmul.mubr.bf16.gmra.mxu0 %v1043
      %v1352 = vpop.f32.mrf.mxu0
      %v1353 = vadd.f32 0.0, %v1352
      %v1354 = vpop.f32.mrf.mxu0
      %v1355 = vadd.f32 0.0, %v1354
      %v1356 = vpop.f32.mrf.mxu0
      %v1357 = vadd.f32 0.0, %v1356
      %v1358 = vpop.f32.mrf.mxu0
      %v1359 = vadd.f32 0.0, %v1358
      %1360 = vmatprep.mubr.bf16.mxu0 0
      %1361 = vmatmul.mubr.bf16.gmra.mxu0 %v1044
      %v1362 = vpop.f32.mrf.mxu0
      %v1363 = vadd.f32 0.0, %v1362
      %v1364 = vpop.f32.mrf.mxu0
      %v1365 = vadd.f32 0.0, %v1364
      %v1366 = vpop.f32.mrf.mxu0
      %v1367 = vadd.f32 0.0, %v1366
      %v1368 = vpop.f32.mrf.mxu0
      %v1369 = vadd.f32 0.0, %v1368
      %1370 = vmatprep.mubr.bf16.mxu0 0
      %1371 = vmatmul.mubr.bf16.gmra.mxu0 %v1045
      %v1372 = vpop.f32.mrf.mxu0
      %v1373 = vadd.f32 0.0, %v1372
      %v1374 = vpop.f32.mrf.mxu0
      %v1375 = vadd.f32 0.0, %v1374
      %v1376 = vpop.f32.mrf.mxu0
      %v1377 = vadd.f32 0.0, %v1376
      %v1378 = vpop.f32.mrf.mxu0
      %v1379 = vadd.f32 0.0, %v1378
      %1380 = vmatprep.mubr.bf16.mxu0 0
      %1381 = vmatmul.mubr.bf16.gmra.mxu0 %v1046
      %v1382 = vpop.f32.mrf.mxu0
      %v1383 = vadd.f32 0.0, %v1382
      %v1384 = vpop.f32.mrf.mxu0
      %v1385 = vadd.f32 0.0, %v1384
      %v1386 = vpop.f32.mrf.mxu0
      %v1387 = vadd.f32 0.0, %v1386
      %v1388 = vpop.f32.mrf.mxu0
      %v1389 = vadd.f32 0.0, %v1388
      %1390 = vmatprep.mubr.bf16.mxu0 0
      %1391 = vmatmul.mubr.bf16.gmra.mxu0 %v1047
      %v1392 = vpop.f32.mrf.mxu0
      %v1393 = vadd.f32 0.0, %v1392
      %v1394 = vpop.f32.mrf.mxu0
      %v1395 = vadd.f32 0.0, %v1394
      %v1396 = vpop.f32.mrf.mxu0
      %v1397 = vadd.f32 0.0, %v1396
      %v1398 = vpop.f32.mrf.mxu0
      %v1399 = vadd.f32 0.0, %v1398
      %1400 = vdwg.mxu0
      %1401 = vmatprep.subr.bf16.mxu0 0
      %1402 = vmatpush1.bf16.msra.mxu0 %v1183
      %1403 = vmatprep.subr.bf16.mxu0 0
      %1404 = vmatpush1.bf16.msra.mxu0 %v1180
      %1405 = vmatprep.subr.bf16.mxu0 0
      %1406 = vmatpush1.bf16.msra.mxu0 %v1177
      %1407 = vmatprep.subr.bf16.mxu0 0
      %1408 = vmatpush1.bf16.msra.mxu0 %v1174
      %1409 = vmatprep.subr.bf16.mxu0 0
      %1410 = vmatpush1.bf16.msra.mxu0 %v1171
      %1411 = vmatprep.subr.bf16.mxu0 0
      %1412 = vmatpush1.bf16.msra.mxu0 %v1168
      %1413 = vmatprep.subr.bf16.mxu0 0
      %1414 = vmatpush1.bf16.msra.mxu0 %v1165
      %1415 = vmatprep.subr.bf16.mxu0 0
      %1416 = vmatpush1.bf16.msra.mxu0 %v1162
      %1417 = vmatprep.subr.bf16.mxu0 0
      %1418 = vmatpush2.bf16.msra.mxu0 0
      %1419 = vmatprep.subr.bf16.mxu0 0
      %1420 = vmatpush2.bf16.msra.mxu0 0
      %1421 = vmatprep.subr.bf16.mxu0 0
      %1422 = vmatpush2.bf16.msra.mxu0 0
      %1423 = vmatprep.subr.bf16.mxu0 0
      %1424 = vmatpush2.bf16.msra.mxu0 0
      %1425 = vmatprep.subr.bf16.mxu0 0
      %1426 = vmatpush2.bf16.msra.mxu0 0
      %1427 = vmatprep.subr.bf16.mxu0 0
      %1428 = vmatpush2.bf16.msra.mxu0 0
      %1429 = vmatprep.subr.bf16.mxu0 0
      %1430 = vmatpush2.bf16.msra.mxu0 0
      %1431 = vmatprep.subr.bf16.mxu0 0
      %1432 = vmatpush2.bf16.msra.mxu0 0
      %1433 = vmatprep.mubr.bf16.mxu0 0
      %1434 = vmatmul.mubr.bf16.gmra.mxu0 %v1032
      %v1435 = vpop.f32.mrf.mxu0
      %v1436 = vadd.f32 0.0, %v1435
      %v1437 = vpop.f32.mrf.mxu0
      %v1438 = vpop.f32.mrf.mxu0
      %v1439 = vadd.f32 0.0, %v1438
      %v1440 = vpop.f32.mrf.mxu0
      %1441 = vmatprep.mubr.bf16.mxu0 0
      %1442 = vmatmul.mubr.bf16.gmra.mxu0 %v1033
      %v1443 = vpop.f32.mrf.mxu0
      %v1444 = vadd.f32 0.0, %v1443
      %v1445 = vpop.f32.mrf.mxu0
      %v1446 = vpop.f32.mrf.mxu0
      %v1447 = vadd.f32 0.0, %v1446
      %v1448 = vpop.f32.mrf.mxu0
      %1449 = vmatprep.mubr.bf16.mxu0 0
      %1450 = vmatmul.mubr.bf16.gmra.mxu0 %v1034
      %v1451 = vpop.f32.mrf.mxu0
      %v1452 = vadd.f32 0.0, %v1451
      %v1453 = vpop.f32.mrf.mxu0
      %v1454 = vpop.f32.mrf.mxu0
      %v1455 = vadd.f32 0.0, %v1454
      %v1456 = vpop.f32.mrf.mxu0
      %1457 = vmatprep.mubr.bf16.mxu0 0
      %1458 = vmatmul.mubr.bf16.gmra.mxu0 %v1035
      %v1459 = vpop.f32.mrf.mxu0
      %v1460 = vadd.f32 0.0, %v1459
      %v1461 = vpop.f32.mrf.mxu0
      %v1462 = vpop.f32.mrf.mxu0
      %v1463 = vadd.f32 0.0, %v1462
      %v1464 = vpop.f32.mrf.mxu0
      %1465 = vmatprep.mubr.bf16.mxu0 0
      %1466 = vmatmul.mubr.bf16.gmra.mxu0 %v1036
      %v1467 = vpop.f32.mrf.mxu0
      %v1468 = vadd.f32 0.0, %v1467
      %v1469 = vpop.f32.mrf.mxu0
      %v1470 = vpop.f32.mrf.mxu0
      %v1471 = vadd.f32 0.0, %v1470
      %v1472 = vpop.f32.mrf.mxu0
      %1473 = vmatprep.mubr.bf16.mxu0 0
      %1474 = vmatmul.mubr.bf16.gmra.mxu0 %v1037
      %v1475 = vpop.f32.mrf.mxu0
      %v1476 = vadd.f32 0.0, %v1475
      %v1477 = vpop.f32.mrf.mxu0
      %v1478 = vpop.f32.mrf.mxu0
      %v1479 = vadd.f32 0.0, %v1478
      %v1480 = vpop.f32.mrf.mxu0
      %1481 = vmatprep.mubr.bf16.mxu0 0
      %1482 = vmatmul.mubr.bf16.gmra.mxu0 %v1038
      %v1483 = vpop.f32.mrf.mxu0
      %v1484 = vadd.f32 0.0, %v1483
      %v1485 = vpop.f32.mrf.mxu0
      %v1486 = vpop.f32.mrf.mxu0
      %v1487 = vadd.f32 0.0, %v1486
      %v1488 = vpop.f32.mrf.mxu0
      %1489 = vmatprep.mubr.bf16.mxu0 0
      %1490 = vmatmul.mubr.bf16.gmra.mxu0 %v1039
      %v1491 = vpop.f32.mrf.mxu0
      %v1492 = vadd.f32 0.0, %v1491
      %v1493 = vpop.f32.mrf.mxu0
      %v1494 = vpop.f32.mrf.mxu0
      %v1495 = vadd.f32 0.0, %v1494
      %v1496 = vpop.f32.mrf.mxu0
      %1497 = vmatprep.mubr.bf16.mxu0 0
      %1498 = vmatmul.mubr.bf16.gmra.mxu0 %v1040
      %v1499 = vpop.f32.mrf.mxu0
      %v1500 = vadd.f32 0.0, %v1499
      %v1501 = vpop.f32.mrf.mxu0
      %v1502 = vpop.f32.mrf.mxu0
      %v1503 = vadd.f32 0.0, %v1502
      %v1504 = vpop.f32.mrf.mxu0
      %1505 = vmatprep.mubr.bf16.mxu0 0
      %1506 = vmatmul.mubr.bf16.gmra.mxu0 %v1041
      %v1507 = vpop.f32.mrf.mxu0
      %v1508 = vadd.f32 0.0, %v1507
      %v1509 = vpop.f32.mrf.mxu0
      %v1510 = vpop.f32.mrf.mxu0
      %v1511 = vadd.f32 0.0, %v1510
      %v1512 = vpop.f32.mrf.mxu0
      %1513 = vmatprep.mubr.bf16.mxu0 0
      %1514 = vmatmul.mubr.bf16.gmra.mxu0 %v1042
      %v1515 = vpop.f32.mrf.mxu0
      %v1516 = vadd.f32 0.0, %v1515
      %v1517 = vpop.f32.mrf.mxu0
      %v1518 = vpop.f32.mrf.mxu0
      %v1519 = vadd.f32 0.0, %v1518
      %v1520 = vpop.f32.mrf.mxu0
      %1521 = vmatprep.mubr.bf16.mxu0 0
      %1522 = vmatmul.mubr.bf16.gmra.mxu0 %v1043
      %v1523 = vpop.f32.mrf.mxu0
      %v1524 = vadd.f32 0.0, %v1523
      %v1525 = vpop.f32.mrf.mxu0
      %v1526 = vpop.f32.mrf.mxu0
      %v1527 = vadd.f32 0.0, %v1526
      %v1528 = vpop.f32.mrf.mxu0
      %1529 = vmatprep.mubr.bf16.mxu0 0
      %1530 = vmatmul.mubr.bf16.gmra.mxu0 %v1044
      %v1531 = vpop.f32.mrf.mxu0
      %v1532 = vadd.f32 0.0, %v1531
      %v1533 = vpop.f32.mrf.mxu0
      %v1534 = vpop.f32.mrf.mxu0
      %v1535 = vadd.f32 0.0, %v1534
      %v1536 = vpop.f32.mrf.mxu0
      %1537 = vmatprep.mubr.bf16.mxu0 0
      %1538 = vmatmul.mubr.bf16.gmra.mxu0 %v1045
      %v1539 = vpop.f32.mrf.mxu0
      %v1540 = vadd.f32 0.0, %v1539
      %v1541 = vpop.f32.mrf.mxu0
      %v1542 = vpop.f32.mrf.mxu0
      %v1543 = vadd.f32 0.0, %v1542
      %v1544 = vpop.f32.mrf.mxu0
      %1545 = vmatprep.mubr.bf16.mxu0 0
      %1546 = vmatmul.mubr.bf16.gmra.mxu0 %v1046
      %v1547 = vpop.f32.mrf.mxu0
      %v1548 = vadd.f32 0.0, %v1547
      %v1549 = vpop.f32.mrf.mxu0
      %v1550 = vpop.f32.mrf.mxu0
      %v1551 = vadd.f32 0.0, %v1550
      %v1552 = vpop.f32.mrf.mxu0
      %1553 = vmatprep.mubr.bf16.mxu0 0
      %1554 = vmatmul.mubr.bf16.gmra.mxu0 %v1047
      %v1555 = vpop.f32.mrf.mxu0
      %v1556 = vadd.f32 0.0, %v1555
      %v1557 = vpop.f32.mrf.mxu0
      %v1558 = vpop.f32.mrf.mxu0
      %v1559 = vadd.f32 0.0, %v1558
      %v1560 = vpop.f32.mrf.mxu0
      %1561 = vdwg.mxu0
      %v1562 = vadd.f32 %v1243, %v1245
      %v1563 = vadd.f32 %v1562, %v1436
      %1564 = vadd.xlane.f32.xlu0 %v1563
      %v1565 = vpop.xlane.xlu0 %1564
      %v1566 = vadd.f32 %v1247, %v1249
      %v1567 = vadd.f32 %v1566, %v1439
      %1568 = vadd.xlane.f32.xlu0 %v1567
      %v1569 = vpop.xlane.xlu0 %1568
      %v1570 = vadd.f32 %v1253, %v1255
      %v1571 = vadd.f32 %v1570, %v1444
      %1572 = vadd.xlane.f32.xlu0 %v1571
      %v1573 = vpop.xlane.xlu0 %1572
      %v1574 = vadd.f32 %v1257, %v1259
      %v1575 = vadd.f32 %v1574, %v1447
      %1576 = vadd.xlane.f32.xlu0 %v1575
      %v1577 = vpop.xlane.xlu0 %1576
      %v1578 = vadd.f32 %v1263, %v1265
      %v1579 = vadd.f32 %v1578, %v1452
      %1580 = vadd.xlane.f32.xlu0 %v1579
      %v1581 = vpop.xlane.xlu0 %1580
      %v1582 = vadd.f32 %v1267, %v1269
      %v1583 = vadd.f32 %v1582, %v1455
      %1584 = vadd.xlane.f32.xlu0 %v1583
      %v1585 = vpop.xlane.xlu0 %1584
      %v1586 = vadd.f32 %v1273, %v1275
      %v1587 = vadd.f32 %v1586, %v1460
      %1588 = vadd.xlane.f32.xlu0 %v1587
      %v1589 = vpop.xlane.xlu0 %1588
      %v1590 = vadd.f32 %v1277, %v1279
      %v1591 = vadd.f32 %v1590, %v1463
      %1592 = vadd.xlane.f32.xlu0 %v1591
      %v1593 = vpop.xlane.xlu0 %1592
      %v1594 = vadd.f32 %v1283, %v1285
      %v1595 = vadd.f32 %v1594, %v1468
      %1596 = vadd.xlane.f32.xlu0 %v1595
      %v1597 = vpop.xlane.xlu0 %1596
      %v1598 = vadd.f32 %v1287, %v1289
      %v1599 = vadd.f32 %v1598, %v1471
      %1600 = vadd.xlane.f32.xlu0 %v1599
      %v1601 = vpop.xlane.xlu0 %1600
      %v1602 = vadd.f32 %v1293, %v1295
      %v1603 = vadd.f32 %v1602, %v1476
      %1604 = vadd.xlane.f32.xlu0 %v1603
      %v1605 = vpop.xlane.xlu0 %1604
      %v1606 = vadd.f32 %v1297, %v1299
      %v1607 = vadd.f32 %v1606, %v1479
      %1608 = vadd.xlane.f32.xlu0 %v1607
      %v1609 = vpop.xlane.xlu0 %1608
      %v1610 = vadd.f32 %v1303, %v1305
      %v1611 = vadd.f32 %v1610, %v1484
      %1612 = vadd.xlane.f32.xlu0 %v1611
      %v1613 = vpop.xlane.xlu0 %1612
      %v1614 = vadd.f32 %v1307, %v1309
      %v1615 = vadd.f32 %v1614, %v1487
      %1616 = vadd.xlane.f32.xlu0 %v1615
      %v1617 = vpop.xlane.xlu0 %1616
      %v1618 = vadd.f32 %v1313, %v1315
      %v1619 = vadd.f32 %v1618, %v1492
      %1620 = vadd.xlane.f32.xlu0 %v1619
      %v1621 = vpop.xlane.xlu0 %1620
      %v1622 = vadd.f32 %v1317, %v1319
      %v1623 = vadd.f32 %v1622, %v1495
      %1624 = vadd.xlane.f32.xlu0 %v1623
      %v1625 = vpop.xlane.xlu0 %1624
      %v1626 = vadd.f32 %v1323, %v1325
      %v1627 = vadd.f32 %v1626, %v1500
      %1628 = vadd.xlane.f32.xlu0 %v1627
      %v1629 = vpop.xlane.xlu0 %1628
      %v1630 = vadd.f32 %v1327, %v1329
      %v1631 = vadd.f32 %v1630, %v1503
      %1632 = vadd.xlane.f32.xlu0 %v1631
      %v1633 = vpop.xlane.xlu0 %1632
      %v1634 = vadd.f32 %v1333, %v1335
      %v1635 = vadd.f32 %v1634, %v1508
      %1636 = vadd.xlane.f32.xlu0 %v1635
      %v1637 = vpop.xlane.xlu0 %1636
      %v1638 = vadd.f32 %v1337, %v1339
      %v1639 = vadd.f32 %v1638, %v1511
      %1640 = vadd.xlane.f32.xlu0 %v1639
      %v1641 = vpop.xlane.xlu0 %1640
      %v1642 = vadd.f32 %v1343, %v1345
      %v1643 = vadd.f32 %v1642, %v1516
      %1644 = vadd.xlane.f32.xlu0 %v1643
      %v1645 = vpop.xlane.xlu0 %1644
      %v1646 = vadd.f32 %v1347, %v1349
      %v1647 = vadd.f32 %v1646, %v1519
      %1648 = vadd.xlane.f32.xlu0 %v1647
      %v1649 = vpop.xlane.xlu0 %1648
      %v1650 = vadd.f32 %v1353, %v1355
      %v1651 = vadd.f32 %v1650, %v1524
      %1652 = vadd.xlane.f32.xlu0 %v1651
      %v1653 = vpop.xlane.xlu0 %1652
      %v1654 = vadd.f32 %v1357, %v1359
      %v1655 = vadd.f32 %v1654, %v1527
      %1656 = vadd.xlane.f32.xlu0 %v1655
      %v1657 = vpop.xlane.xlu0 %1656
      %v1658 = vadd.f32 %v1363, %v1365
      %v1659 = vadd.f32 %v1658, %v1532
      %1660 = vadd.xlane.f32.xlu0 %v1659
      %v1661 = vpop.xlane.xlu0 %1660
      %v1662 = vadd.f32 %v1367, %v1369
      %v1663 = vadd.f32 %v1662, %v1535
      %1664 = vadd.xlane.f32.xlu0 %v1663
      %v1665 = vpop.xlane.xlu0 %1664
      %v1666 = vadd.f32 %v1373, %v1375
      %v1667 = vadd.f32 %v1666, %v1540
      %1668 = vadd.xlane.f32.xlu0 %v1667
      %v1669 = vpop.xlane.xlu0 %1668
      %v1670 = vadd.f32 %v1377, %v1379
      %v1671 = vadd.f32 %v1670, %v1543
      %1672 = vadd.xlane.f32.xlu0 %v1671
      %v1673 = vpop.xlane.xlu0 %1672
      %v1674 = vadd.f32 %v1383, %v1385
      %v1675 = vadd.f32 %v1674, %v1548
      %1676 = vadd.xlane.f32.xlu0 %v1675
      %v1677 = vpop.xlane.xlu0 %1676
      %v1678 = vadd.f32 %v1387, %v1389
      %v1679 = vadd.f32 %v1678, %v1551
      %1680 = vadd.xlane.f32.xlu0 %v1679
      %v1681 = vpop.xlane.xlu0 %1680
      %v1682 = vadd.f32 %v1393, %v1395
      %v1683 = vadd.f32 %v1682, %v1556
      %1684 = vadd.xlane.f32.xlu0 %v1683
      %v1685 = vpop.xlane.xlu0 %1684
      %v1686 = vadd.f32 %v1397, %v1399
      %v1687 = vadd.f32 %v1686, %v1559
      %1688 = vadd.xlane.f32.xlu0 %v1687
      %v1689 = vpop.xlane.xlu0 %1688
      %v1690 = vmul.f32 %v1565, 0.0026041667
      %v1691 = vmul.f32 %v1569, 0.0026041667
      %v1692 = vmul.f32 %v1573, 0.0026041667
      %v1693 = vmul.f32 %v1577, 0.0026041667
      %v1694 = vmul.f32 %v1581, 0.0026041667
      %v1695 = vmul.f32 %v1585, 0.0026041667
      %v1696 = vmul.f32 %v1589, 0.0026041667
      %v1697 = vmul.f32 %v1593, 0.0026041667
      %v1698 = vmul.f32 %v1597, 0.0026041667
      %v1699 = vmul.f32 %v1601, 0.0026041667
      %v1700 = vmul.f32 %v1605, 0.0026041667
      %v1701 = vmul.f32 %v1609, 0.0026041667
      %v1702 = vmul.f32 %v1613, 0.0026041667
      %v1703 = vmul.f32 %v1617, 0.0026041667
      %v1704 = vmul.f32 %v1621, 0.0026041667
      %v1705 = vmul.f32 %v1625, 0.0026041667
      %v1706 = vmul.f32 %v1629, 0.0026041667
      %v1707 = vmul.f32 %v1633, 0.0026041667
      %v1708 = vmul.f32 %v1637, 0.0026041667
      %v1709 = vmul.f32 %v1641, 0.0026041667
      %v1710 = vmul.f32 %v1645, 0.0026041667
      %v1711 = vmul.f32 %v1649, 0.0026041667
      %v1712 = vmul.f32 %v1653, 0.0026041667
      %v1713 = vmul.f32 %v1657, 0.0026041667
      %v1714 = vmul.f32 %v1661, 0.0026041667
      %v1715 = vmul.f32 %v1665, 0.0026041667
      %v1716 = vmul.f32 %v1669, 0.0026041667
      %v1717 = vmul.f32 %v1673, 0.0026041667
      %v1718 = vmul.f32 %v1677, 0.0026041667
      %v1719 = vmul.f32 %v1681, 0.0026041667
      %v1720 = vmul.f32 %v1685, 0.0026041667
      %v1721 = vmul.f32 %v1689, 0.0026041667
      %v1722 = vsub.f32 %v1243, %v1690
      %v1723 = vsub.f32 %v1245, %v1690
      %v1724 = vsub.f32 %v1436, %v1690
      %v1725 = vsub.f32 %v1247, %v1691
      %v1726 = vsub.f32 %v1249, %v1691
      %v1727 = vsub.f32 %v1439, %v1691
      %v1728 = vsub.f32 %v1253, %v1692
      %v1729 = vsub.f32 %v1255, %v1692
      %v1730 = vsub.f32 %v1444, %v1692
      %v1731 = vsub.f32 %v1257, %v1693
      %v1732 = vsub.f32 %v1259, %v1693
      %v1733 = vsub.f32 %v1447, %v1693
      %v1734 = vsub.f32 %v1263, %v1694
      %v1735 = vsub.f32 %v1265, %v1694
      %v1736 = vsub.f32 %v1452, %v1694
      %v1737 = vsub.f32 %v1267, %v1695
      %v1738 = vsub.f32 %v1269, %v1695
      %v1739 = vsub.f32 %v1455, %v1695
      %v1740 = vsub.f32 %v1273, %v1696
      %v1741 = vsub.f32 %v1275, %v1696
      %v1742 = vsub.f32 %v1460, %v1696
      %v1743 = vsub.f32 %v1277, %v1697
      %v1744 = vsub.f32 %v1279, %v1697
      %v1745 = vsub.f32 %v1463, %v1697
      %v1746 = vsub.f32 %v1283, %v1698
      %v1747 = vsub.f32 %v1285, %v1698
      %v1748 = vsub.f32 %v1468, %v1698
      %v1749 = vsub.f32 %v1287, %v1699
      %v1750 = vsub.f32 %v1289, %v1699
      %v1751 = vsub.f32 %v1471, %v1699
      %v1752 = vsub.f32 %v1293, %v1700
      %v1753 = vsub.f32 %v1295, %v1700
      %v1754 = vsub.f32 %v1476, %v1700
      %v1755 = vsub.f32 %v1297, %v1701
      %v1756 = vsub.f32 %v1299, %v1701
      %v1757 = vsub.f32 %v1479, %v1701
      %v1758 = vsub.f32 %v1303, %v1702
      %v1759 = vsub.f32 %v1305, %v1702
      %v1760 = vsub.f32 %v1484, %v1702
      %v1761 = vsub.f32 %v1307, %v1703
      %v1762 = vsub.f32 %v1309, %v1703
      %v1763 = vsub.f32 %v1487, %v1703
      %v1764 = vsub.f32 %v1313, %v1704
      %v1765 = vsub.f32 %v1315, %v1704
      %v1766 = vsub.f32 %v1492, %v1704
      %v1767 = vsub.f32 %v1317, %v1705
      %v1768 = vsub.f32 %v1319, %v1705
      %v1769 = vsub.f32 %v1495, %v1705
      %v1770 = vsub.f32 %v1323, %v1706
      %v1771 = vsub.f32 %v1325, %v1706
      %v1772 = vsub.f32 %v1500, %v1706
      %v1773 = vsub.f32 %v1327, %v1707
      %v1774 = vsub.f32 %v1329, %v1707
      %v1775 = vsub.f32 %v1503, %v1707
      %v1776 = vsub.f32 %v1333, %v1708
      %v1777 = vsub.f32 %v1335, %v1708
      %v1778 = vsub.f32 %v1508, %v1708
      %v1779 = vsub.f32 %v1337, %v1709
      %v1780 = vsub.f32 %v1339, %v1709
      %v1781 = vsub.f32 %v1511, %v1709
      %v1782 = vsub.f32 %v1343, %v1710
      %v1783 = vsub.f32 %v1345, %v1710
      %v1784 = vsub.f32 %v1516, %v1710
      %v1785 = vsub.f32 %v1347, %v1711
      %v1786 = vsub.f32 %v1349, %v1711
      %v1787 = vsub.f32 %v1519, %v1711
      %v1788 = vsub.f32 %v1353, %v1712
      %v1789 = vsub.f32 %v1355, %v1712
      %v1790 = vsub.f32 %v1524, %v1712
      %v1791 = vsub.f32 %v1357, %v1713
      %v1792 = vsub.f32 %v1359, %v1713
      %v1793 = vsub.f32 %v1527, %v1713
      %v1794 = vsub.f32 %v1363, %v1714
      %v1795 = vsub.f32 %v1365, %v1714
      %v1796 = vsub.f32 %v1532, %v1714
      %v1797 = vsub.f32 %v1367, %v1715
      %v1798 = vsub.f32 %v1369, %v1715
      %v1799 = vsub.f32 %v1535, %v1715
      %v1800 = vsub.f32 %v1373, %v1716
      %v1801 = vsub.f32 %v1375, %v1716
      %v1802 = vsub.f32 %v1540, %v1716
      %v1803 = vsub.f32 %v1377, %v1717
      %v1804 = vsub.f32 %v1379, %v1717
      %v1805 = vsub.f32 %v1543, %v1717
      %v1806 = vsub.f32 %v1383, %v1718
      %v1807 = vsub.f32 %v1385, %v1718
      %v1808 = vsub.f32 %v1548, %v1718
      %v1809 = vsub.f32 %v1387, %v1719
      %v1810 = vsub.f32 %v1389, %v1719
      %v1811 = vsub.f32 %v1551, %v1719
      %v1812 = vsub.f32 %v1393, %v1720
      %v1813 = vsub.f32 %v1395, %v1720
      %v1814 = vsub.f32 %v1556, %v1720
      %v1815 = vsub.f32 %v1397, %v1721
      %v1816 = vsub.f32 %v1399, %v1721
      %v1817 = vsub.f32 %v1559, %v1721
      %v1818 = vmax.f32 %v1722, 0.0
      %v1819 = vmax.f32 %v1723, 0.0
      %v1820 = vmax.f32 %v1724, 0.0
      %v1821 = vmax.f32 %v1725, 0.0
      %v1822 = vmax.f32 %v1726, 0.0
      %v1823 = vmax.f32 %v1727, 0.0
      %v1824 = vmax.f32 %v1728, 0.0
      %v1825 = vmax.f32 %v1729, 0.0
      %v1826 = vmax.f32 %v1730, 0.0
      %v1827 = vmax.f32 %v1731, 0.0
      %v1828 = vmax.f32 %v1732, 0.0
      %v1829 = vmax.f32 %v1733, 0.0
      %v1830 = vmax.f32 %v1734, 0.0
      %v1831 = vmax.f32 %v1735, 0.0
      %v1832 = vmax.f32 %v1736, 0.0
      %v1833 = vmax.f32 %v1737, 0.0
      %v1834 = vmax.f32 %v1738, 0.0
      %v1835 = vmax.f32 %v1739, 0.0
      %v1836 = vmax.f32 %v1740, 0.0
      %v1837 = vmax.f32 %v1741, 0.0
      %v1838 = vmax.f32 %v1742, 0.0
      %v1839 = vmax.f32 %v1743, 0.0
      %v1840 = vmax.f32 %v1744, 0.0
      %v1841 = vmax.f32 %v1745, 0.0
      %v1842 = vmax.f32 %v1746, 0.0
      %v1843 = vmax.f32 %v1747, 0.0
      %v1844 = vmax.f32 %v1748, 0.0
      %v1845 = vmax.f32 %v1749, 0.0
      %v1846 = vmax.f32 %v1750, 0.0
      %v1847 = vmax.f32 %v1751, 0.0
      %v1848 = vmax.f32 %v1752, 0.0
      %v1849 = vmax.f32 %v1753, 0.0
      %v1850 = vmax.f32 %v1754, 0.0
      %v1851 = vmax.f32 %v1755, 0.0
      %v1852 = vmax.f32 %v1756, 0.0
      %v1853 = vmax.f32 %v1757, 0.0
      %v1854 = vmax.f32 %v1758, 0.0
      %v1855 = vmax.f32 %v1759, 0.0
      %v1856 = vmax.f32 %v1760, 0.0
      %v1857 = vmax.f32 %v1761, 0.0
      %v1858 = vmax.f32 %v1762, 0.0
      %v1859 = vmax.f32 %v1763, 0.0
      %v1860 = vmax.f32 %v1764, 0.0
      %v1861 = vmax.f32 %v1765, 0.0
      %v1862 = vmax.f32 %v1766, 0.0
      %v1863 = vmax.f32 %v1767, 0.0
      %v1864 = vmax.f32 %v1768, 0.0
      %v1865 = vmax.f32 %v1769, 0.0
      %v1866 = vmax.f32 %v1770, 0.0
      %v1867 = vmax.f32 %v1771, 0.0
      %v1868 = vmax.f32 %v1772, 0.0
      %v1869 = vmax.f32 %v1773, 0.0
      %v1870 = vmax.f32 %v1774, 0.0
      %v1871 = vmax.f32 %v1775, 0.0
      %v1872 = vmax.f32 %v1776, 0.0
      %v1873 = vmax.f32 %v1777, 0.0
      %v1874 = vmax.f32 %v1778, 0.0
      %v1875 = vmax.f32 %v1779, 0.0
      %v1876 = vmax.f32 %v1780, 0.0
      %v1877 = vmax.f32 %v1781, 0.0
      %v1878 = vmax.f32 %v1782, 0.0
      %v1879 = vmax.f32 %v1783, 0.0
      %v1880 = vmax.f32 %v1784, 0.0
      %v1881 = vmax.f32 %v1785, 0.0
      %v1882 = vmax.f32 %v1786, 0.0
      %v1883 = vmax.f32 %v1787, 0.0
      %v1884 = vmax.f32 %v1788, 0.0
      %v1885 = vmax.f32 %v1789, 0.0
      %v1886 = vmax.f32 %v1790, 0.0
      %v1887 = vmax.f32 %v1791, 0.0
      %v1888 = vmax.f32 %v1792, 0.0
      %v1889 = vmax.f32 %v1793, 0.0
      %v1890 = vmax.f32 %v1794, 0.0
      %v1891 = vmax.f32 %v1795, 0.0
      %v1892 = vmax.f32 %v1796, 0.0
      %v1893 = vmax.f32 %v1797, 0.0
      %v1894 = vmax.f32 %v1798, 0.0
      %v1895 = vmax.f32 %v1799, 0.0
      %v1896 = vmax.f32 %v1800, 0.0
      %v1897 = vmax.f32 %v1801, 0.0
      %v1898 = vmax.f32 %v1802, 0.0
      %v1899 = vmax.f32 %v1803, 0.0
      %v1900 = vmax.f32 %v1804, 0.0
      %v1901 = vmax.f32 %v1805, 0.0
      %v1902 = vmax.f32 %v1806, 0.0
      %v1903 = vmax.f32 %v1807, 0.0
      %v1904 = vmax.f32 %v1808, 0.0
      %v1905 = vmax.f32 %v1809, 0.0
      %v1906 = vmax.f32 %v1810, 0.0
      %v1907 = vmax.f32 %v1811, 0.0
      %v1908 = vmax.f32 %v1812, 0.0
      %v1909 = vmax.f32 %v1813, 0.0
      %v1910 = vmax.f32 %v1814, 0.0
      %v1911 = vmax.f32 %v1815, 0.0
      %v1912 = vmax.f32 %v1816, 0.0
      %v1913 = vmax.f32 %v1817, 0.0
      %v1914 = vpow.f32 %v1818, 1.4
      %v1915 = vpow.f32 %v1819, 1.4
      %v1916 = vpow.f32 %v1820, 1.4
      %v1917 = vpow.f32 %v1821, 1.4
      %v1918 = vpow.f32 %v1822, 1.4
      %v1919 = vpow.f32 %v1823, 1.4
      %v1920 = vpow.f32 %v1824, 1.4
      %v1921 = vpow.f32 %v1825, 1.4
      %v1922 = vpow.f32 %v1826, 1.4
      %v1923 = vpow.f32 %v1827, 1.4
      %v1924 = vpow.f32 %v1828, 1.4
      %v1925 = vpow.f32 %v1829, 1.4
      %v1926 = vpow.f32 %v1830, 1.4
      %v1927 = vpow.f32 %v1831, 1.4
      %v1928 = vpow.f32 %v1832, 1.4
      %v1929 = vpow.f32 %v1833, 1.4
      %v1930 = vpow.f32 %v1834, 1.4
      %v1931 = vpow.f32 %v1835, 1.4
      %v1932 = vpow.f32 %v1836, 1.4
      %v1933 = vpow.f32 %v1837, 1.4
      %v1934 = vpow.f32 %v1838, 1.4
      %v1935 = vpow.f32 %v1839, 1.4
      %v1936 = vpow.f32 %v1840, 1.4
      %v1937 = vpow.f32 %v1841, 1.4
      %v1938 = vpow.f32 %v1842, 1.4
      %v1939 = vpow.f32 %v1843, 1.4
      %v1940 = vpow.f32 %v1844, 1.4
      %v1941 = vpow.f32 %v1845, 1.4
      %v1942 = vpow.f32 %v1846, 1.4
      %v1943 = vpow.f32 %v1847, 1.4
      %v1944 = vpow.f32 %v1848, 1.4
      %v1945 = vpow.f32 %v1849, 1.4
      %v1946 = vpow.f32 %v1850, 1.4
      %v1947 = vpow.f32 %v1851, 1.4
      %v1948 = vpow.f32 %v1852, 1.4
      %v1949 = vpow.f32 %v1853, 1.4
      %v1950 = vpow.f32 %v1854, 1.4
      %v1951 = vpow.f32 %v1855, 1.4
      %v1952 = vpow.f32 %v1856, 1.4
      %v1953 = vpow.f32 %v1857, 1.4
      %v1954 = vpow.f32 %v1858, 1.4
      %v1955 = vpow.f32 %v1859, 1.4
      %v1956 = vpow.f32 %v1860, 1.4
      %v1957 = vpow.f32 %v1861, 1.4
      %v1958 = vpow.f32 %v1862, 1.4
      %v1959 = vpow.f32 %v1863, 1.4
      %v1960 = vpow.f32 %v1864, 1.4
      %v1961 = vpow.f32 %v1865, 1.4
      %v1962 = vpow.f32 %v1866, 1.4
      %v1963 = vpow.f32 %v1867, 1.4
      %v1964 = vpow.f32 %v1868, 1.4
      %v1965 = vpow.f32 %v1869, 1.4
      %v1966 = vpow.f32 %v1870, 1.4
      %v1967 = vpow.f32 %v1871, 1.4
      %v1968 = vpow.f32 %v1872, 1.4
      %v1969 = vpow.f32 %v1873, 1.4
      %v1970 = vpow.f32 %v1874, 1.4
      %v1971 = vpow.f32 %v1875, 1.4
      %v1972 = vpow.f32 %v1876, 1.4
      %v1973 = vpow.f32 %v1877, 1.4
      %v1974 = vpow.f32 %v1878, 1.4
      %v1975 = vpow.f32 %v1879, 1.4
      %v1976 = vpow.f32 %v1880, 1.4
      %v1977 = vpow.f32 %v1881, 1.4
      %v1978 = vpow.f32 %v1882, 1.4
      %v1979 = vpow.f32 %v1883, 1.4
      %v1980 = vpow.f32 %v1884, 1.4
      %v1981 = vpow.f32 %v1885, 1.4
      %v1982 = vpow.f32 %v1886, 1.4
      %v1983 = vpow.f32 %v1887, 1.4
      %v1984 = vpow.f32 %v1888, 1.4
      %v1985 = vpow.f32 %v1889, 1.4
      %v1986 = vpow.f32 %v1890, 1.4
      %v1987 = vpow.f32 %v1891, 1.4
      %v1988 = vpow.f32 %v1892, 1.4
      %v1989 = vpow.f32 %v1893, 1.4
      %v1990 = vpow.f32 %v1894, 1.4
      %v1991 = vpow.f32 %v1895, 1.4
      %v1992 = vpow.f32 %v1896, 1.4
      %v1993 = vpow.f32 %v1897, 1.4
      %v1994 = vpow.f32 %v1898, 1.4
      %v1995 = vpow.f32 %v1899, 1.4
      %v1996 = vpow.f32 %v1900, 1.4
      %v1997 = vpow.f32 %v1901, 1.4
      %v1998 = vpow.f32 %v1902, 1.4
      %v1999 = vpow.f32 %v1903, 1.4
      %v2000 = vpow.f32 %v1904, 1.4
      %v2001 = vpow.f32 %v1905, 1.4
      %v2002 = vpow.f32 %v1906, 1.4
      %v2003 = vpow.f32 %v1907, 1.4
      %v2004 = vpow.f32 %v1908, 1.4
      %v2005 = vpow.f32 %v1909, 1.4
      %v2006 = vpow.f32 %v1910, 1.4
      %v2007 = vpow.f32 %v1911, 1.4
      %v2008 = vpow.f32 %v1912, 1.4
      %v2009 = vpow.f32 %v1913, 1.4
      %v2010 = vpack.c.bf16 %v1917, %v1914
      %v2011 = vpack.c.bf16 %v1918, %v1915
      %v2012 = vpack.c.bf16 %v1919, %v1916
      %v2013 = vpack.c.bf16 %v1923, %v1920
      %v2014 = vpack.c.bf16 %v1924, %v1921
      %v2015 = vpack.c.bf16 %v1925, %v1922
      %v2016 = vpack.c.bf16 %v1929, %v1926
      %v2017 = vpack.c.bf16 %v1930, %v1927
      %v2018 = vpack.c.bf16 %v1931, %v1928
      %v2019 = vpack.c.bf16 %v1935, %v1932
      %v2020 = vpack.c.bf16 %v1936, %v1933
      %v2021 = vpack.c.bf16 %v1937, %v1934
      %v2022 = vpack.c.bf16 %v1941, %v1938
      %v2023 = vpack.c.bf16 %v1942, %v1939
      %v2024 = vpack.c.bf16 %v1943, %v1940
      %v2025 = vpack.c.bf16 %v1947, %v1944
      %v2026 = vpack.c.bf16 %v1948, %v1945
      %v2027 = vpack.c.bf16 %v1949, %v1946
      %v2028 = vpack.c.bf16 %v1953, %v1950
      %v2029 = vpack.c.bf16 %v1954, %v1951
      %v2030 = vpack.c.bf16 %v1955, %v1952
      %v2031 = vpack.c.bf16 %v1959, %v1956
      %v2032 = vpack.c.bf16 %v1960, %v1957
      %v2033 = vpack.c.bf16 %v1961, %v1958
      %v2034 = vpack.c.bf16 %v1965, %v1962
      %v2035 = vpack.c.bf16 %v1966, %v1963
      %v2036 = vpack.c.bf16 %v1967, %v1964
      %v2037 = vpack.c.bf16 %v1971, %v1968
      %v2038 = vpack.c.bf16 %v1972, %v1969
      %v2039 = vpack.c.bf16 %v1973, %v1970
      %v2040 = vpack.c.bf16 %v1977, %v1974
      %v2041 = vpack.c.bf16 %v1978, %v1975
      %v2042 = vpack.c.bf16 %v1979, %v1976
      %v2043 = vpack.c.bf16 %v1983, %v1980
      %v2044 = vpack.c.bf16 %v1984, %v1981
      %v2045 = vpack.c.bf16 %v1985, %v1982
      %v2046 = vpack.c.bf16 %v1989, %v1986
      %v2047 = vpack.c.bf16 %v1990, %v1987
      %v2048 = vpack.c.bf16 %v1991, %v1988
      %v2049 = vpack.c.bf16 %v1995, %v1992
      %v2050 = vpack.c.bf16 %v1996, %v1993
      %v2051 = vpack.c.bf16 %v1997, %v1994
      %v2052 = vpack.c.bf16 %v2001, %v1998
      %v2053 = vpack.c.bf16 %v2002, %v1999
      %v2054 = vpack.c.bf16 %v2003, %v2000
      %v2055 = vpack.c.bf16 %v2007, %v2004
      %v2056 = vpack.c.bf16 %v2008, %v2005
      %v2057 = vpack.c.bf16 %v2009, %v2006
      %v2106 = vunpack.c.l.b16 %v2010
      %v2107 = vunpack.c.l.b16 %v2011
      %v2108 = vunpack.c.l.b16 %v2012
      %v2109 = vunpack.c.h.b16 %v2010
      %v2110 = vunpack.c.h.b16 %v2011
      %v2111 = vunpack.c.h.b16 %v2012
      %v2112 = vunpack.c.l.b16 %v2013
      %v2113 = vunpack.c.l.b16 %v2014
      %v2114 = vunpack.c.l.b16 %v2015
      %v2115 = vunpack.c.h.b16 %v2013
      %v2116 = vunpack.c.h.b16 %v2014
      %v2117 = vunpack.c.h.b16 %v2015
      %v2118 = vunpack.c.l.b16 %v2016
      %v2119 = vunpack.c.l.b16 %v2017
      %v2120 = vunpack.c.l.b16 %v2018
      %v2121 = vunpack.c.h.b16 %v2016
      %v2122 = vunpack.c.h.b16 %v2017
      %v2123 = vunpack.c.h.b16 %v2018
      %v2124 = vunpack.c.l.b16 %v2019
      %v2125 = vunpack.c.l.b16 %v2020
      %v2126 = vunpack.c.l.b16 %v2021
      %v2127 = vunpack.c.h.b16 %v2019
      %v2128 = vunpack.c.h.b16 %v2020
      %v2129 = vunpack.c.h.b16 %v2021
      %v2130 = vunpack.c.l.b16 %v2022
      %v2131 = vunpack.c.l.b16 %v2023
      %v2132 = vunpack.c.l.b16 %v2024
      %v2133 = vunpack.c.h.b16 %v2022
      %v2134 = vunpack.c.h.b16 %v2023
      %v2135 = vunpack.c.h.b16 %v2024
      %v2136 = vunpack.c.l.b16 %v2025
      %v2137 = vunpack.c.l.b16 %v2026
      %v2138 = vunpack.c.l.b16 %v2027
      %v2139 = vunpack.c.h.b16 %v2025
      %v2140 = vunpack.c.h.b16 %v2026
      %v2141 = vunpack.c.h.b16 %v2027
      %v2142 = vunpack.c.l.b16 %v2028
      %v2143 = vunpack.c.l.b16 %v2029
      %v2144 = vunpack.c.l.b16 %v2030
      %v2145 = vunpack.c.h.b16 %v2028
      %v2146 = vunpack.c.h.b16 %v2029
      %v2147 = vunpack.c.h.b16 %v2030
      %v2148 = vunpack.c.l.b16 %v2031
      %v2149 = vunpack.c.l.b16 %v2032
      %v2150 = vunpack.c.l.b16 %v2033
      %v2151 = vunpack.c.h.b16 %v2031
      %v2152 = vunpack.c.h.b16 %v2032
      %v2153 = vunpack.c.h.b16 %v2033
      %v2154 = vunpack.c.l.b16 %v2034
      %v2155 = vunpack.c.l.b16 %v2035
      %v2156 = vunpack.c.l.b16 %v2036
      %v2157 = vunpack.c.h.b16 %v2034
      %v2158 = vunpack.c.h.b16 %v2035
      %v2159 = vunpack.c.h.b16 %v2036
      %v2160 = vunpack.c.l.b16 %v2037
      %v2161 = vunpack.c.l.b16 %v2038
      %v2162 = vunpack.c.l.b16 %v2039
      %v2163 = vunpack.c.h.b16 %v2037
      %v2164 = vunpack.c.h.b16 %v2038
      %v2165 = vunpack.c.h.b16 %v2039
      %v2166 = vunpack.c.l.b16 %v2040
      %v2167 = vunpack.c.l.b16 %v2041
      %v2168 = vunpack.c.l.b16 %v2042
      %v2169 = vunpack.c.h.b16 %v2040
      %v2170 = vunpack.c.h.b16 %v2041
      %v2171 = vunpack.c.h.b16 %v2042
      %v2172 = vunpack.c.l.b16 %v2043
      %v2173 = vunpack.c.l.b16 %v2044
      %v2174 = vunpack.c.l.b16 %v2045
      %v2175 = vunpack.c.h.b16 %v2043
      %v2176 = vunpack.c.h.b16 %v2044
      %v2177 = vunpack.c.h.b16 %v2045
      %v2178 = vunpack.c.l.b16 %v2046
      %v2179 = vunpack.c.l.b16 %v2047
      %v2180 = vunpack.c.l.b16 %v2048
      %v2181 = vunpack.c.h.b16 %v2046
      %v2182 = vunpack.c.h.b16 %v2047
      %v2183 = vunpack.c.h.b16 %v2048
      %v2184 = vunpack.c.l.b16 %v2049
      %v2185 = vunpack.c.l.b16 %v2050
      %v2186 = vunpack.c.l.b16 %v2051
      %v2187 = vunpack.c.h.b16 %v2049
      %v2188 = vunpack.c.h.b16 %v2050
      %v2189 = vunpack.c.h.b16 %v2051
      %v2190 = vunpack.c.l.b16 %v2052
      %v2191 = vunpack.c.l.b16 %v2053
      %v2192 = vunpack.c.l.b16 %v2054
      %v2193 = vunpack.c.h.b16 %v2052
      %v2194 = vunpack.c.h.b16 %v2053
      %v2195 = vunpack.c.h.b16 %v2054
      %v2196 = vunpack.c.l.b16 %v2055
      %v2197 = vunpack.c.l.b16 %v2056
      %v2198 = vunpack.c.l.b16 %v2057
      %v2199 = vunpack.c.h.b16 %v2055
      %v2200 = vunpack.c.h.b16 %v2056
      %v2201 = vunpack.c.h.b16 %v2057
      %v2202 = vpack.c.b16 %v2107, %v2106
      %v2203 = vpack.c.b16 %v2108, %v2108
      %v2204 = vpack.c.b16 %v2110, %v2109
      %v2205 = vpack.c.b16 %v2111, %v2111
      %v2206 = vpack.c.b16 %v2113, %v2112
      %v2207 = vpack.c.b16 %v2114, %v2114
      %v2208 = vpack.c.b16 %v2116, %v2115
      %v2209 = vpack.c.b16 %v2117, %v2117
      %v2210 = vpack.c.b16 %v2119, %v2118
      %v2211 = vpack.c.b16 %v2120, %v2120
      %v2212 = vpack.c.b16 %v2122, %v2121
      %v2213 = vpack.c.b16 %v2123, %v2123
      %v2214 = vpack.c.b16 %v2125, %v2124
      %v2215 = vpack.c.b16 %v2126, %v2126
      %v2216 = vpack.c.b16 %v2128, %v2127
      %v2217 = vpack.c.b16 %v2129, %v2129
      %v2218 = vpack.c.b16 %v2131, %v2130
      %v2219 = vpack.c.b16 %v2132, %v2132
      %v2220 = vpack.c.b16 %v2134, %v2133
      %v2221 = vpack.c.b16 %v2135, %v2135
      %v2222 = vpack.c.b16 %v2137, %v2136
      %v2223 = vpack.c.b16 %v2138, %v2138
      %v2224 = vpack.c.b16 %v2140, %v2139
      %v2225 = vpack.c.b16 %v2141, %v2141
      %v2226 = vpack.c.b16 %v2143, %v2142
      %v2227 = vpack.c.b16 %v2144, %v2144
      %v2228 = vpack.c.b16 %v2146, %v2145
      %v2229 = vpack.c.b16 %v2147, %v2147
      %v2230 = vpack.c.b16 %v2149, %v2148
      %v2231 = vpack.c.b16 %v2150, %v2150
      %v2232 = vpack.c.b16 %v2152, %v2151
      %v2233 = vpack.c.b16 %v2153, %v2153
      %v2234 = vpack.c.b16 %v2155, %v2154
      %v2235 = vpack.c.b16 %v2156, %v2156
      %v2236 = vpack.c.b16 %v2158, %v2157
      %v2237 = vpack.c.b16 %v2159, %v2159
      %v2238 = vpack.c.b16 %v2161, %v2160
      %v2239 = vpack.c.b16 %v2162, %v2162
      %v2240 = vpack.c.b16 %v2164, %v2163
      %v2241 = vpack.c.b16 %v2165, %v2165
      %v2242 = vpack.c.b16 %v2167, %v2166
      %v2243 = vpack.c.b16 %v2168, %v2168
      %v2244 = vpack.c.b16 %v2170, %v2169
      %v2245 = vpack.c.b16 %v2171, %v2171
      %v2246 = vpack.c.b16 %v2173, %v2172
      %v2247 = vpack.c.b16 %v2174, %v2174
      %v2248 = vpack.c.b16 %v2176, %v2175
      %v2249 = vpack.c.b16 %v2177, %v2177
      %v2250 = vpack.c.b16 %v2179, %v2178
      %v2251 = vpack.c.b16 %v2180, %v2180
      %v2252 = vpack.c.b16 %v2182, %v2181
      %v2253 = vpack.c.b16 %v2183, %v2183
      %v2254 = vpack.c.b16 %v2185, %v2184
      %v2255 = vpack.c.b16 %v2186, %v2186
      %v2256 = vpack.c.b16 %v2188, %v2187
      %v2257 = vpack.c.b16 %v2189, %v2189
      %v2258 = vpack.c.b16 %v2191, %v2190
      %v2259 = vpack.c.b16 %v2192, %v2192
      %v2260 = vpack.c.b16 %v2194, %v2193
      %v2261 = vpack.c.b16 %v2195, %v2195
      %v2262 = vpack.c.b16 %v2197, %v2196
      %v2263 = vpack.c.b16 %v2198, %v2198
      %v2264 = vpack.c.b16 %v2200, %v2199
      %v2265 = vpack.c.b16 %v2201, %v2201
      %2330 = vst [vmem:[%s170] sm:$0xff] %v2202
      %2331 = vst [vmem:[%s170 + $0x8] sm:$0xf] %v2203
      %2332 = vst [vmem:[%s170 + $0xc] sm:$0xff] %v2204
      %2333 = vst [vmem:[%s170 + $0x14] sm:$0xf] %v2205
      %2334 = vst [vmem:[%s170 + $0x18] sm:$0xff] %v2206
      %2335 = vst [vmem:[%s170 + $0x20] sm:$0xf] %v2207
      %2336 = vst [vmem:[%s170 + $0x24] sm:$0xff] %v2208
      %2337 = vst [vmem:[%s170 + $0x2c] sm:$0xf] %v2209
      %2338 = vst [vmem:[%s170 + $0x30] sm:$0xff] %v2210
      %2339 = vst [vmem:[%s170 + $0x38] sm:$0xf] %v2211
      %2340 = vst [vmem:[%s170 + $0x3c] sm:$0xff] %v2212
      %2341 = vst [vmem:[%s170 + $0x44] sm:$0xf] %v2213
      %2342 = vst [vmem:[%s170 + $0x48] sm:$0xff] %v2214
      %2343 = vst [vmem:[%s170 + $0x50] sm:$0xf] %v2215
      %2344 = vst [vmem:[%s170 + $0x54] sm:$0xff] %v2216
      %2345 = vst [vmem:[%s170 + $0x5c] sm:$0xf] %v2217
      %2346 = vst [vmem:[%s170 + $0x60] sm:$0xff] %v2218
      %2347 = vst [vmem:[%s170 + $0x68] sm:$0xf] %v2219
      %2348 = vst [vmem:[%s170 + $0x6c] sm:$0xff] %v2220
      %2349 = vst [vmem:[%s170 + $0x74] sm:$0xf] %v2221
      %2350 = vst [vmem:[%s170 + $0x78] sm:$0xff] %v2222
      %2351 = vst [vmem:[%s170 + $0x80] sm:$0xf] %v2223
      %2352 = vst [vmem:[%s170 + $0x84] sm:$0xff] %v2224
      %2353 = vst [vmem:[%s170 + $0x8c] sm:$0xf] %v2225
      %2354 = vst [vmem:[%s170 + $0x90] sm:$0xff] %v2226
      %2355 = vst [vmem:[%s170 + $0x98] sm:$0xf] %v2227
      %2356 = vst [vmem:[%s170 + $0x9c] sm:$0xff] %v2228
      %2357 = vst [vmem:[%s170 + $0xa4] sm:$0xf] %v2229
      %2358 = vst [vmem:[%s170 + $0xa8] sm:$0xff] %v2230
      %2359 = vst [vmem:[%s170 + $0xb0] sm:$0xf] %v2231
      %2360 = vst [vmem:[%s170 + $0xb4] sm:$0xff] %v2232
      %2361 = vst [vmem:[%s170 + $0xbc] sm:$0xf] %v2233
      %2362 = vst [vmem:[%s170 + $0xc0] sm:$0xff] %v2234
      %2363 = vst [vmem:[%s170 + $0xc8] sm:$0xf] %v2235
      %2364 = vst [vmem:[%s170 + $0xcc] sm:$0xff] %v2236
      %2365 = vst [vmem:[%s170 + $0xd4] sm:$0xf] %v2237
      %2366 = vst [vmem:[%s170 + $0xd8] sm:$0xff] %v2238
      %2367 = vst [vmem:[%s170 + $0xe0] sm:$0xf] %v2239
      %2368 = vst [vmem:[%s170 + $0xe4] sm:$0xff] %v2240
      %2369 = vst [vmem:[%s170 + $0xec] sm:$0xf] %v2241
      %2370 = vst [vmem:[%s170 + $0xf0] sm:$0xff] %v2242
      %2371 = vst [vmem:[%s170 + $0xf8] sm:$0xf] %v2243
      %2372 = vst [vmem:[%s170 + $0xfc] sm:$0xff] %v2244
      %2373 = vst [vmem:[%s170 + $0x104] sm:$0xf] %v2245
      %2374 = vst [vmem:[%s170 + $0x108] sm:$0xff] %v2246
      %2375 = vst [vmem:[%s170 + $0x110] sm:$0xf] %v2247
      %2376 = vst [vmem:[%s170 + $0x114] sm:$0xff] %v2248
      %2377 = vst [vmem:[%s170 + $0x11c] sm:$0xf] %v2249
      %2378 = vst [vmem:[%s170 + $0x120] sm:$0xff] %v2250
      %2379 = vst [vmem:[%s170 + $0x128] sm:$0xf] %v2251
      %2380 = vst [vmem:[%s170 + $0x12c] sm:$0xff] %v2252
      %2381 = vst [vmem:[%s170 + $0x134] sm:$0xf] %v2253
      %2382 = vst [vmem:[%s170 + $0x138] sm:$0xff] %v2254
      %2383 = vst [vmem:[%s170 + $0x140] sm:$0xf] %v2255
      %2384 = vst [vmem:[%s170 + $0x144] sm:$0xff] %v2256
      %2385 = vst [vmem:[%s170 + $0x14c] sm:$0xf] %v2257
      %2386 = vst [vmem:[%s170 + $0x150] sm:$0xff] %v2258
      %2387 = vst [vmem:[%s170 + $0x158] sm:$0xf] %v2259
      %2388 = vst [vmem:[%s170 + $0x15c] sm:$0xff] %v2260
      %2389 = vst [vmem:[%s170 + $0x164] sm:$0xf] %v2261
      %2390 = vst [vmem:[%s170 + $0x168] sm:$0xff] %v2262
      %2391 = vst [vmem:[%s170 + $0x170] sm:$0xf] %v2263
      %2392 = vst [vmem:[%s170 + $0x174] sm:$0xff] %v2264
      %2393 = vst [vmem:[%s170 + $0x17c] sm:$0xf] %v2265
      %p2394 = scmp.lt.s32.totalorder %s14, 1
      %s2395 = scalar_select %p2394, %s14, 1
      %s2396 = smul.addr %s2395, 96
      %s2397 = smul.addr %s2396, 4
      %s2398 = scalar_lea.vmem %s3, %s2397
      // Predicated region
      $region33: #{net_depthwise_forward.5} parent=31 // pred_check
        %p2399 = pneg %p100
      $region34: #{net_depthwise_forward.5} parent=31 // pred_check_branch
        %2401 = sbr.rel (%p2399) target = $region36
      $region35: #{net_depthwise_forward.5} parent=31 // pred_region
        _
      $region36: #{net_depthwise_forward.5} parent=31 // pred_fallthru
        _
    $region32: #{net_depthwise_forward.5} parent=5 // pred_fallthru
      _
    %p2402 = scmp.le.s32.totalorder 2, %s9
    // Predicated region
    $region37: #{net_depthwise_forward.5} parent=5 // pred_check
      %p2403 = pneg %p2402
    $region38: #{net_depthwise_forward.5} parent=5 // pred_check_branch
      %2405 = sbr.rel (%p2403) target = $region40
    $region39: #{net_depthwise_forward.5} parent=5 // pred_region
      %s2406 = ssub.s32 %s9, 2
      // Predicated region
      $region41: #{net_depthwise_forward.5} parent=39 // pred_check
        %p2407 = pneg %p106
      $region42: #{net_depthwise_forward.5} parent=39 // pred_check_branch
        %2409 = sbr.rel (%p2407) target = $region44
      $region43: #{net_depthwise_forward.5} parent=39 // pred_region
        %p2410 = scmp.lt.s32.totalorder %s15, 1
        %s2411 = scalar_select %p2410, %s15, 1
        %s2412 = smul.addr %s2411, 96
        %s2413 = smul.addr %s2412, 4
        %s2414 = scalar_lea.vmem %s3, %s2413
      $region44: #{net_depthwise_forward.5} parent=39 // pred_fallthru
        _
    $region40: #{net_depthwise_forward.5} parent=5 // pred_fallthru
      _
  $region6: #{net_depthwise_forward.5} parent=0 // loop_footer
    %s13 = sadd.s32 1, %s9
  $region7: #{net_depthwise_forward.5} parent=0 // loop_footer_branch
    %8 = sbr.rel target = $region3
  $region8: #{net_depthwise_forward.5} parent=0 // loop_exit
    _

// kernel: net_depthwise_forward.6
$region0: #{net_depthwise_forward.6}
  #allocation0 [shape = 'u32[]', space=smem, size = 0x4, offset = 0x4, fixed_abs, tag = 'smem constant byte address 0x4 - core index']
  #allocation1 [shape = 'u32[144,128]{1,0:T(1,128)}', space=vmem, size = 0x12000, scoped, tag = 'internal scratch']
  #allocation2 [shape = 'f32[10,24,384]{2,1,0:T(8,128)}', space=vmem, size = 0x5a000, scoped, tag = 'scratch operand']
  %s0 = inlined_call_operand.vmem [shape: bf16[2,8,8,384], index: 0, kind: input, shape index: {}]
  %s1 = inlined_call_operand.vmem [shape: f32[3,3,384], index: 1, kind: input, shape index: {}]
  %s2 = inlined_call_operand.vmem [shape: bf16[384,1536], index: 2, kind: input, shape index: {}]
  %s3 = inlined_call_operand.vmem [shape: bf16[2,8,8,1536], index: 3, kind: output, shape index: {}]
  %s4 = sld [smem:[#allocation0]]
  $region45: #{net_depthwise_forward.6} parent=0
    _
  %s6 = ssub.s32 1, %s4
  %s7 = scalar_select 0, %s6, %s4
  loop: start=0, step=1, limit=4
  $region2: #{net_depthwise_forward.6} parent=0 // loop_pre_header
    _
  $region3: #{net_depthwise_forward.6} parent=0 // loop_header
    %s9 = sphi 0, %s13
    %p10 = scmp.ge.s32.totalorder %s9, 4
    %s19 = sphi 0, %s21
    %s22 = sphi 0, %s19
    %s23 = sphi 0, %s22
    %s39 = sphi 0, %s23
    %s43 = sphi 0, %s43
    %s45 = sphi 0, %s43
    %s46 = sphi 0, %s45
    %s60 = sphi 0, %s46
    %s64 = sphi 0, %s64
    %s66 = sphi 0, %s64
    %s67 = sphi 0, %s66
    %s81 = sphi 0, %s67
    %s87 = sphi 0, %s89
    %s90 = sphi 0, %s87
    %s91 = sphi 0, %s90
    %s107 = sphi 0, %s91
  $region4: #{net_depthwise_forward.6} parent=0 // loop_header_branch
    %12 = sbr.rel (%p10) target = $region8
  $region5: #{net_depthwise_forward.6} parent=0 // loop_body
    %s14 = ssub.s32 %s9, 1
    %s15 = ssub.s32 %s9, 2
    %s16 = sadd.s32 %s9, 1
    %s17 = ssub.s32 %s9, %s16
    %p18 = scmp.eq.s32.totalorder %s17, 0
    %s20 = sadd.s32 %s19, 1
    %s21 = scalar_select %p18, %s19, %s20
    %p24 = pneg %p18
    %p25 = scmp.eq.s32.totalorder %s9, 1
    %p26 = por %p24, %p25
    %p27 = scmp.ne.s32.totalorder %s19, %s22
    %p28 = scmp.eq.s32.totalorder %s9, 0
    %p29 = por %p27, %p28
    %p30 = scmp.ne.s32.totalorder %s19, %s22
    %p31 = scmp.eq.s32.totalorder %s14, 1
    %p32 = por %p30, %p31
    %p33 = scmp.ne.s32.totalorder %s22, %s23
    %p34 = scmp.eq.s32.totalorder %s14, 0
    %p35 = por %p33, %p34
    %p36 = scmp.ne.s32.totalorder %s22, %s23
    %p37 = scmp.eq.s32.totalorder %s15, 1
    %p38 = por %p36, %p37
    %p40 = scmp.ne.s32.totalorder %s23, %s39
    %p41 = scmp.eq.s32.totalorder %s15, 0
    %p42 = por %p40, %p41
    %s44 = sadd.s32 %s43, 1
    %p47 = scmp.eq.s32.totalorder %s9, 1
    %p48 = scmp.ne.s32.totalorder %s43, %s45
    %p49 = scmp.eq.s32.totalorder %s9, 0
    %p50 = por %p48, %p49
    %p51 = scmp.ne.s32.totalorder %s43, %s45
    %p52 = scmp.eq.s32.totalorder %s14, 1
    %p53 = por %p51, %p52
    %p54 = scmp.ne.s32.totalorder %s45, %s46
    %p55 = scmp.eq.s32.totalorder %s14, 0
    %p56 = por %p54, %p55
    %p57 = scmp.ne.s32.totalorder %s45, %s46
    %p58 = scmp.eq.s32.totalorder %s15, 1
    %p59 = por %p57, %p58
    %p61 = scmp.ne.s32.totalorder %s46, %s60
    %p62 = scmp.eq.s32.totalorder %s15, 0
    %p63 = por %p61, %p62
    %s65 = sadd.s32 %s64, 1
    %p68 = scmp.eq.s32.totalorder %s9, 1
    %p69 = scmp.ne.s32.totalorder %s64, %s66
    %p70 = scmp.eq.s32.totalorder %s9, 0
    %p71 = por %p69, %p70
    %p72 = scmp.ne.s32.totalorder %s64, %s66
    %p73 = scmp.eq.s32.totalorder %s14, 1
    %p74 = por %p72, %p73
    %p75 = scmp.ne.s32.totalorder %s66, %s67
    %p76 = scmp.eq.s32.totalorder %s14, 0
    %p77 = por %p75, %p76
    %p78 = scmp.ne.s32.totalorder %s66, %s67
    %p79 = scmp.eq.s32.totalorder %s15, 1
    %p80 = por %p78, %p79
    %p82 = scmp.ne.s32.totalorder %s67, %s81
    %p83 = scmp.eq.s32.totalorder %s15, 0
    %p84 = por %p82, %p83
    %s85 = ssub.s32 %s9, %s16
    %p86 = scmp.eq.s32.totalorder %s85, 0
    %s88 = sadd.s32 %s87, 1
    %s89 = scalar_select %p86, %s87, %s88
    %p92 = pneg %p86
    %p93 = scmp.eq.s32.totalorder %s9, 1
    %p94 = por %p92, %p93
    %p95 = scmp.ne.s32.totalorder %s87, %s90
    %p96 = scmp.eq.s32.totalorder %s9, 0
    %p97 = por %p95, %p96
    %p98 = scmp.ne.s32.totalorder %s87, %s90
    %p99 = scmp.eq.s32.totalorder %s14, 1
    %p100 = por %p98, %p99
    %p101 = scmp.ne.s32.totalorder %s90, %s91
    %p102 = scmp.eq.s32.totalorder %s14, 0
    %p103 = por %p101, %p102
    %p104 = scmp.ne.s32.totalorder %s90, %s91
    %p105 = scmp.eq.s32.totalorder %s15, 1
    %p106 = por %p104, %p105
    %p108 = scmp.ne.s32.totalorder %s91, %s107
    %p109 = scmp.eq.s32.totalorder %s15, 0
    %p110 = por %p108, %p109
    %p111 = scmp.le.s32.totalorder 1, %s9
    %p112 = scmp.lt.s32.totalorder %s9, 3
    %p113 = pnand %p111, %p112
    %p114 = pneg %p113
    // Predicated region
    $region9: #{net_depthwise_forward.6} parent=5 // pred_check
      _
    $region10: #{net_depthwise_forward.6} parent=5 // pred_check_branch
      %116 = sbr.rel (%p113) target = $region12
    $region11: #{net_depthwise_forward.6} parent=5 // pred_region
      %s117 = ssub.s32 %s9, 1
      // Predicated region
      $region13: #{net_depthwise_forward.6} parent=11 // pred_check
        %p118 = pneg %p56
      $region14: #{net_depthwise_forward.6} parent=11 // pred_check_branch
        %120 = sbr.rel (%p118) target = $region16
      $region15: #{net_depthwise_forward.6} parent=11 // pred_region
        _
      $region16: #{net_depthwise_forward.6} parent=11 // pred_fallthru
        _
      // Predicated region
      $region17: #{net_depthwise_forward.6} parent=11 // pred_check
        %p121 = pneg %p77
      $region18: #{net_depthwise_forward.6} parent=11 // pred_check_branch
        %123 = sbr.rel (%p121) target = $region20
      $region19: #{net_depthwise_forward.6} parent=11 // pred_region
        _
      $region20: #{net_depthwise_forward.6} parent=11 // pred_fallthru
        _
    $region12: #{net_depthwise_forward.6} parent=5 // pred_fallthru
      _
    %p124 = scmp.lt.s32.totalorder %s9, 2
    // Predicated region
    $region21: #{net_depthwise_forward.6} parent=5 // pred_check
      %p125 = pneg %p124
    $region22: #{net_depthwise_forward.6} parent=5 // pred_check_branch
      %127 = sbr.rel (%p125) target = $region24
    $region23: #{net_depthwise_forward.6} parent=5 // pred_region
      // Predicated region
      $region25: #{net_depthwise_forward.6} parent=23 // pred_check
        %p128 = pneg %p29
      $region26: #{net_depthwise_forward.6} parent=23 // pred_check_branch
        %130 = sbr.rel (%p128) target = $region28
      $region27: #{net_depthwise_forward.6} parent=23 // pred_region
        %p131 = scmp.lt.s32.totalorder %s9, 1
        %s132 = scalar_select %p131, %s9, 1
        %s133 = smul.addr %s132, 24
        %s134 = smul.addr %s133, 4
        %s135 = scalar_lea.vmem %s0, %s134
      $region28: #{net_depthwise_forward.6} parent=23 // pred_fallthru
        _
    $region24: #{net_depthwise_forward.6} parent=5 // pred_fallthru
      _
    %p136 = scmp.le.s32.totalorder 1, %s9
    %p137 = scmp.lt.s32.totalorder %s9, 3
    %p138 = pnand %p136, %p137
    %p139 = pneg %p138
    // Predicated region
    $region29: #{net_depthwise_forward.6} parent=5 // pred_check
      _
    $region30: #{net_depthwise_forward.6} parent=5 // pred_check_branch
      %141 = sbr.rel (%p138) target = $region32
    $region31: #{net_depthwise_forward.6} parent=5 // pred_region
      %s142 = ssub.s32 %s9, 1
      %p143 = scmp.lt.s32.totalorder %s14, 1
      %s144 = scalar_select %p143, %s14, 1
      %s145 = smul.addr %s144, 24
      %s146 = smul.addr %s145, 4
      %s147 = scalar_lea.vmem %s0, %s146
      %p148 = pneg %p35
      %p149 = pneg %p32
      %p150 = pneg %p56
      %p151 = pneg %p53
      %p152 = pneg %p77
      %p153 = pneg %p74
      %p154 = pneg %p103
      %p155 = pneg %p100
      %p156 = scmp.lt.s32.totalorder %s14, 1
      %s157 = scalar_select %p156, %s14, 1
      %s158 = smul.addr %s157, 96
      %s159 = smul.addr %s158, 4
      %s160 = scalar_lea.vmem %s3, %s159
      %p161 = scmp.lt.s32.totalorder %s14, 1
      %s162 = scalar_select %p161, %s14, 1
      %s163 = smul.addr %s162, 24
      %s164 = smul.addr %s163, 4
      %s165 = scalar_lea.vmem %s0, %s164
      %p166 = scmp.lt.s32.totalorder %s14, 1
      %s167 = scalar_select %p166, %s14, 1
      %s168 = smul.addr %s167, 96
      %s169 = smul.addr %s168, 4
      %s170 = scalar_lea.vmem %s3, %s169
      %172 = vst [vmem:[#allocation2] sm:$0xff] 0.0
      %173 = vst [vmem:[#allocation2 + $0x8] sm:$0xff] 0.0
      %174 = vst [vmem:[#allocation2 + $0x10] sm:$0xff] 0.0
      %175 = vst [vmem:[#allocation2 + $0x18] sm:$0xff] 0.0
      %176 = vst [vmem:[#allocation2 + $0x20] sm:$0xff] 0.0
      %177 = vst [vmem:[#allocation2 + $0x28] sm:$0xff] 0.0
      %178 = vst [vmem:[#allocation2 + $0x30] sm:$0xff] 0.0
      %179 = vst [vmem:[#allocation2 + $0x38] sm:$0xff] 0.0
      %180 = vst [vmem:[#allocation2 + $0x40] sm:$0xff] 0.0
      %181 = vst [vmem:[#allocation2 + $0x48] sm:$0xff] 0.0
      %182 = vst [vmem:[#allocation2 + $0x50] sm:$0xff] 0.0
      %183 = vst [vmem:[#allocation2 + $0x58] sm:$0xff] 0.0
      %184 = vst [vmem:[#allocation2 + $0x60] sm:$0xff] 0.0
      %185 = vst [vmem:[#allocation2 + $0x68] sm:$0xff] 0.0
      %186 = vst [vmem:[#allocation2 + $0x70] sm:$0xff] 0.0
      %187 = vst [vmem:[#allocation2 + $0x78] sm:$0xff] 0.0
      %188 = vst [vmem:[#allocation2 + $0x80] sm:$0xff] 0.0
      %189 = vst [vmem:[#allocation2 + $0x88] sm:$0xff] 0.0
      %190 = vst [vmem:[#allocation2 + $0x90] sm:$0xff] 0.0
      %191 = vst [vmem:[#allocation2 + $0x98] sm:$0xff] 0.0
      %192 = vst [vmem:[#allocation2 + $0xa0] sm:$0xff] 0.0
      %193 = vst [vmem:[#allocation2 + $0xa8] sm:$0xff] 0.0
      %194 = vst [vmem:[#allocation2 + $0xb0] sm:$0xff] 0.0
      %195 = vst [vmem:[#allocation2 + $0xb8] sm:$0xff] 0.0
      %196 = vst [vmem:[#allocation2 + $0xc0] sm:$0xff] 0.0
      %197 = vst [vmem:[#allocation2 + $0xc8] sm:$0xff] 0.0
      %198 = vst [vmem:[#allocation2 + $0xd0] sm:$0xff] 0.0
      %199 = vst [vmem:[#allocation2 + $0xd8] sm:$0xff] 0.0
      %200 = vst [vmem:[#allocation2 + $0xe0] sm:$0xff] 0.0
      %201 = vst [vmem:[#allocation2 + $0xe8] sm:$0xff] 0.0
      %202 = vst [vmem:[#allocation2 + $0xf0] sm:$0xff] 0.0
      %203 = vst [vmem:[#allocation2 + $0xf8] sm:$0xff] 0.0
      %204 = vst [vmem:[#allocation2 + $0x100] sm:$0xff] 0.0
      %205 = vst [vmem:[#allocation2 + $0x108] sm:$0xff] 0.0
      %206 = vst [vmem:[#allocation2 + $0x110] sm:$0xff] 0.0
      %207 = vst [vmem:[#allocation2 + $0x118] sm:$0xff] 0.0
      %208 = vst [vmem:[#allocation2 + $0x120] sm:$0xff] 0.0
      %209 = vst [vmem:[#allocation2 + $0x128] sm:$0xff] 0.0
      %210 = vst [vmem:[#allocation2 + $0x130] sm:$0xff] 0.0
      %211 = vst [vmem:[#allocation2 + $0x138] sm:$0xff] 0.0
      %212 = vst [vmem:[#allocation2 + $0x140] sm:$0xff] 0.0
      %213 = vst [vmem:[#allocation2 + $0x148] sm:$0xff] 0.0
      %214 = vst [vmem:[#allocation2 + $0x150] sm:$0xff] 0.0
      %215 = vst [vmem:[#allocation2 + $0x158] sm:$0xff] 0.0
      %216 = vst [vmem:[#allocation2 + $0x160] sm:$0xff] 0.0
      %217 = vst [vmem:[#allocation2 + $0x168] sm:$0xff] 0.0
      %218 = vst [vmem:[#allocation2 + $0x170] sm:$0xff] 0.0
      %219 = vst [vmem:[#allocation2 + $0x178] sm:$0xff] 0.0
      %220 = vst [vmem:[#allocation2 + $0x180] sm:$0xff] 0.0
      %221 = vst [vmem:[#allocation2 + $0x188] sm:$0xff] 0.0
      %222 = vst [vmem:[#allocation2 + $0x190] sm:$0xff] 0.0
      %223 = vst [vmem:[#allocation2 + $0x198] sm:$0xff] 0.0
      %224 = vst [vmem:[#allocation2 + $0x1a0] sm:$0xff] 0.0
      %225 = vst [vmem:[#allocation2 + $0x1a8] sm:$0xff] 0.0
      %226 = vst [vmem:[#allocation2 + $0x1b0] sm:$0xff] 0.0
      %227 = vst [vmem:[#allocation2 + $0x1b8] sm:$0xff] 0.0
      %228 = vst [vmem:[#allocation2 + $0x1c0] sm:$0xff] 0.0
      %229 = vst [vmem:[#allocation2 + $0x1c8] sm:$0xff] 0.0
      %230 = vst [vmem:[#allocation2 + $0x1d0] sm:$0xff] 0.0
      %231 = vst [vmem:[#allocation2 + $0x1d8] sm:$0xff] 0.0
      %232 = vst [vmem:[#allocation2 + $0x1e0] sm:$0xff] 0.0
      %233 = vst [vmem:[#allocation2 + $0x1e8] sm:$0xff] 0.0
      %234 = vst [vmem:[#allocation2 + $0x1f0] sm:$0xff] 0.0
      %235 = vst [vmem:[#allocation2 + $0x1f8] sm:$0xff] 0.0
      %236 = vst [vmem:[#allocation2 + $0x200] sm:$0xff] 0.0
      %237 = vst [vmem:[#allocation2 + $0x208] sm:$0xff] 0.0
      %238 = vst [vmem:[#allocation2 + $0x210] sm:$0xff] 0.0
      %239 = vst [vmem:[#allocation2 + $0x218] sm:$0xff] 0.0
      %240 = vst [vmem:[#allocation2 + $0x220] sm:$0xff] 0.0
      %241 = vst [vmem:[#allocation2 + $0x228] sm:$0xff] 0.0
      %242 = vst [vmem:[#allocation2 + $0x230] sm:$0xff] 0.0
      %243 = vst [vmem:[#allocation2 + $0x238] sm:$0xff] 0.0
      %244 = vst [vmem:[#allocation2 + $0x240] sm:$0xff] 0.0
      %245 = vst [vmem:[#allocation2 + $0x248] sm:$0xff] 0.0
      %246 = vst [vmem:[#allocation2 + $0x250] sm:$0xff] 0.0
      %247 = vst [vmem:[#allocation2 + $0x258] sm:$0xff] 0.0
      %248 = vst [vmem:[#allocation2 + $0x260] sm:$0xff] 0.0
      %249 = vst [vmem:[#allocation2 + $0x268] sm:$0xff] 0.0
      %250 = vst [vmem:[#allocation2 + $0x270] sm:$0xff] 0.0
      %251 = vst [vmem:[#allocation2 + $0x278] sm:$0xff] 0.0
      %252 = vst [vmem:[#allocation2 + $0x280] sm:$0xff] 0.0
      %253 = vst [vmem:[#allocation2 + $0x288] sm:$0xff] 0.0
      %254 = vst [vmem:[#allocation2 + $0x290] sm:$0xff] 0.0
      %255 = vst [vmem:[#allocation2 + $0x298] sm:$0xff] 0.0
      %256 = vst [vmem:[#allocation2 + $0x2a0] sm:$0xff] 0.0
      %257 = vst [vmem:[#allocation2 + $0x2a8] sm:$0xff] 0.0
      %258 = vst [vmem:[#allocation2 + $0x2b0] sm:$0xff] 0.0
      %259 = vst [vmem:[#allocation2 + $0x2b8] sm:$0xff] 0.0
      %260 = vst [vmem:[#allocation2 + $0x2c0] sm:$0xff] 0.0
      %261 = vst [vmem:[#allocation2 + $0x2c8] sm:$0xff] 0.0
      %v262 = vld [vmem:[%s165] sm:$0xff]
      %v263 = vld [vmem:[%s165 + $0x8] sm:$0xf]
      %v264 = vld [vmem:[%s165 + $0xc] sm:$0xff]
      %v265 = vld [vmem:[%s165 + $0x14] sm:$0xf]
      %v266 = vld [vmem:[%s165 + $0x18] sm:$0xff]
      %v267 = vld [vmem:[%s165 + $0x20] sm:$0xf]
      %v268 = vld [vmem:[%s165 + $0x24] sm:$0xff]
      %v269 = vld [vmem:[%s165 + $0x2c] sm:$0xf]
      %v270 = vld [vmem:[%s165 + $0x30] sm:$0xff]
      %v271 = vld [vmem:[%s165 + $0x38] sm:$0xf]
      %v272 = vld [vmem:[%s165 + $0x3c] sm:$0xff]
      %v273 = vld [vmem:[%s165 + $0x44] sm:$0xf]
      %v274 = vld [vmem:[%s165 + $0x48] sm:$0xff]
      %v275 = vld [vmem:[%s165 + $0x50] sm:$0xf]
      %v276 = vld [vmem:[%s165 + $0x54] sm:$0xff]
      %v277 = vld [vmem:[%s165 + $0x5c] sm:$0xf]
      %v278 = vunpack.c.l.bf16 %v262
      %v279 = vunpack.c.h.bf16 %v262
      %v280 = vunpack.c.l.bf16 %v263
      %v281 = vunpack.c.l.bf16 %v264
      %v282 = vunpack.c.h.bf16 %v264
      %v283 = vunpack.c.l.bf16 %v265
      %v284 = vunpack.c.l.bf16 %v266
      %v285 = vunpack.c.h.bf16 %v266
      %v286 = vunpack.c.l.bf16 %v267
      %v287 = vunpack.c.l.bf16 %v268
      %v288 = vunpack.c.h.bf16 %v268
      %v289 = vunpack.c.l.bf16 %v269
      %v290 = vunpack.c.l.bf16 %v270
      %v291 = vunpack.c.h.bf16 %v270
      %v292 = vunpack.c.l.bf16 %v271
      %v293 = vunpack.c.l.bf16 %v272
      %v294 = vunpack.c.h.bf16 %v272
      %v295 = vunpack.c.l.bf16 %v273
      %v296 = vunpack.c.l.bf16 %v274
      %v297 = vunpack.c.h.bf16 %v274
      %v298 = vunpack.c.l.bf16 %v275
      %v299 = vunpack.c.l.bf16 %v276
      %v300 = vunpack.c.h.bf16 %v276
      %v301 = vunpack.c.l.bf16 %v277
      %s302 = scalar_lea.vmem [#allocation2], 72
      %303 = vst [vmem:[%s302 + $0x18] sm:$0xff] %v278
      %304 = vst [vmem:[%s302 + $0x20] sm:$0xff] %v279
      %305 = vst [vmem:[%s302 + $0x28] sm:$0xff] %v280
      %306 = vst [vmem:[%s302 + $0x60] sm:$0xff] %v281
      %307 = vst [vmem:[%s302 + $0x68] sm:$0xff] %v282
      %308 = vst [vmem:[%s302 + $0x70] sm:$0xff] %v283
      %309 = vst [vmem:[%s302 + $0xa8] sm:$0xff] %v284
      %310 = vst [vmem:[%s302 + $0xb0] sm:$0xff] %v285
      %311 = vst [vmem:[%s302 + $0xb8] sm:$0xff] %v286
      %312 = vst [vmem:[%s302 + $0xf0] sm:$0xff] %v287
      %313 = vst [vmem:[%s302 + $0xf8] sm:$0xff] %v288
      %314 = vst [vmem:[%s302 + $0x100] sm:$0xff] %v289
      %315 = vst [vmem:[%s302 + $0x138] sm:$0xff] %v290
      %316 = vst [vmem:[%s302 + $0x140] sm:$0xff] %v291
      %317 = vst [vmem:[%s302 + $0x148] sm:$0xff] %v292
      %318 = vst [vmem:[%s302 + $0x180] sm:$0xff] %v293
      %319 = vst [vmem:[%s302 + $0x188] sm:$0xff] %v294
      %320 = vst [vmem:[%s302 + $0x190] sm:$0xff] %v295
      %321 = vst [vmem:[%s302 + $0x1c8] sm:$0xff] %v296
      %322 = vst [vmem:[%s302 + $0x1d0] sm:$0xff] %v297
      %323 = vst [vmem:[%s302 + $0x1d8] sm:$0xff] %v298
      %324 = vst [vmem:[%s302 + $0x210] sm:$0xff] %v299
      %325 = vst [vmem:[%s302 + $0x218] sm:$0xff] %v300
      %326 = vst [vmem:[%s302 + $0x220] sm:$0xff] %v301
      %v327 = vld [vmem:[%s1] sm:$0x77]
      %v328 = vld [vmem:[%s1 + $0x8] sm:$0x7]
      %v329 = vld [vmem:[%s1 + $0xc] sm:$0x77]
      %v330 = vld [vmem:[%s1 + $0x14] sm:$0x7]
      %v331 = vld [vmem:[%s1 + $0x18] sm:$0x77]
      %v332 = vld [vmem:[%s1 + $0x20] sm:$0x7]
      %v333 = vld [vmem:[#allocation2] sm:$0x80]
      %v334 = vld [vmem:[#allocation2 + $0x8] sm:$0x80]
      %v335 = vld [vmem:[#allocation2 + $0x10] sm:$0x80]
      %v336 = vld [vmem:[#allocation2 + $0x18] sm:$0x7f]
      %v337 = vld [vmem:[#allocation2 + $0x20] sm:$0x7f]
      %v338 = vld [vmem:[#allocation2 + $0x28] sm:$0x7f]
      %v339 = vld [vmem:[#allocation2 + $0x48] sm:$0x80]
      %v340 = vld [vmem:[#allocation2 + $0x50] sm:$0x80]
      %v341 = vld [vmem:[#allocation2 + $0x58] sm:$0x80]
      %v342 = vld [vmem:[#allocation2 + $0x60] sm:$0x7f]
      %v343 = vld [vmem:[#allocation2 + $0x68] sm:$0x7f]
      %v344 = vld [vmem:[#allocation2 + $0x70] sm:$0x7f]
      %v345 = vld [vmem:[#allocation2 + $0x90] sm:$0x80]
      %v346 = vld [vmem:[#allocation2 + $0x98] sm:$0x80]
      %v347 = vld [vmem:[#allocation2 + $0xa0] sm:$0x80]
      %v348 = vld [vmem:[#allocation2 + $0xa8] sm:$0x7f]
      %v349 = vld [vmem:[#allocation2 + $0xb0] sm:$0x7f]
      %v350 = vld [vmem:[#allocation2 + $0xb8] sm:$0x7f]
      %v351 = vld [vmem:[#allocation2 + $0xd8] sm:$0x80]
      %v352 = vld [vmem:[#allocation2 + $0xe0] sm:$0x80]
      %v353 = vld [vmem:[#allocation2 + $0xe8] sm:$0x80]
      %v354 = vld [vmem:[#allocation2 + $0xf0] sm:$0x7f]
      %v355 = vld [vmem:[#allocation2 + $0xf8] sm:$0x7f]
      %v356 = vld [vmem:[#allocation2 + $0x100] sm:$0x7f]
      %v357 = vld [vmem:[#allocation2 + $0x120] sm:$0x80]
      %v358 = vld [vmem:[#allocation2 + $0x128] sm:$0x80]
      %v359 = vld [vmem:[#allocation2 + $0x130] sm:$0x80]
      %v360 = vld [vmem:[#allocation2 + $0x138] sm:$0x7f]
      %v361 = vld [vmem:[#allocation2 + $0x140] sm:$0x7f]
      %v362 = vld [vmem:[#allocation2 + $0x148] sm:$0x7f]
      %v363 = vld [vmem:[#allocation2 + $0x168] sm:$0x80]
      %v364 = vld [vmem:[#allocation2 + $0x170] sm:$0x80]
      %v365 = vld [vmem:[#allocation2 + $0x178] sm:$0x80]
      %v366 = vld [vmem:[#allocation2 + $0x180] sm:$0x7f]
      %v367 = vld [vmem:[#allocation2 + $0x188] sm:$0x7f]
      %v368 = vld [vmem:[#allocation2 + $0x190] sm:$0x7f]
      %v369 = vld [vmem:[#allocation2 + $0x1b0] sm:$0x80]
      %v370 = vld [vmem:[#allocation2 + $0x1b8] sm:$0x80]
      %v371 = vld [vmem:[#allocation2 + $0x1c0] sm:$0x80]
      %v372 = vld [vmem:[#allocation2 + $0x1c8] sm:$0x7f]
      %v373 = vld [vmem:[#allocation2 + $0x1d0] sm:$0x7f]
      %v374 = vld [vmem:[#allocation2 + $0x1d8] sm:$0x7f]
      %v375 = vld [vmem:[#allocation2 + $0x1f8] sm:$0x80]
      %v376 = vld [vmem:[#allocation2 + $0x200] sm:$0x80]
      %v377 = vld [vmem:[#allocation2 + $0x208] sm:$0x80]
      %v378 = vld [vmem:[#allocation2 + $0x210] sm:$0x7f]
      %v379 = vld [vmem:[#allocation2 + $0x218] sm:$0x7f]
      %v380 = vld [vmem:[#allocation2 + $0x220] sm:$0x7f]
      %v381 = vld [vmem:[#allocation2 + $0x240] sm:$0x80]
      %v382 = vld [vmem:[#allocation2 + $0x248] sm:$0x80]
      %v383 = vld [vmem:[#allocation2 + $0x250] sm:$0x80]
      %v384 = vld [vmem:[#allocation2 + $0x258] sm:$0x7f]
      %v385 = vld [vmem:[#allocation2 + $0x260] sm:$0x7f]
      %v386 = vld [vmem:[#allocation2 + $0x268] sm:$0x7f]
      %v387 = vld [vmem:[#allocation2 + $0x288] sm:$0x80]
      %v388 = vld [vmem:[#allocation2 + $0x290] sm:$0x80]
      %v389 = vld [vmem:[#allocation2 + $0x298] sm:$0x80]
      %v390 = vld [vmem:[#allocation2 + $0x2a0] sm:$0x7f]
      %v391 = vld [vmem:[#allocation2 + $0x2a8] sm:$0x7f]
      %v392 = vld [vmem:[#allocation2 + $0x2b0] sm:$0x7f]
      %v393 = vld [vmem:[#allocation2 + $0x18] sm:$0xff]
      %v394 = vld [vmem:[#allocation2 + $0x20] sm:$0xff]
      %v395 = vld [vmem:[#allocation2 + $0x28] sm:$0xff]
      %v396 = vld [vmem:[#allocation2 + $0x60] sm:$0xff]
      %v397 = vld [vmem:[#allocation2 + $0x68] sm:$0xff]
      %v398 = vld [vmem:[#allocation2 + $0x70] sm:$0xff]
      %v399 = vld [vmem:[#allocation2 + $0xa8] sm:$0xff]
      %v400 = vld [vmem:[#allocation2 + $0xb0] sm:$0xff]
      %v401 = vld [vmem:[#allocation2 + $0xb8] sm:$0xff]
      %v402 = vld [vmem:[#allocation2 + $0xf0] sm:$0xff]
      %v403 = vld [vmem:[#allocation2 + $0xf8] sm:$0xff]
      %v404 = vld [vmem:[#allocation2 + $0x100] sm:$0xff]
      %v405 = vld [vmem:[#allocation2 + $0x138] sm:$0xff]
      %v406 = vld [vmem:[#allocation2 + $0x140] sm:$0xff]
      %v407 = vld [vmem:[#allocation2 + $0x148] sm:$0xff]
      %v408 = vld [vmem:[#allocation2 + $0x180] sm:$0xff]
      %v409 = vld [vmem:[#allocation2 + $0x188] sm:$0xff]
      %v410 = vld [vmem:[#allocation2 + $0x190] sm:$0xff]
      %v411 = vld [vmem:[#allocation2 + $0x1c8] sm:$0xff]
      %v412 = vld [vmem:[#allocation2 + $0x1d0] sm:$0xff]
      %v413 = vld [vmem:[#allocation2 + $0x1d8] sm:$0xff]
      %v414 = vld [vmem:[#allocation2 + $0x210] sm:$0xff]
      %v415 = vld [vmem:[#allocation2 + $0x218] sm:$0xff]
      %v416 = vld [vmem:[#allocation2 + $0x220] sm:$0xff]
      %v417 = vld [vmem:[#allocation2 + $0x258] sm:$0xff]
      %v418 = vld [vmem:[#allocation2 + $0x260] sm:$0xff]
      %v419 = vld [vmem:[#allocation2 + $0x268] sm:$0xff]
      %v420 = vld [vmem:[#allocation2 + $0x2a0] sm:$0xff]
      %v421 = vld [vmem:[#allocation2 + $0x2a8] sm:$0xff]
      %v422 = vld [vmem:[#allocation2 + $0x2b0] sm:$0xff]
      %v423 = vld [vmem:[#allocation2 + $0x18] sm:$0xfe]
      %v424 = vld [vmem:[#allocation2 + $0x20] sm:$0xfe]
      %v425 = vld [vmem:[#allocation2 + $0x28] sm:$0xfe]
      %v426 = vld [vmem:[#allocation2 + $0x30] sm:$0x1]
      %v427 = vld [vmem:[#allocation2 + $0x38] sm:$0x1]
      %v428 = vld [vmem:[#allocation2 + $0x40] sm:$0x1]
      %v429 = vld [vmem:[#allocation2 + $0x60] sm:$0xfe]
      %v430 = vld [vmem:[#allocation2 + $0x68] sm:$0xfe]
      %v431 = vld [vmem:[#allocation2 + $0x70] sm:$0xfe]
      %v432 = vld [vmem:[#allocation2 + $0x78] sm:$0x1]
      %v433 = vld [vmem:[#allocation2 + $0x80] sm:$0x1]
      %v434 = vld [vmem:[#allocation2 + $0x88] sm:$0x1]
      %v435 = vld [vmem:[#allocation2 + $0xa8] sm:$0xfe]
      %v436 = vld [vmem:[#allocation2 + $0xb0] sm:$0xfe]
      %v437 = vld [vmem:[#allocation2 + $0xb8] sm:$0xfe]
      %v438 = vld [vmem:[#allocation2 + $0xc0] sm:$0x1]
      %v439 = vld [vmem:[#allocation2 + $0xc8] sm:$0x1]
      %v440 = vld [vmem:[#allocation2 + $0xd0] sm:$0x1]
      %v441 = vld [vmem:[#allocation2 + $0xf0] sm:$0xfe]
      %v442 = vld [vmem:[#allocation2 + $0xf8] sm:$0xfe]
      %v443 = vld [vmem:[#allocation2 + $0x100] sm:$0xfe]
      %v444 = vld [vmem:[#allocation2 + $0x108] sm:$0x1]
      %v445 = vld [vmem:[#allocation2 + $0x110] sm:$0x1]
      %v446 = vld [vmem:[#allocation2 + $0x118] sm:$0x1]
      %v447 = vld [vmem:[#allocation2 + $0x138] sm:$0xfe]
      %v448 = vld [vmem:[#allocation2 + $0x140] sm:$0xfe]
      %v449 = vld [vmem:[#allocation2 + $0x148] sm:$0xfe]
      %v450 = vld [vmem:[#allocation2 + $0x150] sm:$0x1]
      %v451 = vld [vmem:[#allocation2 + $0x158] sm:$0x1]
      %v452 = vld [vmem:[#allocation2 + $0x160] sm:$0x1]
      %v453 = vld [vmem:[#allocation2 + $0x180] sm:$0xfe]
      %v454 = vld [vmem:[#allocation2 + $0x188] sm:$0xfe]
      %v455 = vld [vmem:[#allocation2 + $0x190] sm:$0xfe]
      %v456 = vld [vmem:[#allocation2 + $0x198] sm:$0x1]
      %v457 = vld [vmem:[#allocation2 + $0x1a0] sm:$0x1]
      %v458 = vld [vmem:[#allocation2 + $0x1a8] sm:$0x1]
      %v459 = vld [vmem:[#allocation2 + $0x1c8] sm:$0xfe]
      %v460 = vld [vmem:[#allocation2 + $0x1d0] sm:$0xfe]
      %v461 = vld [vmem:[#allocation2 + $0x1d8] sm:$0xfe]
      %v462 = vld [vmem:[#allocation2 + $0x1e0] sm:$0x1]
      %v463 = vld [vmem:[#allocation2 + $0x1e8] sm:$0x1]
      %v464 = vld [vmem:[#allocation2 + $0x1f0] sm:$0x1]
      %v465 = vld [vmem:[#allocation2 + $0x210] sm:$0xfe]
      %v466 = vld [vmem:[#allocation2 + $0x218] sm:$0xfe]
      %v467 = vld [vmem:[#allocation2 + $0x220] sm:$0xfe]
      %v468 = vld [vmem:[#allocation2 + $0x228] sm:$0x1]
      %v469 = vld [vmem:[#allocation2 + $0x230] sm:$0x1]
      %v470 = vld [vmem:[#allocation2 + $0x238] sm:$0x1]
      %v471 = vld [vmem:[#allocation2 + $0x258] sm:$0xfe]
      %v472 = vld [vmem:[#allocation2 + $0x260] sm:$0xfe]
      %v473 = vld [vmem:[#allocation2 + $0x268] sm:$0xfe]
      %v474 = vld [vmem:[#allocation2 + $0x270] sm:$0x1]
      %v475 = vld [vmem:[#allocation2 + $0x278] sm:$0x1]
      %v476 = vld [vmem:[#allocation2 + $0x280] sm:$0x1]
      %v477 = vld [vmem:[#allocation2 + $0x2a0] sm:$0xfe]
      %v478 = vld [vmem:[#allocation2 + $0x2a8] sm:$0xfe]
      %v479 = vld [vmem:[#allocation2 + $0x2b0] sm:$0xfe]
      %v480 = vld [vmem:[#allocation2 + $0x2b8] sm:$0x1]
      %v481 = vld [vmem:[#allocation2 + $0x2c0] sm:$0x1]
      %v482 = vld [vmem:[#allocation2 + $0x2c8] sm:$0x1]
      %v485 = vlaneseq
      %v486 = vshrl.u32 %v485, 7
      %v487 = vsub.s32 0, %v486
      %v488 = vrot.slane %v327, %v487
      %v489 = vlaneseq
      %v490 = vshrl.u32 %v489, 7
      %v491 = vsub.s32 4, %v490
      %v492 = vrot.slane %v327, %v491
      %v493 = vlaneseq
      %v494 = vshrl.u32 %v493, 7
      %v495 = vsub.s32 0, %v494
      %v496 = vrot.slane %v328, %v495
      %v500 = vlaneseq
      %v501 = vshrl.u32 %v500, 7
      %v502 = vsub.s32 0, %v501
      %v503 = vrot.slane %v488, %v502
      %v504 = vlaneseq
      %v505 = vshrl.u32 %v504, 7
      %v506 = vsub.s32 0, %v505
      %v507 = vrot.slane %v492, %v506
      %v508 = vlaneseq
      %v509 = vshrl.u32 %v508, 7
      %v510 = vsub.s32 0, %v509
      %v511 = vrot.slane %v496, %v510
      %v512 = vmul.f32 %v333, %v503
      %v513 = vmul.f32 %v334, %v507
      %v514 = vmul.f32 %v335, %v511
      %v515 = vmul.f32 %v336, %v503
      %v516 = vmul.f32 %v337, %v507
      %v517 = vmul.f32 %v338, %v511
      %v518 = vmul.f32 %v339, %v503
      %v519 = vmul.f32 %v340, %v507
      %v520 = vmul.f32 %v341, %v511
      %v521 = vmul.f32 %v342, %v503
      %v522 = vmul.f32 %v343, %v507
      %v523 = vmul.f32 %v344, %v511
      %v524 = vmul.f32 %v345, %v503
      %v525 = vmul.f32 %v346, %v507
      %v526 = vmul.f32 %v347, %v511
      %v527 = vmul.f32 %v348, %v503
      %v528 = vmul.f32 %v349, %v507
      %v529 = vmul.f32 %v350, %v511
      %v530 = vmul.f32 %v351, %v503
      %v531 = vmul.f32 %v352, %v507
      %v532 = vmul.f32 %v353, %v511
      %v533 = vmul.f32 %v354, %v503
      %v534 = vmul.f32 %v355, %v507
      %v535 = vmul.f32 %v356, %v511
      %v536 = vmul.f32 %v357, %v503
      %v537 = vmul.f32 %v358, %v507
      %v538 = vmul.f32 %v359, %v511
      %v539 = vmul.f32 %v360, %v503
      %v540 = vmul.f32 %v361, %v507
      %v541 = vmul.f32 %v362, %v511
      %v542 = vmul.f32 %v363, %v503
      %v543 = vmul.f32 %v364, %v507
      %v544 = vmul.f32 %v365, %v511
      %v545 = vmul.f32 %v366, %v503
      %v546 = vmul.f32 %v367, %v507
      %v547 = vmul.f32 %v368, %v511
      %v548 = vmul.f32 %v369, %v503
      %v549 = vmul.f32 %v370, %v507
      %v550 = vmul.f32 %v371, %v511
      %v551 = vmul.f32 %v372, %v503
      %v552 = vmul.f32 %v373, %v507
      %v553 = vmul.f32 %v374, %v511
      %v554 = vmul.f32 %v375, %v503
      %v555 = vmul.f32 %v376, %v507
      %v556 = vmul.f32 %v377, %v511
      %v557 = vmul.f32 %v378, %v503
      %v558 = vmul.f32 %v379, %v507
      %v559 = vmul.f32 %v380, %v511
      %v562 = vlaneseq
      %v563 = vshrl.u32 %v562, 7
      %v564 = vsub.s32 0, %v563
      %v565 = vrot.slane %v329, %v564
      %v566 = vlaneseq
      %v567 = vshrl.u32 %v566, 7
      %v568 = vsub.s32 4, %v567
      %v569 = vrot.slane %v329, %v568
      %v570 = vlaneseq
      %v571 = vshrl.u32 %v570, 7
      %v572 = vsub.s32 0, %v571
      %v573 = vrot.slane %v330, %v572
      %v577 = vlaneseq
      %v578 = vshrl.u32 %v577, 7
      %v579 = vsub.s32 0, %v578
      %v580 = vrot.slane %v565, %v579
      %v581 = vlaneseq
      %v582 = vshrl.u32 %v581, 7
      %v583 = vsub.s32 0, %v582
      %v584 = vrot.slane %v569, %v583
      %v585 = vlaneseq
      %v586 = vshrl.u32 %v585, 7
      %v587 = vsub.s32 0, %v586
      %v588 = vrot.slane %v573, %v587
      %v589 = vmul.f32 %v339, %v580
      %v590 = vmul.f32 %v340, %v584
      %v591 = vmul.f32 %v341, %v588
      %v592 = vmul.f32 %v342, %v580
      %v593 = vmul.f32 %v343, %v584
      %v594 = vmul.f32 %v344, %v588
      %v595 = vmul.f32 %v345, %v580
      %v596 = vmul.f32 %v346, %v584
      %v597 = vmul.f32 %v347, %v588
      %v598 = vmul.f32 %v348, %v580
      %v599 = vmul.f32 %v349, %v584
      %v600 = vmul.f32 %v350, %v588
      %v601 = vmul.f32 %v351, %v580
      %v602 = vmul.f32 %v352, %v584
      %v603 = vmul.f32 %v353, %v588
      %v604 = vmul.f32 %v354, %v580
      %v605 = vmul.f32 %v355, %v584
      %v606 = vmul.f32 %v356, %v588
      %v607 = vmul.f32 %v357, %v580
      %v608 = vmul.f32 %v358, %v584
      %v609 = vmul.f32 %v359, %v588
      %v610 = vmul.f32 %v360, %v580
      %v611 = vmul.f32 %v361, %v584
      %v612 = vmul.f32 %v362, %v588
      %v613 = vmul.f32 %v363, %v580
      %v614 = vmul.f32 %v364, %v584
      %v615 = vmul.f32 %v365, %v588
      %v616 = vmul.f32 %v366, %v580
      %v617 = vmul.f32 %v367, %v584
      %v618 = vmul.f32 %v368, %v588
      %v619 = vmul.f32 %v369, %v580
      %v620 = vmul.f32 %v370, %v584
      %v621 = vmul.f32 %v371, %v588
      %v622 = vmul.f32 %v372, %v580
      %v623 = vmul.f32 %v373, %v584
      %v624 = vmul.f32 %v374, %v588
      %v625 = vmul.f32 %v375, %v580
      %v626 = vmul.f32 %v376, %v584
      %v627 = vmul.f32 %v377, %v588
      %v628 = vmul.f32 %v378, %v580
      %v629 = vmul.f32 %v379, %v584
      %v630 = vmul.f32 %v380, %v588
      %v631 = vmul.f32 %v381, %v580
      %v632 = vmul.f32 %v382, %v584
      %v633 = vmul.f32 %v383, %v588
      %v634 = vmul.f32 %v384, %v580
      %v635 = vmul.f32 %v385, %v584
      %v636 = vmul.f32 %v386, %v588
      %v637 = vadd.f32 %v512, %v589
      %v638 = vadd.f32 %v513, %v590
      %v639 = vadd.f32 %v514, %v591
      %v640 = vadd.f32 %v515, %v592
      %v641 = vadd.f32 %v516, %v593
      %v642 = vadd.f32 %v517, %v594
      %v643 = vadd.f32 %v518, %v595
      %v644 = vadd.f32 %v519, %v596
      %v645 = vadd.f32 %v520, %v597
      %v646 = vadd.f32 %v521, %v598
      %v647 = vadd.f32 %v522, %v599
      %v648 = vadd.f32 %v523, %v600
      %v649 = vadd.f32 %v524, %v601
      %v650 = vadd.f32 %v525, %v602
      %v651 = vadd.f32 %v526, %v603
      %v652 = vadd.f32 %v527, %v604
      %v653 = vadd.f32 %v528, %v605
      %v654 = vadd.f32 %v529, %v606
      %v655 = vadd.f32 %v530, %v607
      %v656 = vadd.f32 %v531, %v608
      %v657 = vadd.f32 %v532, %v609
      %v658 = vadd.f32 %v533, %v610
      %v659 = vadd.f32 %v534, %v611
      %v660 = vadd.f32 %v535, %v612
      %v661 = vadd.f32 %v536, %v613
      %v662 = vadd.f32 %v537, %v614
      %v663 = vadd.f32 %v538, %v615
      %v664 = vadd.f32 %v539, %v616
      %v665 = vadd.f32 %v540, %v617
      %v666 = vadd.f32 %v541, %v618
      %v667 = vadd.f32 %v542, %v619
      %v668 = vadd.f32 %v543, %v620
      %v669 = vadd.f32 %v544, %v621
      %v670 = vadd.f32 %v545, %v622
      %v671 = vadd.f32 %v546, %v623
      %v672 = vadd.f32 %v547, %v624
      %v673 = vadd.f32 %v548, %v625
      %v674 = vadd.f32 %v549, %v626
      %v675 = vadd.f32 %v550, %v627
      %v676 = vadd.f32 %v551, %v628
      %v677 = vadd.f32 %v552, %v629
      %v678 = vadd.f32 %v553, %v630
      %v679 = vadd.f32 %v554, %v631
      %v680 = vadd.f32 %v555, %v632
      %v681 = vadd.f32 %v556, %v633
      %v682 = vadd.f32 %v557, %v634
      %v683 = vadd.f32 %v558, %v635
      %v684 = vadd.f32 %v559, %v636
      %v687 = vlaneseq
      %v688 = vshrl.u32 %v687, 7
      %v689 = vsub.s32 0, %v688
      %v690 = vrot.slane %v331, %v689
      %v691 = vlaneseq
      %v692 = vshrl.u32 %v691, 7
      %v693 = vsub.s32 4, %v692
      %v694 = vrot.slane %v331, %v693
      %v695 = vlaneseq
      %v696 = vshrl.u32 %v695, 7
      %v697 = vsub.s32 0, %v696
      %v698 = vrot.slane %v332, %v697
      %v702 = vlaneseq
      %v703 = vshrl.u32 %v702, 7
      %v704 = vsub.s32 0, %v703
      %v705 = vrot.slane %v690, %v704
      %v706 = vlaneseq
      %v707 = vshrl.u32 %v706, 7
      %v708 = vsub.s32 0, %v707
      %v709 = vrot.slane %v694, %v708
      %v710 = vlaneseq
      %v711 = vshrl.u32 %v710, 7
      %v712 = vsub.s32 0, %v711
      %v713 = vrot.slane %v698, %v712
      %v714 = vmul.f32 %v345, %v705
      %v715 = vmul.f32 %v346, %v709
      %v716 = vmul.f32 %v347, %v713
      %v717 = vmul.f32 %v348, %v705
      %v718 = vmul.f32 %v349, %v709
      %v719 = vmul.f32 %v350, %v713
      %v720 = vmul.f32 %v351, %v705
      %v721 = vmul.f32 %v352, %v709
      %v722 = vmul.f32 %v353, %v713
      %v723 = vmul.f32 %v354, %v705
      %v724 = vmul.f32 %v355, %v709
      %v725 = vmul.f32 %v356, %v713
      %v726 = vmul.f32 %v357, %v705
      %v727 = vmul.f32 %v358, %v709
      %v728 = vmul.f32 %v359, %v713
      %v729 = vmul.f32 %v360, %v705
      %v730 = vmul.f32 %v361, %v709
      %v731 = vmul.f32 %v362, %v713
      %v732 = vmul.f32 %v363, %v705
      %v733 = vmul.f32 %v364, %v709
      %v734 = vmul.f32 %v365, %v713
      %v735 = vmul.f32 %v366, %v705
      %v736 = vmul.f32 %v367, %v709
      %v737 = vmul.f32 %v368, %v713
      %v738 = vmul.f32 %v369, %v705
      %v739 = vmul.f32 %v370, %v709
      %v740 = vmul.f32 %v371, %v713
      %v741 = vmul.f32 %v372, %v705
      %v742 = vmul.f32 %v373, %v709
      %v743 = vmul.f32 %v374, %v713
      %v744 = vmul.f32 %v375, %v705
      %v745 = vmul.f32 %v376, %v709
      %v746 = vmul.f32 %v377, %v713
      %v747 = vmul.f32 %v378, %v705
      %v748 = vmul.f32 %v379, %v709
      %v749 = vmul.f32 %v380, %v713
      %v750 = vmul.f32 %v381, %v705
      %v751 = vmul.f32 %v382, %v709
      %v752 = vmul.f32 %v383, %v713
      %v753 = vmul.f32 %v384, %v705
      %v754 = vmul.f32 %v385, %v709
      %v755 = vmul.f32 %v386, %v713
      %v756 = vmul.f32 %v387, %v705
      %v757 = vmul.f32 %v388, %v709
      %v758 = vmul.f32 %v389, %v713
      %v759 = vmul.f32 %v390, %v705
      %v760 = vmul.f32 %v391, %v709
      %v761 = vmul.f32 %v392, %v713
      %v762 = vadd.f32 %v637, %v714
      %v763 = vadd.f32 %v638, %v715
      %v764 = vadd.f32 %v639, %v716
      %v765 = vadd.f32 %v640, %v717
      %v766 = vadd.f32 %v641, %v718
      %v767 = vadd.f32 %v642, %v719
      %v768 = vadd.f32 %v643, %v720
      %v769 = vadd.f32 %v644, %v721
      %v770 = vadd.f32 %v645, %v722
      %v771 = vadd.f32 %v646, %v723
      %v772 = vadd.f32 %v647, %v724
      %v773 = vadd.f32 %v648, %v725
      %v774 = vadd.f32 %v649, %v726
      %v775 = vadd.f32 %v650, %v727
      %v776 = vadd.f32 %v651, %v728
      %v777 = vadd.f32 %v652, %v729
      %v778 = vadd.f32 %v653, %v730
      %v779 = vadd.f32 %v654, %v731
      %v780 = vadd.f32 %v655, %v732
      %v781 = vadd.f32 %v656, %v733
      %v782 = vadd.f32 %v657, %v734
      %v783 = vadd.f32 %v658, %v735
      %v784 = vadd.f32 %v659, %v736
      %v785 = vadd.f32 %v660, %v737
      %v786 = vadd.f32 %v661, %v738
      %v787 = vadd.f32 %v662, %v739
      %v788 = vadd.f32 %v663, %v740
      %v789 = vadd.f32 %v664, %v741
      %v790 = vadd.f32 %v665, %v742
      %v791 = vadd.f32 %v666, %v743
      %v792 = vadd.f32 %v667, %v744
      %v793 = vadd.f32 %v668, %v745
      %v794 = vadd.f32 %v669, %v746
      %v795 = vadd.f32 %v670, %v747
      %v796 = vadd.f32 %v671, %v748
      %v797 = vadd.f32 %v672, %v749
      %v798 = vadd.f32 %v673, %v750
      %v799 = vadd.f32 %v674, %v751
      %v800 = vadd.f32 %v675, %v752
      %v801 = vadd.f32 %v676, %v753
      %v802 = vadd.f32 %v677, %v754
      %v803 = vadd.f32 %v678, %v755
      %v804 = vadd.f32 %v679, %v756
      %v805 = vadd.f32 %v680, %v757
      %v806 = vadd.f32 %v681, %v758
      %v807 = vadd.f32 %v682, %v759
      %v808 = vadd.f32 %v683, %v760
      %v809 = vadd.f32 %v684, %v761
      %v810 = vlaneseq
      %v811 = vshrl.u32 %v810, 7
      %v812 = vsub.s32 1, %v811
      %v813 = vrot.slane %v327, %v812
      %v814 = vlaneseq
      %v815 = vshrl.u32 %v814, 7
      %v816 = vsub.s32 5, %v815
      %v817 = vrot.slane %v327, %v816
      %v818 = vlaneseq
      %v819 = vshrl.u32 %v818, 7
      %v820 = vsub.s32 1, %v819
      %v821 = vrot.slane %v328, %v820
      %v825 = vlaneseq
      %v826 = vshrl.u32 %v825, 7
      %v827 = vsub.s32 1, %v826
      %v828 = vrot.slane %v813, %v827
      %v829 = vlaneseq
      %v830 = vshrl.u32 %v829, 7
      %v831 = vsub.s32 1, %v830
      %v832 = vrot.slane %v817, %v831
      %v833 = vlaneseq
      %v834 = vshrl.u32 %v833, 7
      %v835 = vsub.s32 1, %v834
      %v836 = vrot.slane %v821, %v835
      %v837 = vmul.f32 %v393, %v828
      %v838 = vmul.f32 %v394, %v832
      %v839 = vmul.f32 %v395, %v836
      %v840 = vmul.f32 %v396, %v828
      %v841 = vmul.f32 %v397, %v832
      %v842 = vmul.f32 %v398, %v836
      %v843 = vmul.f32 %v399, %v828
      %v844 = vmul.f32 %v400, %v832
      %v845 = vmul.f32 %v401, %v836
      %v846 = vmul.f32 %v402, %v828
      %v847 = vmul.f32 %v403, %v832
      %v848 = vmul.f32 %v404, %v836
      %v849 = vmul.f32 %v405, %v828
      %v850 = vmul.f32 %v406, %v832
      %v851 = vmul.f32 %v407, %v836
      %v852 = vmul.f32 %v408, %v828
      %v853 = vmul.f32 %v409, %v832
      %v854 = vmul.f32 %v410, %v836
      %v855 = vmul.f32 %v411, %v828
      %v856 = vmul.f32 %v412, %v832
      %v857 = vmul.f32 %v413, %v836
      %v858 = vmul.f32 %v414, %v828
      %v859 = vmul.f32 %v415, %v832
      %v860 = vmul.f32 %v416, %v836
      %v861 = vlaneseq
      %v862 = vshrl.u32 %v861, 7
      %v863 = vsub.s32 1, %v862
      %v864 = vrot.slane %v329, %v863
      %v865 = vlaneseq
      %v866 = vshrl.u32 %v865, 7
      %v867 = vsub.s32 5, %v866
      %v868 = vrot.slane %v329, %v867
      %v869 = vlaneseq
      %v870 = vshrl.u32 %v869, 7
      %v871 = vsub.s32 1, %v870
      %v872 = vrot.slane %v330, %v871
      %v876 = vlaneseq
      %v877 = vshrl.u32 %v876, 7
      %v878 = vsub.s32 1, %v877
      %v879 = vrot.slane %v864, %v878
      %v880 = vlaneseq
      %v881 = vshrl.u32 %v880, 7
      %v882 = vsub.s32 1, %v881
      %v883 = vrot.slane %v868, %v882
      %v884 = vlaneseq
      %v885 = vshrl.u32 %v884, 7
      %v886 = vsub.s32 1, %v885
      %v887 = vrot.slane %v872, %v886
      %v888 = vmul.f32 %v396, %v879
      %v889 = vmul.f32 %v397, %v883
      %v890 = vmul.f32 %v398, %v887
      %v891 = vmul.f32 %v399, %v879
      %v892 = vmul.f32 %v400, %v883
      %v893 = vmul.f32 %v401, %v887
      %v894 = vmul.f32 %v402, %v879
      %v895 = vmul.f32 %v403, %v883
      %v896 = vmul.f32 %v404, %v887
      %v897 = vmul.f32 %v405, %v879
      %v898 = vmul.f32 %v406, %v883
      %v899 = vmul.f32 %v407, %v887
      %v900 = vmul.f32 %v408, %v879
      %v901 = vmul.f32 %v409, %v883
      %v902 = vmul.f32 %v410, %v887
      %v903 = vmul.f32 %v411, %v879
      %v904 = vmul.f32 %v412, %v883
      %v905 = vmul.f32 %v413, %v887
      %v906 = vmul.f32 %v414, %v879
      %v907 = vmul.f32 %v415, %v883
      %v908 = vmul.f32 %v416, %v887
      %v909 = vmul.f32 %v417, %v879
      %v910 = vmul.f32 %v418, %v883
      %v911 = vmul.f32 %v419, %v887
      %v912 = vadd.f32 %v837, %v888
      %v913 = vadd.f32 %v838, %v889
      %v914 = vadd.f32 %v839, %v890
      %v915 = vadd.f32 %v840, %v891
      %v916 = vadd.f32 %v841, %v892
      %v917 = vadd.f32 %v842, %v893
      %v918 = vadd.f32 %v843, %v894
      %v919 = vadd.f32 %v844, %v895
      %v920 = vadd.f32 %v845, %v896
      %v921 = vadd.f32 %v846, %v897
      %v922 = vadd.f32 %v847, %v898
      %v923 = vadd.f32 %v848, %v899
      %v924 = vadd.f32 %v849, %v900
      %v925 = vadd.f32 %v850, %v901
      %v926 = vadd.f32 %v851, %v902
      %v927 = vadd.f32 %v852, %v903
      %v928 = vadd.f32 %v853, %v904
      %v929 = vadd.f32 %v854, %v905
      %v930 = vadd.f32 %v855, %v906
      %v931 = vadd.f32 %v856, %v907
      %v932 = vadd.f32 %v857, %v908
      %v933 = vadd.f32 %v858, %v909
      %v934 = vadd.f32 %v859, %v910
      %v935 = vadd.f32 %v860, %v911
      %v936 = vlaneseq
      %v937 = vshrl.u32 %v936, 7
      %v938 = vsub.s32 1, %v937
      %v939 = vrot.slane %v331, %v938
      %v940 = vlaneseq
      %v941 = vshrl.u32 %v940, 7
      %v942 = vsub.s32 5, %v941
      %v943 = vrot.slane %v331, %v942
      %v944 = vlaneseq
      %v945 = vshrl.u32 %v944, 7
      %v946 = vsub.s32 1, %v945
      %v947 = vrot.slane %v332, %v946
      %v951 = vlaneseq
      %v952 = vshrl.u32 %v951, 7
      %v953 = vsub.s32 1, %v952
      %v954 = vrot.slane %v939, %v953
      %v955 = vlaneseq
      %v956 = vshrl.u32 %v955, 7
      %v957 = vsub.s32 1, %v956
      %v958 = vrot.slane %v943, %v957
      %v959 = vlaneseq
      %v960 = vshrl.u32 %v959, 7
      %v961 = vsub.s32 1, %v960
      %v962 = vrot.slane %v947, %v961
      %v963 = vmul.f32 %v399, %v954
      %v964 = vmul.f32 %v400, %v958
      %v965 = vmul.f32 %v401, %v962
      %v966 = vmul.f32 %v402, %v954
      %v967 = vmul.f32 %v403, %v958
      %v968 = vmul.f32 %v404, %v962
      %v969 = vmul.f32 %v405, %v954
      %v970 = vmul.f32 %v406, %v958
      %v971 = vmul.f32 %v407, %v962
      %v972 = vmul.f32 %v408, %v954
      %v973 = vmul.f32 %v409, %v958
      %v974 = vmul.f32 %v410, %v962
      %v975 = vmul.f32 %v411, %v954
      %v976 = vmul.f32 %v412, %v958
      %v977 = vmul.f32 %v413, %v962
      %v978 = vmul.f32 %v414, %v954
      %v979 = vmul.f32 %v415, %v958
      %v980 = vmul.f32 %v416, %v962
      %v981 = vmul.f32 %v417, %v954
      %v982 = vmul.f32 %v418, %v958
      %v983 = vmul.f32 %v419, %v962
      %v984 = vmul.f32 %v420, %v954
      %v985 = vmul.f32 %v421, %v958
      %v986 = vmul.f32 %v422, %v962
      %v987 = vadd.f32 %v912, %v963
      %v988 = vadd.f32 %v913, %v964
      %v989 = vadd.f32 %v914, %v965
      %v990 = vadd.f32 %v915, %v966
      %v991 = vadd.f32 %v916, %v967
      %v992 = vadd.f32 %v917, %v968
      %v993 = vadd.f32 %v918, %v969
      %v994 = vadd.f32 %v919, %v970
      %v995 = vadd.f32 %v920, %v971
      %v996 = vadd.f32 %v921, %v972
      %v997 = vadd.f32 %v922, %v973
      %v998 = vadd.f32 %v923, %v974
      %v999 = vadd.f32 %v924, %v975
      %v1000 = vadd.f32 %v925, %v976
      %v1001 = vadd.f32 %v926, %v977
      %v1002 = vadd.f32 %v927, %v978
      %v1003 = vadd.f32 %v928, %v979
      %v1004 = vadd.f32 %v929, %v980
      %v1005 = vadd.f32 %v930, %v981
      %v1006 = vadd.f32 %v931, %v982
      %v1007 = vadd.f32 %v932, %v983
      %v1008 = vadd.f32 %v933, %v984
      %v1009 = vadd.f32 %v934, %v985
      %v1010 = vadd.f32 %v935, %v986
      %v1011 = vlaneseq
      %v1012 = vshrl.u32 %v1011, 7
      %v1013 = vsub.s32 2, %v1012
      %v1014 = vrot.slane %v327, %v1013
      %v1015 = vlaneseq
      %v1016 = vshrl.u32 %v1015, 7
      %v1017 = vsub.s32 6, %v1016
      %v1018 = vrot.slane %v327, %v1017
      %v1019 = vlaneseq
      %v1020 = vshrl.u32 %v1019, 7
      %v1021 = vsub.s32 2, %v1020
      %v1022 = vrot.slane %v328, %v1021
      %v1026 = vlaneseq
      %v1027 = vshrl.u32 %v1026, 7
      %v1028 = vsub.s32 2, %v1027
      %v1029 = vrot.slane %v1014, %v1028
      %v1030 = vlaneseq
      %v1031 = vshrl.u32 %v1030, 7
      %v1032 = vsub.s32 2, %v1031
      %v1033 = vrot.slane %v1018, %v1032
      %v1034 = vlaneseq
      %v1035 = vshrl.u32 %v1034, 7
      %v1036 = vsub.s32 2, %v1035
      %v1037 = vrot.slane %v1022, %v1036
      %v1038 = vmul.f32 %v423, %v1029
      %v1039 = vmul.f32 %v424, %v1033
      %v1040 = vmul.f32 %v425, %v1037
      %v1041 = vmul.f32 %v426, %v1029
      %v1042 = vmul.f32 %v427, %v1033
      %v1043 = vmul.f32 %v428, %v1037
      %v1044 = vmul.f32 %v429, %v1029
      %v1045 = vmul.f32 %v430, %v1033
      %v1046 = vmul.f32 %v431, %v1037
      %v1047 = vmul.f32 %v432, %v1029
      %v1048 = vmul.f32 %v433, %v1033
      %v1049 = vmul.f32 %v434, %v1037
      %v1050 = vmul.f32 %v435, %v1029
      %v1051 = vmul.f32 %v436, %v1033
      %v1052 = vmul.f32 %v437, %v1037
      %v1053 = vmul.f32 %v438, %v1029
      %v1054 = vmul.f32 %v439, %v1033
      %v1055 = vmul.f32 %v440, %v1037
      %v1056 = vmul.f32 %v441, %v1029
      %v1057 = vmul.f32 %v442, %v1033
      %v1058 = vmul.f32 %v443, %v1037
      %v1059 = vmul.f32 %v444, %v1029
      %v1060 = vmul.f32 %v445, %v1033
      %v1061 = vmul.f32 %v446, %v1037
      %v1062 = vmul.f32 %v447, %v1029
      %v1063 = vmul.f32 %v448, %v1033
      %v1064 = vmul.f32 %v449, %v1037
      %v1065 = vmul.f32 %v450, %v1029
      %v1066 = vmul.f32 %v451, %v1033
      %v1067 = vmul.f32 %v452, %v1037
      %v1068 = vmul.f32 %v453, %v1029
      %v1069 = vmul.f32 %v454, %v1033
      %v1070 = vmul.f32 %v455, %v1037
      %v1071 = vmul.f32 %v456, %v1029
      %v1072 = vmul.f32 %v457, %v1033
      %v1073 = vmul.f32 %v458, %v1037
      %v1074 = vmul.f32 %v459, %v1029
      %v1075 = vmul.f32 %v460, %v1033
      %v1076 = vmul.f32 %v461, %v1037
      %v1077 = vmul.f32 %v462, %v1029
      %v1078 = vmul.f32 %v463, %v1033
      %v1079 = vmul.f32 %v464, %v1037
      %v1080 = vmul.f32 %v465, %v1029
      %v1081 = vmul.f32 %v466, %v1033
      %v1082 = vmul.f32 %v467, %v1037
      %v1083 = vmul.f32 %v468, %v1029
      %v1084 = vmul.f32 %v469, %v1033
      %v1085 = vmul.f32 %v470, %v1037
      %v1086 = vlaneseq
      %v1087 = vshrl.u32 %v1086, 7
      %v1088 = vsub.s32 2, %v1087
      %v1089 = vrot.slane %v329, %v1088
      %v1090 = vlaneseq
      %v1091 = vshrl.u32 %v1090, 7
      %v1092 = vsub.s32 6, %v1091
      %v1093 = vrot.slane %v329, %v1092
      %v1094 = vlaneseq
      %v1095 = vshrl.u32 %v1094, 7
      %v1096 = vsub.s32 2, %v1095
      %v1097 = vrot.slane %v330, %v1096
      %v1101 = vlaneseq
      %v1102 = vshrl.u32 %v1101, 7
      %v1103 = vsub.s32 2, %v1102
      %v1104 = vrot.slane %v1089, %v1103
      %v1105 = vlaneseq
      %v1106 = vshrl.u32 %v1105, 7
      %v1107 = vsub.s32 2, %v1106
      %v1108 = vrot.slane %v1093, %v1107
      %v1109 = vlaneseq
      %v1110 = vshrl.u32 %v1109, 7
      %v1111 = vsub.s32 2, %v1110
      %v1112 = vrot.slane %v1097, %v1111
      %v1113 = vmul.f32 %v429, %v1104
      %v1114 = vmul.f32 %v430, %v1108
      %v1115 = vmul.f32 %v431, %v1112
      %v1116 = vmul.f32 %v432, %v1104
      %v1117 = vmul.f32 %v433, %v1108
      %v1118 = vmul.f32 %v434, %v1112
      %v1119 = vmul.f32 %v435, %v1104
      %v1120 = vmul.f32 %v436, %v1108
      %v1121 = vmul.f32 %v437, %v1112
      %v1122 = vmul.f32 %v438, %v1104
      %v1123 = vmul.f32 %v439, %v1108
      %v1124 = vmul.f32 %v440, %v1112
      %v1125 = vmul.f32 %v441, %v1104
      %v1126 = vmul.f32 %v442, %v1108
      %v1127 = vmul.f32 %v443, %v1112
      %v1128 = vmul.f32 %v444, %v1104
      %v1129 = vmul.f32 %v445, %v1108
      %v1130 = vmul.f32 %v446, %v1112
      %v1131 = vmul.f32 %v447, %v1104
      %v1132 = vmul.f32 %v448, %v1108
      %v1133 = vmul.f32 %v449, %v1112
      %v1134 = vmul.f32 %v450, %v1104
      %v1135 = vmul.f32 %v451, %v1108
      %v1136 = vmul.f32 %v452, %v1112
      %v1137 = vmul.f32 %v453, %v1104
      %v1138 = vmul.f32 %v454, %v1108
      %v1139 = vmul.f32 %v455, %v1112
      %v1140 = vmul.f32 %v456, %v1104
      %v1141 = vmul.f32 %v457, %v1108
      %v1142 = vmul.f32 %v458, %v1112
      %v1143 = vmul.f32 %v459, %v1104
      %v1144 = vmul.f32 %v460, %v1108
      %v1145 = vmul.f32 %v461, %v1112
      %v1146 = vmul.f32 %v462, %v1104
      %v1147 = vmul.f32 %v463, %v1108
      %v1148 = vmul.f32 %v464, %v1112
      %v1149 = vmul.f32 %v465, %v1104
      %v1150 = vmul.f32 %v466, %v1108
      %v1151 = vmul.f32 %v467, %v1112
      %v1152 = vmul.f32 %v468, %v1104
      %v1153 = vmul.f32 %v469, %v1108
      %v1154 = vmul.f32 %v470, %v1112
      %v1155 = vmul.f32 %v471, %v1104
      %v1156 = vmul.f32 %v472, %v1108
      %v1157 = vmul.f32 %v473, %v1112
      %v1158 = vmul.f32 %v474, %v1104
      %v1159 = vmul.f32 %v475, %v1108
      %v1160 = vmul.f32 %v476, %v1112
      %v1161 = vadd.f32 %v1038, %v1113
      %v1162 = vadd.f32 %v1039, %v1114
      %v1163 = vadd.f32 %v1040, %v1115
      %v1164 = vadd.f32 %v1041, %v1116
      %v1165 = vadd.f32 %v1042, %v1117
      %v1166 = vadd.f32 %v1043, %v1118
      %v1167 = vadd.f32 %v1044, %v1119
      %v1168 = vadd.f32 %v1045, %v1120
      %v1169 = vadd.f32 %v1046, %v1121
      %v1170 = vadd.f32 %v1047, %v1122
      %v1171 = vadd.f32 %v1048, %v1123
      %v1172 = vadd.f32 %v1049, %v1124
      %v1173 = vadd.f32 %v1050, %v1125
      %v1174 = vadd.f32 %v1051, %v1126
      %v1175 = vadd.f32 %v1052, %v1127
      %v1176 = vadd.f32 %v1053, %v1128
      %v1177 = vadd.f32 %v1054, %v1129
      %v1178 = vadd.f32 %v1055, %v1130
      %v1179 = vadd.f32 %v1056, %v1131
      %v1180 = vadd.f32 %v1057, %v1132
      %v1181 = vadd.f32 %v1058, %v1133
      %v1182 = vadd.f32 %v1059, %v1134
      %v1183 = vadd.f32 %v1060, %v1135
      %v1184 = vadd.f32 %v1061, %v1136
      %v1185 = vadd.f32 %v1062, %v1137
      %v1186 = vadd.f32 %v1063, %v1138
      %v1187 = vadd.f32 %v1064, %v1139
      %v1188 = vadd.f32 %v1065, %v1140
      %v1189 = vadd.f32 %v1066, %v1141
      %v1190 = vadd.f32 %v1067, %v1142
      %v1191 = vadd.f32 %v1068, %v1143
      %v1192 = vadd.f32 %v1069, %v1144
      %v1193 = vadd.f32 %v1070, %v1145
      %v1194 = vadd.f32 %v1071, %v1146
      %v1195 = vadd.f32 %v1072, %v1147
      %v1196 = vadd.f32 %v1073, %v1148
      %v1197 = vadd.f32 %v1074, %v1149
      %v1198 = vadd.f32 %v1075, %v1150
      %v1199 = vadd.f32 %v1076, %v1151
      %v1200 = vadd.f32 %v1077, %v1152
      %v1201 = vadd.f32 %v1078, %v1153
      %v1202 = vadd.f32 %v1079, %v1154
      %v1203 = vadd.f32 %v1080, %v1155
      %v1204 = vadd.f32 %v1081, %v1156
      %v1205 = vadd.f32 %v1082, %v1157
      %v1206 = vadd.f32 %v1083, %v1158
      %v1207 = vadd.f32 %v1084, %v1159
      %v1208 = vadd.f32 %v1085, %v1160
      %v1209 = vlaneseq
      %v1210 = vshrl.u32 %v1209, 7
      %v1211 = vsub.s32 2, %v1210
      %v1212 = vrot.slane %v331, %v1211
      %v1213 = vlaneseq
      %v1214 = vshrl.u32 %v1213, 7
      %v1215 = vsub.s32 6, %v1214
      %v1216 = vrot.slane %v331, %v1215
      %v1217 = vlaneseq
      %v1218 = vshrl.u32 %v1217, 7
      %v1219 = vsub.s32 2, %v1218
      %v1220 = vrot.slane %v332, %v1219
      %v1224 = vlaneseq
      %v1225 = vshrl.u32 %v1224, 7
      %v1226 = vsub.s32 2, %v1225
      %v1227 = vrot.slane %v1212, %v1226
      %v1228 = vlaneseq
      %v1229 = vshrl.u32 %v1228, 7
      %v1230 = vsub.s32 2, %v1229
      %v1231 = vrot.slane %v1216, %v1230
      %v1232 = vlaneseq
      %v1233 = vshrl.u32 %v1232, 7
      %v1234 = vsub.s32 2, %v1233
      %v1235 = vrot.slane %v1220, %v1234
      %v1236 = vmul.f32 %v435, %v1227
      %v1237 = vmul.f32 %v436, %v1231
      %v1238 = vmul.f32 %v437, %v1235
      %v1239 = vmul.f32 %v438, %v1227
      %v1240 = vmul.f32 %v439, %v1231
      %v1241 = vmul.f32 %v440, %v1235
      %v1242 = vmul.f32 %v441, %v1227
      %v1243 = vmul.f32 %v442, %v1231
      %v1244 = vmul.f32 %v443, %v1235
      %v1245 = vmul.f32 %v444, %v1227
      %v1246 = vmul.f32 %v445, %v1231
      %v1247 = vmul.f32 %v446, %v1235
      %v1248 = vmul.f32 %v447, %v1227
      %v1249 = vmul.f32 %v448, %v1231
      %v1250 = vmul.f32 %v449, %v1235
      %v1251 = vmul.f32 %v450, %v1227
      %v1252 = vmul.f32 %v451, %v1231
      %v1253 = vmul.f32 %v452, %v1235
      %v1254 = vmul.f32 %v453, %v1227
      %v1255 = vmul.f32 %v454, %v1231
      %v1256 = vmul.f32 %v455, %v1235
      %v1257 = vmul.f32 %v456, %v1227
      %v1258 = vmul.f32 %v457, %v1231
      %v1259 = vmul.f32 %v458, %v1235
      %v1260 = vmul.f32 %v459, %v1227
      %v1261 = vmul.f32 %v460, %v1231
      %v1262 = vmul.f32 %v461, %v1235
      %v1263 = vmul.f32 %v462, %v1227
      %v1264 = vmul.f32 %v463, %v1231
      %v1265 = vmul.f32 %v464, %v1235
      %v1266 = vmul.f32 %v465, %v1227
      %v1267 = vmul.f32 %v466, %v1231
      %v1268 = vmul.f32 %v467, %v1235
      %v1269 = vmul.f32 %v468, %v1227
      %v1270 = vmul.f32 %v469, %v1231
      %v1271 = vmul.f32 %v470, %v1235
      %v1272 = vmul.f32 %v471, %v1227
      %v1273 = vmul.f32 %v472, %v1231
      %v1274 = vmul.f32 %v473, %v1235
      %v1275 = vmul.f32 %v474, %v1227
      %v1276 = vmul.f32 %v475, %v1231
      %v1277 = vmul.f32 %v476, %v1235
      %v1278 = vmul.f32 %v477, %v1227
      %v1279 = vmul.f32 %v478, %v1231
      %v1280 = vmul.f32 %v479, %v1235
      %v1281 = vmul.f32 %v480, %v1227
      %v1282 = vmul.f32 %v481, %v1231
      %v1283 = vmul.f32 %v482, %v1235
      %v1284 = vadd.f32 %v1161, %v1236
      %v1285 = vadd.f32 %v1162, %v1237
      %v1286 = vadd.f32 %v1163, %v1238
      %v1287 = vadd.f32 %v1164, %v1239
      %v1288 = vadd.f32 %v1165, %v1240
      %v1289 = vadd.f32 %v1166, %v1241
      %v1290 = vadd.f32 %v1167, %v1242
      %v1291 = vadd.f32 %v1168, %v1243
      %v1292 = vadd.f32 %v1169, %v1244
      %v1293 = vadd.f32 %v1170, %v1245
      %v1294 = vadd.f32 %v1171, %v1246
      %v1295 = vadd.f32 %v1172, %v1247
      %v1296 = vadd.f32 %v1173, %v1248
      %v1297 = vadd.f32 %v1174, %v1249
      %v1298 = vadd.f32 %v1175, %v1250
      %v1299 = vadd.f32 %v1176, %v1251
      %v1300 = vadd.f32 %v1177, %v1252
      %v1301 = vadd.f32 %v1178, %v1253
      %v1302 = vadd.f32 %v1179, %v1254
      %v1303 = vadd.f32 %v1180, %v1255
      %v1304 = vadd.f32 %v1181, %v1256
      %v1305 = vadd.f32 %v1182, %v1257
      %v1306 = vadd.f32 %v1183, %v1258
      %v1307 = vadd.f32 %v1184, %v1259
      %v1308 = vadd.f32 %v1185, %v1260
      %v1309 = vadd.f32 %v1186, %v1261
      %v1310 = vadd.f32 %v1187, %v1262
      %v1311 = vadd.f32 %v1188, %v1263
      %v1312 = vadd.f32 %v1189, %v1264
      %v1313 = vadd.f32 %v1190, %v1265
      %v1314 = vadd.f32 %v1191, %v1266
      %v1315 = vadd.f32 %v1192, %v1267
      %v1316 = vadd.f32 %v1193, %v1268
      %v1317 = vadd.f32 %v1194, %v1269
      %v1318 = vadd.f32 %v1195, %v1270
      %v1319 = vadd.f32 %v1196, %v1271
      %v1320 = vadd.f32 %v1197, %v1272
      %v1321 = vadd.f32 %v1198, %v1273
      %v1322 = vadd.f32 %v1199, %v1274
      %v1323 = vadd.f32 %v1200, %v1275
      %v1324 = vadd.f32 %v1201, %v1276
      %v1325 = vadd.f32 %v1202, %v1277
      %v1326 = vadd.f32 %v1203, %v1278
      %v1327 = vadd.f32 %v1204, %v1279
      %v1328 = vadd.f32 %v1205, %v1280
      %v1329 = vadd.f32 %v1206, %v1281
      %v1330 = vadd.f32 %v1207, %v1282
      %v1331 = vadd.f32 %v1208, %v1283
      %v1356 = vrot.slane %v987, 1
      %v1357 = vrot.slane %v988, 1
      %v1358 = vrot.slane %v989, 1
      %v1359 = vrot.slane %v990, 1
      %v1360 = vrot.slane %v991, 1
      %v1361 = vrot.slane %v992, 1
      %v1362 = vrot.slane %v993, 1
      %v1363 = vrot.slane %v994, 1
      %v1364 = vrot.slane %v995, 1
      %v1365 = vrot.slane %v996, 1
      %v1366 = vrot.slane %v997, 1
      %v1367 = vrot.slane %v998, 1
      %v1368 = vrot.slane %v999, 1
      %v1369 = vrot.slane %v1000, 1
      %v1370 = vrot.slane %v1001, 1
      %v1371 = vrot.slane %v1002, 1
      %v1372 = vrot.slane %v1003, 1
      %v1373 = vrot.slane %v1004, 1
      %v1374 = vrot.slane %v1005, 1
      %v1375 = vrot.slane %v1006, 1
      %v1376 = vrot.slane %v1007, 1
      %v1377 = vrot.slane %v1008, 1
      %v1378 = vrot.slane %v1009, 1
      %v1379 = vrot.slane %v1010, 1
      %v1404 = vadd.f32 %v762, %v1356
      %v1405 = vadd.f32 %v763, %v1357
      %v1406 = vadd.f32 %v764, %v1358
      %v1407 = vadd.f32 %v765, %v1356
      %v1408 = vadd.f32 %v766, %v1357
      %v1409 = vadd.f32 %v767, %v1358
      %v1410 = vadd.f32 %v768, %v1359
      %v1411 = vadd.f32 %v769, %v1360
      %v1412 = vadd.f32 %v770, %v1361
      %v1413 = vadd.f32 %v771, %v1359
      %v1414 = vadd.f32 %v772, %v1360
      %v1415 = vadd.f32 %v773, %v1361
      %v1416 = vadd.f32 %v774, %v1362
      %v1417 = vadd.f32 %v775, %v1363
      %v1418 = vadd.f32 %v776, %v1364
      %v1419 = vadd.f32 %v777, %v1362
      %v1420 = vadd.f32 %v778, %v1363
      %v1421 = vadd.f32 %v779, %v1364
      %v1422 = vadd.f32 %v780, %v1365
      %v1423 = vadd.f32 %v781, %v1366
      %v1424 = vadd.f32 %v782, %v1367
      %v1425 = vadd.f32 %v783, %v1365
      %v1426 = vadd.f32 %v784, %v1366
      %v1427 = vadd.f32 %v785, %v1367
      %v1428 = vadd.f32 %v786, %v1368
      %v1429 = vadd.f32 %v787, %v1369
      %v1430 = vadd.f32 %v788, %v1370
      %v1431 = vadd.f32 %v789, %v1368
      %v1432 = vadd.f32 %v790, %v1369
      %v1433 = vadd.f32 %v791, %v1370
      %v1434 = vadd.f32 %v792, %v1371
      %v1435 = vadd.f32 %v793, %v1372
      %v1436 = vadd.f32 %v794, %v1373
      %v1437 = vadd.f32 %v795, %v1371
      %v1438 = vadd.f32 %v796, %v1372
      %v1439 = vadd.f32 %v797, %v1373
      %v1440 = vadd.f32 %v798, %v1374
      %v1441 = vadd.f32 %v799, %v1375
      %v1442 = vadd.f32 %v800, %v1376
      %v1443 = vadd.f32 %v801, %v1374
      %v1444 = vadd.f32 %v802, %v1375
      %v1445 = vadd.f32 %v803, %v1376
      %v1446 = vadd.f32 %v804, %v1377
      %v1447 = vadd.f32 %v805, %v1378
      %v1448 = vadd.f32 %v806, %v1379
      %v1449 = vadd.f32 %v807, %v1377
      %v1450 = vadd.f32 %v808, %v1378
      %v1451 = vadd.f32 %v809, %v1379
      %vm1500 = vcmask 1045504
      %v1501 = vrot.slane %v1284, 2
      %v1502 = vrot.slane %v1285, 2
      %v1503 = vrot.slane %v1286, 2
      %v1504 = vrot.slane %v1287, 2
      %v1505 = vsel %vm1500, %v1501, %v1504
      %v1506 = vrot.slane %v1288, 2
      %v1507 = vsel %vm1500, %v1502, %v1506
      %v1508 = vrot.slane %v1289, 2
      %v1509 = vsel %vm1500, %v1503, %v1508
      %v1510 = vrot.slane %v1290, 2
      %v1511 = vrot.slane %v1291, 2
      %v1512 = vrot.slane %v1292, 2
      %v1513 = vrot.slane %v1293, 2
      %v1514 = vsel %vm1500, %v1510, %v1513
      %v1515 = vrot.slane %v1294, 2
      %v1516 = vsel %vm1500, %v1511, %v1515
      %v1517 = vrot.slane %v1295, 2
      %v1518 = vsel %vm1500, %v1512, %v1517
      %v1519 = vrot.slane %v1296, 2
      %v1520 = vrot.slane %v1297, 2
      %v1521 = vrot.slane %v1298, 2
      %v1522 = vrot.slane %v1299, 2
      %v1523 = vsel %vm1500, %v1519, %v1522
      %v1524 = vrot.slane %v1300, 2
      %v1525 = vsel %vm1500, %v1520, %v1524
      %v1526 = vrot.slane %v1301, 2
      %v1527 = vsel %vm1500, %v1521, %v1526
      %v1528 = vrot.slane %v1302, 2
      %v1529 = vrot.slane %v1303, 2
      %v1530 = vrot.slane %v1304, 2
      %v1531 = vrot.slane %v1305, 2
      %v1532 = vsel %vm1500, %v1528, %v1531
      %v1533 = vrot.slane %v1306, 2
      %v1534 = vsel %vm1500, %v1529, %v1533
      %v1535 = vrot.slane %v1307, 2
      %v1536 = vsel %vm1500, %v1530, %v1535
      %v1537 = vrot.slane %v1308, 2
      %v1538 = vrot.slane %v1309, 2
      %v1539 = vrot.slane %v1310, 2
      %v1540 = vrot.slane %v1311, 2
      %v1541 = vsel %vm1500, %v1537, %v1540
      %v1542 = vrot.slane %v1312, 2
      %v1543 = vsel %vm1500, %v1538, %v1542
      %v1544 = vrot.slane %v1313, 2
      %v1545 = vsel %vm1500, %v1539, %v1544
      %v1546 = vrot.slane %v1314, 2
      %v1547 = vrot.slane %v1315, 2
      %v1548 = vrot.slane %v1316, 2
      %v1549 = vrot.slane %v1317, 2
      %v1550 = vsel %vm1500, %v1546, %v1549
      %v1551 = vrot.slane %v1318, 2
      %v1552 = vsel %vm1500, %v1547, %v1551
      %v1553 = vrot.slane %v1319, 2
      %v1554 = vsel %vm1500, %v1548, %v1553
      %v1555 = vrot.slane %v1320, 2
      %v1556 = vrot.slane %v1321, 2
      %v1557 = vrot.slane %v1322, 2
      %v1558 = vrot.slane %v1323, 2
      %v1559 = vsel %vm1500, %v1555, %v1558
      %v1560 = vrot.slane %v1324, 2
      %v1561 = vsel %vm1500, %v1556, %v1560
      %v1562 = vrot.slane %v1325, 2
      %v1563 = vsel %vm1500, %v1557, %v1562
      %v1564 = vrot.slane %v1326, 2
      %v1565 = vrot.slane %v1327, 2
      %v1566 = vrot.slane %v1328, 2
      %v1567 = vrot.slane %v1329, 2
      %v1568 = vsel %vm1500, %v1564, %v1567
      %v1569 = vrot.slane %v1330, 2
      %v1570 = vsel %vm1500, %v1565, %v1569
      %v1571 = vrot.slane %v1331, 2
      %v1572 = vsel %vm1500, %v1566, %v1571
      %v1621 = vadd.f32 %v1404, %v1501
      %v1622 = vadd.f32 %v1405, %v1502
      %v1623 = vadd.f32 %v1406, %v1503
      %v1624 = vadd.f32 %v1407, %v1505
      %v1625 = vadd.f32 %v1408, %v1507
      %v1626 = vadd.f32 %v1409, %v1509
      %v1627 = vadd.f32 %v1410, %v1510
      %v1628 = vadd.f32 %v1411, %v1511
      %v1629 = vadd.f32 %v1412, %v1512
      %v1630 = vadd.f32 %v1413, %v1514
      %v1631 = vadd.f32 %v1414, %v1516
      %v1632 = vadd.f32 %v1415, %v1518
      %v1633 = vadd.f32 %v1416, %v1519
      %v1634 = vadd.f32 %v1417, %v1520
      %v1635 = vadd.f32 %v1418, %v1521
      %v1636 = vadd.f32 %v1419, %v1523
      %v1637 = vadd.f32 %v1420, %v1525
      %v1638 = vadd.f32 %v1421, %v1527
      %v1639 = vadd.f32 %v1422, %v1528
      %v1640 = vadd.f32 %v1423, %v1529
      %v1641 = vadd.f32 %v1424, %v1530
      %v1642 = vadd.f32 %v1425, %v1532
      %v1643 = vadd.f32 %v1426, %v1534
      %v1644 = vadd.f32 %v1427, %v1536
      %v1645 = vadd.f32 %v1428, %v1537
      %v1646 = vadd.f32 %v1429, %v1538
      %v1647 = vadd.f32 %v1430, %v1539
      %v1648 = vadd.f32 %v1431, %v1541
      %v1649 = vadd.f32 %v1432, %v1543
      %v1650 = vadd.f32 %v1433, %v1545
      %v1651 = vadd.f32 %v1434, %v1546
      %v1652 = vadd.f32 %v1435, %v1547
      %v1653 = vadd.f32 %v1436, %v1548
      %v1654 = vadd.f32 %v1437, %v1550
      %v1655 = vadd.f32 %v1438, %v1552
      %v1656 = vadd.f32 %v1439, %v1554
      %v1657 = vadd.f32 %v1440, %v1555
      %v1658 = vadd.f32 %v1441, %v1556
      %v1659 = vadd.f32 %v1442, %v1557
      %v1660 = vadd.f32 %v1443, %v1559
      %v1661 = vadd.f32 %v1444, %v1561
      %v1662 = vadd.f32 %v1445, %v1563
      %v1663 = vadd.f32 %v1446, %v1564
      %v1664 = vadd.f32 %v1447, %v1565
      %v1665 = vadd.f32 %v1448, %v1566
      %v1666 = vadd.f32 %v1449, %v1568
      %v1667 = vadd.f32 %v1450, %v1570
      %v1668 = vadd.f32 %v1451, %v1572
      %vm1717 = vcmask 1040384
      %v1718 = vrot.slane %v1621, 7
      %v1719 = vrot.slane %v1624, 7
      %v1720 = vsel %vm1717, %v1718, %v1719
      %v1721 = vrot.slane %v1622, 7
      %v1722 = vrot.slane %v1625, 7
      %v1723 = vsel %vm1717, %v1721, %v1722
      %v1724 = vrot.slane %v1623, 7
      %v1725 = vrot.slane %v1626, 7
      %v1726 = vsel %vm1717, %v1724, %v1725
      %v1727 = vrot.slane %v1627, 7
      %v1728 = vrot.slane %v1630, 7
      %v1729 = vsel %vm1717, %v1727, %v1728
      %v1730 = vrot.slane %v1628, 7
      %v1731 = vrot.slane %v1631, 7
      %v1732 = vsel %vm1717, %v1730, %v1731
      %v1733 = vrot.slane %v1629, 7
      %v1734 = vrot.slane %v1632, 7
      %v1735 = vsel %vm1717, %v1733, %v1734
      %v1736 = vrot.slane %v1633, 7
      %v1737 = vrot.slane %v1636, 7
      %v1738 = vsel %vm1717, %v1736, %v1737
      %v1739 = vrot.slane %v1634, 7
      %v1740 = vrot.slane %v1637, 7
      %v1741 = vsel %vm1717, %v1739, %v1740
      %v1742 = vrot.slane %v1635, 7
      %v1743 = vrot.slane %v1638, 7
      %v1744 = vsel %vm1717, %v1742, %v1743
      %v1745 = vrot.slane %v1639, 7
      %v1746 = vrot.slane %v1642, 7
      %v1747 = vsel %vm1717, %v1745, %v1746
      %v1748 = vrot.slane %v1640, 7
      %v1749 = vrot.slane %v1643, 7
      %v1750 = vsel %vm1717, %v1748, %v1749
      %v1751 = vrot.slane %v1641, 7
      %v1752 = vrot.slane %v1644, 7
      %v1753 = vsel %vm1717, %v1751, %v1752
      %v1754 = vrot.slane %v1645, 7
      %v1755 = vrot.slane %v1648, 7
      %v1756 = vsel %vm1717, %v1754, %v1755
      %v1757 = vrot.slane %v1646, 7
      %v1758 = vrot.slane %v1649, 7
      %v1759 = vsel %vm1717, %v1757, %v1758
      %v1760 = vrot.slane %v1647, 7
      %v1761 = vrot.slane %v1650, 7
      %v1762 = vsel %vm1717, %v1760, %v1761
      %v1763 = vrot.slane %v1651, 7
      %v1764 = vrot.slane %v1654, 7
      %v1765 = vsel %vm1717, %v1763, %v1764
      %v1766 = vrot.slane %v1652, 7
      %v1767 = vrot.slane %v1655, 7
      %v1768 = vsel %vm1717, %v1766, %v1767
      %v1769 = vrot.slane %v1653, 7
      %v1770 = vrot.slane %v1656, 7
      %v1771 = vsel %vm1717, %v1769, %v1770
      %v1772 = vrot.slane %v1657, 7
      %v1773 = vrot.slane %v1660, 7
      %v1774 = vsel %vm1717, %v1772, %v1773
      %v1775 = vrot.slane %v1658, 7
      %v1776 = vrot.slane %v1661, 7
      %v1777 = vsel %vm1717, %v1775, %v1776
      %v1778 = vrot.slane %v1659, 7
      %v1779 = vrot.slane %v1662, 7
      %v1780 = vsel %vm1717, %v1778, %v1779
      %v1781 = vrot.slane %v1663, 7
      %v1782 = vrot.slane %v1666, 7
      %v1783 = vsel %vm1717, %v1781, %v1782
      %v1784 = vrot.slane %v1664, 7
      %v1785 = vrot.slane %v1667, 7
      %v1786 = vsel %vm1717, %v1784, %v1785
      %v1787 = vrot.slane %v1665, 7
      %v1788 = vrot.slane %v1668, 7
      %v1789 = vsel %vm1717, %v1787, %v1788
      %v1814 = vpack.c.bf16 %v1729, %v1720
      %v1815 = vpack.c.bf16 %v1732, %v1723
      %v1816 = vpack.c.bf16 %v1735, %v1726
      %v1817 = vpack.c.bf16 %v1747, %v1738
      %v1818 = vpack.c.bf16 %v1750, %v1741
      %v1819 = vpack.c.bf16 %v1753, %v1744
      %v1820 = vpack.c.bf16 %v1765, %v1756
      %v1821 = vpack.c.bf16 %v1768, %v1759
      %v1822 = vpack.c.bf16 %v1771, %v1762
      %v1823 = vpack.c.bf16 %v1783, %v1774
      %v1824 = vpack.c.bf16 %v1786, %v1777
      %v1825 = vpack.c.bf16 %v1789, %v1780
      %v1826 = vld [vmem:[%s2] sm:$0xff]
      %v1827 = vld [vmem:[%s2 + $0x8] sm:$0xff]
      %v1828 = vld [vmem:[%s2 + $0x10] sm:$0xff]
      %v1829 = vld [vmem:[%s2 + $0x18] sm:$0xff]
      %v1830 = vld [vmem:[%s2 + $0x20] sm:$0xff]
      %v1831 = vld [vmem:[%s2 + $0x28] sm:$0xff]
      %v1832 = vld [vmem:[%s2 + $0x30] sm:$0xff]
      %v1833 = vld [vmem:[%s2 + $0x38] sm:$0xff]
      %v1834 = vld [vmem:[%s2 + $0x40] sm:$0xff]
      %v1835 = vld [vmem:[%s2 + $0x48] sm:$0xff]
      %v1836 = vld [vmem:[%s2 + $0x50] sm:$0xff]
      %v1837 = vld [vmem:[%s2 + $0x58] sm:$0xff]
      %v1838 = vld [vmem:[%s2 + $0x60] sm:$0xff]
      %v1839 = vld [vmem:[%s2 + $0x68] sm:$0xff]
      %v1840 = vld [vmem:[%s2 + $0x70] sm:$0xff]
      %v1841 = vld [vmem:[%s2 + $0x78] sm:$0xff]
      %v1842 = vld [vmem:[%s2 + $0x80] sm:$0xff]
      %v1843 = vld [vmem:[%s2 + $0x88] sm:$0xff]
      %v1844 = vld [vmem:[%s2 + $0x90] sm:$0xff]
      %v1845 = vld [vmem:[%s2 + $0x98] sm:$0xff]
      %v1846 = vld [vmem:[%s2 + $0xa0] sm:$0xff]
      %v1847 = vld [vmem:[%s2 + $0xa8] sm:$0xff]
      %v1848 = vld [vmem:[%s2 + $0xb0] sm:$0xff]
      %v1849 = vld [vmem:[%s2 + $0xb8] sm:$0xff]
      %v1850 = vld [vmem:[%s2 + $0xc0] sm:$0xff]
      %v1851 = vld [vmem:[%s2 + $0xc8] sm:$0xff]
      %v1852 = vld [vmem:[%s2 + $0xd0] sm:$0xff]
      %v1853 = vld [vmem:[%s2 + $0xd8] sm:$0xff]
      %v1854 = vld [vmem:[%s2 + $0xe0] sm:$0xff]
      %v1855 = vld [vmem:[%s2 + $0xe8] sm:$0xff]
      %v1856 = vld [vmem:[%s2 + $0xf0] sm:$0xff]
      %v1857 = vld [vmem:[%s2 + $0xf8] sm:$0xff]
      %v1858 = vld [vmem:[%s2 + $0x100] sm:$0xff]
      %v1859 = vld [vmem:[%s2 + $0x108] sm:$0xff]
      %v1860 = vld [vmem:[%s2 + $0x110] sm:$0xff]
      %v1861 = vld [vmem:[%s2 + $0x118] sm:$0xff]
      %v1862 = vld [vmem:[%s2 + $0x120] sm:$0xff]
      %v1863 = vld [vmem:[%s2 + $0x128] sm:$0xff]
      %v1864 = vld [vmem:[%s2 + $0x130] sm:$0xff]
      %v1865 = vld [vmem:[%s2 + $0x138] sm:$0xff]
      %v1866 = vld [vmem:[%s2 + $0x140] sm:$0xff]
      %v1867 = vld [vmem:[%s2 + $0x148] sm:$0xff]
      %v1868 = vld [vmem:[%s2 + $0x150] sm:$0xff]
      %v1869 = vld [vmem:[%s2 + $0x158] sm:$0xff]
      %v1870 = vld [vmem:[%s2 + $0x160] sm:$0xff]
      %v1871 = vld [vmem:[%s2 + $0x168] sm:$0xff]
      %v1872 = vld [vmem:[%s2 + $0x170] sm:$0xff]
      %v1873 = vld [vmem:[%s2 + $0x178] sm:$0xff]
      %v1874 = vld [vmem:[%s2 + $0x180] sm:$0xff]
      %v1875 = vld [vmem:[%s2 + $0x188] sm:$0xff]
      %v1876 = vld [vmem:[%s2 + $0x190] sm:$0xff]
      %v1877 = vld [vmem:[%s2 + $0x198] sm:$0xff]
      %v1878 = vld [vmem:[%s2 + $0x1a0] sm:$0xff]
      %v1879 = vld [vmem:[%s2 + $0x1a8] sm:$0xff]
      %v1880 = vld [vmem:[%s2 + $0x1b0] sm:$0xff]
      %v1881 = vld [vmem:[%s2 + $0x1b8] sm:$0xff]
      %v1882 = vld [vmem:[%s2 + $0x1c0] sm:$0xff]
      %v1883 = vld [vmem:[%s2 + $0x1c8] sm:$0xff]
      %v1884 = vld [vmem:[%s2 + $0x1d0] sm:$0xff]
      %v1885 = vld [vmem:[%s2 + $0x1d8] sm:$0xff]
      %v1886 = vld [vmem:[%s2 + $0x1e0] sm:$0xff]
      %v1887 = vld [vmem:[%s2 + $0x1e8] sm:$0xff]
      %v1888 = vld [vmem:[%s2 + $0x1f0] sm:$0xff]
      %v1889 = vld [vmem:[%s2 + $0x1f8] sm:$0xff]
      %v1890 = vld [vmem:[%s2 + $0x200] sm:$0xff]
      %v1891 = vld [vmem:[%s2 + $0x208] sm:$0xff]
      %v1892 = vld [vmem:[%s2 + $0x210] sm:$0xff]
      %v1893 = vld [vmem:[%s2 + $0x218] sm:$0xff]
      %v1894 = vld [vmem:[%s2 + $0x220] sm:$0xff]
      %v1895 = vld [vmem:[%s2 + $0x228] sm:$0xff]
      %v1896 = vld [vmem:[%s2 + $0x230] sm:$0xff]
      %v1897 = vld [vmem:[%s2 + $0x238] sm:$0xff]
      %v1898 = vld [vmem:[%s2 + $0x240] sm:$0xff]
      %v1899 = vld [vmem:[%s2 + $0x248] sm:$0xff]
      %v1900 = vld [vmem:[%s2 + $0x250] sm:$0xff]
      %v1901 = vld [vmem:[%s2 + $0x258] sm:$0xff]
      %v1902 = vld [vmem:[%s2 + $0x260] sm:$0xff]
      %v1903 = vld [vmem:[%s2 + $0x268] sm:$0xff]
      %v1904 = vld [vmem:[%s2 + $0x270] sm:$0xff]
      %v1905 = vld [vmem:[%s2 + $0x278] sm:$0xff]
      %v1906 = vld [vmem:[%s2 + $0x280] sm:$0xff]
      %v1907 = vld [vmem:[%s2 + $0x288] sm:$0xff]
      %v1908 = vld [vmem:[%s2 + $0x290] sm:$0xff]
      %v1909 = vld [vmem:[%s2 + $0x298] sm:$0xff]
      %v1910 = vld [vmem:[%s2 + $0x2a0] sm:$0xff]
      %v1911 = vld [vmem:[%s2 + $0x2a8] sm:$0xff]
      %v1912 = vld [vmem:[%s2 + $0x2b0] sm:$0xff]
      %v1913 = vld [vmem:[%s2 + $0x2b8] sm:$0xff]
      %v1914 = vld [vmem:[%s2 + $0x2c0] sm:$0xff]
      %v1915 = vld [vmem:[%s2 + $0x2c8] sm:$0xff]
      %v1916 = vld [vmem:[%s2 + $0x2d0] sm:$0xff]
      %v1917 = vld [vmem:[%s2 + $0x2d8] sm:$0xff]
      %v1918 = vld [vmem:[%s2 + $0x2e0] sm:$0xff]
      %v1919 = vld [vmem:[%s2 + $0x2e8] sm:$0xff]
      %v1920 = vld [vmem:[%s2 + $0x2f0] sm:$0xff]
      %v1921 = vld [vmem:[%s2 + $0x2f8] sm:$0xff]
      %v1922 = vld [vmem:[%s2 + $0x300] sm:$0xff]
      %v1923 = vld [vmem:[%s2 + $0x308] sm:$0xff]
      %v1924 = vld [vmem:[%s2 + $0x310] sm:$0xff]
      %v1925 = vld [vmem:[%s2 + $0x318] sm:$0xff]
      %v1926 = vld [vmem:[%s2 + $0x320] sm:$0xff]
      %v1927 = vld [vmem:[%s2 + $0x328] sm:$0xff]
      %v1928 = vld [vmem:[%s2 + $0x330] sm:$0xff]
      %v1929 = vld [vmem:[%s2 + $0x338] sm:$0xff]
      %v1930 = vld [vmem:[%s2 + $0x340] sm:$0xff]
      %v1931 = vld [vmem:[%s2 + $0x348] sm:$0xff]
      %v1932 = vld [vmem:[%s2 + $0x350] sm:$0xff]
      %v1933 = vld [vmem:[%s2 + $0x358] sm:$0xff]
      %v1934 = vld [vmem:[%s2 + $0x360] sm:$0xff]
      %v1935 = vld [vmem:[%s2 + $0x368] sm:$0xff]
      %v1936 = vld [vmem:[%s2 + $0x370] sm:$0xff]
      %v1937 = vld [vmem:[%s2 + $0x378] sm:$0xff]
      %v1938 = vld [vmem:[%s2 + $0x380] sm:$0xff]
      %v1939 = vld [vmem:[%s2 + $0x388] sm:$0xff]
      %v1940 = vld [vmem:[%s2 + $0x390] sm:$0xff]
      %v1941 = vld [vmem:[%s2 + $0x398] sm:$0xff]
      %v1942 = vld [vmem:[%s2 + $0x3a0] sm:$0xff]
      %v1943 = vld [vmem:[%s2 + $0x3a8] sm:$0xff]
      %v1944 = vld [vmem:[%s2 + $0x3b0] sm:$0xff]
      %v1945 = vld [vmem:[%s2 + $0x3b8] sm:$0xff]
      %v1946 = vld [vmem:[%s2 + $0x3c0] sm:$0xff]
      %v1947 = vld [vmem:[%s2 + $0x3c8] sm:$0xff]
      %v1948 = vld [vmem:[%s2 + $0x3d0] sm:$0xff]
      %v1949 = vld [vmem:[%s2 + $0x3d8] sm:$0xff]
      %v1950 = vld [vmem:[%s2 + $0x3e0] sm:$0xff]
      %v1951 = vld [vmem:[%s2 + $0x3e8] sm:$0xff]
      %v1952 = vld [vmem:[%s2 + $0x3f0] sm:$0xff]
      %v1953 = vld [vmem:[%s2 + $0x3f8] sm:$0xff]
      %v1954 = vld [vmem:[%s2 + $0x400] sm:$0xff]
      %v1955 = vld [vmem:[%s2 + $0x408] sm:$0xff]
      %v1956 = vld [vmem:[%s2 + $0x410] sm:$0xff]
      %v1957 = vld [vmem:[%s2 + $0x418] sm:$0xff]
      %v1958 = vld [vmem:[%s2 + $0x420] sm:$0xff]
      %v1959 = vld [vmem:[%s2 + $0x428] sm:$0xff]
      %v1960 = vld [vmem:[%s2 + $0x430] sm:$0xff]
      %v1961 = vld [vmem:[%s2 + $0x438] sm:$0xff]
      %v1962 = vld [vmem:[%s2 + $0x440] sm:$0xff]
      %v1963 = vld [vmem:[%s2 + $0x448] sm:$0xff]
      %v1964 = vld [vmem:[%s2 + $0x450] sm:$0xff]
      %v1965 = vld [vmem:[%s2 + $0x458] sm:$0xff]
      %v1966 = vld [vmem:[%s2 + $0x460] sm:$0xff]
      %v1967 = vld [vmem:[%s2 + $0x468] sm:$0xff]
      %v1968 = vld [vmem:[%s2 + $0x470] sm:$0xff]
      %v1969 = vld [vmem:[%s2 + $0x478] sm:$0xff]
      %v1970 = vld [vmem:[%s2 + $0x480] sm:$0xff]
      %v1971 = vld [vmem:[%s2 + $0x488] sm:$0xff]
      %v1972 = vld [vmem:[%s2 + $0x490] sm:$0xff]
      %v1973 = vld [vmem:[%s2 + $0x498] sm:$0xff]
      %v1974 = vld [vmem:[%s2 + $0x4a0] sm:$0xff]
      %v1975 = vld [vmem:[%s2 + $0x4a8] sm:$0xff]
      %v1976 = vld [vmem:[%s2 + $0x4b0] sm:$0xff]
      %v1977 = vld [vmem:[%s2 + $0x4b8] sm:$0xff]
      %v1978 = vld [vmem:[%s2 + $0x4c0] sm:$0xff]
      %v1979 = vld [vmem:[%s2 + $0x4c8] sm:$0xff]
      %v1980 = vld [vmem:[%s2 + $0x4d0] sm:$0xff]
      %v1981 = vld [vmem:[%s2 + $0x4d8] sm:$0xff]
      %v1982 = vld [vmem:[%s2 + $0x4e0] sm:$0xff]
      %v1983 = vld [vmem:[%s2 + $0x4e8] sm:$0xff]
      %v1984 = vld [vmem:[%s2 + $0x4f0] sm:$0xff]
      %v1985 = vld [vmem:[%s2 + $0x4f8] sm:$0xff]
      %v1986 = vld [vmem:[%s2 + $0x500] sm:$0xff]
      %v1987 = vld [vmem:[%s2 + $0x508] sm:$0xff]
      %v1988 = vld [vmem:[%s2 + $0x510] sm:$0xff]
      %v1989 = vld [vmem:[%s2 + $0x518] sm:$0xff]
      %v1990 = vld [vmem:[%s2 + $0x520] sm:$0xff]
      %v1991 = vld [vmem:[%s2 + $0x528] sm:$0xff]
      %v1992 = vld [vmem:[%s2 + $0x530] sm:$0xff]
      %v1993 = vld [vmem:[%s2 + $0x538] sm:$0xff]
      %v1994 = vld [vmem:[%s2 + $0x540] sm:$0xff]
      %v1995 = vld [vmem:[%s2 + $0x548] sm:$0xff]
      %v1996 = vld [vmem:[%s2 + $0x550] sm:$0xff]
      %v1997 = vld [vmem:[%s2 + $0x558] sm:$0xff]
      %v1998 = vld [vmem:[%s2 + $0x560] sm:$0xff]
      %v1999 = vld [vmem:[%s2 + $0x568] sm:$0xff]
      %v2000 = vld [vmem:[%s2 + $0x570] sm:$0xff]
      %v2001 = vld [vmem:[%s2 + $0x578] sm:$0xff]
      %v2002 = vld [vmem:[%s2 + $0x580] sm:$0xff]
      %v2003 = vld [vmem:[%s2 + $0x588] sm:$0xff]
      %v2004 = vld [vmem:[%s2 + $0x590] sm:$0xff]
      %v2005 = vld [vmem:[%s2 + $0x598] sm:$0xff]
      %v2006 = vld [vmem:[%s2 + $0x5a0] sm:$0xff]
      %v2007 = vld [vmem:[%s2 + $0x5a8] sm:$0xff]
      %v2008 = vld [vmem:[%s2 + $0x5b0] sm:$0xff]
      %v2009 = vld [vmem:[%s2 + $0x5b8] sm:$0xff]
      %v2010 = vld [vmem:[%s2 + $0x5c0] sm:$0xff]
      %v2011 = vld [vmem:[%s2 + $0x5c8] sm:$0xff]
      %v2012 = vld [vmem:[%s2 + $0x5d0] sm:$0xff]
      %v2013 = vld [vmem:[%s2 + $0x5d8] sm:$0xff]
      %v2014 = vld [vmem:[%s2 + $0x5e0] sm:$0xff]
      %v2015 = vld [vmem:[%s2 + $0x5e8] sm:$0xff]
      %v2016 = vld [vmem:[%s2 + $0x5f0] sm:$0xff]
      %v2017 = vld [vmem:[%s2 + $0x5f8] sm:$0xff]
      %v2018 = vld [vmem:[%s2 + $0x600] sm:$0xff]
      %v2019 = vld [vmem:[%s2 + $0x608] sm:$0xff]
      %v2020 = vld [vmem:[%s2 + $0x610] sm:$0xff]
      %v2021 = vld [vmem:[%s2 + $0x618] sm:$0xff]
      %v2022 = vld [vmem:[%s2 + $0x620] sm:$0xff]
      %v2023 = vld [vmem:[%s2 + $0x628] sm:$0xff]
      %v2024 = vld [vmem:[%s2 + $0x630] sm:$0xff]
      %v2025 = vld [vmem:[%s2 + $0x638] sm:$0xff]
      %v2026 = vld [vmem:[%s2 + $0x640] sm:$0xff]
      %v2027 = vld [vmem:[%s2 + $0x648] sm:$0xff]
      %v2028 = vld [vmem:[%s2 + $0x650] sm:$0xff]
      %v2029 = vld [vmem:[%s2 + $0x658] sm:$0xff]
      %v2030 = vld [vmem:[%s2 + $0x660] sm:$0xff]
      %v2031 = vld [vmem:[%s2 + $0x668] sm:$0xff]
      %v2032 = vld [vmem:[%s2 + $0x670] sm:$0xff]
      %v2033 = vld [vmem:[%s2 + $0x678] sm:$0xff]
      %v2034 = vld [vmem:[%s2 + $0x680] sm:$0xff]
      %v2035 = vld [vmem:[%s2 + $0x688] sm:$0xff]
      %v2036 = vld [vmem:[%s2 + $0x690] sm:$0xff]
      %v2037 = vld [vmem:[%s2 + $0x698] sm:$0xff]
      %v2038 = vld [vmem:[%s2 + $0x6a0] sm:$0xff]
      %v2039 = vld [vmem:[%s2 + $0x6a8] sm:$0xff]
      %v2040 = vld [vmem:[%s2 + $0x6b0] sm:$0xff]
      %v2041 = vld [vmem:[%s2 + $0x6b8] sm:$0xff]
      %v2042 = vld [vmem:[%s2 + $0x6c0] sm:$0xff]
      %v2043 = vld [vmem:[%s2 + $0x6c8] sm:$0xff]
      %v2044 = vld [vmem:[%s2 + $0x6d0] sm:$0xff]
      %v2045 = vld [vmem:[%s2 + $0x6d8] sm:$0xff]
      %v2046 = vld [vmem:[%s2 + $0x6e0] sm:$0xff]
      %v2047 = vld [vmem:[%s2 + $0x6e8] sm:$0xff]
      %v2048 = vld [vmem:[%s2 + $0x6f0] sm:$0xff]
      %v2049 = vld [vmem:[%s2 + $0x6f8] sm:$0xff]
      %v2050 = vld [vmem:[%s2 + $0x700] sm:$0xff]
      %v2051 = vld [vmem:[%s2 + $0x708] sm:$0xff]
      %v2052 = vld [vmem:[%s2 + $0x710] sm:$0xff]
      %v2053 = vld [vmem:[%s2 + $0x718] sm:$0xff]
      %v2054 = vld [vmem:[%s2 + $0x720] sm:$0xff]
      %v2055 = vld [vmem:[%s2 + $0x728] sm:$0xff]
      %v2056 = vld [vmem:[%s2 + $0x730] sm:$0xff]
      %v2057 = vld [vmem:[%s2 + $0x738] sm:$0xff]
      %v2058 = vld [vmem:[%s2 + $0x740] sm:$0xff]
      %v2059 = vld [vmem:[%s2 + $0x748] sm:$0xff]
      %v2060 = vld [vmem:[%s2 + $0x750] sm:$0xff]
      %v2061 = vld [vmem:[%s2 + $0x758] sm:$0xff]
      %v2062 = vld [vmem:[%s2 + $0x760] sm:$0xff]
      %v2063 = vld [vmem:[%s2 + $0x768] sm:$0xff]
      %v2064 = vld [vmem:[%s2 + $0x770] sm:$0xff]
      %v2065 = vld [vmem:[%s2 + $0x778] sm:$0xff]
      %v2066 = vld [vmem:[%s2 + $0x780] sm:$0xff]
      %v2067 = vld [vmem:[%s2 + $0x788] sm:$0xff]
      %v2068 = vld [vmem:[%s2 + $0x790] sm:$0xff]
      %v2069 = vld [vmem:[%s2 + $0x798] sm:$0xff]
      %v2070 = vld [vmem:[%s2 + $0x7a0] sm:$0xff]
      %v2071 = vld [vmem:[%s2 + $0x7a8] sm:$0xff]
      %v2072 = vld [vmem:[%s2 + $0x7b0] sm:$0xff]
      %v2073 = vld [vmem:[%s2 + $0x7b8] sm:$0xff]
      %v2074 = vld [vmem:[%s2 + $0x7c0] sm:$0xff]
      %v2075 = vld [vmem:[%s2 + $0x7c8] sm:$0xff]
      %v2076 = vld [vmem:[%s2 + $0x7d0] sm:$0xff]
      %v2077 = vld [vmem:[%s2 + $0x7d8] sm:$0xff]
      %v2078 = vld [vmem:[%s2 + $0x7e0] sm:$0xff]
      %v2079 = vld [vmem:[%s2 + $0x7e8] sm:$0xff]
      %v2080 = vld [vmem:[%s2 + $0x7f0] sm:$0xff]
      %v2081 = vld [vmem:[%s2 + $0x7f8] sm:$0xff]
      %v2082 = vld [vmem:[%s2 + $0x800] sm:$0xff]
      %v2083 = vld [vmem:[%s2 + $0x808] sm:$0xff]
      %v2084 = vld [vmem:[%s2 + $0x810] sm:$0xff]
      %v2085 = vld [vmem:[%s2 + $0x818] sm:$0xff]
      %v2086 = vld [vmem:[%s2 + $0x820] sm:$0xff]
      %v2087 = vld [vmem:[%s2 + $0x828] sm:$0xff]
      %v2088 = vld [vmem:[%s2 + $0x830] sm:$0xff]
      %v2089 = vld [vmem:[%s2 + $0x838] sm:$0xff]
      %v2090 = vld [vmem:[%s2 + $0x840] sm:$0xff]
      %v2091 = vld [vmem:[%s2 + $0x848] sm:$0xff]
      %v2092 = vld [vmem:[%s2 + $0x850] sm:$0xff]
      %v2093 = vld [vmem:[%s2 + $0x858] sm:$0xff]
      %v2094 = vld [vmem:[%s2 + $0x860] sm:$0xff]
      %v2095 = vld [vmem:[%s2 + $0x868] sm:$0xff]
      %v2096 = vld [vmem:[%s2 + $0x870] sm:$0xff]
      %v2097 = vld [vmem:[%s2 + $0x878] sm:$0xff]
      %v2098 = vld [vmem:[%s2 + $0x880] sm:$0xff]
      %v2099 = vld [vmem:[%s2 + $0x888] sm:$0xff]
      %v2100 = vld [vmem:[%s2 + $0x890] sm:$0xff]
      %v2101 = vld [vmem:[%s2 + $0x898] sm:$0xff]
      %v2102 = vld [vmem:[%s2 + $0x8a0] sm:$0xff]
      %v2103 = vld [vmem:[%s2 + $0x8a8] sm:$0xff]
      %v2104 = vld [vmem:[%s2 + $0x8b0] sm:$0xff]
      %v2105 = vld [vmem:[%s2 + $0x8b8] sm:$0xff]
      %v2106 = vld [vmem:[%s2 + $0x8c0] sm:$0xff]
      %v2107 = vld [vmem:[%s2 + $0x8c8] sm:$0xff]
      %v2108 = vld [vmem:[%s2 + $0x8d0] sm:$0xff]
      %v2109 = vld [vmem:[%s2 + $0x8d8] sm:$0xff]
      %v2110 = vld [vmem:[%s2 + $0x8e0] sm:$0xff]
      %v2111 = vld [vmem:[%s2 + $0x8e8] sm:$0xff]
      %v2112 = vld [vmem:[%s2 + $0x8f0] sm:$0xff]
      %v2113 = vld [vmem:[%s2 + $0x8f8] sm:$0xff]
      %v2402 = vunpack.c.l.b16 %v1826
      %v2403 = vunpack.c.h.b16 %v1826
      %v2404 = vunpack.c.l.b16 %v1827
      %v2405 = vunpack.c.h.b16 %v1827
      %v2406 = vunpack.c.l.b16 %v1828
      %v2407 = vunpack.c.h.b16 %v1828
      %v2408 = vunpack.c.l.b16 %v1829
      %v2409 = vunpack.c.h.b16 %v1829
      %v2410 = vunpack.c.l.b16 %v1830
      %v2411 = vunpack.c.h.b16 %v1830
      %v2412 = vunpack.c.l.b16 %v1831
      %v2413 = vunpack.c.h.b16 %v1831
      %v2414 = vunpack.c.l.b16 %v1832
      %v2415 = vunpack.c.h.b16 %v1832
      %v2416 = vunpack.c.l.b16 %v1833
      %v2417 = vunpack.c.h.b16 %v1833
      %v2418 = vunpack.c.l.b16 %v1834
      %v2419 = vunpack.c.h.b16 %v1834
      %v2420 = vunpack.c.l.b16 %v1835
      %v2421 = vunpack.c.h.b16 %v1835
      %v2422 = vunpack.c.l.b16 %v1836
      %v2423 = vunpack.c.h.b16 %v1836
      %v2424 = vunpack.c.l.b16 %v1837
      %v2425 = vunpack.c.h.b16 %v1837
      %v2426 = vunpack.c.l.b16 %v1838
      %v2427 = vunpack.c.h.b16 %v1838
      %v2428 = vunpack.c.l.b16 %v1839
      %v2429 = vunpack.c.h.b16 %v1839
      %v2430 = vunpack.c.l.b16 %v1840
      %v2431 = vunpack.c.h.b16 %v1840
      %v2432 = vunpack.c.l.b16 %v1841
      %v2433 = vunpack.c.h.b16 %v1841
      %v2434 = vunpack.c.l.b16 %v1842
      %v2435 = vunpack.c.h.b16 %v1842
      %v2436 = vunpack.c.l.b16 %v1843
      %v2437 = vunpack.c.h.b16 %v1843
      %v2438 = vunpack.c.l.b16 %v1844
      %v2439 = vunpack.c.h.b16 %v1844
      %v2440 = vunpack.c.l.b16 %v1845
      %v2441 = vunpack.c.h.b16 %v1845
      %v2442 = vunpack.c.l.b16 %v1846
      %v2443 = vunpack.c.h.b16 %v1846
      %v2444 = vunpack.c.l.b16 %v1847
      %v2445 = vunpack.c.h.b16 %v1847
      %v2446 = vunpack.c.l.b16 %v1848
      %v2447 = vunpack.c.h.b16 %v1848
      %v2448 = vunpack.c.l.b16 %v1849
      %v2449 = vunpack.c.h.b16 %v1849
      %v2450 = vunpack.c.l.b16 %v1850
      %v2451 = vunpack.c.h.b16 %v1850
      %v2452 = vunpack.c.l.b16 %v1851
      %v2453 = vunpack.c.h.b16 %v1851
      %v2454 = vunpack.c.l.b16 %v1852
      %v2455 = vunpack.c.h.b16 %v1852
      %v2456 = vunpack.c.l.b16 %v1853
      %v2457 = vunpack.c.h.b16 %v1853
      %v2458 = vunpack.c.l.b16 %v1854
      %v2459 = vunpack.c.h.b16 %v1854
      %v2460 = vunpack.c.l.b16 %v1855
      %v2461 = vunpack.c.h.b16 %v1855
      %v2462 = vunpack.c.l.b16 %v1856
      %v2463 = vunpack.c.h.b16 %v1856
      %v2464 = vunpack.c.l.b16 %v1857
      %v2465 = vunpack.c.h.b16 %v1857
      %v2466 = vunpack.c.l.b16 %v1858
      %v2467 = vunpack.c.h.b16 %v1858
      %v2468 = vunpack.c.l.b16 %v1859
      %v2469 = vunpack.c.h.b16 %v1859
      %v2470 = vunpack.c.l.b16 %v1860
      %v2471 = vunpack.c.h.b16 %v1860
      %v2472 = vunpack.c.l.b16 %v1861
      %v2473 = vunpack.c.h.b16 %v1861
      %v2474 = vunpack.c.l.b16 %v1862
      %v2475 = vunpack.c.h.b16 %v1862
      %v2476 = vunpack.c.l.b16 %v1863
      %v2477 = vunpack.c.h.b16 %v1863
      %v2478 = vunpack.c.l.b16 %v1864
      %v2479 = vunpack.c.h.b16 %v1864
      %v2480 = vunpack.c.l.b16 %v1865
      %v2481 = vunpack.c.h.b16 %v1865
      %v2482 = vunpack.c.l.b16 %v1866
      %v2483 = vunpack.c.h.b16 %v1866
      %v2484 = vunpack.c.l.b16 %v1867
      %v2485 = vunpack.c.h.b16 %v1867
      %v2486 = vunpack.c.l.b16 %v1868
      %v2487 = vunpack.c.h.b16 %v1868
      %v2488 = vunpack.c.l.b16 %v1869
      %v2489 = vunpack.c.h.b16 %v1869
      %v2490 = vunpack.c.l.b16 %v1870
      %v2491 = vunpack.c.h.b16 %v1870
      %v2492 = vunpack.c.l.b16 %v1871
      %v2493 = vunpack.c.h.b16 %v1871
      %v2494 = vunpack.c.l.b16 %v1872
      %v2495 = vunpack.c.h.b16 %v1872
      %v2496 = vunpack.c.l.b16 %v1873
      %v2497 = vunpack.c.h.b16 %v1873
      %v2498 = vunpack.c.l.b16 %v1874
      %v2499 = vunpack.c.h.b16 %v1874
      %v2500 = vunpack.c.l.b16 %v1875
      %v2501 = vunpack.c.h.b16 %v1875
      %v2502 = vunpack.c.l.b16 %v1876
      %v2503 = vunpack.c.h.b16 %v1876
      %v2504 = vunpack.c.l.b16 %v1877
      %v2505 = vunpack.c.h.b16 %v1877
      %v2506 = vunpack.c.l.b16 %v1878
      %v2507 = vunpack.c.h.b16 %v1878
      %v2508 = vunpack.c.l.b16 %v1879
      %v2509 = vunpack.c.h.b16 %v1879
      %v2510 = vunpack.c.l.b16 %v1880
      %v2511 = vunpack.c.h.b16 %v1880
      %v2512 = vunpack.c.l.b16 %v1881
      %v2513 = vunpack.c.h.b16 %v1881
      %v2514 = vunpack.c.l.b16 %v1882
      %v2515 = vunpack.c.h.b16 %v1882
      %v2516 = vunpack.c.l.b16 %v1883
      %v2517 = vunpack.c.h.b16 %v1883
      %v2518 = vunpack.c.l.b16 %v1884
      %v2519 = vunpack.c.h.b16 %v1884
      %v2520 = vunpack.c.l.b16 %v1885
      %v2521 = vunpack.c.h.b16 %v1885
      %v2522 = vunpack.c.l.b16 %v1886
      %v2523 = vunpack.c.h.b16 %v1886
      %v2524 = vunpack.c.l.b16 %v1887
      %v2525 = vunpack.c.h.b16 %v1887
      %v2526 = vunpack.c.l.b16 %v1888
      %v2527 = vunpack.c.h.b16 %v1888
      %v2528 = vunpack.c.l.b16 %v1889
      %v2529 = vunpack.c.h.b16 %v1889
      %v2530 = vunpack.c.l.b16 %v1890
      %v2531 = vunpack.c.h.b16 %v1890
      %v2532 = vunpack.c.l.b16 %v1891
      %v2533 = vunpack.c.h.b16 %v1891
      %v2534 = vunpack.c.l.b16 %v1892
      %v2535 = vunpack.c.h.b16 %v1892
      %v2536 = vunpack.c.l.b16 %v1893
      %v2537 = vunpack.c.h.b16 %v1893
      %v2538 = vunpack.c.l.b16 %v1894
      %v2539 = vunpack.c.h.b16 %v1894
      %v2540 = vunpack.c.l.b16 %v1895
      %v2541 = vunpack.c.h.b16 %v1895
      %v2542 = vunpack.c.l.b16 %v1896
      %v2543 = vunpack.c.h.b16 %v1896
      %v2544 = vunpack.c.l.b16 %v1897
      %v2545 = vunpack.c.h.b16 %v1897
      %v2546 = vunpack.c.l.b16 %v1898
      %v2547 = vunpack.c.h.b16 %v1898
      %v2548 = vunpack.c.l.b16 %v1899
      %v2549 = vunpack.c.h.b16 %v1899
      %v2550 = vunpack.c.l.b16 %v1900
      %v2551 = vunpack.c.h.b16 %v1900
      %v2552 = vunpack.c.l.b16 %v1901
      %v2553 = vunpack.c.h.b16 %v1901
      %v2554 = vunpack.c.l.b16 %v1902
      %v2555 = vunpack.c.h.b16 %v1902
      %v2556 = vunpack.c.l.b16 %v1903
      %v2557 = vunpack.c.h.b16 %v1903
      %v2558 = vunpack.c.l.b16 %v1904
      %v2559 = vunpack.c.h.b16 %v1904
      %v2560 = vunpack.c.l.b16 %v1905
      %v2561 = vunpack.c.h.b16 %v1905
      %v2562 = vunpack.c.l.b16 %v1906
      %v2563 = vunpack.c.h.b16 %v1906
      %v2564 = vunpack.c.l.b16 %v1907
      %v2565 = vunpack.c.h.b16 %v1907
      %v2566 = vunpack.c.l.b16 %v1908
      %v2567 = vunpack.c.h.b16 %v1908
      %v2568 = vunpack.c.l.b16 %v1909
      %v2569 = vunpack.c.h.b16 %v1909
      %v2570 = vunpack.c.l.b16 %v1910
      %v2571 = vunpack.c.h.b16 %v1910
      %v2572 = vunpack.c.l.b16 %v1911
      %v2573 = vunpack.c.h.b16 %v1911
      %v2574 = vunpack.c.l.b16 %v1912
      %v2575 = vunpack.c.h.b16 %v1912
      %v2576 = vunpack.c.l.b16 %v1913
      %v2577 = vunpack.c.h.b16 %v1913
      %v2578 = vunpack.c.l.b16 %v1914
      %v2579 = vunpack.c.h.b16 %v1914
      %v2580 = vunpack.c.l.b16 %v1915
      %v2581 = vunpack.c.h.b16 %v1915
      %v2582 = vunpack.c.l.b16 %v1916
      %v2583 = vunpack.c.h.b16 %v1916
      %v2584 = vunpack.c.l.b16 %v1917
      %v2585 = vunpack.c.h.b16 %v1917
      %v2586 = vunpack.c.l.b16 %v1918
      %v2587 = vunpack.c.h.b16 %v1918
      %v2588 = vunpack.c.l.b16 %v1919
      %v2589 = vunpack.c.h.b16 %v1919
      %v2590 = vunpack.c.l.b16 %v1920
      %v2591 = vunpack.c.h.b16 %v1920
      %v2592 = vunpack.c.l.b16 %v1921
      %v2593 = vunpack.c.h.b16 %v1921
      %v2594 = vunpack.c.l.b16 %v1922
      %v2595 = vunpack.c.h.b16 %v1922
      %v2596 = vunpack.c.l.b16 %v1923
      %v2597 = vunpack.c.h.b16 %v1923
      %v2598 = vunpack.c.l.b16 %v1924
      %v2599 = vunpack.c.h.b16 %v1924
      %v2600 = vunpack.c.l.b16 %v1925
      %v2601 = vunpack.c.h.b16 %v1925
      %v2602 = vunpack.c.l.b16 %v1926
      %v2603 = vunpack.c.h.b16 %v1926
      %v2604 = vunpack.c.l.b16 %v1927
      %v2605 = vunpack.c.h.b16 %v1927
      %v2606 = vunpack.c.l.b16 %v1928
      %v2607 = vunpack.c.h.b16 %v1928
      %v2608 = vunpack.c.l.b16 %v1929
      %v2609 = vunpack.c.h.b16 %v1929
      %v2610 = vunpack.c.l.b16 %v1930
      %v2611 = vunpack.c.h.b16 %v1930
      %v2612 = vunpack.c.l.b16 %v1931
      %v2613 = vunpack.c.h.b16 %v1931
      %v2614 = vunpack.c.l.b16 %v1932
      %v2615 = vunpack.c.h.b16 %v1932
      %v2616 = vunpack.c.l.b16 %v1933
      %v2617 = vunpack.c.h.b16 %v1933
      %v2618 = vunpack.c.l.b16 %v1934
      %v2619 = vunpack.c.h.b16 %v1934
      %v2620 = vunpack.c.l.b16 %v1935
      %v2621 = vunpack.c.h.b16 %v1935
      %v2622 = vunpack.c.l.b16 %v1936
      %v2623 = vunpack.c.h.b16 %v1936
      %v2624 = vunpack.c.l.b16 %v1937
      %v2625 = vunpack.c.h.b16 %v1937
      %v2626 = vunpack.c.l.b16 %v1938
      %v2627 = vunpack.c.h.b16 %v1938
      %v2628 = vunpack.c.l.b16 %v1939
      %v2629 = vunpack.c.h.b16 %v1939
      %v2630 = vunpack.c.l.b16 %v1940
      %v2631 = vunpack.c.h.b16 %v1940
      %v2632 = vunpack.c.l.b16 %v1941
      %v2633 = vunpack.c.h.b16 %v1941
      %v2634 = vunpack.c.l.b16 %v1942
      %v2635 = vunpack.c.h.b16 %v1942
      %v2636 = vunpack.c.l.b16 %v1943
      %v2637 = vunpack.c.h.b16 %v1943
      %v2638 = vunpack.c.l.b16 %v1944
      %v2639 = vunpack.c.h.b16 %v1944
      %v2640 = vunpack.c.l.b16 %v1945
      %v2641 = vunpack.c.h.b16 %v1945
      %v2642 = vunpack.c.l.b16 %v1946
      %v2643 = vunpack.c.h.b16 %v1946
      %v2644 = vunpack.c.l.b16 %v1947
      %v2645 = vunpack.c.h.b16 %v1947
      %v2646 = vunpack.c.l.b16 %v1948
      %v2647 = vunpack.c.h.b16 %v1948
      %v2648 = vunpack.c.l.b16 %v1949
      %v2649 = vunpack.c.h.b16 %v1949
      %v2650 = vunpack.c.l.b16 %v1950
      %v2651 = vunpack.c.h.b16 %v1950
      %v2652 = vunpack.c.l.b16 %v1951
      %v2653 = vunpack.c.h.b16 %v1951
      %v2654 = vunpack.c.l.b16 %v1952
      %v2655 = vunpack.c.h.b16 %v1952
      %v2656 = vunpack.c.l.b16 %v1953
      %v2657 = vunpack.c.h.b16 %v1953
      %v2658 = vunpack.c.l.b16 %v1954
      %v2659 = vunpack.c.h.b16 %v1954
      %v2660 = vunpack.c.l.b16 %v1955
      %v2661 = vunpack.c.h.b16 %v1955
      %v2662 = vunpack.c.l.b16 %v1956
      %v2663 = vunpack.c.h.b16 %v1956
      %v2664 = vunpack.c.l.b16 %v1957
      %v2665 = vunpack.c.h.b16 %v1957
      %v2666 = vunpack.c.l.b16 %v1958
      %v2667 = vunpack.c.h.b16 %v1958
      %v2668 = vunpack.c.l.b16 %v1959
      %v2669 = vunpack.c.h.b16 %v1959
      %v2670 = vunpack.c.l.b16 %v1960
      %v2671 = vunpack.c.h.b16 %v1960
      %v2672 = vunpack.c.l.b16 %v1961
      %v2673 = vunpack.c.h.b16 %v1961
      %v2674 = vunpack.c.l.b16 %v1962
      %v2675 = vunpack.c.h.b16 %v1962
      %v2676 = vunpack.c.l.b16 %v1963
      %v2677 = vunpack.c.h.b16 %v1963
      %v2678 = vunpack.c.l.b16 %v1964
      %v2679 = vunpack.c.h.b16 %v1964
      %v2680 = vunpack.c.l.b16 %v1965
      %v2681 = vunpack.c.h.b16 %v1965
      %v2682 = vunpack.c.l.b16 %v1966
      %v2683 = vunpack.c.h.b16 %v1966
      %v2684 = vunpack.c.l.b16 %v1967
      %v2685 = vunpack.c.h.b16 %v1967
      %v2686 = vunpack.c.l.b16 %v1968
      %v2687 = vunpack.c.h.b16 %v1968
      %v2688 = vunpack.c.l.b16 %v1969
      %v2689 = vunpack.c.h.b16 %v1969
      %v2690 = vunpack.c.l.b16 %v1970
      %v2691 = vunpack.c.h.b16 %v1970
      %v2692 = vunpack.c.l.b16 %v1971
      %v2693 = vunpack.c.h.b16 %v1971
      %v2694 = vunpack.c.l.b16 %v1972
      %v2695 = vunpack.c.h.b16 %v1972
      %v2696 = vunpack.c.l.b16 %v1973
      %v2697 = vunpack.c.h.b16 %v1973
      %v2698 = vunpack.c.l.b16 %v1974
      %v2699 = vunpack.c.h.b16 %v1974
      %v2700 = vunpack.c.l.b16 %v1975
      %v2701 = vunpack.c.h.b16 %v1975
      %v2702 = vunpack.c.l.b16 %v1976
      %v2703 = vunpack.c.h.b16 %v1976
      %v2704 = vunpack.c.l.b16 %v1977
      %v2705 = vunpack.c.h.b16 %v1977
      %v2706 = vunpack.c.l.b16 %v1978
      %v2707 = vunpack.c.h.b16 %v1978
      %v2708 = vunpack.c.l.b16 %v1979
      %v2709 = vunpack.c.h.b16 %v1979
      %v2710 = vunpack.c.l.b16 %v1980
      %v2711 = vunpack.c.h.b16 %v1980
      %v2712 = vunpack.c.l.b16 %v1981
      %v2713 = vunpack.c.h.b16 %v1981
      %v2714 = vunpack.c.l.b16 %v1982
      %v2715 = vunpack.c.h.b16 %v1982
      %v2716 = vunpack.c.l.b16 %v1983
      %v2717 = vunpack.c.h.b16 %v1983
      %v2718 = vunpack.c.l.b16 %v1984
      %v2719 = vunpack.c.h.b16 %v1984
      %v2720 = vunpack.c.l.b16 %v1985
      %v2721 = vunpack.c.h.b16 %v1985
      %v2722 = vunpack.c.l.b16 %v1986
      %v2723 = vunpack.c.h.b16 %v1986
      %v2724 = vunpack.c.l.b16 %v1987
      %v2725 = vunpack.c.h.b16 %v1987
      %v2726 = vunpack.c.l.b16 %v1988
      %v2727 = vunpack.c.h.b16 %v1988
      %v2728 = vunpack.c.l.b16 %v1989
      %v2729 = vunpack.c.h.b16 %v1989
      %v2730 = vunpack.c.l.b16 %v1990
      %v2731 = vunpack.c.h.b16 %v1990
      %v2732 = vunpack.c.l.b16 %v1991
      %v2733 = vunpack.c.h.b16 %v1991
      %v2734 = vunpack.c.l.b16 %v1992
      %v2735 = vunpack.c.h.b16 %v1992
      %v2736 = vunpack.c.l.b16 %v1993
      %v2737 = vunpack.c.h.b16 %v1993
      %v2738 = vunpack.c.l.b16 %v1994
      %v2739 = vunpack.c.h.b16 %v1994
      %v2740 = vunpack.c.l.b16 %v1995
      %v2741 = vunpack.c.h.b16 %v1995
      %v2742 = vunpack.c.l.b16 %v1996
      %v2743 = vunpack.c.h.b16 %v1996
      %v2744 = vunpack.c.l.b16 %v1997
      %v2745 = vunpack.c.h.b16 %v1997
      %v2746 = vunpack.c.l.b16 %v1998
      %v2747 = vunpack.c.h.b16 %v1998
      %v2748 = vunpack.c.l.b16 %v1999
      %v2749 = vunpack.c.h.b16 %v1999
      %v2750 = vunpack.c.l.b16 %v2000
      %v2751 = vunpack.c.h.b16 %v2000
      %v2752 = vunpack.c.l.b16 %v2001
      %v2753 = vunpack.c.h.b16 %v2001
      %v2754 = vunpack.c.l.b16 %v2002
      %v2755 = vunpack.c.h.b16 %v2002
      %v2756 = vunpack.c.l.b16 %v2003
      %v2757 = vunpack.c.h.b16 %v2003
      %v2758 = vunpack.c.l.b16 %v2004
      %v2759 = vunpack.c.h.b16 %v2004
      %v2760 = vunpack.c.l.b16 %v2005
      %v2761 = vunpack.c.h.b16 %v2005
      %v2762 = vunpack.c.l.b16 %v2006
      %v2763 = vunpack.c.h.b16 %v2006
      %v2764 = vunpack.c.l.b16 %v2007
      %v2765 = vunpack.c.h.b16 %v2007
      %v2766 = vunpack.c.l.b16 %v2008
      %v2767 = vunpack.c.h.b16 %v2008
      %v2768 = vunpack.c.l.b16 %v2009
      %v2769 = vunpack.c.h.b16 %v2009
      %v2770 = vunpack.c.l.b16 %v2010
      %v2771 = vunpack.c.h.b16 %v2010
      %v2772 = vunpack.c.l.b16 %v2011
      %v2773 = vunpack.c.h.b16 %v2011
      %v2774 = vunpack.c.l.b16 %v2012
      %v2775 = vunpack.c.h.b16 %v2012
      %v2776 = vunpack.c.l.b16 %v2013
      %v2777 = vunpack.c.h.b16 %v2013
      %v2778 = vunpack.c.l.b16 %v2014
      %v2779 = vunpack.c.h.b16 %v2014
      %v2780 = vunpack.c.l.b16 %v2015
      %v2781 = vunpack.c.h.b16 %v2015
      %v2782 = vunpack.c.l.b16 %v2016
      %v2783 = vunpack.c.h.b16 %v2016
      %v2784 = vunpack.c.l.b16 %v2017
      %v2785 = vunpack.c.h.b16 %v2017
      %v2786 = vunpack.c.l.b16 %v2018
      %v2787 = vunpack.c.h.b16 %v2018
      %v2788 = vunpack.c.l.b16 %v2019
      %v2789 = vunpack.c.h.b16 %v2019
      %v2790 = vunpack.c.l.b16 %v2020
      %v2791 = vunpack.c.h.b16 %v2020
      %v2792 = vunpack.c.l.b16 %v2021
      %v2793 = vunpack.c.h.b16 %v2021
      %v2794 = vunpack.c.l.b16 %v2022
      %v2795 = vunpack.c.h.b16 %v2022
      %v2796 = vunpack.c.l.b16 %v2023
      %v2797 = vunpack.c.h.b16 %v2023
      %v2798 = vunpack.c.l.b16 %v2024
      %v2799 = vunpack.c.h.b16 %v2024
      %v2800 = vunpack.c.l.b16 %v2025
      %v2801 = vunpack.c.h.b16 %v2025
      %v2802 = vunpack.c.l.b16 %v2026
      %v2803 = vunpack.c.h.b16 %v2026
      %v2804 = vunpack.c.l.b16 %v2027
      %v2805 = vunpack.c.h.b16 %v2027
      %v2806 = vunpack.c.l.b16 %v2028
      %v2807 = vunpack.c.h.b16 %v2028
      %v2808 = vunpack.c.l.b16 %v2029
      %v2809 = vunpack.c.h.b16 %v2029
      %v2810 = vunpack.c.l.b16 %v2030
      %v2811 = vunpack.c.h.b16 %v2030
      %v2812 = vunpack.c.l.b16 %v2031
      %v2813 = vunpack.c.h.b16 %v2031
      %v2814 = vunpack.c.l.b16 %v2032
      %v2815 = vunpack.c.h.b16 %v2032
      %v2816 = vunpack.c.l.b16 %v2033
      %v2817 = vunpack.c.h.b16 %v2033
      %v2818 = vunpack.c.l.b16 %v2034
      %v2819 = vunpack.c.h.b16 %v2034
      %v2820 = vunpack.c.l.b16 %v2035
      %v2821 = vunpack.c.h.b16 %v2035
      %v2822 = vunpack.c.l.b16 %v2036
      %v2823 = vunpack.c.h.b16 %v2036
      %v2824 = vunpack.c.l.b16 %v2037
      %v2825 = vunpack.c.h.b16 %v2037
      %v2826 = vunpack.c.l.b16 %v2038
      %v2827 = vunpack.c.h.b16 %v2038
      %v2828 = vunpack.c.l.b16 %v2039
      %v2829 = vunpack.c.h.b16 %v2039
      %v2830 = vunpack.c.l.b16 %v2040
      %v2831 = vunpack.c.h.b16 %v2040
      %v2832 = vunpack.c.l.b16 %v2041
      %v2833 = vunpack.c.h.b16 %v2041
      %v2834 = vunpack.c.l.b16 %v2042
      %v2835 = vunpack.c.h.b16 %v2042
      %v2836 = vunpack.c.l.b16 %v2043
      %v2837 = vunpack.c.h.b16 %v2043
      %v2838 = vunpack.c.l.b16 %v2044
      %v2839 = vunpack.c.h.b16 %v2044
      %v2840 = vunpack.c.l.b16 %v2045
      %v2841 = vunpack.c.h.b16 %v2045
      %v2842 = vunpack.c.l.b16 %v2046
      %v2843 = vunpack.c.h.b16 %v2046
      %v2844 = vunpack.c.l.b16 %v2047
      %v2845 = vunpack.c.h.b16 %v2047
      %v2846 = vunpack.c.l.b16 %v2048
      %v2847 = vunpack.c.h.b16 %v2048
      %v2848 = vunpack.c.l.b16 %v2049
      %v2849 = vunpack.c.h.b16 %v2049
      %v2850 = vunpack.c.l.b16 %v2050
      %v2851 = vunpack.c.h.b16 %v2050
      %v2852 = vunpack.c.l.b16 %v2051
      %v2853 = vunpack.c.h.b16 %v2051
      %v2854 = vunpack.c.l.b16 %v2052
      %v2855 = vunpack.c.h.b16 %v2052
      %v2856 = vunpack.c.l.b16 %v2053
      %v2857 = vunpack.c.h.b16 %v2053
      %v2858 = vunpack.c.l.b16 %v2054
      %v2859 = vunpack.c.h.b16 %v2054
      %v2860 = vunpack.c.l.b16 %v2055
      %v2861 = vunpack.c.h.b16 %v2055
      %v2862 = vunpack.c.l.b16 %v2056
      %v2863 = vunpack.c.h.b16 %v2056
      %v2864 = vunpack.c.l.b16 %v2057
      %v2865 = vunpack.c.h.b16 %v2057
      %v2866 = vunpack.c.l.b16 %v2058
      %v2867 = vunpack.c.h.b16 %v2058
      %v2868 = vunpack.c.l.b16 %v2059
      %v2869 = vunpack.c.h.b16 %v2059
      %v2870 = vunpack.c.l.b16 %v2060
      %v2871 = vunpack.c.h.b16 %v2060
      %v2872 = vunpack.c.l.b16 %v2061
      %v2873 = vunpack.c.h.b16 %v2061
      %v2874 = vunpack.c.l.b16 %v2062
      %v2875 = vunpack.c.h.b16 %v2062
      %v2876 = vunpack.c.l.b16 %v2063
      %v2877 = vunpack.c.h.b16 %v2063
      %v2878 = vunpack.c.l.b16 %v2064
      %v2879 = vunpack.c.h.b16 %v2064
      %v2880 = vunpack.c.l.b16 %v2065
      %v2881 = vunpack.c.h.b16 %v2065
      %v2882 = vunpack.c.l.b16 %v2066
      %v2883 = vunpack.c.h.b16 %v2066
      %v2884 = vunpack.c.l.b16 %v2067
      %v2885 = vunpack.c.h.b16 %v2067
      %v2886 = vunpack.c.l.b16 %v2068
      %v2887 = vunpack.c.h.b16 %v2068
      %v2888 = vunpack.c.l.b16 %v2069
      %v2889 = vunpack.c.h.b16 %v2069
      %v2890 = vunpack.c.l.b16 %v2070
      %v2891 = vunpack.c.h.b16 %v2070
      %v2892 = vunpack.c.l.b16 %v2071
      %v2893 = vunpack.c.h.b16 %v2071
      %v2894 = vunpack.c.l.b16 %v2072
      %v2895 = vunpack.c.h.b16 %v2072
      %v2896 = vunpack.c.l.b16 %v2073
      %v2897 = vunpack.c.h.b16 %v2073
      %v2898 = vunpack.c.l.b16 %v2074
      %v2899 = vunpack.c.h.b16 %v2074
      %v2900 = vunpack.c.l.b16 %v2075
      %v2901 = vunpack.c.h.b16 %v2075
      %v2902 = vunpack.c.l.b16 %v2076
      %v2903 = vunpack.c.h.b16 %v2076
      %v2904 = vunpack.c.l.b16 %v2077
      %v2905 = vunpack.c.h.b16 %v2077
      %v2906 = vunpack.c.l.b16 %v2078
      %v2907 = vunpack.c.h.b16 %v2078
      %v2908 = vunpack.c.l.b16 %v2079
      %v2909 = vunpack.c.h.b16 %v2079
      %v2910 = vunpack.c.l.b16 %v2080
      %v2911 = vunpack.c.h.b16 %v2080
      %v2912 = vunpack.c.l.b16 %v2081
      %v2913 = vunpack.c.h.b16 %v2081
      %v2914 = vunpack.c.l.b16 %v2082
      %v2915 = vunpack.c.h.b16 %v2082
      %v2916 = vunpack.c.l.b16 %v2083
      %v2917 = vunpack.c.h.b16 %v2083
      %v2918 = vunpack.c.l.b16 %v2084
      %v2919 = vunpack.c.h.b16 %v2084
      %v2920 = vunpack.c.l.b16 %v2085
      %v2921 = vunpack.c.h.b16 %v2085
      %v2922 = vunpack.c.l.b16 %v2086
      %v2923 = vunpack.c.h.b16 %v2086
      %v2924 = vunpack.c.l.b16 %v2087
      %v2925 = vunpack.c.h.b16 %v2087
      %v2926 = vunpack.c.l.b16 %v2088
      %v2927 = vunpack.c.h.b16 %v2088
      %v2928 = vunpack.c.l.b16 %v2089
      %v2929 = vunpack.c.h.b16 %v2089
      %v2930 = vunpack.c.l.b16 %v2090
      %v2931 = vunpack.c.h.b16 %v2090
      %v2932 = vunpack.c.l.b16 %v2091
      %v2933 = vunpack.c.h.b16 %v2091
      %v2934 = vunpack.c.l.b16 %v2092
      %v2935 = vunpack.c.h.b16 %v2092
      %v2936 = vunpack.c.l.b16 %v2093
      %v2937 = vunpack.c.h.b16 %v2093
      %v2938 = vunpack.c.l.b16 %v2094
      %v2939 = vunpack.c.h.b16 %v2094
      %v2940 = vunpack.c.l.b16 %v2095
      %v2941 = vunpack.c.h.b16 %v2095
      %v2942 = vunpack.c.l.b16 %v2096
      %v2943 = vunpack.c.h.b16 %v2096
      %v2944 = vunpack.c.l.b16 %v2097
      %v2945 = vunpack.c.h.b16 %v2097
      %v2946 = vunpack.c.l.b16 %v2098
      %v2947 = vunpack.c.h.b16 %v2098
      %v2948 = vunpack.c.l.b16 %v2099
      %v2949 = vunpack.c.h.b16 %v2099
      %v2950 = vunpack.c.l.b16 %v2100
      %v2951 = vunpack.c.h.b16 %v2100
      %v2952 = vunpack.c.l.b16 %v2101
      %v2953 = vunpack.c.h.b16 %v2101
      %v2954 = vunpack.c.l.b16 %v2102
      %v2955 = vunpack.c.h.b16 %v2102
      %v2956 = vunpack.c.l.b16 %v2103
      %v2957 = vunpack.c.h.b16 %v2103
      %v2958 = vunpack.c.l.b16 %v2104
      %v2959 = vunpack.c.h.b16 %v2104
      %v2960 = vunpack.c.l.b16 %v2105
      %v2961 = vunpack.c.h.b16 %v2105
      %v2962 = vunpack.c.l.b16 %v2106
      %v2963 = vunpack.c.h.b16 %v2106
      %v2964 = vunpack.c.l.b16 %v2107
      %v2965 = vunpack.c.h.b16 %v2107
      %v2966 = vunpack.c.l.b16 %v2108
      %v2967 = vunpack.c.h.b16 %v2108
      %v2968 = vunpack.c.l.b16 %v2109
      %v2969 = vunpack.c.h.b16 %v2109
      %v2970 = vunpack.c.l.b16 %v2110
      %v2971 = vunpack.c.h.b16 %v2110
      %v2972 = vunpack.c.l.b16 %v2111
      %v2973 = vunpack.c.h.b16 %v2111
      %v2974 = vunpack.c.l.b16 %v2112
      %v2975 = vunpack.c.h.b16 %v2112
      %v2976 = vunpack.c.l.b16 %v2113
      %v2977 = vunpack.c.h.b16 %v2113
      %v2978 = vpack.c.b16 %v2414, %v2402
      %v2979 = vpack.c.b16 %v2415, %v2403
      %v2980 = vpack.c.b16 %v2416, %v2404
      %v2981 = vpack.c.b16 %v2417, %v2405
      %v2982 = vpack.c.b16 %v2418, %v2406
      %v2983 = vpack.c.b16 %v2419, %v2407
      %v2984 = vpack.c.b16 %v2420, %v2408
      %v2985 = vpack.c.b16 %v2421, %v2409
      %v2986 = vpack.c.b16 %v2422, %v2410
      %v2987 = vpack.c.b16 %v2423, %v2411
      %v2988 = vpack.c.b16 %v2424, %v2412
      %v2989 = vpack.c.b16 %v2425, %v2413
      %v2990 = vpack.c.b16 %v2438, %v2426
      %v2991 = vpack.c.b16 %v2439, %v2427
      %v2992 = vpack.c.b16 %v2440, %v2428
      %v2993 = vpack.c.b16 %v2441, %v2429
      %v2994 = vpack.c.b16 %v2442, %v2430
      %v2995 = vpack.c.b16 %v2443, %v2431
      %v2996 = vpack.c.b16 %v2444, %v2432
      %v2997 = vpack.c.b16 %v2445, %v2433
      %v2998 = vpack.c.b16 %v2446, %v2434
      %v2999 = vpack.c.b16 %v2447, %v2435
      %v3000 = vpack.c.b16 %v2448, %v2436
      %v3001 = vpack.c.b16 %v2449, %v2437
      %v3002 = vpack.c.b16 %v2462, %v2450
      %v3003 = vpack.c.b16 %v2463, %v2451
      %v3004 = vpack.c.b16 %v2464, %v2452
      %v3005 = vpack.c.b16 %v2465, %v2453
      %v3006 = vpack.c.b16 %v2466, %v2454
      %v3007 = vpack.c.b16 %v2467, %v2455
      %v3008 = vpack.c.b16 %v2468, %v2456
      %v3009 = vpack.c.b16 %v2469, %v2457
      %v3010 = vpack.c.b16 %v2470, %v2458
      %v3011 = vpack.c.b16 %v2471, %v2459
      %v3012 = vpack.c.b16 %v2472, %v2460
      %v3013 = vpack.c.b16 %v2473, %v2461
      %v3014 = vpack.c.b16 %v2486, %v2474
      %v3015 = vpack.c.b16 %v2487, %v2475
      %v3016 = vpack.c.b16 %v2488, %v2476
      %v3017 = vpack.c.b16 %v2489, %v2477
      %v3018 = vpack.c.b16 %v2490, %v2478
      %v3019 = vpack.c.b16 %v2491, %v2479
      %v3020 = vpack.c.b16 %v2492, %v2480
      %v3021 = vpack.c.b16 %v2493, %v2481
      %v3022 = vpack.c.b16 %v2494, %v2482
      %v3023 = vpack.c.b16 %v2495, %v2483
      %v3024 = vpack.c.b16 %v2496, %v2484
      %v3025 = vpack.c.b16 %v2497, %v2485
      %v3026 = vpack.c.b16 %v2510, %v2498
      %v3027 = vpack.c.b16 %v2511, %v2499
      %v3028 = vpack.c.b16 %v2512, %v2500
      %v3029 = vpack.c.b16 %v2513, %v2501
      %v3030 = vpack.c.b16 %v2514, %v2502
      %v3031 = vpack.c.b16 %v2515, %v2503
      %v3032 = vpack.c.b16 %v2516, %v2504
      %v3033 = vpack.c.b16 %v2517, %v2505
      %v3034 = vpack.c.b16 %v2518, %v2506
      %v3035 = vpack.c.b16 %v2519, %v2507
      %v3036 = vpack.c.b16 %v2520, %v2508
      %v3037 = vpack.c.b16 %v2521, %v2509
      %v3038 = vpack.c.b16 %v2534, %v2522
      %v3039 = vpack.c.b16 %v2535, %v2523
      %v3040 = vpack.c.b16 %v2536, %v2524
      %v3041 = vpack.c.b16 %v2537, %v2525
      %v3042 = vpack.c.b16 %v2538, %v2526
      %v3043 = vpack.c.b16 %v2539, %v2527
      %v3044 = vpack.c.b16 %v2540, %v2528
      %v3045 = vpack.c.b16 %v2541, %v2529
      %v3046 = vpack.c.b16 %v2542, %v2530
      %v3047 = vpack.c.b16 %v2543, %v2531
      %v3048 = vpack.c.b16 %v2544, %v2532
      %v3049 = vpack.c.b16 %v2545, %v2533
      %v3050 = vpack.c.b16 %v2558, %v2546
      %v3051 = vpack.c.b16 %v2559, %v2547
      %v3052 = vpack.c.b16 %v2560, %v2548
      %v3053 = vpack.c.b16 %v2561, %v2549
      %v3054 = vpack.c.b16 %v2562, %v2550
      %v3055 = vpack.c.b16 %v2563, %v2551
      %v3056 = vpack.c.b16 %v2564, %v2552
      %v3057 = vpack.c.b16 %v2565, %v2553
      %v3058 = vpack.c.b16 %v2566, %v2554
      %v3059 = vpack.c.b16 %v2567, %v2555
      %v3060 = vpack.c.b16 %v2568, %v2556
      %v3061 = vpack.c.b16 %v2569, %v2557
      %v3062 = vpack.c.b16 %v2582, %v2570
      %v3063 = vpack.c.b16 %v2583, %v2571
      %v3064 = vpack.c.b16 %v2584, %v2572
      %v3065 = vpack.c.b16 %v2585, %v2573
      %v3066 = vpack.c.b16 %v2586, %v2574
      %v3067 = vpack.c.b16 %v2587, %v2575
      %v3068 = vpack.c.b16 %v2588, %v2576
      %v3069 = vpack.c.b16 %v2589, %v2577
      %v3070 = vpack.c.b16 %v2590, %v2578
      %v3071 = vpack.c.b16 %v2591, %v2579
      %v3072 = vpack.c.b16 %v2592, %v2580
      %v3073 = vpack.c.b16 %v2593, %v2581
      %v3074 = vpack.c.b16 %v2606, %v2594
      %v3075 = vpack.c.b16 %v2607, %v2595
      %v3076 = vpack.c.b16 %v2608, %v2596
      %v3077 = vpack.c.b16 %v2609, %v2597
      %v3078 = vpack.c.b16 %v2610, %v2598
      %v3079 = vpack.c.b16 %v2611, %v2599
      %v3080 = vpack.c.b16 %v2612, %v2600
      %v3081 = vpack.c.b16 %v2613, %v2601
      %v3082 = vpack.c.b16 %v2614, %v2602
      %v3083 = vpack.c.b16 %v2615, %v2603
      %v3084 = vpack.c.b16 %v2616, %v2604
      %v3085 = vpack.c.b16 %v2617, %v2605
      %v3086 = vpack.c.b16 %v2630, %v2618
      %v3087 = vpack.c.b16 %v2631, %v2619
      %v3088 = vpack.c.b16 %v2632, %v2620
      %v3089 = vpack.c.b16 %v2633, %v2621
      %v3090 = vpack.c.b16 %v2634, %v2622
      %v3091 = vpack.c.b16 %v2635, %v2623
      %v3092 = vpack.c.b16 %v2636, %v2624
      %v3093 = vpack.c.b16 %v2637, %v2625
      %v3094 = vpack.c.b16 %v2638, %v2626
      %v3095 = vpack.c.b16 %v2639, %v2627
      %v3096 = vpack.c.b16 %v2640, %v2628
      %v3097 = vpack.c.b16 %v2641, %v2629
      %v3098 = vpack.c.b16 %v2654, %v2642
      %v3099 = vpack.c.b16 %v2655, %v2643
      %v3100 = vpack.c.b16 %v2656, %v2644
      %v3101 = vpack.c.b16 %v2657, %v2645
      %v3102 = vpack.c.b16 %v2658, %v2646
      %v3103 = vpack.c.b16 %v2659, %v2647
      %v3104 = vpack.c.b16 %v2660, %v2648
      %v3105 = vpack.c.b16 %v2661, %v2649
      %v3106 = vpack.c.b16 %v2662, %v2650
      %v3107 = vpack.c.b16 %v2663, %v2651
      %v3108 = vpack.c.b16 %v2664, %v2652
      %v3109 = vpack.c.b16 %v2665, %v2653
      %v3110 = vpack.c.b16 %v2678, %v2666
      %v3111 = vpack.c.b16 %v2679, %v2667
      %v3112 = vpack.c.b16 %v2680, %v2668
      %v3113 = vpack.c.b16 %v2681, %v2669
      %v3114 = vpack.c.b16 %v2682, %v2670
      %v3115 = vpack.c.b16 %v2683, %v2671
      %v3116 = vpack.c.b16 %v2684, %v2672
      %v3117 = vpack.c.b16 %v2685, %v2673
      %v3118 = vpack.c.b16 %v2686, %v2674
      %v3119 = vpack.c.b16 %v2687, %v2675
      %v3120 = vpack.c.b16 %v2688, %v2676
      %v3121 = vpack.c.b16 %v2689, %v2677
      %v3122 = vpack.c.b16 %v2702, %v2690
      %v3123 = vpack.c.b16 %v2703, %v2691
      %v3124 = vpack.c.b16 %v2704, %v2692
      %v3125 = vpack.c.b16 %v2705, %v2693
      %v3126 = vpack.c.b16 %v2706, %v2694
      %v3127 = vpack.c.b16 %v2707, %v2695
      %v3128 = vpack.c.b16 %v2708, %v2696
      %v3129 = vpack.c.b16 %v2709, %v2697
      %v3130 = vpack.c.b16 %v2710, %v2698
      %v3131 = vpack.c.b16 %v2711, %v2699
      %v3132 = vpack.c.b16 %v2712, %v2700
      %v3133 = vpack.c.b16 %v2713, %v2701
      %v3134 = vpack.c.b16 %v2726, %v2714
      %v3135 = vpack.c.b16 %v2727, %v2715
      %v3136 = vpack.c.b16 %v2728, %v2716
      %v3137 = vpack.c.b16 %v2729, %v2717
      %v3138 = vpack.c.b16 %v2730, %v2718
      %v3139 = vpack.c.b16 %v2731, %v2719
      %v3140 = vpack.c.b16 %v2732, %v2720
      %v3141 = vpack.c.b16 %v2733, %v2721
      %v3142 = vpack.c.b16 %v2734, %v2722
      %v3143 = vpack.c.b16 %v2735, %v2723
      %v3144 = vpack.c.b16 %v2736, %v2724
      %v3145 = vpack.c.b16 %v2737, %v2725
      %v3146 = vpack.c.b16 %v2750, %v2738
      %v3147 = vpack.c.b16 %v2751, %v2739
      %v3148 = vpack.c.b16 %v2752, %v2740
      %v3149 = vpack.c.b16 %v2753, %v2741
      %v3150 = vpack.c.b16 %v2754, %v2742
      %v3151 = vpack.c.b16 %v2755, %v2743
      %v3152 = vpack.c.b16 %v2756, %v2744
      %v3153 = vpack.c.b16 %v2757, %v2745
      %v3154 = vpack.c.b16 %v2758, %v2746
      %v3155 = vpack.c.b16 %v2759, %v2747
      %v3156 = vpack.c.b16 %v2760, %v2748
      %v3157 = vpack.c.b16 %v2761, %v2749
      %v3158 = vpack.c.b16 %v2774, %v2762
      %v3159 = vpack.c.b16 %v2775, %v2763
      %v3160 = vpack.c.b16 %v2776, %v2764
      %v3161 = vpack.c.b16 %v2777, %v2765
      %v3162 = vpack.c.b16 %v2778, %v2766
      %v3163 = vpack.c.b16 %v2779, %v2767
      %v3164 = vpack.c.b16 %v2780, %v2768
      %v3165 = vpack.c.b16 %v2781, %v2769
      %v3166 = vpack.c.b16 %v2782, %v2770
      %v3167 = vpack.c.b16 %v2783, %v2771
      %v3168 = vpack.c.b16 %v2784, %v2772
      %v3169 = vpack.c.b16 %v2785, %v2773
      %v3170 = vpack.c.b16 %v2798, %v2786
      %v3171 = vpack.c.b16 %v2799, %v2787
      %v3172 = vpack.c.b16 %v2800, %v2788
      %v3173 = vpack.c.b16 %v2801, %v2789
      %v3174 = vpack.c.b16 %v2802, %v2790
      %v3175 = vpack.c.b16 %v2803, %v2791
      %v3176 = vpack.c.b16 %v2804, %v2792
      %v3177 = vpack.c.b16 %v2805, %v2793
      %v3178 = vpack.c.b16 %v2806, %v2794
      %v3179 = vpack.c.b16 %v2807, %v2795
      %v3180 = vpack.c.b16 %v2808, %v2796
      %v3181 = vpack.c.b16 %v2809, %v2797
      %v3182 = vpack.c.b16 %v2822, %v2810
      %v3183 = vpack.c.b16 %v2823, %v2811
      %v3184 = vpack.c.b16 %v2824, %v2812
      %v3185 = vpack.c.b16 %v2825, %v2813
      %v3186 = vpack.c.b16 %v2826, %v2814
      %v3187 = vpack.c.b16 %v2827, %v2815
      %v3188 = vpack.c.b16 %v2828, %v2816
      %v3189 = vpack.c.b16 %v2829, %v2817
      %v3190 = vpack.c.b16 %v2830, %v2818
      %v3191 = vpack.c.b16 %v2831, %v2819
      %v3192 = vpack.c.b16 %v2832, %v2820
      %v3193 = vpack.c.b16 %v2833, %v2821
      %v3194 = vpack.c.b16 %v2846, %v2834
      %v3195 = vpack.c.b16 %v2847, %v2835
      %v3196 = vpack.c.b16 %v2848, %v2836
      %v3197 = vpack.c.b16 %v2849, %v2837
      %v3198 = vpack.c.b16 %v2850, %v2838
      %v3199 = vpack.c.b16 %v2851, %v2839
      %v3200 = vpack.c.b16 %v2852, %v2840
      %v3201 = vpack.c.b16 %v2853, %v2841
      %v3202 = vpack.c.b16 %v2854, %v2842
      %v3203 = vpack.c.b16 %v2855, %v2843
      %v3204 = vpack.c.b16 %v2856, %v2844
      %v3205 = vpack.c.b16 %v2857, %v2845
      %v3206 = vpack.c.b16 %v2870, %v2858
      %v3207 = vpack.c.b16 %v2871, %v2859
      %v3208 = vpack.c.b16 %v2872, %v2860
      %v3209 = vpack.c.b16 %v2873, %v2861
      %v3210 = vpack.c.b16 %v2874, %v2862
      %v3211 = vpack.c.b16 %v2875, %v2863
      %v3212 = vpack.c.b16 %v2876, %v2864
      %v3213 = vpack.c.b16 %v2877, %v2865
      %v3214 = vpack.c.b16 %v2878, %v2866
      %v3215 = vpack.c.b16 %v2879, %v2867
      %v3216 = vpack.c.b16 %v2880, %v2868
      %v3217 = vpack.c.b16 %v2881, %v2869
      %v3218 = vpack.c.b16 %v2894, %v2882
      %v3219 = vpack.c.b16 %v2895, %v2883
      %v3220 = vpack.c.b16 %v2896, %v2884
      %v3221 = vpack.c.b16 %v2897, %v2885
      %v3222 = vpack.c.b16 %v2898, %v2886
      %v3223 = vpack.c.b16 %v2899, %v2887
      %v3224 = vpack.c.b16 %v2900, %v2888
      %v3225 = vpack.c.b16 %v2901, %v2889
      %v3226 = vpack.c.b16 %v2902, %v2890
      %v3227 = vpack.c.b16 %v2903, %v2891
      %v3228 = vpack.c.b16 %v2904, %v2892
      %v3229 = vpack.c.b16 %v2905, %v2893
      %v3230 = vpack.c.b16 %v2918, %v2906
      %v3231 = vpack.c.b16 %v2919, %v2907
      %v3232 = vpack.c.b16 %v2920, %v2908
      %v3233 = vpack.c.b16 %v2921, %v2909
      %v3234 = vpack.c.b16 %v2922, %v2910
      %v3235 = vpack.c.b16 %v2923, %v2911
      %v3236 = vpack.c.b16 %v2924, %v2912
      %v3237 = vpack.c.b16 %v2925, %v2913
      %v3238 = vpack.c.b16 %v2926, %v2914
      %v3239 = vpack.c.b16 %v2927, %v2915
      %v3240 = vpack.c.b16 %v2928, %v2916
      %v3241 = vpack.c.b16 %v2929, %v2917
      %v3242 = vpack.c.b16 %v2942, %v2930
      %v3243 = vpack.c.b16 %v2943, %v2931
      %v3244 = vpack.c.b16 %v2944, %v2932
      %v3245 = vpack.c.b16 %v2945, %v2933
      %v3246 = vpack.c.b16 %v2946, %v2934
      %v3247 = vpack.c.b16 %v2947, %v2935
      %v3248 = vpack.c.b16 %v2948, %v2936
      %v3249 = vpack.c.b16 %v2949, %v2937
      %v3250 = vpack.c.b16 %v2950, %v2938
      %v3251 = vpack.c.b16 %v2951, %v2939
      %v3252 = vpack.c.b16 %v2952, %v2940
      %v3253 = vpack.c.b16 %v2953, %v2941
      %v3254 = vpack.c.b16 %v2966, %v2954
      %v3255 = vpack.c.b16 %v2967, %v2955
      %v3256 = vpack.c.b16 %v2968, %v2956
      %v3257 = vpack.c.b16 %v2969, %v2957
      %v3258 = vpack.c.b16 %v2970, %v2958
      %v3259 = vpack.c.b16 %v2971, %v2959
      %v3260 = vpack.c.b16 %v2972, %v2960
      %v3261 = vpack.c.b16 %v2973, %v2961
      %v3262 = vpack.c.b16 %v2974, %v2962
      %v3263 = vpack.c.b16 %v2975, %v2963
      %v3264 = vpack.c.b16 %v2976, %v2964
      %v3265 = vpack.c.b16 %v2977, %v2965
      %3554 = vmatprep.subr.bf16.mxu0 %v3063
      %3555 = vmatpush1.bf16.msra.mxu0 %v3062
      %3556 = vmatprep.subr.bf16.mxu0 %v3051
      %3557 = vmatpush1.bf16.msra.mxu0 %v3050
      %3558 = vmatprep.subr.bf16.mxu0 %v3039
      %3559 = vmatpush1.bf16.msra.mxu0 %v3038
      %3560 = vmatprep.subr.bf16.mxu0 %v3027
      %3561 = vmatpush1.bf16.msra.mxu0 %v3026
      %3562 = vmatprep.subr.bf16.mxu0 %v3015
      %3563 = vmatpush1.bf16.msra.mxu0 %v3014
      %3564 = vmatprep.subr.bf16.mxu0 %v3003
      %3565 = vmatpush1.bf16.msra.mxu0 %v3002
      %3566 = vmatprep.subr.bf16.mxu0 %v2991
      %3567 = vmatpush1.bf16.msra.mxu0 %v2990
      %3568 = vmatprep.subr.bf16.mxu0 %v2979
      %3569 = vmatpush1.bf16.msra.mxu0 %v2978
      %3570 = vmatprep.subr.bf16.mxu0 %v3159
      %3571 = vmatpush2.bf16.msra.mxu0 %v3158
      %3572 = vmatprep.subr.bf16.mxu0 %v3147
      %3573 = vmatpush2.bf16.msra.mxu0 %v3146
      %3574 = vmatprep.subr.bf16.mxu0 %v3135
      %3575 = vmatpush2.bf16.msra.mxu0 %v3134
      %3576 = vmatprep.subr.bf16.mxu0 %v3123
      %3577 = vmatpush2.bf16.msra.mxu0 %v3122
      %3578 = vmatprep.subr.bf16.mxu0 %v3111
      %3579 = vmatpush2.bf16.msra.mxu0 %v3110
      %3580 = vmatprep.subr.bf16.mxu0 %v3099
      %3581 = vmatpush2.bf16.msra.mxu0 %v3098
      %3582 = vmatprep.subr.bf16.mxu0 %v3087
      %3583 = vmatpush2.bf16.msra.mxu0 %v3086
      %3584 = vmatprep.subr.bf16.mxu0 %v3075
      %3585 = vmatpush2.bf16.msra.mxu0 %v3074
      %3586 = vmatprep.mubr.bf16.mxu0 %v1815
      %3587 = vmatmul.mubr.bf16.gmra.mxu0 %v1814
      %v3588 = vpop.f32.mrf.mxu0
      %v3589 = vadd.f32 0.0, %v3588
      %v3590 = vpop.f32.mrf.mxu0
      %v3591 = vadd.f32 0.0, %v3590
      %v3592 = vpop.f32.mrf.mxu0
      %v3593 = vadd.f32 0.0, %v3592
      %v3594 = vpop.f32.mrf.mxu0
      %v3595 = vadd.f32 0.0, %v3594
      %3596 = vmatprep.mubr.bf16.mxu0 %v1818
      %3597 = vmatmul.mubr.bf16.gmra.mxu0 %v1817
      %v3598 = vpop.f32.mrf.mxu0
      %v3599 = vadd.f32 0.0, %v3598
      %v3600 = vpop.f32.mrf.mxu0
      %v3601 = vadd.f32 0.0, %v3600
      %v3602 = vpop.f32.mrf.mxu0
      %v3603 = vadd.f32 0.0, %v3602
      %v3604 = vpop.f32.mrf.mxu0
      %v3605 = vadd.f32 0.0, %v3604
      %3606 = vmatprep.mubr.bf16.mxu0 %v1821
      %3607 = vmatmul.mubr.bf16.gmra.mxu0 %v1820
      %v3608 = vpop.f32.mrf.mxu0
      %v3609 = vadd.f32 0.0, %v3608
      %v3610 = vpop.f32.mrf.mxu0
      %v3611 = vadd.f32 0.0, %v3610
      %v3612 = vpop.f32.mrf.mxu0
      %v3613 = vadd.f32 0.0, %v3612
      %v3614 = vpop.f32.mrf.mxu0
      %v3615 = vadd.f32 0.0, %v3614
      %3616 = vmatprep.mubr.bf16.mxu0 %v1824
      %3617 = vmatmul.mubr.bf16.gmra.mxu0 %v1823
      %v3618 = vpop.f32.mrf.mxu0
      %v3619 = vadd.f32 0.0, %v3618
      %v3620 = vpop.f32.mrf.mxu0
      %v3621 = vadd.f32 0.0, %v3620
      %v3622 = vpop.f32.mrf.mxu0
      %v3623 = vadd.f32 0.0, %v3622
      %v3624 = vpop.f32.mrf.mxu0
      %v3625 = vadd.f32 0.0, %v3624
      %3626 = vdwg.mxu0
      %3627 = vmatprep.subr.bf16.mxu0 %v3255
      %3628 = vmatpush1.bf16.msra.mxu0 %v3254
      %3629 = vmatprep.subr.bf16.mxu0 %v3243
      %3630 = vmatpush1.bf16.msra.mxu0 %v3242
      %3631 = vmatprep.subr.bf16.mxu0 %v3231
      %3632 = vmatpush1.bf16.msra.mxu0 %v3230
      %3633 = vmatprep.subr.bf16.mxu0 %v3219
      %3634 = vmatpush1.bf16.msra.mxu0 %v3218
      %3635 = vmatprep.subr.bf16.mxu0 %v3207
      %3636 = vmatpush1.bf16.msra.mxu0 %v3206
      %3637 = vmatprep.subr.bf16.mxu0 %v3195
      %3638 = vmatpush1.bf16.msra.mxu0 %v3194
      %3639 = vmatprep.subr.bf16.mxu0 %v3183
      %3640 = vmatpush1.bf16.msra.mxu0 %v3182
      %3641 = vmatprep.subr.bf16.mxu0 %v3171
      %3642 = vmatpush1.bf16.msra.mxu0 %v3170
      %3643 = vmatprep.subr.bf16.mxu0 0
      %3644 = vmatpush2.bf16.msra.mxu0 0
      %3645 = vmatprep.subr.bf16.mxu0 0
      %3646 = vmatpush2.bf16.msra.mxu0 0
      %3647 = vmatprep.subr.bf16.mxu0 0
      %3648 = vmatpush2.bf16.msra.mxu0 0
      %3649 = vmatprep.subr.bf16.mxu0 0
      %3650 = vmatpush2.bf16.msra.mxu0 0
      %3651 = vmatprep.subr.bf16.mxu0 0
      %3652 = vmatpush2.bf16.msra.mxu0 0
      %3653 = vmatprep.subr.bf16.mxu0 0
      %3654 = vmatpush2.bf16.msra.mxu0 0
      %3655 = vmatprep.subr.bf16.mxu0 0
      %3656 = vmatpush2.bf16.msra.mxu0 0
      %3657 = vmatprep.subr.bf16.mxu0 0
      %3658 = vmatpush2.bf16.msra.mxu0 0
      %3659 = vmatprep.mubr.bf16.mxu0 0
      %3660 = vmatmul.mubr.bf16.gmra.mxu0 %v1816
      %v3661 = vpop.f32.mrf.mxu0
      %v3662 = vadd.f32 %v3589, %v3661
      %v3663 = vpop.f32.mrf.mxu0
      %v3664 = vadd.f32 %v3591, %v3663
      %v3665 = vpop.f32.mrf.mxu0
      %v3666 = vadd.f32 %v3593, %v3665
      %v3667 = vpop.f32.mrf.mxu0
      %v3668 = vadd.f32 %v3595, %v3667
      %3669 = vmatprep.mubr.bf16.mxu0 0
      %3670 = vmatmul.mubr.bf16.gmra.mxu0 %v1819
      %v3671 = vpop.f32.mrf.mxu0
      %v3672 = vadd.f32 %v3599, %v3671
      %v3673 = vpop.f32.mrf.mxu0
      %v3674 = vadd.f32 %v3601, %v3673
      %v3675 = vpop.f32.mrf.mxu0
      %v3676 = vadd.f32 %v3603, %v3675
      %v3677 = vpop.f32.mrf.mxu0
      %v3678 = vadd.f32 %v3605, %v3677
      %3679 = vmatprep.mubr.bf16.mxu0 0
      %3680 = vmatmul.mubr.bf16.gmra.mxu0 %v1822
      %v3681 = vpop.f32.mrf.mxu0
      %v3682 = vadd.f32 %v3609, %v3681
      %v3683 = vpop.f32.mrf.mxu0
      %v3684 = vadd.f32 %v3611, %v3683
      %v3685 = vpop.f32.mrf.mxu0
      %v3686 = vadd.f32 %v3613, %v3685
      %v3687 = vpop.f32.mrf.mxu0
      %v3688 = vadd.f32 %v3615, %v3687
      %3689 = vmatprep.mubr.bf16.mxu0 0
      %3690 = vmatmul.mubr.bf16.gmra.mxu0 %v1825
      %v3691 = vpop.f32.mrf.mxu0
      %v3692 = vadd.f32 %v3619, %v3691
      %v3693 = vpop.f32.mrf.mxu0
      %v3694 = vadd.f32 %v3621, %v3693
      %v3695 = vpop.f32.mrf.mxu0
      %v3696 = vadd.f32 %v3623, %v3695
      %v3697 = vpop.f32.mrf.mxu0
      %v3698 = vadd.f32 %v3625, %v3697
      %3699 = vdwg.mxu0
      %3700 = vmatprep.subr.bf16.mxu0 %v3065
      %3701 = vmatpush1.bf16.msra.mxu0 %v3064
      %3702 = vmatprep.subr.bf16.mxu0 %v3053
      %3703 = vmatpush1.bf16.msra.mxu0 %v3052
      %3704 = vmatprep.subr.bf16.mxu0 %v3041
      %3705 = vmatpush1.bf16.msra.mxu0 %v3040
      %3706 = vmatprep.subr.bf16.mxu0 %v3029
      %3707 = vmatpush1.bf16.msra.mxu0 %v3028
      %3708 = vmatprep.subr.bf16.mxu0 %v3017
      %3709 = vmatpush1.bf16.msra.mxu0 %v3016
      %3710 = vmatprep.subr.bf16.mxu0 %v3005
      %3711 = vmatpush1.bf16.msra.mxu0 %v3004
      %3712 = vmatprep.subr.bf16.mxu0 %v2993
      %3713 = vmatpush1.bf16.msra.mxu0 %v2992
      %3714 = vmatprep.subr.bf16.mxu0 %v2981
      %3715 = vmatpush1.bf16.msra.mxu0 %v2980
      %3716 = vmatprep.subr.bf16.mxu0 %v3161
      %3717 = vmatpush2.bf16.msra.mxu0 %v3160
      %3718 = vmatprep.subr.bf16.mxu0 %v3149
      %3719 = vmatpush2.bf16.msra.mxu0 %v3148
      %3720 = vmatprep.subr.bf16.mxu0 %v3137
      %3721 = vmatpush2.bf16.msra.mxu0 %v3136
      %3722 = vmatprep.subr.bf16.mxu0 %v3125
      %3723 = vmatpush2.bf16.msra.mxu0 %v3124
      %3724 = vmatprep.subr.bf16.mxu0 %v3113
      %3725 = vmatpush2.bf16.msra.mxu0 %v3112
      %3726 = vmatprep.subr.bf16.mxu0 %v3101
      %3727 = vmatpush2.bf16.msra.mxu0 %v3100
      %3728 = vmatprep.subr.bf16.mxu0 %v3089
      %3729 = vmatpush2.bf16.msra.mxu0 %v3088
      %3730 = vmatprep.subr.bf16.mxu0 %v3077
      %3731 = vmatpush2.bf16.msra.mxu0 %v3076
      %3732 = vmatprep.mubr.bf16.mxu0 %v1815
      %3733 = vmatmul.mubr.bf16.gmra.mxu0 %v1814
      %v3734 = vpop.f32.mrf.mxu0
      %v3735 = vadd.f32 0.0, %v3734
      %v3736 = vpop.f32.mrf.mxu0
      %v3737 = vadd.f32 0.0, %v3736
      %v3738 = vpop.f32.mrf.mxu0
      %v3739 = vadd.f32 0.0, %v3738
      %v3740 = vpop.f32.mrf.mxu0
      %v3741 = vadd.f32 0.0, %v3740
      %3742 = vmatprep.mubr.bf16.mxu0 %v1818
      %3743 = vmatmul.mubr.bf16.gmra.mxu0 %v1817
      %v3744 = vpop.f32.mrf.mxu0
      %v3745 = vadd.f32 0.0, %v3744
      %v3746 = vpop.f32.mrf.mxu0
      %v3747 = vadd.f32 0.0, %v3746
      %v3748 = vpop.f32.mrf.mxu0
      %v3749 = vadd.f32 0.0, %v3748
      %v3750 = vpop.f32.mrf.mxu0
      %v3751 = vadd.f32 0.0, %v3750
      %3752 = vmatprep.mubr.bf16.mxu0 %v1821
      %3753 = vmatmul.mubr.bf16.gmra.mxu0 %v1820
      %v3754 = vpop.f32.mrf.mxu0
      %v3755 = vadd.f32 0.0, %v3754
      %v3756 = vpop.f32.mrf.mxu0
      %v3757 = vadd.f32 0.0, %v3756
      %v3758 = vpop.f32.mrf.mxu0
      %v3759 = vadd.f32 0.0, %v3758
      %v3760 = vpop.f32.mrf.mxu0
      %v3761 = vadd.f32 0.0, %v3760
      %3762 = vmatprep.mubr.bf16.mxu0 %v1824
      %3763 = vmatmul.mubr.bf16.gmra.mxu0 %v1823
      %v3764 = vpop.f32.mrf.mxu0
      %v3765 = vadd.f32 0.0, %v3764
      %v3766 = vpop.f32.mrf.mxu0
      %v3767 = vadd.f32 0.0, %v3766
      %v3768 = vpop.f32.mrf.mxu0
      %v3769 = vadd.f32 0.0, %v3768
      %v3770 = vpop.f32.mrf.mxu0
      %v3771 = vadd.f32 0.0, %v3770
      %3772 = vdwg.mxu0
      %3773 = vmatprep.subr.bf16.mxu0 %v3257
      %3774 = vmatpush1.bf16.msra.mxu0 %v3256
      %3775 = vmatprep.subr.bf16.mxu0 %v3245
      %3776 = vmatpush1.bf16.msra.mxu0 %v3244
      %3777 = vmatprep.subr.bf16.mxu0 %v3233
      %3778 = vmatpush1.bf16.msra.mxu0 %v3232
      %3779 = vmatprep.subr.bf16.mxu0 %v3221
      %3780 = vmatpush1.bf16.msra.mxu0 %v3220
      %3781 = vmatprep.subr.bf16.mxu0 %v3209
      %3782 = vmatpush1.bf16.msra.mxu0 %v3208
      %3783 = vmatprep.subr.bf16.mxu0 %v3197
      %3784 = vmatpush1.bf16.msra.mxu0 %v3196
      %3785 = vmatprep.subr.bf16.mxu0 %v3185
      %3786 = vmatpush1.bf16.msra.mxu0 %v3184
      %3787 = vmatprep.subr.bf16.mxu0 %v3173
      %3788 = vmatpush1.bf16.msra.mxu0 %v3172
      %3789 = vmatprep.subr.bf16.mxu0 0
      %3790 = vmatpush2.bf16.msra.mxu0 0
      %3791 = vmatprep.subr.bf16.mxu0 0
      %3792 = vmatpush2.bf16.msra.mxu0 0
      %3793 = vmatprep.subr.bf16.mxu0 0
      %3794 = vmatpush2.bf16.msra.mxu0 0
      %3795 = vmatprep.subr.bf16.mxu0 0
      %3796 = vmatpush2.bf16.msra.mxu0 0
      %3797 = vmatprep.subr.bf16.mxu0 0
      %3798 = vmatpush2.bf16.msra.mxu0 0
      %3799 = vmatprep.subr.bf16.mxu0 0
      %3800 = vmatpush2.bf16.msra.mxu0 0
      %3801 = vmatprep.subr.bf16.mxu0 0
      %3802 = vmatpush2.bf16.msra.mxu0 0
      %3803 = vmatprep.subr.bf16.mxu0 0
      %3804 = vmatpush2.bf16.msra.mxu0 0
      %3805 = vmatprep.mubr.bf16.mxu0 0
      %3806 = vmatmul.mubr.bf16.gmra.mxu0 %v1816
      %v3807 = vpop.f32.mrf.mxu0
      %v3808 = vadd.f32 %v3735, %v3807
      %v3809 = vpop.f32.mrf.mxu0
      %v3810 = vadd.f32 %v3737, %v3809
      %v3811 = vpop.f32.mrf.mxu0
      %v3812 = vadd.f32 %v3739, %v3811
      %v3813 = vpop.f32.mrf.mxu0
      %v3814 = vadd.f32 %v3741, %v3813
      %3815 = vmatprep.mubr.bf16.mxu0 0
      %3816 = vmatmul.mubr.bf16.gmra.mxu0 %v1819
      %v3817 = vpop.f32.mrf.mxu0
      %v3818 = vadd.f32 %v3745, %v3817
      %v3819 = vpop.f32.mrf.mxu0
      %v3820 = vadd.f32 %v3747, %v3819
      %v3821 = vpop.f32.mrf.mxu0
      %v3822 = vadd.f32 %v3749, %v3821
      %v3823 = vpop.f32.mrf.mxu0
      %v3824 = vadd.f32 %v3751, %v3823
      %3825 = vmatprep.mubr.bf16.mxu0 0
      %3826 = vmatmul.mubr.bf16.gmra.mxu0 %v1822
      %v3827 = vpop.f32.mrf.mxu0
      %v3828 = vadd.f32 %v3755, %v3827
      %v3829 = vpop.f32.mrf.mxu0
      %v3830 = vadd.f32 %v3757, %v3829
      %v3831 = vpop.f32.mrf.mxu0
      %v3832 = vadd.f32 %v3759, %v3831
      %v3833 = vpop.f32.mrf.mxu0
      %v3834 = vadd.f32 %v3761, %v3833
      %3835 = vmatprep.mubr.bf16.mxu0 0
      %3836 = vmatmul.mubr.bf16.gmra.mxu0 %v1825
      %v3837 = vpop.f32.mrf.mxu0
      %v3838 = vadd.f32 %v3765, %v3837
      %v3839 = vpop.f32.mrf.mxu0
      %v3840 = vadd.f32 %v3767, %v3839
      %v3841 = vpop.f32.mrf.mxu0
      %v3842 = vadd.f32 %v3769, %v3841
      %v3843 = vpop.f32.mrf.mxu0
      %v3844 = vadd.f32 %v3771, %v3843
      %3845 = vdwg.mxu0
      %3846 = vmatprep.subr.bf16.mxu0 %v3067
      %3847 = vmatpush1.bf16.msra.mxu0 %v3066
      %3848 = vmatprep.subr.bf16.mxu0 %v3055
      %3849 = vmatpush1.bf16.msra.mxu0 %v3054
      %3850 = vmatprep.subr.bf16.mxu0 %v3043
      %3851 = vmatpush1.bf16.msra.mxu0 %v3042
      %3852 = vmatprep.subr.bf16.mxu0 %v3031
      %3853 = vmatpush1.bf16.msra.mxu0 %v3030
      %3854 = vmatprep.subr.bf16.mxu0 %v3019
      %3855 = vmatpush1.bf16.msra.mxu0 %v3018
      %3856 = vmatprep.subr.bf16.mxu0 %v3007
      %3857 = vmatpush1.bf16.msra.mxu0 %v3006
      %3858 = vmatprep.subr.bf16.mxu0 %v2995
      %3859 = vmatpush1.bf16.msra.mxu0 %v2994
      %3860 = vmatprep.subr.bf16.mxu0 %v2983
      %3861 = vmatpush1.bf16.msra.mxu0 %v2982
      %3862 = vmatprep.subr.bf16.mxu0 %v3163
      %3863 = vmatpush2.bf16.msra.mxu0 %v3162
      %3864 = vmatprep.subr.bf16.mxu0 %v3151
      %3865 = vmatpush2.bf16.msra.mxu0 %v3150
      %3866 = vmatprep.subr.bf16.mxu0 %v3139
      %3867 = vmatpush2.bf16.msra.mxu0 %v3138
      %3868 = vmatprep.subr.bf16.mxu0 %v3127
      %3869 = vmatpush2.bf16.msra.mxu0 %v3126
      %3870 = vmatprep.subr.bf16.mxu0 %v3115
      %3871 = vmatpush2.bf16.msra.mxu0 %v3114
      %3872 = vmatprep.subr.bf16.mxu0 %v3103
      %3873 = vmatpush2.bf16.msra.mxu0 %v3102
      %3874 = vmatprep.subr.bf16.mxu0 %v3091
      %3875 = vmatpush2.bf16.msra.mxu0 %v3090
      %3876 = vmatprep.subr.bf16.mxu0 %v3079
      %3877 = vmatpush2.bf16.msra.mxu0 %v3078
      %3878 = vmatprep.mubr.bf16.mxu0 %v1815
      %3879 = vmatmul.mubr.bf16.gmra.mxu0 %v1814
      %v3880 = vpop.f32.mrf.mxu0
      %v3881 = vadd.f32 0.0, %v3880
      %v3882 = vpop.f32.mrf.mxu0
      %v3883 = vadd.f32 0.0, %v3882
      %v3884 = vpop.f32.mrf.mxu0
      %v3885 = vadd.f32 0.0, %v3884
      %v3886 = vpop.f32.mrf.mxu0
      %v3887 = vadd.f32 0.0, %v3886
      %3888 = vmatprep.mubr.bf16.mxu0 %v1818
      %3889 = vmatmul.mubr.bf16.gmra.mxu0 %v1817
      %v3890 = vpop.f32.mrf.mxu0
      %v3891 = vadd.f32 0.0, %v3890
      %v3892 = vpop.f32.mrf.mxu0
      %v3893 = vadd.f32 0.0, %v3892
      %v3894 = vpop.f32.mrf.mxu0
      %v3895 = vadd.f32 0.0, %v3894
      %v3896 = vpop.f32.mrf.mxu0
      %v3897 = vadd.f32 0.0, %v3896
      %3898 = vmatprep.mubr.bf16.mxu0 %v1821
      %3899 = vmatmul.mubr.bf16.gmra.mxu0 %v1820
      %v3900 = vpop.f32.mrf.mxu0
      %v3901 = vadd.f32 0.0, %v3900
      %v3902 = vpop.f32.mrf.mxu0
      %v3903 = vadd.f32 0.0, %v3902
      %v3904 = vpop.f32.mrf.mxu0
      %v3905 = vadd.f32 0.0, %v3904
      %v3906 = vpop.f32.mrf.mxu0
      %v3907 = vadd.f32 0.0, %v3906
      %3908 = vmatprep.mubr.bf16.mxu0 %v1824
      %3909 = vmatmul.mubr.bf16.gmra.mxu0 %v1823
      %v3910 = vpop.f32.mrf.mxu0
      %v3911 = vadd.f32 0.0, %v3910
      %v3912 = vpop.f32.mrf.mxu0
      %v3913 = vadd.f32 0.0, %v3912
      %v3914 = vpop.f32.mrf.mxu0
      %v3915 = vadd.f32 0.0, %v3914
      %v3916 = vpop.f32.mrf.mxu0
      %v3917 = vadd.f32 0.0, %v3916
      %3918 = vdwg.mxu0
      %3919 = vmatprep.subr.bf16.mxu0 %v3259
      %3920 = vmatpush1.bf16.msra.mxu0 %v3258
      %3921 = vmatprep.subr.bf16.mxu0 %v3247
      %3922 = vmatpush1.bf16.msra.mxu0 %v3246
      %3923 = vmatprep.subr.bf16.mxu0 %v3235
      %3924 = vmatpush1.bf16.msra.mxu0 %v3234
      %3925 = vmatprep.subr.bf16.mxu0 %v3223
      %3926 = vmatpush1.bf16.msra.mxu0 %v3222
      %3927 = vmatprep.subr.bf16.mxu0 %v3211
      %3928 = vmatpush1.bf16.msra.mxu0 %v3210
      %3929 = vmatprep.subr.bf16.mxu0 %v3199
      %3930 = vmatpush1.bf16.msra.mxu0 %v3198
      %3931 = vmatprep.subr.bf16.mxu0 %v3187
      %3932 = vmatpush1.bf16.msra.mxu0 %v3186
      %3933 = vmatprep.subr.bf16.mxu0 %v3175
      %3934 = vmatpush1.bf16.msra.mxu0 %v3174
      %3935 = vmatprep.subr.bf16.mxu0 0
      %3936 = vmatpush2.bf16.msra.mxu0 0
      %3937 = vmatprep.subr.bf16.mxu0 0
      %3938 = vmatpush2.bf16.msra.mxu0 0
      %3939 = vmatprep.subr.bf16.mxu0 0
      %3940 = vmatpush2.bf16.msra.mxu0 0
      %3941 = vmatprep.subr.bf16.mxu0 0
      %3942 = vmatpush2.bf16.msra.mxu0 0
      %3943 = vmatprep.subr.bf16.mxu0 0
      %3944 = vmatpush2.bf16.msra.mxu0 0
      %3945 = vmatprep.subr.bf16.mxu0 0
      %3946 = vmatpush2.bf16.msra.mxu0 0
      %3947 = vmatprep.subr.bf16.mxu0 0
      %3948 = vmatpush2.bf16.msra.mxu0 0
      %3949 = vmatprep.subr.bf16.mxu0 0
      %3950 = vmatpush2.bf16.msra.mxu0 0
      %3951 = vmatprep.mubr.bf16.mxu0 0
      %3952 = vmatmul.mubr.bf16.gmra.mxu0 %v1816
      %v3953 = vpop.f32.mrf.mxu0
      %v3954 = vadd.f32 %v3881, %v3953
      %v3955 = vpop.f32.mrf.mxu0
      %v3956 = vadd.f32 %v3883, %v3955
      %v3957 = vpop.f32.mrf.mxu0
      %v3958 = vadd.f32 %v3885, %v3957
      %v3959 = vpop.f32.mrf.mxu0
      %v3960 = vadd.f32 %v3887, %v3959
      %3961 = vmatprep.mubr.bf16.mxu0 0
      %3962 = vmatmul.mubr.bf16.gmra.mxu0 %v1819
      %v3963 = vpop.f32.mrf.mxu0
      %v3964 = vadd.f32 %v3891, %v3963
      %v3965 = vpop.f32.mrf.mxu0
      %v3966 = vadd.f32 %v3893, %v3965
      %v3967 = vpop.f32.mrf.mxu0
      %v3968 = vadd.f32 %v3895, %v3967
      %v3969 = vpop.f32.mrf.mxu0
      %v3970 = vadd.f32 %v3897, %v3969
      %3971 = vmatprep.mubr.bf16.mxu0 0
      %3972 = vmatmul.mubr.bf16.gmra.mxu0 %v1822
      %v3973 = vpop.f32.mrf.mxu0
      %v3974 = vadd.f32 %v3901, %v3973
      %v3975 = vpop.f32.mrf.mxu0
      %v3976 = vadd.f32 %v3903, %v3975
      %v3977 = vpop.f32.mrf.mxu0
      %v3978 = vadd.f32 %v3905, %v3977
      %v3979 = vpop.f32.mrf.mxu0
      %v3980 = vadd.f32 %v3907, %v3979
      %3981 = vmatprep.mubr.bf16.mxu0 0
      %3982 = vmatmul.mubr.bf16.gmra.mxu0 %v1825
      %v3983 = vpop.f32.mrf.mxu0
      %v3984 = vadd.f32 %v3911, %v3983
      %v3985 = vpop.f32.mrf.mxu0
      %v3986 = vadd.f32 %v3913, %v3985
      %v3987 = vpop.f32.mrf.mxu0
      %v3988 = vadd.f32 %v3915, %v3987
      %v3989 = vpop.f32.mrf.mxu0
      %v3990 = vadd.f32 %v3917, %v3989
      %3991 = vdwg.mxu0
      %3992 = vmatprep.subr.bf16.mxu0 %v3069
      %3993 = vmatpush1.bf16.msra.mxu0 %v3068
      %3994 = vmatprep.subr.bf16.mxu0 %v3057
      %3995 = vmatpush1.bf16.msra.mxu0 %v3056
      %3996 = vmatprep.subr.bf16.mxu0 %v3045
      %3997 = vmatpush1.bf16.msra.mxu0 %v3044
      %3998 = vmatprep.subr.bf16.mxu0 %v3033
      %3999 = vmatpush1.bf16.msra.mxu0 %v3032
      %4000 = vmatprep.subr.bf16.mxu0 %v3021
      %4001 = vmatpush1.bf16.msra.mxu0 %v3020
      %4002 = vmatprep.subr.bf16.mxu0 %v3009
      %4003 = vmatpush1.bf16.msra.mxu0 %v3008
      %4004 = vmatprep.subr.bf16.mxu0 %v2997
      %4005 = vmatpush1.bf16.msra.mxu0 %v2996
      %4006 = vmatprep.subr.bf16.mxu0 %v2985
      %4007 = vmatpush1.bf16.msra.mxu0 %v2984
      %4008 = vmatprep.subr.bf16.mxu0 %v3165
      %4009 = vmatpush2.bf16.msra.mxu0 %v3164
      %4010 = vmatprep.subr.bf16.mxu0 %v3153
      %4011 = vmatpush2.bf16.msra.mxu0 %v3152
      %4012 = vmatprep.subr.bf16.mxu0 %v3141
      %4013 = vmatpush2.bf16.msra.mxu0 %v3140
      %4014 = vmatprep.subr.bf16.mxu0 %v3129
      %4015 = vmatpush2.bf16.msra.mxu0 %v3128
      %4016 = vmatprep.subr.bf16.mxu0 %v3117
      %4017 = vmatpush2.bf16.msra.mxu0 %v3116
      %4018 = vmatprep.subr.bf16.mxu0 %v3105
      %4019 = vmatpush2.bf16.msra.mxu0 %v3104
      %4020 = vmatprep.subr.bf16.mxu0 %v3093
      %4021 = vmatpush2.bf16.msra.mxu0 %v3092
      %4022 = vmatprep.subr.bf16.mxu0 %v3081
      %4023 = vmatpush2.bf16.msra.mxu0 %v3080
      %4024 = vmatprep.mubr.bf16.mxu0 %v1815
      %4025 = vmatmul.mubr.bf16.gmra.mxu0 %v1814
      %v4026 = vpop.f32.mrf.mxu0
      %v4027 = vadd.f32 0.0, %v4026
      %v4028 = vpop.f32.mrf.mxu0
      %v4029 = vadd.f32 0.0, %v4028
      %v4030 = vpop.f32.mrf.mxu0
      %v4031 = vadd.f32 0.0, %v4030
      %v4032 = vpop.f32.mrf.mxu0
      %v4033 = vadd.f32 0.0, %v4032
      %4034 = vmatprep.mubr.bf16.mxu0 %v1818
      %4035 = vmatmul.mubr.bf16.gmra.mxu0 %v1817
      %v4036 = vpop.f32.mrf.mxu0
      %v4037 = vadd.f32 0.0, %v4036
      %v4038 = vpop.f32.mrf.mxu0
      %v4039 = vadd.f32 0.0, %v4038
      %v4040 = vpop.f32.mrf.mxu0
      %v4041 = vadd.f32 0.0, %v4040
      %v4042 = vpop.f32.mrf.mxu0
      %v4043 = vadd.f32 0.0, %v4042
      %4044 = vmatprep.mubr.bf16.mxu0 %v1821
      %4045 = vmatmul.mubr.bf16.gmra.mxu0 %v1820
      %v4046 = vpop.f32.mrf.mxu0
      %v4047 = vadd.f32 0.0, %v4046
      %v4048 = vpop.f32.mrf.mxu0
      %v4049 = vadd.f32 0.0, %v4048
      %v4050 = vpop.f32.mrf.mxu0
      %v4051 = vadd.f32 0.0, %v4050
      %v4052 = vpop.f32.mrf.mxu0
      %v4053 = vadd.f32 0.0, %v4052
      %4054 = vmatprep.mubr.bf16.mxu0 %v1824
      %4055 = vmatmul.mubr.bf16.gmra.mxu0 %v1823
      %v4056 = vpop.f32.mrf.mxu0
      %v4057 = vadd.f32 0.0, %v4056
      %v4058 = vpop.f32.mrf.mxu0
      %v4059 = vadd.f32 0.0, %v4058
      %v4060 = vpop.f32.mrf.mxu0
      %v4061 = vadd.f32 0.0, %v4060
      %v4062 = vpop.f32.mrf.mxu0
      %v4063 = vadd.f32 0.0, %v4062
      %4064 = vdwg.mxu0
      %4065 = vmatprep.subr.bf16.mxu0 %v3261
      %4066 = vmatpush1.bf16.msra.mxu0 %v3260
      %4067 = vmatprep.subr.bf16.mxu0 %v3249
      %4068 = vmatpush1.bf16.msra.mxu0 %v3248
      %4069 = vmatprep.subr.bf16.mxu0 %v3237
      %4070 = vmatpush1.bf16.msra.mxu0 %v3236
      %4071 = vmatprep.subr.bf16.mxu0 %v3225
      %4072 = vmatpush1.bf16.msra.mxu0 %v3224
      %4073 = vmatprep.subr.bf16.mxu0 %v3213
      %4074 = vmatpush1.bf16.msra.mxu0 %v3212
      %4075 = vmatprep.subr.bf16.mxu0 %v3201
      %4076 = vmatpush1.bf16.msra.mxu0 %v3200
      %4077 = vmatprep.subr.bf16.mxu0 %v3189
      %4078 = vmatpush1.bf16.msra.mxu0 %v3188
      %4079 = vmatprep.subr.bf16.mxu0 %v3177
      %4080 = vmatpush1.bf16.msra.mxu0 %v3176
      %4081 = vmatprep.subr.bf16.mxu0 0
      %4082 = vmatpush2.bf16.msra.mxu0 0
      %4083 = vmatprep.subr.bf16.mxu0 0
      %4084 = vmatpush2.bf16.msra.mxu0 0
      %4085 = vmatprep.subr.bf16.mxu0 0
      %4086 = vmatpush2.bf16.msra.mxu0 0
      %4087 = vmatprep.subr.bf16.mxu0 0
      %4088 = vmatpush2.bf16.msra.mxu0 0
      %4089 = vmatprep.subr.bf16.mxu0 0
      %4090 = vmatpush2.bf16.msra.mxu0 0
      %4091 = vmatprep.subr.bf16.mxu0 0
      %4092 = vmatpush2.bf16.msra.mxu0 0
      %4093 = vmatprep.subr.bf16.mxu0 0
      %4094 = vmatpush2.bf16.msra.mxu0 0
      %4095 = vmatprep.subr.bf16.mxu0 0
      %4096 = vmatpush2.bf16.msra.mxu0 0
      %4097 = vmatprep.mubr.bf16.mxu0 0
      %4098 = vmatmul.mubr.bf16.gmra.mxu0 %v1816
      %v4099 = vpop.f32.mrf.mxu0
      %v4100 = vadd.f32 %v4027, %v4099
      %v4101 = vpop.f32.mrf.mxu0
      %v4102 = vadd.f32 %v4029, %v4101
      %v4103 = vpop.f32.mrf.mxu0
      %v4104 = vadd.f32 %v4031, %v4103
      %v4105 = vpop.f32.mrf.mxu0
      %v4106 = vadd.f32 %v4033, %v4105
      %4107 = vmatprep.mubr.bf16.mxu0 0
      %4108 = vmatmul.mubr.bf16.gmra.mxu0 %v1819
      %v4109 = vpop.f32.mrf.mxu0
      %v4110 = vadd.f32 %v4037, %v4109
      %v4111 = vpop.f32.mrf.mxu0
      %v4112 = vadd.f32 %v4039, %v4111
      %v4113 = vpop.f32.mrf.mxu0
      %v4114 = vadd.f32 %v4041, %v4113
      %v4115 = vpop.f32.mrf.mxu0
      %v4116 = vadd.f32 %v4043, %v4115
      %4117 = vmatprep.mubr.bf16.mxu0 0
      %4118 = vmatmul.mubr.bf16.gmra.mxu0 %v1822
      %v4119 = vpop.f32.mrf.mxu0
      %v4120 = vadd.f32 %v4047, %v4119
      %v4121 = vpop.f32.mrf.mxu0
      %v4122 = vadd.f32 %v4049, %v4121
      %v4123 = vpop.f32.mrf.mxu0
      %v4124 = vadd.f32 %v4051, %v4123
      %v4125 = vpop.f32.mrf.mxu0
      %v4126 = vadd.f32 %v4053, %v4125
      %4127 = vmatprep.mubr.bf16.mxu0 0
      %4128 = vmatmul.mubr.bf16.gmra.mxu0 %v1825
      %v4129 = vpop.f32.mrf.mxu0
      %v4130 = vadd.f32 %v4057, %v4129
      %v4131 = vpop.f32.mrf.mxu0
      %v4132 = vadd.f32 %v4059, %v4131
      %v4133 = vpop.f32.mrf.mxu0
      %v4134 = vadd.f32 %v4061, %v4133
      %v4135 = vpop.f32.mrf.mxu0
      %v4136 = vadd.f32 %v4063, %v4135
      %4137 = vdwg.mxu0
      %4138 = vmatprep.subr.bf16.mxu0 %v3071
      %4139 = vmatpush1.bf16.msra.mxu0 %v3070
      %4140 = vmatprep.subr.bf16.mxu0 %v3059
      %4141 = vmatpush1.bf16.msra.mxu0 %v3058
      %4142 = vmatprep.subr.bf16.mxu0 %v3047
      %4143 = vmatpush1.bf16.msra.mxu0 %v3046
      %4144 = vmatprep.subr.bf16.mxu0 %v3035
      %4145 = vmatpush1.bf16.msra.mxu0 %v3034
      %4146 = vmatprep.subr.bf16.mxu0 %v3023
      %4147 = vmatpush1.bf16.msra.mxu0 %v3022
      %4148 = vmatprep.subr.bf16.mxu0 %v3011
      %4149 = vmatpush1.bf16.msra.mxu0 %v3010
      %4150 = vmatprep.subr.bf16.mxu0 %v2999
      %4151 = vmatpush1.bf16.msra.mxu0 %v2998
      %4152 = vmatprep.subr.bf16.mxu0 %v2987
      %4153 = vmatpush1.bf16.msra.mxu0 %v2986
      %4154 = vmatprep.subr.bf16.mxu0 %v3167
      %4155 = vmatpush2.bf16.msra.mxu0 %v3166
      %4156 = vmatprep.subr.bf16.mxu0 %v3155
      %4157 = vmatpush2.bf16.msra.mxu0 %v3154
      %4158 = vmatprep.subr.bf16.mxu0 %v3143
      %4159 = vmatpush2.bf16.msra.mxu0 %v3142
      %4160 = vmatprep.subr.bf16.mxu0 %v3131
      %4161 = vmatpush2.bf16.msra.mxu0 %v3130
      %4162 = vmatprep.subr.bf16.mxu0 %v3119
      %4163 = vmatpush2.bf16.msra.mxu0 %v3118
      %4164 = vmatprep.subr.bf16.mxu0 %v3107
      %4165 = vmatpush2.bf16.msra.mxu0 %v3106
      %4166 = vmatprep.subr.bf16.mxu0 %v3095
      %4167 = vmatpush2.bf16.msra.mxu0 %v3094
      %4168 = vmatprep.subr.bf16.mxu0 %v3083
      %4169 = vmatpush2.bf16.msra.mxu0 %v3082
      %4170 = vmatprep.mubr.bf16.mxu0 %v1815
      %4171 = vmatmul.mubr.bf16.gmra.mxu0 %v1814
      %v4172 = vpop.f32.mrf.mxu0
      %v4173 = vadd.f32 0.0, %v4172
      %v4174 = vpop.f32.mrf.mxu0
      %v4175 = vadd.f32 0.0, %v4174
      %v4176 = vpop.f32.mrf.mxu0
      %v4177 = vadd.f32 0.0, %v4176
      %v4178 = vpop.f32.mrf.mxu0
      %v4179 = vadd.f32 0.0, %v4178
      %4180 = vmatprep.mubr.bf16.mxu0 %v1818
      %4181 = vmatmul.mubr.bf16.gmra.mxu0 %v1817
      %v4182 = vpop.f32.mrf.mxu0
      %v4183 = vadd.f32 0.0, %v4182
      %v4184 = vpop.f32.mrf.mxu0
      %v4185 = vadd.f32 0.0, %v4184
      %v4186 = vpop.f32.mrf.mxu0
      %v4187 = vadd.f32 0.0, %v4186
      %v4188 = vpop.f32.mrf.mxu0
      %v4189 = vadd.f32 0.0, %v4188
      %4190 = vmatprep.mubr.bf16.mxu0 %v1821
      %4191 = vmatmul.mubr.bf16.gmra.mxu0 %v1820
      %v4192 = vpop.f32.mrf.mxu0
      %v4193 = vadd.f32 0.0, %v4192
      %v4194 = vpop.f32.mrf.mxu0
      %v4195 = vadd.f32 0.0, %v4194
      %v4196 = vpop.f32.mrf.mxu0
      %v4197 = vadd.f32 0.0, %v4196
      %v4198 = vpop.f32.mrf.mxu0
      %v4199 = vadd.f32 0.0, %v4198
      %4200 = vmatprep.mubr.bf16.mxu0 %v1824
      %4201 = vmatmul.mubr.bf16.gmra.mxu0 %v1823
      %v4202 = vpop.f32.mrf.mxu0
      %v4203 = vadd.f32 0.0, %v4202
      %v4204 = vpop.f32.mrf.mxu0
      %v4205 = vadd.f32 0.0, %v4204
      %v4206 = vpop.f32.mrf.mxu0
      %v4207 = vadd.f32 0.0, %v4206
      %v4208 = vpop.f32.mrf.mxu0
      %v4209 = vadd.f32 0.0, %v4208
      %4210 = vdwg.mxu0
      %4211 = vmatprep.subr.bf16.mxu0 %v3263
      %4212 = vmatpush1.bf16.msra.mxu0 %v3262
      %4213 = vmatprep.subr.bf16.mxu0 %v3251
      %4214 = vmatpush1.bf16.msra.mxu0 %v3250
      %4215 = vmatprep.subr.bf16.mxu0 %v3239
      %4216 = vmatpush1.bf16.msra.mxu0 %v3238
      %4217 = vmatprep.subr.bf16.mxu0 %v3227
      %4218 = vmatpush1.bf16.msra.mxu0 %v3226
      %4219 = vmatprep.subr.bf16.mxu0 %v3215
      %4220 = vmatpush1.bf16.msra.mxu0 %v3214
      %4221 = vmatprep.subr.bf16.mxu0 %v3203
      %4222 = vmatpush1.bf16.msra.mxu0 %v3202
      %4223 = vmatprep.subr.bf16.mxu0 %v3191
      %4224 = vmatpush1.bf16.msra.mxu0 %v3190
      %4225 = vmatprep.subr.bf16.mxu0 %v3179
      %4226 = vmatpush1.bf16.msra.mxu0 %v3178
      %4227 = vmatprep.subr.bf16.mxu0 0
      %4228 = vmatpush2.bf16.msra.mxu0 0
      %4229 = vmatprep.subr.bf16.mxu0 0
      %4230 = vmatpush2.bf16.msra.mxu0 0
      %4231 = vmatprep.subr.bf16.mxu0 0
      %4232 = vmatpush2.bf16.msra.mxu0 0
      %4233 = vmatprep.subr.bf16.mxu0 0
      %4234 = vmatpush2.bf16.msra.mxu0 0
      %4235 = vmatprep.subr.bf16.mxu0 0
      %4236 = vmatpush2.bf16.msra.mxu0 0
      %4237 = vmatprep.subr.bf16.mxu0 0
      %4238 = vmatpush2.bf16.msra.mxu0 0
      %4239 = vmatprep.subr.bf16.mxu0 0
      %4240 = vmatpush2.bf16.msra.mxu0 0
      %4241 = vmatprep.subr.bf16.mxu0 0
      %4242 = vmatpush2.bf16.msra.mxu0 0
      %4243 = vmatprep.mubr.bf16.mxu0 0
      %4244 = vmatmul.mubr.bf16.gmra.mxu0 %v1816
      %v4245 = vpop.f32.mrf.mxu0
      %v4246 = vadd.f32 %v4173, %v4245
      %v4247 = vpop.f32.mrf.mxu0
      %v4248 = vadd.f32 %v4175, %v4247
      %v4249 = vpop.f32.mrf.mxu0
      %v4250 = vadd.f32 %v4177, %v4249
      %v4251 = vpop.f32.mrf.mxu0
      %v4252 = vadd.f32 %v4179, %v4251
      %4253 = vmatprep.mubr.bf16.mxu0 0
      %4254 = vmatmul.mubr.bf16.gmra.mxu0 %v1819
      %v4255 = vpop.f32.mrf.mxu0
      %v4256 = vadd.f32 %v4183, %v4255
      %v4257 = vpop.f32.mrf.mxu0
      %v4258 = vadd.f32 %v4185, %v4257
      %v4259 = vpop.f32.mrf.mxu0
      %v4260 = vadd.f32 %v4187, %v4259
      %v4261 = vpop.f32.mrf.mxu0
      %v4262 = vadd.f32 %v4189, %v4261
      %4263 = vmatprep.mubr.bf16.mxu0 0
      %4264 = vmatmul.mubr.bf16.gmra.mxu0 %v1822
      %v4265 = vpop.f32.mrf.mxu0
      %v4266 = vadd.f32 %v4193, %v4265
      %v4267 = vpop.f32.mrf.mxu0
      %v4268 = vadd.f32 %v4195, %v4267
      %v4269 = vpop.f32.mrf.mxu0
      %v4270 = vadd.f32 %v4197, %v4269
      %v4271 = vpop.f32.mrf.mxu0
      %v4272 = vadd.f32 %v4199, %v4271
      %4273 = vmatprep.mubr.bf16.mxu0 0
      %4274 = vmatmul.mubr.bf16.gmra.mxu0 %v1825
      %v4275 = vpop.f32.mrf.mxu0
      %v4276 = vadd.f32 %v4203, %v4275
      %v4277 = vpop.f32.mrf.mxu0
      %v4278 = vadd.f32 %v4205, %v4277
      %v4279 = vpop.f32.mrf.mxu0
      %v4280 = vadd.f32 %v4207, %v4279
      %v4281 = vpop.f32.mrf.mxu0
      %v4282 = vadd.f32 %v4209, %v4281
      %4283 = vdwg.mxu0
      %4284 = vmatprep.subr.bf16.mxu0 %v3073
      %4285 = vmatpush1.bf16.msra.mxu0 %v3072
      %4286 = vmatprep.subr.bf16.mxu0 %v3061
      %4287 = vmatpush1.bf16.msra.mxu0 %v3060
      %4288 = vmatprep.subr.bf16.mxu0 %v3049
      %4289 = vmatpush1.bf16.msra.mxu0 %v3048
      %4290 = vmatprep.subr.bf16.mxu0 %v3037
      %4291 = vmatpush1.bf16.msra.mxu0 %v3036
      %4292 = vmatprep.subr.bf16.mxu0 %v3025
      %4293 = vmatpush1.bf16.msra.mxu0 %v3024
      %4294 = vmatprep.subr.bf16.mxu0 %v3013
      %4295 = vmatpush1.bf16.msra.mxu0 %v3012
      %4296 = vmatprep.subr.bf16.mxu0 %v3001
      %4297 = vmatpush1.bf16.msra.mxu0 %v3000
      %4298 = vmatprep.subr.bf16.mxu0 %v2989
      %4299 = vmatpush1.bf16.msra.mxu0 %v2988
      %4300 = vmatprep.subr.bf16.mxu0 %v3169
      %4301 = vmatpush2.bf16.msra.mxu0 %v3168
      %4302 = vmatprep.subr.bf16.mxu0 %v3157
      %4303 = vmatpush2.bf16.msra.mxu0 %v3156
      %4304 = vmatprep.subr.bf16.mxu0 %v3145
      %4305 = vmatpush2.bf16.msra.mxu0 %v3144
      %4306 = vmatprep.subr.bf16.mxu0 %v3133
      %4307 = vmatpush2.bf16.msra.mxu0 %v3132
      %4308 = vmatprep.subr.bf16.mxu0 %v3121
      %4309 = vmatpush2.bf16.msra.mxu0 %v3120
      %4310 = vmatprep.subr.bf16.mxu0 %v3109
      %4311 = vmatpush2.bf16.msra.mxu0 %v3108
      %4312 = vmatprep.subr.bf16.mxu0 %v3097
      %4313 = vmatpush2.bf16.msra.mxu0 %v3096
      %4314 = vmatprep.subr.bf16.mxu0 %v3085
      %4315 = vmatpush2.bf16.msra.mxu0 %v3084
      %4316 = vmatprep.mubr.bf16.mxu0 %v1815
      %4317 = vmatmul.mubr.bf16.gmra.mxu0 %v1814
      %v4318 = vpop.f32.mrf.mxu0
      %v4319 = vadd.f32 0.0, %v4318
      %v4320 = vpop.f32.mrf.mxu0
      %v4321 = vadd.f32 0.0, %v4320
      %v4322 = vpop.f32.mrf.mxu0
      %v4323 = vadd.f32 0.0, %v4322
      %v4324 = vpop.f32.mrf.mxu0
      %v4325 = vadd.f32 0.0, %v4324
      %4326 = vmatprep.mubr.bf16.mxu0 %v1818
      %4327 = vmatmul.mubr.bf16.gmra.mxu0 %v1817
      %v4328 = vpop.f32.mrf.mxu0
      %v4329 = vadd.f32 0.0, %v4328
      %v4330 = vpop.f32.mrf.mxu0
      %v4331 = vadd.f32 0.0, %v4330
      %v4332 = vpop.f32.mrf.mxu0
      %v4333 = vadd.f32 0.0, %v4332
      %v4334 = vpop.f32.mrf.mxu0
      %v4335 = vadd.f32 0.0, %v4334
      %4336 = vmatprep.mubr.bf16.mxu0 %v1821
      %4337 = vmatmul.mubr.bf16.gmra.mxu0 %v1820
      %v4338 = vpop.f32.mrf.mxu0
      %v4339 = vadd.f32 0.0, %v4338
      %v4340 = vpop.f32.mrf.mxu0
      %v4341 = vadd.f32 0.0, %v4340
      %v4342 = vpop.f32.mrf.mxu0
      %v4343 = vadd.f32 0.0, %v4342
      %v4344 = vpop.f32.mrf.mxu0
      %v4345 = vadd.f32 0.0, %v4344
      %4346 = vmatprep.mubr.bf16.mxu0 %v1824
      %4347 = vmatmul.mubr.bf16.gmra.mxu0 %v1823
      %v4348 = vpop.f32.mrf.mxu0
      %v4349 = vadd.f32 0.0, %v4348
      %v4350 = vpop.f32.mrf.mxu0
      %v4351 = vadd.f32 0.0, %v4350
      %v4352 = vpop.f32.mrf.mxu0
      %v4353 = vadd.f32 0.0, %v4352
      %v4354 = vpop.f32.mrf.mxu0
      %v4355 = vadd.f32 0.0, %v4354
      %4356 = vdwg.mxu0
      %4357 = vmatprep.subr.bf16.mxu0 %v3265
      %4358 = vmatpush1.bf16.msra.mxu0 %v3264
      %4359 = vmatprep.subr.bf16.mxu0 %v3253
      %4360 = vmatpush1.bf16.msra.mxu0 %v3252
      %4361 = vmatprep.subr.bf16.mxu0 %v3241
      %4362 = vmatpush1.bf16.msra.mxu0 %v3240
      %4363 = vmatprep.subr.bf16.mxu0 %v3229
      %4364 = vmatpush1.bf16.msra.mxu0 %v3228
      %4365 = vmatprep.subr.bf16.mxu0 %v3217
      %4366 = vmatpush1.bf16.msra.mxu0 %v3216
      %4367 = vmatprep.subr.bf16.mxu0 %v3205
      %4368 = vmatpush1.bf16.msra.mxu0 %v3204
      %4369 = vmatprep.subr.bf16.mxu0 %v3193
      %4370 = vmatpush1.bf16.msra.mxu0 %v3192
      %4371 = vmatprep.subr.bf16.mxu0 %v3181
      %4372 = vmatpush1.bf16.msra.mxu0 %v3180
      %4373 = vmatprep.subr.bf16.mxu0 0
      %4374 = vmatpush2.bf16.msra.mxu0 0
      %4375 = vmatprep.subr.bf16.mxu0 0
      %4376 = vmatpush2.bf16.msra.mxu0 0
      %4377 = vmatprep.subr.bf16.mxu0 0
      %4378 = vmatpush2.bf16.msra.mxu0 0
      %4379 = vmatprep.subr.bf16.mxu0 0
      %4380 = vmatpush2.bf16.msra.mxu0 0
      %4381 = vmatprep.subr.bf16.mxu0 0
      %4382 = vmatpush2.bf16.msra.mxu0 0
      %4383 = vmatprep.subr.bf16.mxu0 0
      %4384 = vmatpush2.bf16.msra.mxu0 0
      %4385 = vmatprep.subr.bf16.mxu0 0
      %4386 = vmatpush2.bf16.msra.mxu0 0
      %4387 = vmatprep.subr.bf16.mxu0 0
      %4388 = vmatpush2.bf16.msra.mxu0 0
      %4389 = vmatprep.mubr.bf16.mxu0 0
      %4390 = vmatmul.mubr.bf16.gmra.mxu0 %v1816
      %v4391 = vpop.f32.mrf.mxu0
      %v4392 = vadd.f32 %v4319, %v4391
      %v4393 = vpop.f32.mrf.mxu0
      %v4394 = vadd.f32 %v4321, %v4393
      %v4395 = vpop.f32.mrf.mxu0
      %v4396 = vadd.f32 %v4323, %v4395
      %v4397 = vpop.f32.mrf.mxu0
      %v4398 = vadd.f32 %v4325, %v4397
      %4399 = vmatprep.mubr.bf16.mxu0 0
      %4400 = vmatmul.mubr.bf16.gmra.mxu0 %v1819
      %v4401 = vpop.f32.mrf.mxu0
      %v4402 = vadd.f32 %v4329, %v4401
      %v4403 = vpop.f32.mrf.mxu0
      %v4404 = vadd.f32 %v4331, %v4403
      %v4405 = vpop.f32.mrf.mxu0
      %v4406 = vadd.f32 %v4333, %v4405
      %v4407 = vpop.f32.mrf.mxu0
      %v4408 = vadd.f32 %v4335, %v4407
      %4409 = vmatprep.mubr.bf16.mxu0 0
      %4410 = vmatmul.mubr.bf16.gmra.mxu0 %v1822
      %v4411 = vpop.f32.mrf.mxu0
      %v4412 = vadd.f32 %v4339, %v4411
      %v4413 = vpop.f32.mrf.mxu0
      %v4414 = vadd.f32 %v4341, %v4413
      %v4415 = vpop.f32.mrf.mxu0
      %v4416 = vadd.f32 %v4343, %v4415
      %v4417 = vpop.f32.mrf.mxu0
      %v4418 = vadd.f32 %v4345, %v4417
      %4419 = vmatprep.mubr.bf16.mxu0 0
      %4420 = vmatmul.mubr.bf16.gmra.mxu0 %v1825
      %v4421 = vpop.f32.mrf.mxu0
      %v4422 = vadd.f32 %v4349, %v4421
      %v4423 = vpop.f32.mrf.mxu0
      %v4424 = vadd.f32 %v4351, %v4423
      %v4425 = vpop.f32.mrf.mxu0
      %v4426 = vadd.f32 %v4353, %v4425
      %v4427 = vpop.f32.mrf.mxu0
      %v4428 = vadd.f32 %v4355, %v4427
      %4429 = vdwg.mxu0
      %v4430 = vadd.f32 %v3662, %v3664
      %v4431 = vadd.f32 %v4430, %v3808
      %v4432 = vadd.f32 %v4431, %v3810
      %v4433 = vadd.f32 %v4432, %v3954
      %v4434 = vadd.f32 %v4433, %v3956
      %v4435 = vadd.f32 %v4434, %v4100
      %v4436 = vadd.f32 %v4435, %v4102
      %v4437 = vadd.f32 %v4436, %v4246
      %v4438 = vadd.f32 %v4437, %v4248
      %v4439 = vadd.f32 %v4438, %v4392
      %v4440 = vadd.f32 %v4439, %v4394
      %4441 = vadd.xlane.f32.xlu0 %v4440
      %v4442 = vpop.xlane.xlu0 %4441
      %v4443 = vadd.f32 %v3666, %v3668
      %v4444 = vadd.f32 %v4443, %v3812
      %v4445 = vadd.f32 %v4444, %v3814
      %v4446 = vadd.f32 %v4445, %v3958
      %v4447 = vadd.f32 %v4446, %v3960
      %v4448 = vadd.f32 %v4447, %v4104
      %v4449 = vadd.f32 %v4448, %v4106
      %v4450 = vadd.f32 %v4449, %v4250
      %v4451 = vadd.f32 %v4450, %v4252
      %v4452 = vadd.f32 %v4451, %v4396
      %v4453 = vadd.f32 %v4452, %v4398
      %4454 = vadd.xlane.f32.xlu0 %v4453
      %v4455 = vpop.xlane.xlu0 %4454
      %v4456 = vadd.f32 %v3672, %v3674
      %v4457 = vadd.f32 %v4456, %v3818
      %v4458 = vadd.f32 %v4457, %v3820
      %v4459 = vadd.f32 %v4458, %v3964
      %v4460 = vadd.f32 %v4459, %v3966
      %v4461 = vadd.f32 %v4460, %v4110
      %v4462 = vadd.f32 %v4461, %v4112
      %v4463 = vadd.f32 %v4462, %v4256
      %v4464 = vadd.f32 %v4463, %v4258
      %v4465 = vadd.f32 %v4464, %v4402
      %v4466 = vadd.f32 %v4465, %v4404
      %4467 = vadd.xlane.f32.xlu0 %v4466
      %v4468 = vpop.xlane.xlu0 %4467
      %v4469 = vadd.f32 %v3676, %v3678
      %v4470 = vadd.f32 %v4469, %v3822
      %v4471 = vadd.f32 %v4470, %v3824
      %v4472 = vadd.f32 %v4471, %v3968
      %v4473 = vadd.f32 %v4472, %v3970
      %v4474 = vadd.f32 %v4473, %v4114
      %v4475 = vadd.f32 %v4474, %v4116
      %v4476 = vadd.f32 %v4475, %v4260
      %v4477 = vadd.f32 %v4476, %v4262
      %v4478 = vadd.f32 %v4477, %v4406
      %v4479 = vadd.f32 %v4478, %v4408
      %4480 = vadd.xlane.f32.xlu0 %v4479
      %v4481 = vpop.xlane.xlu0 %4480
      %v4482 = vadd.f32 %v3682, %v3684
      %v4483 = vadd.f32 %v4482, %v3828
      %v4484 = vadd.f32 %v4483, %v3830
      %v4485 = vadd.f32 %v4484, %v3974
      %v4486 = vadd.f32 %v4485, %v3976
      %v4487 = vadd.f32 %v4486, %v4120
      %v4488 = vadd.f32 %v4487, %v4122
      %v4489 = vadd.f32 %v4488, %v4266
      %v4490 = vadd.f32 %v4489, %v4268
      %v4491 = vadd.f32 %v4490, %v4412
      %v4492 = vadd.f32 %v4491, %v4414
      %4493 = vadd.xlane.f32.xlu0 %v4492
      %v4494 = vpop.xlane.xlu0 %4493
      %v4495 = vadd.f32 %v3686, %v3688
      %v4496 = vadd.f32 %v4495, %v3832
      %v4497 = vadd.f32 %v4496, %v3834
      %v4498 = vadd.f32 %v4497, %v3978
      %v4499 = vadd.f32 %v4498, %v3980
      %v4500 = vadd.f32 %v4499, %v4124
      %v4501 = vadd.f32 %v4500, %v4126
      %v4502 = vadd.f32 %v4501, %v4270
      %v4503 = vadd.f32 %v4502, %v4272
      %v4504 = vadd.f32 %v4503, %v4416
      %v4505 = vadd.f32 %v4504, %v4418
      %4506 = vadd.xlane.f32.xlu0 %v4505
      %v4507 = vpop.xlane.xlu0 %4506
      %v4508 = vadd.f32 %v3692, %v3694
      %v4509 = vadd.f32 %v4508, %v3838
      %v4510 = vadd.f32 %v4509, %v3840
      %v4511 = vadd.f32 %v4510, %v3984
      %v4512 = vadd.f32 %v4511, %v3986
      %v4513 = vadd.f32 %v4512, %v4130
      %v4514 = vadd.f32 %v4513, %v4132
      %v4515 = vadd.f32 %v4514, %v4276
      %v4516 = vadd.f32 %v4515, %v4278
      %v4517 = vadd.f32 %v4516, %v4422
      %v4518 = vadd.f32 %v4517, %v4424
      %4519 = vadd.xlane.f32.xlu0 %v4518
      %v4520 = vpop.xlane.xlu0 %4519
      %v4521 = vadd.f32 %v3696, %v3698
      %v4522 = vadd.f32 %v4521, %v3842
      %v4523 = vadd.f32 %v4522, %v3844
      %v4524 = vadd.f32 %v4523, %v3988
      %v4525 = vadd.f32 %v4524, %v3990
      %v4526 = vadd.f32 %v4525, %v4134
      %v4527 = vadd.f32 %v4526, %v4136
      %v4528 = vadd.f32 %v4527, %v4280
      %v4529 = vadd.f32 %v4528, %v4282
      %v4530 = vadd.f32 %v4529, %v4426
      %v4531 = vadd.f32 %v4530, %v4428
      %4532 = vadd.xlane.f32.xlu0 %v4531
      %v4533 = vpop.xlane.xlu0 %4532
      %v4534 = vmul.f32 %v4442, 0.0006510417
      %v4535 = vmul.f32 %v4455, 0.0006510417
      %v4536 = vmul.f32 %v4468, 0.0006510417
      %v4537 = vmul.f32 %v4481, 0.0006510417
      %v4538 = vmul.f32 %v4494, 0.0006510417
      %v4539 = vmul.f32 %v4507, 0.0006510417
      %v4540 = vmul.f32 %v4520, 0.0006510417
      %v4541 = vmul.f32 %v4533, 0.0006510417
      %v4542 = vsub.f32 %v3662, %v4534
      %v4543 = vsub.f32 %v3664, %v4534
      %v4544 = vsub.f32 %v3808, %v4534
      %v4545 = vsub.f32 %v3810, %v4534
      %v4546 = vsub.f32 %v3954, %v4534
      %v4547 = vsub.f32 %v3956, %v4534
      %v4548 = vsub.f32 %v4100, %v4534
      %v4549 = vsub.f32 %v4102, %v4534
      %v4550 = vsub.f32 %v4246, %v4534
      %v4551 = vsub.f32 %v4248, %v4534
      %v4552 = vsub.f32 %v4392, %v4534
      %v4553 = vsub.f32 %v4394, %v4534
      %v4554 = vsub.f32 %v3666, %v4535
      %v4555 = vsub.f32 %v3668, %v4535
      %v4556 = vsub.f32 %v3812, %v4535
      %v4557 = vsub.f32 %v3814, %v4535
      %v4558 = vsub.f32 %v3958, %v4535
      %v4559 = vsub.f32 %v3960, %v4535
      %v4560 = vsub.f32 %v4104, %v4535
      %v4561 = vsub.f32 %v4106, %v4535
      %v4562 = vsub.f32 %v4250, %v4535
      %v4563 = vsub.f32 %v4252, %v4535
      %v4564 = vsub.f32 %v4396, %v4535
      %v4565 = vsub.f32 %v4398, %v4535
      %v4566 = vsub.f32 %v3672, %v4536
      %v4567 = vsub.f32 %v3674, %v4536
      %v4568 = vsub.f32 %v3818, %v4536
      %v4569 = vsub.f32 %v3820, %v4536
      %v4570 = vsub.f32 %v3964, %v4536
      %v4571 = vsub.f32 %v3966, %v4536
      %v4572 = vsub.f32 %v4110, %v4536
      %v4573 = vsub.f32 %v4112, %v4536
      %v4574 = vsub.f32 %v4256, %v4536
      %v4575 = vsub.f32 %v4258, %v4536
      %v4576 = vsub.f32 %v4402, %v4536
      %v4577 = vsub.f32 %v4404, %v4536
      %v4578 = vsub.f32 %v3676, %v4537
      %v4579 = vsub.f32 %v3678, %v4537
      %v4580 = vsub.f32 %v3822, %v4537
      %v4581 = vsub.f32 %v3824, %v4537
      %v4582 = vsub.f32 %v3968, %v4537
      %v4583 = vsub.f32 %v3970, %v4537
      %v4584 = vsub.f32 %v4114, %v4537
      %v4585 = vsub.f32 %v4116, %v4537
      %v4586 = vsub.f32 %v4260, %v4537
      %v4587 = vsub.f32 %v4262, %v4537
      %v4588 = vsub.f32 %v4406, %v4537
      %v4589 = vsub.f32 %v4408, %v4537
      %v4590 = vsub.f32 %v3682, %v4538
      %v4591 = vsub.f32 %v3684, %v4538
      %v4592 = vsub.f32 %v3828, %v4538
      %v4593 = vsub.f32 %v3830, %v4538
      %v4594 = vsub.f32 %v3974, %v4538
      %v4595 = vsub.f32 %v3976, %v4538
      %v4596 = vsub.f32 %v4120, %v4538
      %v4597 = vsub.f32 %v4122, %v4538
      %v4598 = vsub.f32 %v4266, %v4538
      %v4599 = vsub.f32 %v4268, %v4538
      %v4600 = vsub.f32 %v4412, %v4538
      %v4601 = vsub.f32 %v4414, %v4538
      %v4602 = vsub.f32 %v3686, %v4539
      %v4603 = vsub.f32 %v3688, %v4539
      %v4604 = vsub.f32 %v3832, %v4539
      %v4605 = vsub.f32 %v3834, %v4539
      %v4606 = vsub.f32 %v3978, %v4539
      %v4607 = vsub.f32 %v3980, %v4539
      %v4608 = vsub.f32 %v4124, %v4539
      %v4609 = vsub.f32 %v4126, %v4539
      %v4610 = vsub.f32 %v4270, %v4539
      %v4611 = vsub.f32 %v4272, %v4539
      %v4612 = vsub.f32 %v4416, %v4539
      %v4613 = vsub.f32 %v4418, %v4539
      %v4614 = vsub.f32 %v3692, %v4540
      %v4615 = vsub.f32 %v3694, %v4540
      %v4616 = vsub.f32 %v3838, %v4540
      %v4617 = vsub.f32 %v3840, %v4540
      %v4618 = vsub.f32 %v3984, %v4540
      %v4619 = vsub.f32 %v3986, %v4540
      %v4620 = vsub.f32 %v4130, %v4540
      %v4621 = vsub.f32 %v4132, %v4540
      %v4622 = vsub.f32 %v4276, %v4540
      %v4623 = vsub.f32 %v4278, %v4540
      %v4624 = vsub.f32 %v4422, %v4540
      %v4625 = vsub.f32 %v4424, %v4540
      %v4626 = vsub.f32 %v3696, %v4541
      %v4627 = vsub.f32 %v3698, %v4541
      %v4628 = vsub.f32 %v3842, %v4541
      %v4629 = vsub.f32 %v3844, %v4541
      %v4630 = vsub.f32 %v3988, %v4541
      %v4631 = vsub.f32 %v3990, %v4541
      %v4632 = vsub.f32 %v4134, %v4541
      %v4633 = vsub.f32 %v4136, %v4541
      %v4634 = vsub.f32 %v4280, %v4541
      %v4635 = vsub.f32 %v4282, %v4541
      %v4636 = vsub.f32 %v4426, %v4541
      %v4637 = vsub.f32 %v4428, %v4541
      %v4638 = vmax.f32 %v4542, 0.0
      %v4639 = vmax.f32 %v4543, 0.0
      %v4640 = vmax.f32 %v4544, 0.0
      %v4641 = vmax.f32 %v4545, 0.0
      %v4642 = vmax.f32 %v4546, 0.0
      %v4643 = vmax.f32 %v4547, 0.0
      %v4644 = vmax.f32 %v4548, 0.0
      %v4645 = vmax.f32 %v4549, 0.0
      %v4646 = vmax.f32 %v4550, 0.0
      %v4647 = vmax.f32 %v4551, 0.0
      %v4648 = vmax.f32 %v4552, 0.0
      %v4649 = vmax.f32 %v4553, 0.0
      %v4650 = vmax.f32 %v4554, 0.0
      %v4651 = vmax.f32 %v4555, 0.0
      %v4652 = vmax.f32 %v4556, 0.0
      %v4653 = vmax.f32 %v4557, 0.0
      %v4654 = vmax.f32 %v4558, 0.0
      %v4655 = vmax.f32 %v4559, 0.0
      %v4656 = vmax.f32 %v4560, 0.0
      %v4657 = vmax.f32 %v4561, 0.0
      %v4658 = vmax.f32 %v4562, 0.0
      %v4659 = vmax.f32 %v4563, 0.0
      %v4660 = vmax.f32 %v4564, 0.0
      %v4661 = vmax.f32 %v4565, 0.0
      %v4662 = vmax.f32 %v4566, 0.0
      %v4663 = vmax.f32 %v4567, 0.0
      %v4664 = vmax.f32 %v4568, 0.0
      %v4665 = vmax.f32 %v4569, 0.0
      %v4666 = vmax.f32 %v4570, 0.0
      %v4667 = vmax.f32 %v4571, 0.0
      %v4668 = vmax.f32 %v4572, 0.0
      %v4669 = vmax.f32 %v4573, 0.0
      %v4670 = vmax.f32 %v4574, 0.0
      %v4671 = vmax.f32 %v4575, 0.0
      %v4672 = vmax.f32 %v4576, 0.0
      %v4673 = vmax.f32 %v4577, 0.0
      %v4674 = vmax.f32 %v4578, 0.0
      %v4675 = vmax.f32 %v4579, 0.0
      %v4676 = vmax.f32 %v4580, 0.0
      %v4677 = vmax.f32 %v4581, 0.0
      %v4678 = vmax.f32 %v4582, 0.0
      %v4679 = vmax.f32 %v4583, 0.0
      %v4680 = vmax.f32 %v4584, 0.0
      %v4681 = vmax.f32 %v4585, 0.0
      %v4682 = vmax.f32 %v4586, 0.0
      %v4683 = vmax.f32 %v4587, 0.0
      %v4684 = vmax.f32 %v4588, 0.0
      %v4685 = vmax.f32 %v4589, 0.0
      %v4686 = vmax.f32 %v4590, 0.0
      %v4687 = vmax.f32 %v4591, 0.0
      %v4688 = vmax.f32 %v4592, 0.0
      %v4689 = vmax.f32 %v4593, 0.0
      %v4690 = vmax.f32 %v4594, 0.0
      %v4691 = vmax.f32 %v4595, 0.0
      %v4692 = vmax.f32 %v4596, 0.0
      %v4693 = vmax.f32 %v4597, 0.0
      %v4694 = vmax.f32 %v4598, 0.0
      %v4695 = vmax.f32 %v4599, 0.0
      %v4696 = vmax.f32 %v4600, 0.0
      %v4697 = vmax.f32 %v4601, 0.0
      %v4698 = vmax.f32 %v4602, 0.0
      %v4699 = vmax.f32 %v4603, 0.0
      %v4700 = vmax.f32 %v4604, 0.0
      %v4701 = vmax.f32 %v4605, 0.0
      %v4702 = vmax.f32 %v4606, 0.0
      %v4703 = vmax.f32 %v4607, 0.0
      %v4704 = vmax.f32 %v4608, 0.0
      %v4705 = vmax.f32 %v4609, 0.0
      %v4706 = vmax.f32 %v4610, 0.0
      %v4707 = vmax.f32 %v4611, 0.0
      %v4708 = vmax.f32 %v4612, 0.0
      %v4709 = vmax.f32 %v4613, 0.0
      %v4710 = vmax.f32 %v4614, 0.0
      %v4711 = vmax.f32 %v4615, 0.0
      %v4712 = vmax.f32 %v4616, 0.0
      %v4713 = vmax.f32 %v4617, 0.0
      %v4714 = vmax.f32 %v4618, 0.0
      %v4715 = vmax.f32 %v4619, 0.0
      %v4716 = vmax.f32 %v4620, 0.0
      %v4717 = vmax.f32 %v4621, 0.0
      %v4718 = vmax.f32 %v4622, 0.0
      %v4719 = vmax.f32 %v4623, 0.0
      %v4720 = vmax.f32 %v4624, 0.0
      %v4721 = vmax.f32 %v4625, 0.0
      %v4722 = vmax.f32 %v4626, 0.0
      %v4723 = vmax.f32 %v4627, 0.0
      %v4724 = vmax.f32 %v4628, 0.0
      %v4725 = vmax.f32 %v4629, 0.0
      %v4726 = vmax.f32 %v4630, 0.0
      %v4727 = vmax.f32 %v4631, 0.0
      %v4728 = vmax.f32 %v4632, 0.0
      %v4729 = vmax.f32 %v4633, 0.0
      %v4730 = vmax.f32 %v4634, 0.0
      %v4731 = vmax.f32 %v4635, 0.0
      %v4732 = vmax.f32 %v4636, 0.0
      %v4733 = vmax.f32 %v4637, 0.0
      %v4734 = vpack.c.bf16 %v4638, %v4638
      %v4735 = vpack.c.bf16 %v4639, %v4639
      %v4736 = vpack.c.bf16 %v4640, %v4640
      %v4737 = vpack.c.bf16 %v4641, %v4641
      %v4738 = vpack.c.bf16 %v4642, %v4642
      %v4739 = vpack.c.bf16 %v4643, %v4643
      %v4740 = vpack.c.bf16 %v4644, %v4644
      %v4741 = vpack.c.bf16 %v4645, %v4645
      %v4742 = vpack.c.bf16 %v4646, %v4646
      %v4743 = vpack.c.bf16 %v4647, %v4647
      %v4744 = vpack.c.bf16 %v4648, %v4648
      %v4745 = vpack.c.bf16 %v4649, %v4649
      %v4746 = vpack.c.bf16 %v4650, %v4650
      %v4747 = vpack.c.bf16 %v4651, %v4651
      %v4748 = vpack.c.bf16 %v4652, %v4652
      %v4749 = vpack.c.bf16 %v4653, %v4653
      %v4750 = vpack.c.bf16 %v4654, %v4654
      %v4751 = vpack.c.bf16 %v4655, %v4655
      %v4752 = vpack.c.bf16 %v4656, %v4656
      %v4753 = vpack.c.bf16 %v4657, %v4657
      %v4754 = vpack.c.bf16 %v4658, %v4658
      %v4755 = vpack.c.bf16 %v4659, %v4659
      %v4756 = vpack.c.bf16 %v4660, %v4660
      %v4757 = vpack.c.bf16 %v4661, %v4661
      %v4758 = vpack.c.bf16 %v4662, %v4662
      %v4759 = vpack.c.bf16 %v4663, %v4663
      %v4760 = vpack.c.bf16 %v4664, %v4664
      %v4761 = vpack.c.bf16 %v4665, %v4665
      %v4762 = vpack.c.bf16 %v4666, %v4666
      %v4763 = vpack.c.bf16 %v4667, %v4667
      %v4764 = vpack.c.bf16 %v4668, %v4668
      %v4765 = vpack.c.bf16 %v4669, %v4669
      %v4766 = vpack.c.bf16 %v4670, %v4670
      %v4767 = vpack.c.bf16 %v4671, %v4671
      %v4768 = vpack.c.bf16 %v4672, %v4672
      %v4769 = vpack.c.bf16 %v4673, %v4673
      %v4770 = vpack.c.bf16 %v4674, %v4674
      %v4771 = vpack.c.bf16 %v4675, %v4675
      %v4772 = vpack.c.bf16 %v4676, %v4676
      %v4773 = vpack.c.bf16 %v4677, %v4677
      %v4774 = vpack.c.bf16 %v4678, %v4678
      %v4775 = vpack.c.bf16 %v4679, %v4679
      %v4776 = vpack.c.bf16 %v4680, %v4680
      %v4777 = vpack.c.bf16 %v4681, %v4681
      %v4778 = vpack.c.bf16 %v4682, %v4682
      %v4779 = vpack.c.bf16 %v4683, %v4683
      %v4780 = vpack.c.bf16 %v4684, %v4684
      %v4781 = vpack.c.bf16 %v4685, %v4685
      %v4782 = vpack.c.bf16 %v4686, %v4686
      %v4783 = vpack.c.bf16 %v4687, %v4687
      %v4784 = vpack.c.bf16 %v4688, %v4688
      %v4785 = vpack.c.bf16 %v4689, %v4689
      %v4786 = vpack.c.bf16 %v4690, %v4690
      %v4787 = vpack.c.bf16 %v4691, %v4691
      %v4788 = vpack.c.bf16 %v4692, %v4692
      %v4789 = vpack.c.bf16 %v4693, %v4693
      %v4790 = vpack.c.bf16 %v4694, %v4694
      %v4791 = vpack.c.bf16 %v4695, %v4695
      %v4792 = vpack.c.bf16 %v4696, %v4696
      %v4793 = vpack.c.bf16 %v4697, %v4697
      %v4794 = vpack.c.bf16 %v4698, %v4698
      %v4795 = vpack.c.bf16 %v4699, %v4699
      %v4796 = vpack.c.bf16 %v4700, %v4700
      %v4797 = vpack.c.bf16 %v4701, %v4701
      %v4798 = vpack.c.bf16 %v4702, %v4702
      %v4799 = vpack.c.bf16 %v4703, %v4703
      %v4800 = vpack.c.bf16 %v4704, %v4704
      %v4801 = vpack.c.bf16 %v4705, %v4705
      %v4802 = vpack.c.bf16 %v4706, %v4706
      %v4803 = vpack.c.bf16 %v4707, %v4707
      %v4804 = vpack.c.bf16 %v4708, %v4708
      %v4805 = vpack.c.bf16 %v4709, %v4709
      %v4806 = vpack.c.bf16 %v4710, %v4710
      %v4807 = vpack.c.bf16 %v4711, %v4711
      %v4808 = vpack.c.bf16 %v4712, %v4712
      %v4809 = vpack.c.bf16 %v4713, %v4713
      %v4810 = vpack.c.bf16 %v4714, %v4714
      %v4811 = vpack.c.bf16 %v4715, %v4715
      %v4812 = vpack.c.bf16 %v4716, %v4716
      %v4813 = vpack.c.bf16 %v4717, %v4717
      %v4814 = vpack.c.bf16 %v4718, %v4718
      %v4815 = vpack.c.bf16 %v4719, %v4719
      %v4816 = vpack.c.bf16 %v4720, %v4720
      %v4817 = vpack.c.bf16 %v4721, %v4721
      %v4818 = vpack.c.bf16 %v4722, %v4722
      %v4819 = vpack.c.bf16 %v4723, %v4723
      %v4820 = vpack.c.bf16 %v4724, %v4724
      %v4821 = vpack.c.bf16 %v4725, %v4725
      %v4822 = vpack.c.bf16 %v4726, %v4726
      %v4823 = vpack.c.bf16 %v4727, %v4727
      %v4824 = vpack.c.bf16 %v4728, %v4728
      %v4825 = vpack.c.bf16 %v4729, %v4729
      %v4826 = vpack.c.bf16 %v4730, %v4730
      %v4827 = vpack.c.bf16 %v4731, %v4731
      %v4828 = vpack.c.bf16 %v4732, %v4732
      %v4829 = vpack.c.bf16 %v4733, %v4733
      %v4926 = vunpack.c.l.b16 %v4734
      %v4927 = vunpack.c.l.b16 %v4735
      %v4928 = vunpack.c.l.b16 %v4736
      %v4929 = vunpack.c.l.b16 %v4737
      %v4930 = vunpack.c.l.b16 %v4738
      %v4931 = vunpack.c.l.b16 %v4739
      %v4932 = vunpack.c.l.b16 %v4740
      %v4933 = vunpack.c.l.b16 %v4741
      %v4934 = vunpack.c.l.b16 %v4742
      %v4935 = vunpack.c.l.b16 %v4743
      %v4936 = vunpack.c.l.b16 %v4744
      %v4937 = vunpack.c.l.b16 %v4745
      %v4938 = vunpack.c.l.b16 %v4746
      %v4939 = vunpack.c.l.b16 %v4747
      %v4940 = vunpack.c.l.b16 %v4748
      %v4941 = vunpack.c.l.b16 %v4749
      %v4942 = vunpack.c.l.b16 %v4750
      %v4943 = vunpack.c.l.b16 %v4751
      %v4944 = vunpack.c.l.b16 %v4752
      %v4945 = vunpack.c.l.b16 %v4753
      %v4946 = vunpack.c.l.b16 %v4754
      %v4947 = vunpack.c.l.b16 %v4755
      %v4948 = vunpack.c.l.b16 %v4756
      %v4949 = vunpack.c.l.b16 %v4757
      %v4950 = vunpack.c.l.b16 %v4758
      %v4951 = vunpack.c.l.b16 %v4759
      %v4952 = vunpack.c.l.b16 %v4760
      %v4953 = vunpack.c.l.b16 %v4761
      %v4954 = vunpack.c.l.b16 %v4762
      %v4955 = vunpack.c.l.b16 %v4763
      %v4956 = vunpack.c.l.b16 %v4764
      %v4957 = vunpack.c.l.b16 %v4765
      %v4958 = vunpack.c.l.b16 %v4766
      %v4959 = vunpack.c.l.b16 %v4767
      %v4960 = vunpack.c.l.b16 %v4768
      %v4961 = vunpack.c.l.b16 %v4769
      %v4962 = vunpack.c.l.b16 %v4770
      %v4963 = vunpack.c.l.b16 %v4771
      %v4964 = vunpack.c.l.b16 %v4772
      %v4965 = vunpack.c.l.b16 %v4773
      %v4966 = vunpack.c.l.b16 %v4774
      %v4967 = vunpack.c.l.b16 %v4775
      %v4968 = vunpack.c.l.b16 %v4776
      %v4969 = vunpack.c.l.b16 %v4777
      %v4970 = vunpack.c.l.b16 %v4778
      %v4971 = vunpack.c.l.b16 %v4779
      %v4972 = vunpack.c.l.b16 %v4780
      %v4973 = vunpack.c.l.b16 %v4781
      %v4974 = vunpack.c.l.b16 %v4782
      %v4975 = vunpack.c.l.b16 %v4783
      %v4976 = vunpack.c.l.b16 %v4784
      %v4977 = vunpack.c.l.b16 %v4785
      %v4978 = vunpack.c.l.b16 %v4786
      %v4979 = vunpack.c.l.b16 %v4787
      %v4980 = vunpack.c.l.b16 %v4788
      %v4981 = vunpack.c.l.b16 %v4789
      %v4982 = vunpack.c.l.b16 %v4790
      %v4983 = vunpack.c.l.b16 %v4791
      %v4984 = vunpack.c.l.b16 %v4792
      %v4985 = vunpack.c.l.b16 %v4793
      %v4986 = vunpack.c.l.b16 %v4794
      %v4987 = vunpack.c.l.b16 %v4795
      %v4988 = vunpack.c.l.b16 %v4796
      %v4989 = vunpack.c.l.b16 %v4797
      %v4990 = vunpack.c.l.b16 %v4798
      %v4991 = vunpack.c.l.b16 %v4799
      %v4992 = vunpack.c.l.b16 %v4800
      %v4993 = vunpack.c.l.b16 %v4801
      %v4994 = vunpack.c.l.b16 %v4802
      %v4995 = vunpack.c.l.b16 %v4803
      %v4996 = vunpack.c.l.b16 %v4804
      %v4997 = vunpack.c.l.b16 %v4805
      %v4998 = vunpack.c.l.b16 %v4806
      %v4999 = vunpack.c.l.b16 %v4807
      %v5000 = vunpack.c.l.b16 %v4808
      %v5001 = vunpack.c.l.b16 %v4809
      %v5002 = vunpack.c.l.b16 %v4810
      %v5003 = vunpack.c.l.b16 %v4811
      %v5004 = vunpack.c.l.b16 %v4812
      %v5005 = vunpack.c.l.b16 %v4813
      %v5006 = vunpack.c.l.b16 %v4814
      %v5007 = vunpack.c.l.b16 %v4815
      %v5008 = vunpack.c.l.b16 %v4816
      %v5009 = vunpack.c.l.b16 %v4817
      %v5010 = vunpack.c.l.b16 %v4818
      %v5011 = vunpack.c.l.b16 %v4819
      %v5012 = vunpack.c.l.b16 %v4820
      %v5013 = vunpack.c.l.b16 %v4821
      %v5014 = vunpack.c.l.b16 %v4822
      %v5015 = vunpack.c.l.b16 %v4823
      %v5016 = vunpack.c.l.b16 %v4824
      %v5017 = vunpack.c.l.b16 %v4825
      %v5018 = vunpack.c.l.b16 %v4826
      %v5019 = vunpack.c.l.b16 %v4827
      %v5020 = vunpack.c.l.b16 %v4828
      %v5021 = vunpack.c.l.b16 %v4829
      %v5022 = vpack.c.b16 %v4927, %v4926
      %v5023 = vpack.c.b16 %v4929, %v4928
      %v5024 = vpack.c.b16 %v4931, %v4930
      %v5025 = vpack.c.b16 %v4933, %v4932
      %v5026 = vpack.c.b16 %v4935, %v4934
      %v5027 = vpack.c.b16 %v4937, %v4936
      %v5028 = vpack.c.b16 %v4939, %v4938
      %v5029 = vpack.c.b16 %v4941, %v4940
      %v5030 = vpack.c.b16 %v4943, %v4942
      %v5031 = vpack.c.b16 %v4945, %v4944
      %v5032 = vpack.c.b16 %v4947, %v4946
      %v5033 = vpack.c.b16 %v4949, %v4948
      %v5034 = vpack.c.b16 %v4951, %v4950
      %v5035 = vpack.c.b16 %v4953, %v4952
      %v5036 = vpack.c.b16 %v4955, %v4954
      %v5037 = vpack.c.b16 %v4957, %v4956
      %v5038 = vpack.c.b16 %v4959, %v4958
      %v5039 = vpack.c.b16 %v4961, %v4960
      %v5040 = vpack.c.b16 %v4963, %v4962
      %v5041 = vpack.c.b16 %v4965, %v4964
      %v5042 = vpack.c.b16 %v4967, %v4966
      %v5043 = vpack.c.b16 %v4969, %v4968
      %v5044 = vpack.c.b16 %v4971, %v4970
      %v5045 = vpack.c.b16 %v4973, %v4972
      %v5046 = vpack.c.b16 %v4975, %v4974
      %v5047 = vpack.c.b16 %v4977, %v4976
      %v5048 = vpack.c.b16 %v4979, %v4978
      %v5049 = vpack.c.b16 %v4981, %v4980
      %v5050 = vpack.c.b16 %v4983, %v4982
      %v5051 = vpack.c.b16 %v4985, %v4984
      %v5052 = vpack.c.b16 %v4987, %v4986
      %v5053 = vpack.c.b16 %v4989, %v4988
      %v5054 = vpack.c.b16 %v4991, %v4990
      %v5055 = vpack.c.b16 %v4993, %v4992
      %v5056 = vpack.c.b16 %v4995, %v4994
      %v5057 = vpack.c.b16 %v4997, %v4996
      %v5058 = vpack.c.b16 %v4999, %v4998
      %v5059 = vpack.c.b16 %v5001, %v5000
      %v5060 = vpack.c.b16 %v5003, %v5002
      %v5061 = vpack.c.b16 %v5005, %v5004
      %v5062 = vpack.c.b16 %v5007, %v5006
      %v5063 = vpack.c.b16 %v5009, %v5008
      %v5064 = vpack.c.b16 %v5011, %v5010
      %v5065 = vpack.c.b16 %v5013, %v5012
      %v5066 = vpack.c.b16 %v5015, %v5014
      %v5067 = vpack.c.b16 %v5017, %v5016
      %v5068 = vpack.c.b16 %v5019, %v5018
      %v5069 = vpack.c.b16 %v5021, %v5020
      %5118 = vst [vmem:[%s170] sm:$0xff] %v5022
      %5119 = vst [vmem:[%s170 + $0x8] sm:$0xff] %v5023
      %5120 = vst [vmem:[%s170 + $0x10] sm:$0xff] %v5024
      %5121 = vst [vmem:[%s170 + $0x18] sm:$0xff] %v5025
      %5122 = vst [vmem:[%s170 + $0x20] sm:$0xff] %v5026
      %5123 = vst [vmem:[%s170 + $0x28] sm:$0xff] %v5027
      %5124 = vst [vmem:[%s170 + $0x30] sm:$0xff] %v5028
      %5125 = vst [vmem:[%s170 + $0x38] sm:$0xff] %v5029
      %5126 = vst [vmem:[%s170 + $0x40] sm:$0xff] %v5030
      %5127 = vst [vmem:[%s170 + $0x48] sm:$0xff] %v5031
      %5128 = vst [vmem:[%s170 + $0x50] sm:$0xff] %v5032
      %5129 = vst [vmem:[%s170 + $0x58] sm:$0xff] %v5033
      %5130 = vst [vmem:[%s170 + $0x60] sm:$0xff] %v5034
      %5131 = vst [vmem:[%s170 + $0x68] sm:$0xff] %v5035
      %5132 = vst [vmem:[%s170 + $0x70] sm:$0xff] %v5036
      %5133 = vst [vmem:[%s170 + $0x78] sm:$0xff] %v5037
      %5134 = vst [vmem:[%s170 + $0x80] sm:$0xff] %v5038
      %5135 = vst [vmem:[%s170 + $0x88] sm:$0xff] %v5039
      %5136 = vst [vmem:[%s170 + $0x90] sm:$0xff] %v5040
      %5137 = vst [vmem:[%s170 + $0x98] sm:$0xff] %v5041
      %5138 = vst [vmem:[%s170 + $0xa0] sm:$0xff] %v5042
      %5139 = vst [vmem:[%s170 + $0xa8] sm:$0xff] %v5043
      %5140 = vst [vmem:[%s170 + $0xb0] sm:$0xff] %v5044
      %5141 = vst [vmem:[%s170 + $0xb8] sm:$0xff] %v5045
      %5142 = vst [vmem:[%s170 + $0xc0] sm:$0xff] %v5046
      %5143 = vst [vmem:[%s170 + $0xc8] sm:$0xff] %v5047
      %5144 = vst [vmem:[%s170 + $0xd0] sm:$0xff] %v5048
      %5145 = vst [vmem:[%s170 + $0xd8] sm:$0xff] %v5049
      %5146 = vst [vmem:[%s170 + $0xe0] sm:$0xff] %v5050
      %5147 = vst [vmem:[%s170 + $0xe8] sm:$0xff] %v5051
      %5148 = vst [vmem:[%s170 + $0xf0] sm:$0xff] %v5052
      %5149 = vst [vmem:[%s170 + $0xf8] sm:$0xff] %v5053
      %5150 = vst [vmem:[%s170 + $0x100] sm:$0xff] %v5054
      %5151 = vst [vmem:[%s170 + $0x108] sm:$0xff] %v5055
      %5152 = vst [vmem:[%s170 + $0x110] sm:$0xff] %v5056
      %5153 = vst [vmem:[%s170 + $0x118] sm:$0xff] %v5057
      %5154 = vst [vmem:[%s170 + $0x120] sm:$0xff] %v5058
      %5155 = vst [vmem:[%s170 + $0x128] sm:$0xff] %v5059
      %5156 = vst [vmem:[%s170 + $0x130] sm:$0xff] %v5060
      %5157 = vst [vmem:[%s170 + $0x138] sm:$0xff] %v5061
      %5158 = vst [vmem:[%s170 + $0x140] sm:$0xff] %v5062
      %5159 = vst [vmem:[%s170 + $0x148] sm:$0xff] %v5063
      %5160 = vst [vmem:[%s170 + $0x150] sm:$0xff] %v5064
      %5161 = vst [vmem:[%s170 + $0x158] sm:$0xff] %v5065
      %5162 = vst [vmem:[%s170 + $0x160] sm:$0xff] %v5066
      %5163 = vst [vmem:[%s170 + $0x168] sm:$0xff] %v5067
      %5164 = vst [vmem:[%s170 + $0x170] sm:$0xff] %v5068
      %5165 = vst [vmem:[%s170 + $0x178] sm:$0xff] %v5069
      %p5166 = scmp.lt.s32.totalorder %s14, 1
      %s5167 = scalar_select %p5166, %s14, 1
      %s5168 = smul.addr %s5167, 96
      %s5169 = smul.addr %s5168, 4
      %s5170 = scalar_lea.vmem %s3, %s5169
      // Predicated region
      $region33: #{net_depthwise_forward.6} parent=31 // pred_check
        %p5171 = pneg %p100
      $region34: #{net_depthwise_forward.6} parent=31 // pred_check_branch
        %5173 = sbr.rel (%p5171) target = $region36
      $region35: #{net_depthwise_forward.6} parent=31 // pred_region
        _
      $region36: #{net_depthwise_forward.6} parent=31 // pred_fallthru
        _
    $region32: #{net_depthwise_forward.6} parent=5 // pred_fallthru
      _
    %p5174 = scmp.le.s32.totalorder 2, %s9
    // Predicated region
    $region37: #{net_depthwise_forward.6} parent=5 // pred_check
      %p5175 = pneg %p5174
    $region38: #{net_depthwise_forward.6} parent=5 // pred_check_branch
      %5177 = sbr.rel (%p5175) target = $region40
    $region39: #{net_depthwise_forward.6} parent=5 // pred_region
      %s5178 = ssub.s32 %s9, 2
      // Predicated region
      $region41: #{net_depthwise_forward.6} parent=39 // pred_check
        %p5179 = pneg %p106
      $region42: #{net_depthwise_forward.6} parent=39 // pred_check_branch
        %5181 = sbr.rel (%p5179) target = $region44
      $region43: #{net_depthwise_forward.6} parent=39 // pred_region
        %p5182 = scmp.lt.s32.totalorder %s15, 1
        %s5183 = scalar_select %p5182, %s15, 1
        %s5184 = smul.addr %s5183, 96
        %s5185 = smul.addr %s5184, 4
        %s5186 = scalar_lea.vmem %s3, %s5185
      $region44: #{net_depthwise_forward.6} parent=39 // pred_fallthru
        _
    $region40: #{net_depthwise_forward.6} parent=5 // pred_fallthru
      _
  $region6: #{net_depthwise_forward.6} parent=0 // loop_footer
    %s13 = sadd.s32 1, %s9
  $region7: #{net_depthwise_forward.6} parent=0 // loop_footer_branch
    %8 = sbr.rel target = $region3
  $region8: #{net_depthwise_forward.6} parent=0 // loop_exit
    _

// kernel: net_depthwise_forward.7
$region0: #{net_depthwise_forward.7}
  #allocation0 [shape = 'u32[]', space=smem, size = 0x4, offset = 0x4, fixed_abs, tag = 'smem constant byte address 0x4 - core index']
  #allocation1 [shape = 'u32[144,128]{1,0:T(1,128)}', space=vmem, size = 0x12000, scoped, tag = 'internal scratch']
  %s0 = inlined_call_operand.vmem [shape: bf16[16,2,1536], index: 0, kind: input, shape index: {}]
  %s1 = inlined_call_operand.vmem [shape: bf16[16,1536,128], index: 1, kind: input, shape index: {}]
  %s2 = inlined_call_operand.vmem [shape: f32[1,128], index: 2, kind: input, shape index: {}]
  %s3 = inlined_call_operand.hbm [shape: f32[2,128], index: 3, kind: output, shape index: {}]
  %s4 = sld [smem:[#allocation0]]
  $region53: #{net_depthwise_forward.7} parent=0
    _
  %s6 = ssub.s32 1, %s4
  %s7 = scalar_select 0, %s6, %s4
  $region1: #{net_depthwise_forward.7} parent=0
    #allocation2 [shape = 'u8[1024]{0}', space=vmem, size = 0x400, scoped, tag = 'output window, operand 0, single buffered']
    #allocation3 [shape = 's32[2]{0}', space=sflag, size = 0x8, scoped, tag = 'scoped memory for net_depthwise_forward.7']
    %8 = vsyncpa [#allocation3], 0
    loop: start=0, step=1, limit=18
    $region2: #{net_depthwise_forward.7} parent=1 // loop_pre_header
      _
    $region3: #{net_depthwise_forward.7} parent=1 // loop_header
      %s10 = sphi 0, %s14
      %p11 = scmp.ge.s32.totalorder %s10, 18
      %s20 = sphi 0, %s22
      %s23 = sphi 0, %s20
      %s24 = sphi 0, %s23
      %s40 = sphi 0, %s24
      %s46 = sphi 0, %s48
      %s49 = sphi 0, %s46
      %s50 = sphi 0, %s49
      %s66 = sphi 0, %s50
      %s70 = sphi 0, %s70
      %s72 = sphi 0, %s70
      %s73 = sphi 0, %s72
      %s87 = sphi 0, %s73
      %s91 = sphi 0, %s91
      %s93 = sphi 0, %s91
      %s94 = sphi 0, %s93
      %s108 = sphi 0, %s94
    $region4: #{net_depthwise_forward.7} parent=1 // loop_header_branch
      %13 = sbr.rel (%p11) target = $region8
    $region5: #{net_depthwise_forward.7} parent=1 // loop_body
      %s15 = ssub.s32 %s10, 1
      %s16 = ssub.s32 %s10, 2
      %s17 = sadd.s32 %s10, 1
      %s18 = ssub.s32 %s10, %s17
      %p19 = scmp.eq.s32.totalorder %s18, 0
      %s21 = sadd.s32 %s20, 1
      %s22 = scalar_select %p19, %s20, %s21
      %p25 = pneg %p19
      %p26 = scmp.eq.s32.totalorder %s10, 15
      %p27 = por %p25, %p26
      %p28 = scmp.ne.s32.totalorder %s20, %s23
      %p29 = scmp.eq.s32.totalorder %s10, 0
      %p30 = por %p28, %p29
      %p31 = scmp.ne.s32.totalorder %s20, %s23
      %p32 = scmp.eq.s32.totalorder %s15, 15
      %p33 = por %p31, %p32
      %p34 = scmp.ne.s32.totalorder %s23, %s24
      %p35 = scmp.eq.s32.totalorder %s15, 0
      %p36 = por %p34, %p35
      %p37 = scmp.ne.s32.totalorder %s23, %s24
      %p38 = scmp.eq.s32.totalorder %s16, 15
      %p39 = por %p37, %p38
      %p41 = scmp.ne.s32.totalorder %s24, %s40
      %p42 = scmp.eq.s32.totalorder %s16, 0
      %p43 = por %p41, %p42
      %s44 = ssub.s32 %s10, %s17
      %p45 = scmp.eq.s32.totalorder %s44, 0
      %s47 = sadd.s32 %s46, 1
      %s48 = scalar_select %p45, %s46, %s47
      %p51 = pneg %p45
      %p52 = scmp.eq.s32.totalorder %s10, 15
      %p53 = por %p51, %p52
      %p54 = scmp.ne.s32.totalorder %s46, %s49
      %p55 = scmp.eq.s32.totalorder %s10, 0
      %p56 = por %p54, %p55
      %p57 = scmp.ne.s32.totalorder %s46, %s49
      %p58 = scmp.eq.s32.totalorder %s15, 15
      %p59 = por %p57, %p58
      %p60 = scmp.ne.s32.totalorder %s49, %s50
      %p61 = scmp.eq.s32.totalorder %s15, 0
      %p62 = por %p60, %p61
      %p63 = scmp.ne.s32.totalorder %s49, %s50
      %p64 = scmp.eq.s32.totalorder %s16, 15
      %p65 = por %p63, %p64
      %p67 = scmp.ne.s32.totalorder %s50, %s66
      %p68 = scmp.eq.s32.totalorder %s16, 0
      %p69 = por %p67, %p68
      %s71 = sadd.s32 %s70, 1
      %p74 = scmp.eq.s32.totalorder %s10, 15
      %p75 = scmp.ne.s32.totalorder %s70, %s72
      %p76 = scmp.eq.s32.totalorder %s10, 0
      %p77 = por %p75, %p76
      %p78 = scmp.ne.s32.totalorder %s70, %s72
      %p79 = scmp.eq.s32.totalorder %s15, 15
      %p80 = por %p78, %p79
      %p81 = scmp.ne.s32.totalorder %s72, %s73
      %p82 = scmp.eq.s32.totalorder %s15, 0
      %p83 = por %p81, %p82
      %p84 = scmp.ne.s32.totalorder %s72, %s73
      %p85 = scmp.eq.s32.totalorder %s16, 15
      %p86 = por %p84, %p85
      %p88 = scmp.ne.s32.totalorder %s73, %s87
      %p89 = scmp.eq.s32.totalorder %s16, 0
      %p90 = por %p88, %p89
      %s92 = sadd.s32 %s91, 1
      %p95 = scmp.eq.s32.totalorder %s10, 15
      %p96 = scmp.ne.s32.totalorder %s91, %s93
      %p97 = scmp.eq.s32.totalorder %s10, 0
      %p98 = por %p96, %p97
      %p99 = scmp.ne.s32.totalorder %s91, %s93
      %p100 = scmp.eq.s32.totalorder %s15, 15
      %p101 = por %p99, %p100
      %p102 = scmp.ne.s32.totalorder %s93, %s94
      %p103 = scmp.eq.s32.totalorder %s15, 0
      %p104 = por %p102, %p103
      %p105 = scmp.ne.s32.totalorder %s93, %s94
      %p106 = scmp.eq.s32.totalorder %s16, 15
      %p107 = por %p105, %p106
      %p109 = scmp.ne.s32.totalorder %s94, %s108
      %p110 = scmp.eq.s32.totalorder %s16, 0
      %p111 = por %p109, %p110
      %p112 = scmp.le.s32.totalorder 1, %s10
      %p113 = scmp.lt.s32.totalorder %s10, 17
      %p114 = pnand %p112, %p113
      %p115 = pneg %p114
      // Predicated region
      $region9: #{net_depthwise_forward.7} parent=5 // pred_check
        _
      $region10: #{net_depthwise_forward.7} parent=5 // pred_check_branch
        %117 = sbr.rel (%p114) target = $region12
      $region11: #{net_depthwise_forward.7} parent=5 // pred_region
        %s118 = ssub.s32 %s10, 1
        // Predicated region
        $region13: #{net_depthwise_forward.7} parent=11 // pred_check
          %p119 = pneg %p83
        $region14: #{net_depthwise_forward.7} parent=11 // pred_check_branch
          %121 = sbr.rel (%p119) target = $region16
        $region15: #{net_depthwise_forward.7} parent=11 // pred_region
          _
        $region16: #{net_depthwise_forward.7} parent=11 // pred_fallthru
          _
      $region12: #{net_depthwise_forward.7} parent=5 // pred_fallthru
        _
      %p122 = scmp.lt.s32.totalorder %s10, 16
      // Predicated region
      $region17: #{net_depthwise_forward.7} parent=5 // pred_check
        %p123 = pneg %p122
      $region18: #{net_depthwise_forward.7} parent=5 // pred_check_branch
        %125 = sbr.rel (%p123) target = $region20
      $region19: #{net_depthwise_forward.7} parent=5 // pred_region
        // Predicated region
        $region21: #{net_depthwise_forward.7} parent=19 // pred_check
          %p126 = pneg %p30
        $region22: #{net_depthwise_forward.7} parent=19 // pred_check_branch
          %128 = sbr.rel (%p126) target = $region24
        $region23: #{net_depthwise_forward.7} parent=19 // pred_region
          %p129 = scmp.lt.s32.totalorder %s10, 15
          %s130 = scalar_select %p129, %s10, 15
          %s131 = smul.addr %s130, 12
          %s132 = scalar_lea.vmem %s0, %s131
        $region24: #{net_depthwise_forward.7} parent=19 // pred_fallthru
          _
        // Predicated region
        $region25: #{net_depthwise_forward.7} parent=19 // pred_check
          %p133 = pneg %p56
        $region26: #{net_depthwise_forward.7} parent=19 // pred_check_branch
          %135 = sbr.rel (%p133) target = $region28
        $region27: #{net_depthwise_forward.7} parent=19 // pred_region
          %p136 = scmp.lt.s32.totalorder %s10, 15
          %s137 = scalar_select %p136, %s10, 15
          %s138 = smul.addr %s137, 192
          %s139 = smul.addr %s138, 4
          %s140 = scalar_lea.vmem %s1, %s139
        $region28: #{net_depthwise_forward.7} parent=19 // pred_fallthru
          _
      $region20: #{net_depthwise_forward.7} parent=5 // pred_fallthru
        _
      %p141 = scmp.le.s32.totalorder 1, %s10
      %p142 = scmp.lt.s32.totalorder %s10, 17
      %p143 = pnand %p141, %p142
      %p144 = pneg %p143
      // Predicated region
      $region29: #{net_depthwise_forward.7} parent=5 // pred_check
        _
      $region30: #{net_depthwise_forward.7} parent=5 // pred_check_branch
        %146 = sbr.rel (%p143) target = $region32
      $region31: #{net_depthwise_forward.7} parent=5 // pred_region
        %s147 = ssub.s32 %s10, 1
        %p148 = scmp.lt.s32.totalorder %s15, 15
        %s149 = scalar_select %p148, %s15, 15
        %s150 = smul.addr %s149, 12
        %s151 = scalar_lea.vmem %s0, %s150
        %p152 = pneg %p36
        %p153 = pneg %p33
        %p154 = scmp.lt.s32.totalorder %s15, 15
        %s155 = scalar_select %p154, %s15, 15
        %s156 = smul.addr %s155, 192
        %s157 = smul.addr %s156, 4
        %s158 = scalar_lea.vmem %s1, %s157
        %p159 = pneg %p62
        %p160 = pneg %p59
        %p161 = pneg %p83
        %p162 = pneg %p80
        %p163 = pneg %p104
        %p164 = pneg %p101
        %p165 = scmp.lt.s32.totalorder %s15, 15
        %s166 = scalar_select %p165, %s15, 15
        %s167 = smul.addr %s166, 12
        %s168 = scalar_lea.vmem %s0, %s167
        %p169 = scmp.lt.s32.totalorder %s15, 15
        %s170 = scalar_select %p169, %s15, 15
        %s171 = smul.addr %s170, 192
        %s172 = smul.addr %s171, 4
        %s173 = scalar_lea.vmem %s1, %s172
        %p175 = scmp.eq.s32.totalorder %s15, 0
        // Predicated region
        $region33: #{net_depthwise_forward.7} parent=31 // pred_check
          %p176 = pneg %p175
        $region34: #{net_depthwise_forward.7} parent=31 // pred_check_branch
          %178 = sbr.rel (%p176) target = $region36
        $region35: #{net_depthwise_forward.7} parent=31 // pred_region
          %179 = vst [vmem:[#allocation2] sm:$0x3] 0.0
        $region36: #{net_depthwise_forward.7} parent=31 // pred_fallthru
          _
        %v180 = vld [vmem:[#allocation2] sm:$0x3]
        %v181 = vld [vmem:[%s168] sm:$0xff]
        %v182 = vld [vmem:[%s168 + $0x8] sm:$0xf]
        %v183 = vld [vmem:[%s173] sm:$0xf]
        %v184 = vld [vmem:[%s173 + $0x4] sm:$0xf]
        %v185 = vld [vmem:[%s173 + $0x8] sm:$0xf]
        %v186 = vld [vmem:[%s173 + $0xc] sm:$0xf]
        %v187 = vld [vmem:[%s173 + $0x10] sm:$0xf]
        %v188 = vld [vmem:[%s173 + $0x14] sm:$0xf]
        %v189 = vld [vmem:[%s173 + $0x18] sm:$0xf]
        %v190 = vld [vmem:[%s173 + $0x1c] sm:$0xf]
        %v191 = vld [vmem:[%s173 + $0x20] sm:$0xf]
        %v192 = vld [vmem:[%s173 + $0x24] sm:$0xf]
        %v193 = vld [vmem:[%s173 + $0x28] sm:$0xf]
        %v194 = vld [vmem:[%s173 + $0x2c] sm:$0xf]
        %v195 = vld [vmem:[%s173 + $0x30] sm:$0xf]
        %v196 = vld [vmem:[%s173 + $0x34] sm:$0xf]
        %v197 = vld [vmem:[%s173 + $0x38] sm:$0xf]
        %v198 = vld [vmem:[%s173 + $0x3c] sm:$0xf]
        %v199 = vld [vmem:[%s173 + $0x40] sm:$0xf]
        %v200 = vld [vmem:[%s173 + $0x44] sm:$0xf]
        %v201 = vld [vmem:[%s173 + $0x48] sm:$0xf]
        %v202 = vld [vmem:[%s173 + $0x4c] sm:$0xf]
        %v203 = vld [vmem:[%s173 + $0x50] sm:$0xf]
        %v204 = vld [vmem:[%s173 + $0x54] sm:$0xf]
        %v205 = vld [vmem:[%s173 + $0x58] sm:$0xf]
        %v206 = vld [vmem:[%s173 + $0x5c] sm:$0xf]
        %v207 = vld [vmem:[%s173 + $0x60] sm:$0xf]
        %v208 = vld [vmem:[%s173 + $0x64] sm:$0xf]
        %v209 = vld [vmem:[%s173 + $0x68] sm:$0xf]
        %v210 = vld [vmem:[%s173 + $0x6c] sm:$0xf]
        %v211 = vld [vmem:[%s173 + $0x70] sm:$0xf]
        %v212 = vld [vmem:[%s173 + $0x74] sm:$0xf]
        %v213 = vld [vmem:[%s173 + $0x78] sm:$0xf]
        %v214 = vld [vmem:[%s173 + $0x7c] sm:$0xf]
        %v215 = vld [vmem:[%s173 + $0x80] sm:$0xf]
        %v216 = vld [vmem:[%s173 + $0x84] sm:$0xf]
        %v217 = vld [vmem:[%s173 + $0x88] sm:$0xf]
        %v218 = vld [vmem:[%s173 + $0x8c] sm:$0xf]
        %v219 = vld [vmem:[%s173 + $0x90] sm:$0xf]
        %v220 = vld [vmem:[%s173 + $0x94] sm:$0xf]
        %v221 = vld [vmem:[%s173 + $0x98] sm:$0xf]
        %v222 = vld [vmem:[%s173 + $0x9c] sm:$0xf]
        %v223 = vld [vmem:[%s173 + $0xa0] sm:$0xf]
        %v224 = vld [vmem:[%s173 + $0xa4] sm:$0xf]
        %v225 = vld [vmem:[%s173 + $0xa8] sm:$0xf]
        %v226 = vld [vmem:[%s173 + $0xac] sm:$0xf]
        %v227 = vld [vmem:[%s173 + $0xb0] sm:$0xf]
        %v228 = vld [vmem:[%s173 + $0xb4] sm:$0xf]
        %v229 = vld [vmem:[%s173 + $0xb8] sm:$0xf]
        %v230 = vld [vmem:[%s173 + $0xbc] sm:$0xf]
        %v231 = vld [vmem:[%s173 + $0xc0] sm:$0xf]
        %v232 = vld [vmem:[%s173 + $0xc4] sm:$0xf]
        %v233 = vld [vmem:[%s173 + $0xc8] sm:$0xf]
        %v234 = vld [vmem:[%s173 + $0xcc] sm:$0xf]
        %v235 = vld [vmem:[%s173 + $0xd0] sm:$0xf]
        %v236 = vld [vmem:[%s173 + $0xd4] sm:$0xf]
        %v237 = vld [vmem:[%s173 + $0xd8] sm:$0xf]
        %v238 = vld [vmem:[%s173 + $0xdc] sm:$0xf]
        %v239 = vld [vmem:[%s173 + $0xe0] sm:$0xf]
        %v240 = vld [vmem:[%s173 + $0xe4] sm:$0xf]
        %v241 = vld [vmem:[%s173 + $0xe8] sm:$0xf]
        %v242 = vld [vmem:[%s173 + $0xec] sm:$0xf]
        %v243 = vld [vmem:[%s173 + $0xf0] sm:$0xf]
        %v244 = vld [vmem:[%s173 + $0xf4] sm:$0xf]
        %v245 = vld [vmem:[%s173 + $0xf8] sm:$0xf]
        %v246 = vld [vmem:[%s173 + $0xfc] sm:$0xf]
        %v247 = vld [vmem:[%s173 + $0x100] sm:$0xf]
        %v248 = vld [vmem:[%s173 + $0x104] sm:$0xf]
        %v249 = vld [vmem:[%s173 + $0x108] sm:$0xf]
        %v250 = vld [vmem:[%s173 + $0x10c] sm:$0xf]
        %v251 = vld [vmem:[%s173 + $0x110] sm:$0xf]
        %v252 = vld [vmem:[%s173 + $0x114] sm:$0xf]
        %v253 = vld [vmem:[%s173 + $0x118] sm:$0xf]
        %v254 = vld [vmem:[%s173 + $0x11c] sm:$0xf]
        %v255 = vld [vmem:[%s173 + $0x120] sm:$0xf]
        %v256 = vld [vmem:[%s173 + $0x124] sm:$0xf]
        %v257 = vld [vmem:[%s173 + $0x128] sm:$0xf]
        %v258 = vld [vmem:[%s173 + $0x12c] sm:$0xf]
        %v259 = vld [vmem:[%s173 + $0x130] sm:$0xf]
        %v260 = vld [vmem:[%s173 + $0x134] sm:$0xf]
        %v261 = vld [vmem:[%s173 + $0x138] sm:$0xf]
        %v262 = vld [vmem:[%s173 + $0x13c] sm:$0xf]
        %v263 = vld [vmem:[%s173 + $0x140] sm:$0xf]
        %v264 = vld [vmem:[%s173 + $0x144] sm:$0xf]
        %v265 = vld [vmem:[%s173 + $0x148] sm:$0xf]
        %v266 = vld [vmem:[%s173 + $0x14c] sm:$0xf]
        %v267 = vld [vmem:[%s173 + $0x150] sm:$0xf]
        %v268 = vld [vmem:[%s173 + $0x154] sm:$0xf]
        %v269 = vld [vmem:[%s173 + $0x158] sm:$0xf]
        %v270 = vld [vmem:[%s173 + $0x15c] sm:$0xf]
        %v271 = vld [vmem:[%s173 + $0x160] sm:$0xf]
        %v272 = vld [vmem:[%s173 + $0x164] sm:$0xf]
        %v273 = vld [vmem:[%s173 + $0x168] sm:$0xf]
        %v274 = vld [vmem:[%s173 + $0x16c] sm:$0xf]
        %v275 = vld [vmem:[%s173 + $0x170] sm:$0xf]
        %v276 = vld [vmem:[%s173 + $0x174] sm:$0xf]
        %v277 = vld [vmem:[%s173 + $0x178] sm:$0xf]
        %v278 = vld [vmem:[%s173 + $0x17c] sm:$0xf]
        %v279 = vld [vmem:[%s173 + $0x180] sm:$0xf]
        %v280 = vld [vmem:[%s173 + $0x184] sm:$0xf]
        %v281 = vld [vmem:[%s173 + $0x188] sm:$0xf]
        %v282 = vld [vmem:[%s173 + $0x18c] sm:$0xf]
        %v283 = vld [vmem:[%s173 + $0x190] sm:$0xf]
        %v284 = vld [vmem:[%s173 + $0x194] sm:$0xf]
        %v285 = vld [vmem:[%s173 + $0x198] sm:$0xf]
        %v286 = vld [vmem:[%s173 + $0x19c] sm:$0xf]
        %v287 = vld [vmem:[%s173 + $0x1a0] sm:$0xf]
        %v288 = vld [vmem:[%s173 + $0x1a4] sm:$0xf]
        %v289 = vld [vmem:[%s173 + $0x1a8] sm:$0xf]
        %v290 = vld [vmem:[%s173 + $0x1ac] sm:$0xf]
        %v291 = vld [vmem:[%s173 + $0x1b0] sm:$0xf]
        %v292 = vld [vmem:[%s173 + $0x1b4] sm:$0xf]
        %v293 = vld [vmem:[%s173 + $0x1b8] sm:$0xf]
        %v294 = vld [vmem:[%s173 + $0x1bc] sm:$0xf]
        %v295 = vld [vmem:[%s173 + $0x1c0] sm:$0xf]
        %v296 = vld [vmem:[%s173 + $0x1c4] sm:$0xf]
        %v297 = vld [vmem:[%s173 + $0x1c8] sm:$0xf]
        %v298 = vld [vmem:[%s173 + $0x1cc] sm:$0xf]
        %v299 = vld [vmem:[%s173 + $0x1d0] sm:$0xf]
        %v300 = vld [vmem:[%s173 + $0x1d4] sm:$0xf]
        %v301 = vld [vmem:[%s173 + $0x1d8] sm:$0xf]
        %v302 = vld [vmem:[%s173 + $0x1dc] sm:$0xf]
        %v303 = vld [vmem:[%s173 + $0x1e0] sm:$0xf]
        %v304 = vld [vmem:[%s173 + $0x1e4] sm:$0xf]
        %v305 = vld [vmem:[%s173 + $0x1e8] sm:$0xf]
        %v306 = vld [vmem:[%s173 + $0x1ec] sm:$0xf]
        %v307 = vld [vmem:[%s173 + $0x1f0] sm:$0xf]
        %v308 = vld [vmem:[%s173 + $0x1f4] sm:$0xf]
        %v309 = vld [vmem:[%s173 + $0x1f8] sm:$0xf]
        %v310 = vld [vmem:[%s173 + $0x1fc] sm:$0xf]
        %v311 = vld [vmem:[%s173 + $0x200] sm:$0xf]
        %v312 = vld [vmem:[%s173 + $0x204] sm:$0xf]
        %v313 = vld [vmem:[%s173 + $0x208] sm:$0xf]
        %v314 = vld [vmem:[%s173 + $0x20c] sm:$0xf]
        %v315 = vld [vmem:[%s173 + $0x210] sm:$0xf]
        %v316 = vld [vmem:[%s173 + $0x214] sm:$0xf]
        %v317 = vld [vmem:[%s173 + $0x218] sm:$0xf]
        %v318 = vld [vmem:[%s173 + $0x21c] sm:$0xf]
        %v319 = vld [vmem:[%s173 + $0x220] sm:$0xf]
        %v320 = vld [vmem:[%s173 + $0x224] sm:$0xf]
        %v321 = vld [vmem:[%s173 + $0x228] sm:$0xf]
        %v322 = vld [vmem:[%s173 + $0x22c] sm:$0xf]
        %v323 = vld [vmem:[%s173 + $0x230] sm:$0xf]
        %v324 = vld [vmem:[%s173 + $0x234] sm:$0xf]
        %v325 = vld [vmem:[%s173 + $0x238] sm:$0xf]
        %v326 = vld [vmem:[%s173 + $0x23c] sm:$0xf]
        %v327 = vld [vmem:[%s173 + $0x240] sm:$0xf]
        %v328 = vld [vmem:[%s173 + $0x244] sm:$0xf]
        %v329 = vld [vmem:[%s173 + $0x248] sm:$0xf]
        %v330 = vld [vmem:[%s173 + $0x24c] sm:$0xf]
        %v331 = vld [vmem:[%s173 + $0x250] sm:$0xf]
        %v332 = vld [vmem:[%s173 + $0x254] sm:$0xf]
        %v333 = vld [vmem:[%s173 + $0x258] sm:$0xf]
        %v334 = vld [vmem:[%s173 + $0x25c] sm:$0xf]
        %v335 = vld [vmem:[%s173 + $0x260] sm:$0xf]
        %v336 = vld [vmem:[%s173 + $0x264] sm:$0xf]
        %v337 = vld [vmem:[%s173 + $0x268] sm:$0xf]
        %v338 = vld [vmem:[%s173 + $0x26c] sm:$0xf]
        %v339 = vld [vmem:[%s173 + $0x270] sm:$0xf]
        %v340 = vld [vmem:[%s173 + $0x274] sm:$0xf]
        %v341 = vld [vmem:[%s173 + $0x278] sm:$0xf]
        %v342 = vld [vmem:[%s173 + $0x27c] sm:$0xf]
        %v343 = vld [vmem:[%s173 + $0x280] sm:$0xf]
        %v344 = vld [vmem:[%s173 + $0x284] sm:$0xf]
        %v345 = vld [vmem:[%s173 + $0x288] sm:$0xf]
        %v346 = vld [vmem:[%s173 + $0x28c] sm:$0xf]
        %v347 = vld [vmem:[%s173 + $0x290] sm:$0xf]
        %v348 = vld [vmem:[%s173 + $0x294] sm:$0xf]
        %v349 = vld [vmem:[%s173 + $0x298] sm:$0xf]
        %v350 = vld [vmem:[%s173 + $0x29c] sm:$0xf]
        %v351 = vld [vmem:[%s173 + $0x2a0] sm:$0xf]
        %v352 = vld [vmem:[%s173 + $0x2a4] sm:$0xf]
        %v353 = vld [vmem:[%s173 + $0x2a8] sm:$0xf]
        %v354 = vld [vmem:[%s173 + $0x2ac] sm:$0xf]
        %v355 = vld [vmem:[%s173 + $0x2b0] sm:$0xf]
        %v356 = vld [vmem:[%s173 + $0x2b4] sm:$0xf]
        %v357 = vld [vmem:[%s173 + $0x2b8] sm:$0xf]
        %v358 = vld [vmem:[%s173 + $0x2bc] sm:$0xf]
        %v359 = vld [vmem:[%s173 + $0x2c0] sm:$0xf]
        %v360 = vld [vmem:[%s173 + $0x2c4] sm:$0xf]
        %v361 = vld [vmem:[%s173 + $0x2c8] sm:$0xf]
        %v362 = vld [vmem:[%s173 + $0x2cc] sm:$0xf]
        %v363 = vld [vmem:[%s173 + $0x2d0] sm:$0xf]
        %v364 = vld [vmem:[%s173 + $0x2d4] sm:$0xf]
        %v365 = vld [vmem:[%s173 + $0x2d8] sm:$0xf]
        %v366 = vld [vmem:[%s173 + $0x2dc] sm:$0xf]
        %v367 = vld [vmem:[%s173 + $0x2e0] sm:$0xf]
        %v368 = vld [vmem:[%s173 + $0x2e4] sm:$0xf]
        %v369 = vld [vmem:[%s173 + $0x2e8] sm:$0xf]
        %v370 = vld [vmem:[%s173 + $0x2ec] sm:$0xf]
        %v371 = vld [vmem:[%s173 + $0x2f0] sm:$0xf]
        %v372 = vld [vmem:[%s173 + $0x2f4] sm:$0xf]
        %v373 = vld [vmem:[%s173 + $0x2f8] sm:$0xf]
        %v374 = vld [vmem:[%s173 + $0x2fc] sm:$0xf]
        %v377 = vcombine.high %v181, %v181
        %v379 = vunpack.c.l.s4 1966171168
        %v380 = vunpack.c.0.s8 %v379
        %v381 = vlaneseq
        %v382 = vshrl.u32 %v381, 7
        %v383 = vsub.s32 %v380, %v382
        %v384 = vrot.slane %v181, %v383
        %v386 = vunpack.c.l.s4 1966171168
        %v387 = vunpack.c.0.s8 %v386
        %v388 = vlaneseq
        %v389 = vshrl.u32 %v388, 7
        %v390 = vsub.s32 %v387, %v389
        %v391 = vrot.slane %v377, %v390
        %v392 = vcombine.high %v384, %v384
        %v393 = vcombine.high %v391, %v391
        %v395 = vunpack.c.l.s4 1966171168
        %v396 = vunpack.c.0.s8 %v395
        %v397 = vlaneseq
        %v398 = vshrl.u32 %v397, 7
        %v399 = vsub.s32 %v396, %v398
        %v400 = vrot.slane %v384, %v399
        %v402 = vunpack.c.l.s4 1966171168
        %v403 = vunpack.c.0.s8 %v402
        %v404 = vlaneseq
        %v405 = vshrl.u32 %v404, 7
        %v406 = vsub.s32 %v403, %v405
        %v407 = vrot.slane %v391, %v406
        %v409 = vunpack.c.l.s4 1966171168
        %v410 = vunpack.c.0.s8 %v409
        %v411 = vlaneseq
        %v412 = vshrl.u32 %v411, 7
        %v413 = vsub.s32 %v410, %v412
        %v414 = vrot.slane %v392, %v413
        %v416 = vunpack.c.l.s4 1966171168
        %v417 = vunpack.c.0.s8 %v416
        %v418 = vlaneseq
        %v419 = vshrl.u32 %v418, 7
        %v420 = vsub.s32 %v417, %v419
        %v421 = vrot.slane %v393, %v420
        %v422 = vcombine.high %v400, %v400
        %v423 = vcombine.high %v407, %v407
        %v424 = vcombine.high %v414, %v414
        %v425 = vcombine.high %v421, %v421
        %v427 = vunpack.c.l.s4 1966171168
        %v428 = vunpack.c.0.s8 %v427
        %v429 = vlaneseq
        %v430 = vshrl.u32 %v429, 7
        %v431 = vsub.s32 %v428, %v430
        %v432 = vrot.slane %v182, %v431
        %v433 = vcombine.high %v432, %v432
        %v435 = vunpack.c.l.s4 1966171168
        %v436 = vunpack.c.0.s8 %v435
        %v437 = vlaneseq
        %v438 = vshrl.u32 %v437, 7
        %v439 = vsub.s32 %v436, %v438
        %v440 = vrot.slane %v432, %v439
        %v442 = vunpack.c.l.s4 1966171168
        %v443 = vunpack.c.0.s8 %v442
        %v444 = vlaneseq
        %v445 = vshrl.u32 %v444, 7
        %v446 = vsub.s32 %v443, %v445
        %v447 = vrot.slane %v433, %v446
        %v448 = vcombine.high %v440, %v440
        %v449 = vcombine.high %v447, %v447
        %v654 = vunpack.c.l.b16 %v183
        %v655 = vunpack.c.l.b16 %v184
        %v656 = vunpack.c.l.b16 %v185
        %v657 = vunpack.c.l.b16 %v186
        %v658 = vunpack.c.l.b16 %v187
        %v659 = vunpack.c.l.b16 %v188
        %v660 = vunpack.c.l.b16 %v189
        %v661 = vunpack.c.l.b16 %v190
        %v662 = vunpack.c.l.b16 %v191
        %v663 = vunpack.c.l.b16 %v192
        %v664 = vunpack.c.l.b16 %v193
        %v665 = vunpack.c.l.b16 %v194
        %v666 = vunpack.c.l.b16 %v195
        %v667 = vunpack.c.l.b16 %v196
        %v668 = vunpack.c.l.b16 %v197
        %v669 = vunpack.c.l.b16 %v198
        %v670 = vunpack.c.l.b16 %v199
        %v671 = vunpack.c.l.b16 %v200
        %v672 = vunpack.c.l.b16 %v201
        %v673 = vunpack.c.l.b16 %v202
        %v674 = vunpack.c.l.b16 %v203
        %v675 = vunpack.c.l.b16 %v204
        %v676 = vunpack.c.l.b16 %v205
        %v677 = vunpack.c.l.b16 %v206
        %v678 = vunpack.c.l.b16 %v207
        %v679 = vunpack.c.l.b16 %v208
        %v680 = vunpack.c.l.b16 %v209
        %v681 = vunpack.c.l.b16 %v210
        %v682 = vunpack.c.l.b16 %v211
        %v683 = vunpack.c.l.b16 %v212
        %v684 = vunpack.c.l.b16 %v213
        %v685 = vunpack.c.l.b16 %v214
        %v686 = vunpack.c.l.b16 %v215
        %v687 = vunpack.c.l.b16 %v216
        %v688 = vunpack.c.l.b16 %v217
        %v689 = vunpack.c.l.b16 %v218
        %v690 = vunpack.c.l.b16 %v219
        %v691 = vunpack.c.l.b16 %v220
        %v692 = vunpack.c.l.b16 %v221
        %v693 = vunpack.c.l.b16 %v222
        %v694 = vunpack.c.l.b16 %v223
        %v695 = vunpack.c.l.b16 %v224
        %v696 = vunpack.c.l.b16 %v225
        %v697 = vunpack.c.l.b16 %v226
        %v698 = vunpack.c.l.b16 %v227
        %v699 = vunpack.c.l.b16 %v228
        %v700 = vunpack.c.l.b16 %v229
        %v701 = vunpack.c.l.b16 %v230
        %v702 = vunpack.c.l.b16 %v231
        %v703 = vunpack.c.l.b16 %v232
        %v704 = vunpack.c.l.b16 %v233
        %v705 = vunpack.c.l.b16 %v234
        %v706 = vunpack.c.l.b16 %v235
        %v707 = vunpack.c.l.b16 %v236
        %v708 = vunpack.c.l.b16 %v237
        %v709 = vunpack.c.l.b16 %v238
        %v710 = vunpack.c.l.b16 %v239
        %v711 = vunpack.c.l.b16 %v240
        %v712 = vunpack.c.l.b16 %v241
        %v713 = vunpack.c.l.b16 %v242
        %v714 = vunpack.c.l.b16 %v243
        %v715 = vunpack.c.l.b16 %v244
        %v716 = vunpack.c.l.b16 %v245
        %v717 = vunpack.c.l.b16 %v246
        %v718 = vunpack.c.l.b16 %v247
        %v719 = vunpack.c.l.b16 %v248
        %v720 = vunpack.c.l.b16 %v249
        %v721 = vunpack.c.l.b16 %v250
        %v722 = vunpack.c.l.b16 %v251
        %v723 = vunpack.c.l.b16 %v252
        %v724 = vunpack.c.l.b16 %v253
        %v725 = vunpack.c.l.b16 %v254
        %v726 = vunpack.c.l.b16 %v255
        %v727 = vunpack.c.l.b16 %v256
        %v728 = vunpack.c.l.b16 %v257
        %v729 = vunpack.c.l.b16 %v258
        %v730 = vunpack.c.l.b16 %v259
        %v731 = vunpack.c.l.b16 %v260
        %v732 = vunpack.c.l.b16 %v261
        %v733 = vunpack.c.l.b16 %v262
        %v734 = vunpack.c.l.b16 %v263
        %v735 = vunpack.c.l.b16 %v264
        %v736 = vunpack.c.l.b16 %v265
        %v737 = vunpack.c.l.b16 %v266
        %v738 = vunpack.c.l.b16 %v267
        %v739 = vunpack.c.l.b16 %v268
        %v740 = vunpack.c.l.b16 %v269
        %v741 = vunpack.c.l.b16 %v270
        %v742 = vunpack.c.l.b16 %v271
        %v743 = vunpack.c.l.b16 %v272
        %v744 = vunpack.c.l.b16 %v273
        %v745 = vunpack.c.l.b16 %v274
        %v746 = vunpack.c.l.b16 %v275
        %v747 = vunpack.c.l.b16 %v276
        %v748 = vunpack.c.l.b16 %v277
        %v749 = vunpack.c.l.b16 %v278
        %v750 = vunpack.c.l.b16 %v279
        %v751 = vunpack.c.l.b16 %v280
        %v752 = vunpack.c.l.b16 %v281
        %v753 = vunpack.c.l.b16 %v282
        %v754 = vunpack.c.l.b16 %v283
        %v755 = vunpack.c.l.b16 %v284
        %v756 = vunpack.c.l.b16 %v285
        %v757 = vunpack.c.l.b16 %v286
        %v758 = vunpack.c.l.b16 %v287
        %v759 = vunpack.c.l.b16 %v288
        %v760 = vunpack.c.l.b16 %v289
        %v761 = vunpack.c.l.b16 %v290
        %v762 = vunpack.c.l.b16 %v291
        %v763 = vunpack.c.l.b16 %v292
        %v764 = vunpack.c.l.b16 %v293
        %v765 = vunpack.c.l.b16 %v294
        %v766 = vunpack.c.l.b16 %v295
        %v767 = vunpack.c.l.b16 %v296
        %v768 = vunpack.c.l.b16 %v297
        %v769 = vunpack.c.l.b16 %v298
        %v770 = vunpack.c.l.b16 %v299
        %v771 = vunpack.c.l.b16 %v300
        %v772 = vunpack.c.l.b16 %v301
        %v773 = vunpack.c.l.b16 %v302
        %v774 = vunpack.c.l.b16 %v303
        %v775 = vunpack.c.l.b16 %v304
        %v776 = vunpack.c.l.b16 %v305
        %v777 = vunpack.c.l.b16 %v306
        %v778 = vunpack.c.l.b16 %v307
        %v779 = vunpack.c.l.b16 %v308
        %v780 = vunpack.c.l.b16 %v309
        %v781 = vunpack.c.l.b16 %v310
        %v782 = vunpack.c.l.b16 %v311
        %v783 = vunpack.c.l.b16 %v312
        %v784 = vunpack.c.l.b16 %v313
        %v785 = vunpack.c.l.b16 %v314
        %v786 = vunpack.c.l.b16 %v315
        %v787 = vunpack.c.l.b16 %v316
        %v788 = vunpack.c.l.b16 %v317
        %v789 = vunpack.c.l.b16 %v318
        %v790 = vunpack.c.l.b16 %v319
        %v791 = vunpack.c.l.b16 %v320
        %v792 = vunpack.c.l.b16 %v321
        %v793 = vunpack.c.l.b16 %v322
        %v794 = vunpack.c.l.b16 %v323
        %v795 = vunpack.c.l.b16 %v324
        %v796 = vunpack.c.l.b16 %v325
        %v797 = vunpack.c.l.b16 %v326
        %v798 = vunpack.c.l.b16 %v327
        %v799 = vunpack.c.l.b16 %v328
        %v800 = vunpack.c.l.b16 %v329
        %v801 = vunpack.c.l.b16 %v330
        %v802 = vunpack.c.l.b16 %v331
        %v803 = vunpack.c.l.b16 %v332
        %v804 = vunpack.c.l.b16 %v333
        %v805 = vunpack.c.l.b16 %v334
        %v806 = vunpack.c.l.b16 %v335
        %v807 = vunpack.c.l.b16 %v336
        %v808 = vunpack.c.l.b16 %v337
        %v809 = vunpack.c.l.b16 %v338
        %v810 = vunpack.c.l.b16 %v339
        %v811 = vunpack.c.l.b16 %v340
        %v812 = vunpack.c.l.b16 %v341
        %v813 = vunpack.c.l.b16 %v342
        %v814 = vunpack.c.l.b16 %v343
        %v815 = vunpack.c.l.b16 %v344
        %v816 = vunpack.c.l.b16 %v345
        %v817 = vunpack.c.l.b16 %v346
        %v818 = vunpack.c.l.b16 %v347
        %v819 = vunpack.c.l.b16 %v348
        %v820 = vunpack.c.l.b16 %v349
        %v821 = vunpack.c.l.b16 %v350
        %v822 = vunpack.c.l.b16 %v351
        %v823 = vunpack.c.l.b16 %v352
        %v824 = vunpack.c.l.b16 %v353
        %v825 = vunpack.c.l.b16 %v354
        %v826 = vunpack.c.l.b16 %v355
        %v827 = vunpack.c.l.b16 %v356
        %v828 = vunpack.c.l.b16 %v357
        %v829 = vunpack.c.l.b16 %v358
        %v830 = vunpack.c.l.b16 %v359
        %v831 = vunpack.c.l.b16 %v360
        %v832 = vunpack.c.l.b16 %v361
        %v833 = vunpack.c.l.b16 %v362
        %v834 = vunpack.c.l.b16 %v363
        %v835 = vunpack.c.l.b16 %v364
        %v836 = vunpack.c.l.b16 %v365
        %v837 = vunpack.c.l.b16 %v366
        %v838 = vunpack.c.l.b16 %v367
        %v839 = vunpack.c.l.b16 %v368
        %v840 = vunpack.c.l.b16 %v369
        %v841 = vunpack.c.l.b16 %v370
        %v842 = vunpack.c.l.b16 %v371
        %v843 = vunpack.c.l.b16 %v372
        %v844 = vunpack.c.l.b16 %v373
        %v845 = vunpack.c.l.b16 %v374
        %v846 = vpack.c.b16 %v655, %v654
        %v847 = vpack.c.b16 %v657, %v656
        %v848 = vpack.c.b16 %v659, %v658
        %v849 = vpack.c.b16 %v661, %v660
        %v850 = vpack.c.b16 %v663, %v662
        %v851 = vpack.c.b16 %v665, %v664
        %v852 = vpack.c.b16 %v667, %v666
        %v853 = vpack.c.b16 %v669, %v668
        %v854 = vpack.c.b16 %v671, %v670
        %v855 = vpack.c.b16 %v673, %v672
        %v856 = vpack.c.b16 %v675, %v674
        %v857 = vpack.c.b16 %v677, %v676
        %v858 = vpack.c.b16 %v679, %v678
        %v859 = vpack.c.b16 %v681, %v680
        %v860 = vpack.c.b16 %v683, %v682
        %v861 = vpack.c.b16 %v685, %v684
        %v862 = vpack.c.b16 %v687, %v686
        %v863 = vpack.c.b16 %v689, %v688
        %v864 = vpack.c.b16 %v691, %v690
        %v865 = vpack.c.b16 %v693, %v692
        %v866 = vpack.c.b16 %v695, %v694
        %v867 = vpack.c.b16 %v697, %v696
        %v868 = vpack.c.b16 %v699, %v698
        %v869 = vpack.c.b16 %v701, %v700
        %v870 = vpack.c.b16 %v703, %v702
        %v871 = vpack.c.b16 %v705, %v704
        %v872 = vpack.c.b16 %v707, %v706
        %v873 = vpack.c.b16 %v709, %v708
        %v874 = vpack.c.b16 %v711, %v710
        %v875 = vpack.c.b16 %v713, %v712
        %v876 = vpack.c.b16 %v715, %v714
        %v877 = vpack.c.b16 %v717, %v716
        %v878 = vpack.c.b16 %v719, %v718
        %v879 = vpack.c.b16 %v721, %v720
        %v880 = vpack.c.b16 %v723, %v722
        %v881 = vpack.c.b16 %v725, %v724
        %v882 = vpack.c.b16 %v727, %v726
        %v883 = vpack.c.b16 %v729, %v728
        %v884 = vpack.c.b16 %v731, %v730
        %v885 = vpack.c.b16 %v733, %v732
        %v886 = vpack.c.b16 %v735, %v734
        %v887 = vpack.c.b16 %v737, %v736
        %v888 = vpack.c.b16 %v739, %v738
        %v889 = vpack.c.b16 %v741, %v740
        %v890 = vpack.c.b16 %v743, %v742
        %v891 = vpack.c.b16 %v745, %v744
        %v892 = vpack.c.b16 %v747, %v746
        %v893 = vpack.c.b16 %v749, %v748
        %v894 = vpack.c.b16 %v751, %v750
        %v895 = vpack.c.b16 %v753, %v752
        %v896 = vpack.c.b16 %v755, %v754
        %v897 = vpack.c.b16 %v757, %v756
        %v898 = vpack.c.b16 %v759, %v758
        %v899 = vpack.c.b16 %v761, %v760
        %v900 = vpack.c.b16 %v763, %v762
        %v901 = vpack.c.b16 %v765, %v764
        %v902 = vpack.c.b16 %v767, %v766
        %v903 = vpack.c.b16 %v769, %v768
        %v904 = vpack.c.b16 %v771, %v770
        %v905 = vpack.c.b16 %v773, %v772
        %v906 = vpack.c.b16 %v775, %v774
        %v907 = vpack.c.b16 %v777, %v776
        %v908 = vpack.c.b16 %v779, %v778
        %v909 = vpack.c.b16 %v781, %v780
        %v910 = vpack.c.b16 %v783, %v782
        %v911 = vpack.c.b16 %v785, %v784
        %v912 = vpack.c.b16 %v787, %v786
        %v913 = vpack.c.b16 %v789, %v788
        %v914 = vpack.c.b16 %v791, %v790
        %v915 = vpack.c.b16 %v793, %v792
        %v916 = vpack.c.b16 %v795, %v794
        %v917 = vpack.c.b16 %v797, %v796
        %v918 = vpack.c.b16 %v799, %v798
        %v919 = vpack.c.b16 %v801, %v800
        %v920 = vpack.c.b16 %v803, %v802
        %v921 = vpack.c.b16 %v805, %v804
        %v922 = vpack.c.b16 %v807, %v806
        %v923 = vpack.c.b16 %v809, %v808
        %v924 = vpack.c.b16 %v811, %v810
        %v925 = vpack.c.b16 %v813, %v812
        %v926 = vpack.c.b16 %v815, %v814
        %v927 = vpack.c.b16 %v817, %v816
        %v928 = vpack.c.b16 %v819, %v818
        %v929 = vpack.c.b16 %v821, %v820
        %v930 = vpack.c.b16 %v823, %v822
        %v931 = vpack.c.b16 %v825, %v824
        %v932 = vpack.c.b16 %v827, %v826
        %v933 = vpack.c.b16 %v829, %v828
        %v934 = vpack.c.b16 %v831, %v830
        %v935 = vpack.c.b16 %v833, %v832
        %v936 = vpack.c.b16 %v835, %v834
        %v937 = vpack.c.b16 %v837, %v836
        %v938 = vpack.c.b16 %v839, %v838
        %v939 = vpack.c.b16 %v841, %v840
        %v940 = vpack.c.b16 %v843, %v842
        %v941 = vpack.c.b16 %v845, %v844
        %1038 = vmatprep.subr.bf16.mxu0 0
        %1039 = vmatpush1.bf16.msra.mxu0 %v853
        %1040 = vmatprep.subr.bf16.mxu0 0
        %1041 = vmatpush1.bf16.msra.mxu0 %v852
        %1042 = vmatprep.subr.bf16.mxu0 0
        %1043 = vmatpush1.bf16.msra.mxu0 %v851
        %1044 = vmatprep.subr.bf16.mxu0 0
        %1045 = vmatpush1.bf16.msra.mxu0 %v850
        %1046 = vmatprep.subr.bf16.mxu0 0
        %1047 = vmatpush1.bf16.msra.mxu0 %v849
        %1048 = vmatprep.subr.bf16.mxu0 0
        %1049 = vmatpush1.bf16.msra.mxu0 %v848
        %1050 = vmatprep.subr.bf16.mxu0 0
        %1051 = vmatpush1.bf16.msra.mxu0 %v847
        %1052 = vmatprep.subr.bf16.mxu0 0
        %1053 = vmatpush1.bf16.msra.mxu0 %v846
        %1054 = vmatprep.subr.bf16.mxu0 0
        %1055 = vmatpush2.bf16.msra.mxu0 %v861
        %1056 = vmatprep.subr.bf16.mxu0 0
        %1057 = vmatpush2.bf16.msra.mxu0 %v860
        %1058 = vmatprep.subr.bf16.mxu0 0
        %1059 = vmatpush2.bf16.msra.mxu0 %v859
        %1060 = vmatprep.subr.bf16.mxu0 0
        %1061 = vmatpush2.bf16.msra.mxu0 %v858
        %1062 = vmatprep.subr.bf16.mxu0 0
        %1063 = vmatpush2.bf16.msra.mxu0 %v857
        %1064 = vmatprep.subr.bf16.mxu0 0
        %1065 = vmatpush2.bf16.msra.mxu0 %v856
        %1066 = vmatprep.subr.bf16.mxu0 0
        %1067 = vmatpush2.bf16.msra.mxu0 %v855
        %1068 = vmatprep.subr.bf16.mxu0 0
        %1069 = vmatpush2.bf16.msra.mxu0 %v854
        %1070 = vmatprep.mubr.bf16.mxu0 %v414
        %1071 = vmatmul.mubr.bf16.gmra.mxu0 %v400
        %v1072 = vpop.f32.mrf.mxu0
        %v1073 = vadd.f32 0.0, %v1072
        %v1074 = vpop.f32.mrf.mxu0
        %v1075 = vpop.f32.mrf.mxu0
        %v1076 = vpop.f32.mrf.mxu0
        %1077 = vdwg.mxu0
        %1078 = vmatprep.subr.bf16.mxu0 0
        %1079 = vmatpush1.bf16.msra.mxu0 %v869
        %1080 = vmatprep.subr.bf16.mxu0 0
        %1081 = vmatpush1.bf16.msra.mxu0 %v868
        %1082 = vmatprep.subr.bf16.mxu0 0
        %1083 = vmatpush1.bf16.msra.mxu0 %v867
        %1084 = vmatprep.subr.bf16.mxu0 0
        %1085 = vmatpush1.bf16.msra.mxu0 %v866
        %1086 = vmatprep.subr.bf16.mxu0 0
        %1087 = vmatpush1.bf16.msra.mxu0 %v865
        %1088 = vmatprep.subr.bf16.mxu0 0
        %1089 = vmatpush1.bf16.msra.mxu0 %v864
        %1090 = vmatprep.subr.bf16.mxu0 0
        %1091 = vmatpush1.bf16.msra.mxu0 %v863
        %1092 = vmatprep.subr.bf16.mxu0 0
        %1093 = vmatpush1.bf16.msra.mxu0 %v862
        %1094 = vmatprep.subr.bf16.mxu0 0
        %1095 = vmatpush2.bf16.msra.mxu0 %v877
        %1096 = vmatprep.subr.bf16.mxu0 0
        %1097 = vmatpush2.bf16.msra.mxu0 %v876
        %1098 = vmatprep.subr.bf16.mxu0 0
        %1099 = vmatpush2.bf16.msra.mxu0 %v875
        %1100 = vmatprep.subr.bf16.mxu0 0
        %1101 = vmatpush2.bf16.msra.mxu0 %v874
        %1102 = vmatprep.subr.bf16.mxu0 0
        %1103 = vmatpush2.bf16.msra.mxu0 %v873
        %1104 = vmatprep.subr.bf16.mxu0 0
        %1105 = vmatpush2.bf16.msra.mxu0 %v872
        %1106 = vmatprep.subr.bf16.mxu0 0
        %1107 = vmatpush2.bf16.msra.mxu0 %v871
        %1108 = vmatprep.subr.bf16.mxu0 0
        %1109 = vmatpush2.bf16.msra.mxu0 %v870
        %1110 = vmatprep.mubr.bf16.mxu0 %v424
        %1111 = vmatmul.mubr.bf16.gmra.mxu0 %v422
        %v1112 = vpop.f32.mrf.mxu0
        %v1113 = vadd.f32 %v1073, %v1112
        %v1114 = vpop.f32.mrf.mxu0
        %v1115 = vpop.f32.mrf.mxu0
        %v1116 = vpop.f32.mrf.mxu0
        %1117 = vdwg.mxu0
        %1118 = vmatprep.subr.bf16.mxu0 0
        %1119 = vmatpush1.bf16.msra.mxu0 %v885
        %1120 = vmatprep.subr.bf16.mxu0 0
        %1121 = vmatpush1.bf16.msra.mxu0 %v884
        %1122 = vmatprep.subr.bf16.mxu0 0
        %1123 = vmatpush1.bf16.msra.mxu0 %v883
        %1124 = vmatprep.subr.bf16.mxu0 0
        %1125 = vmatpush1.bf16.msra.mxu0 %v882
        %1126 = vmatprep.subr.bf16.mxu0 0
        %1127 = vmatpush1.bf16.msra.mxu0 %v881
        %1128 = vmatprep.subr.bf16.mxu0 0
        %1129 = vmatpush1.bf16.msra.mxu0 %v880
        %1130 = vmatprep.subr.bf16.mxu0 0
        %1131 = vmatpush1.bf16.msra.mxu0 %v879
        %1132 = vmatprep.subr.bf16.mxu0 0
        %1133 = vmatpush1.bf16.msra.mxu0 %v878
        %1134 = vmatprep.subr.bf16.mxu0 0
        %1135 = vmatpush2.bf16.msra.mxu0 %v893
        %1136 = vmatprep.subr.bf16.mxu0 0
        %1137 = vmatpush2.bf16.msra.mxu0 %v892
        %1138 = vmatprep.subr.bf16.mxu0 0
        %1139 = vmatpush2.bf16.msra.mxu0 %v891
        %1140 = vmatprep.subr.bf16.mxu0 0
        %1141 = vmatpush2.bf16.msra.mxu0 %v890
        %1142 = vmatprep.subr.bf16.mxu0 0
        %1143 = vmatpush2.bf16.msra.mxu0 %v889
        %1144 = vmatprep.subr.bf16.mxu0 0
        %1145 = vmatpush2.bf16.msra.mxu0 %v888
        %1146 = vmatprep.subr.bf16.mxu0 0
        %1147 = vmatpush2.bf16.msra.mxu0 %v887
        %1148 = vmatprep.subr.bf16.mxu0 0
        %1149 = vmatpush2.bf16.msra.mxu0 %v886
        %1150 = vmatprep.mubr.bf16.mxu0 %v421
        %1151 = vmatmul.mubr.bf16.gmra.mxu0 %v407
        %v1152 = vpop.f32.mrf.mxu0
        %v1153 = vadd.f32 %v1113, %v1152
        %v1154 = vpop.f32.mrf.mxu0
        %v1155 = vpop.f32.mrf.mxu0
        %v1156 = vpop.f32.mrf.mxu0
        %1157 = vdwg.mxu0
        %1158 = vmatprep.subr.bf16.mxu0 0
        %1159 = vmatpush1.bf16.msra.mxu0 %v901
        %1160 = vmatprep.subr.bf16.mxu0 0
        %1161 = vmatpush1.bf16.msra.mxu0 %v900
        %1162 = vmatprep.subr.bf16.mxu0 0
        %1163 = vmatpush1.bf16.msra.mxu0 %v899
        %1164 = vmatprep.subr.bf16.mxu0 0
        %1165 = vmatpush1.bf16.msra.mxu0 %v898
        %1166 = vmatprep.subr.bf16.mxu0 0
        %1167 = vmatpush1.bf16.msra.mxu0 %v897
        %1168 = vmatprep.subr.bf16.mxu0 0
        %1169 = vmatpush1.bf16.msra.mxu0 %v896
        %1170 = vmatprep.subr.bf16.mxu0 0
        %1171 = vmatpush1.bf16.msra.mxu0 %v895
        %1172 = vmatprep.subr.bf16.mxu0 0
        %1173 = vmatpush1.bf16.msra.mxu0 %v894
        %1174 = vmatprep.subr.bf16.mxu0 0
        %1175 = vmatpush2.bf16.msra.mxu0 %v909
        %1176 = vmatprep.subr.bf16.mxu0 0
        %1177 = vmatpush2.bf16.msra.mxu0 %v908
        %1178 = vmatprep.subr.bf16.mxu0 0
        %1179 = vmatpush2.bf16.msra.mxu0 %v907
        %1180 = vmatprep.subr.bf16.mxu0 0
        %1181 = vmatpush2.bf16.msra.mxu0 %v906
        %1182 = vmatprep.subr.bf16.mxu0 0
        %1183 = vmatpush2.bf16.msra.mxu0 %v905
        %1184 = vmatprep.subr.bf16.mxu0 0
        %1185 = vmatpush2.bf16.msra.mxu0 %v904
        %1186 = vmatprep.subr.bf16.mxu0 0
        %1187 = vmatpush2.bf16.msra.mxu0 %v903
        %1188 = vmatprep.subr.bf16.mxu0 0
        %1189 = vmatpush2.bf16.msra.mxu0 %v902
        %1190 = vmatprep.mubr.bf16.mxu0 %v425
        %1191 = vmatmul.mubr.bf16.gmra.mxu0 %v423
        %v1192 = vpop.f32.mrf.mxu0
        %v1193 = vadd.f32 %v1153, %v1192
        %v1194 = vpop.f32.mrf.mxu0
        %v1195 = vpop.f32.mrf.mxu0
        %v1196 = vpop.f32.mrf.mxu0
        %1197 = vdwg.mxu0
        %1198 = vmatprep.subr.bf16.mxu0 0
        %1199 = vmatpush1.bf16.msra.mxu0 %v917
        %1200 = vmatprep.subr.bf16.mxu0 0
        %1201 = vmatpush1.bf16.msra.mxu0 %v916
        %1202 = vmatprep.subr.bf16.mxu0 0
        %1203 = vmatpush1.bf16.msra.mxu0 %v915
        %1204 = vmatprep.subr.bf16.mxu0 0
        %1205 = vmatpush1.bf16.msra.mxu0 %v914
        %1206 = vmatprep.subr.bf16.mxu0 0
        %1207 = vmatpush1.bf16.msra.mxu0 %v913
        %1208 = vmatprep.subr.bf16.mxu0 0
        %1209 = vmatpush1.bf16.msra.mxu0 %v912
        %1210 = vmatprep.subr.bf16.mxu0 0
        %1211 = vmatpush1.bf16.msra.mxu0 %v911
        %1212 = vmatprep.subr.bf16.mxu0 0
        %1213 = vmatpush1.bf16.msra.mxu0 %v910
        %1214 = vmatprep.subr.bf16.mxu0 0
        %1215 = vmatpush2.bf16.msra.mxu0 %v925
        %1216 = vmatprep.subr.bf16.mxu0 0
        %1217 = vmatpush2.bf16.msra.mxu0 %v924
        %1218 = vmatprep.subr.bf16.mxu0 0
        %1219 = vmatpush2.bf16.msra.mxu0 %v923
        %1220 = vmatprep.subr.bf16.mxu0 0
        %1221 = vmatpush2.bf16.msra.mxu0 %v922
        %1222 = vmatprep.subr.bf16.mxu0 0
        %1223 = vmatpush2.bf16.msra.mxu0 %v921
        %1224 = vmatprep.subr.bf16.mxu0 0
        %1225 = vmatpush2.bf16.msra.mxu0 %v920
        %1226 = vmatprep.subr.bf16.mxu0 0
        %1227 = vmatpush2.bf16.msra.mxu0 %v919
        %1228 = vmatprep.subr.bf16.mxu0 0
        %1229 = vmatpush2.bf16.msra.mxu0 %v918
        %1230 = vmatprep.mubr.bf16.mxu0 %v447
        %1231 = vmatmul.mubr.bf16.gmra.mxu0 %v440
        %v1232 = vpop.f32.mrf.mxu0
        %v1233 = vadd.f32 %v1193, %v1232
        %v1234 = vpop.f32.mrf.mxu0
        %v1235 = vpop.f32.mrf.mxu0
        %v1236 = vpop.f32.mrf.mxu0
        %1237 = vdwg.mxu0
        %1238 = vmatprep.subr.bf16.mxu0 0
        %1239 = vmatpush1.bf16.msra.mxu0 %v933
        %1240 = vmatprep.subr.bf16.mxu0 0
        %1241 = vmatpush1.bf16.msra.mxu0 %v932
        %1242 = vmatprep.subr.bf16.mxu0 0
        %1243 = vmatpush1.bf16.msra.mxu0 %v931
        %1244 = vmatprep.subr.bf16.mxu0 0
        %1245 = vmatpush1.bf16.msra.mxu0 %v930
        %1246 = vmatprep.subr.bf16.mxu0 0
        %1247 = vmatpush1.bf16.msra.mxu0 %v929
        %1248 = vmatprep.subr.bf16.mxu0 0
        %1249 = vmatpush1.bf16.msra.mxu0 %v928
        %1250 = vmatprep.subr.bf16.mxu0 0
        %1251 = vmatpush1.bf16.msra.mxu0 %v927
        %1252 = vmatprep.subr.bf16.mxu0 0
        %1253 = vmatpush1.bf16.msra.mxu0 %v926
        %1254 = vmatprep.subr.bf16.mxu0 0
        %1255 = vmatpush2.bf16.msra.mxu0 %v941
        %1256 = vmatprep.subr.bf16.mxu0 0
        %1257 = vmatpush2.bf16.msra.mxu0 %v940
        %1258 = vmatprep.subr.bf16.mxu0 0
        %1259 = vmatpush2.bf16.msra.mxu0 %v939
        %1260 = vmatprep.subr.bf16.mxu0 0
        %1261 = vmatpush2.bf16.msra.mxu0 %v938
        %1262 = vmatprep.subr.bf16.mxu0 0
        %1263 = vmatpush2.bf16.msra.mxu0 %v937
        %1264 = vmatprep.subr.bf16.mxu0 0
        %1265 = vmatpush2.bf16.msra.mxu0 %v936
        %1266 = vmatprep.subr.bf16.mxu0 0
        %1267 = vmatpush2.bf16.msra.mxu0 %v935
        %1268 = vmatprep.subr.bf16.mxu0 0
        %1269 = vmatpush2.bf16.msra.mxu0 %v934
        %1270 = vmatprep.mubr.bf16.mxu0 %v449
        %1271 = vmatmul.mubr.bf16.gmra.mxu0 %v448
        %v1272 = vpop.f32.mrf.mxu0
        %v1273 = vadd.f32 %v1233, %v1272
        %v1274 = vpop.f32.mrf.mxu0
        %v1275 = vpop.f32.mrf.mxu0
        %v1276 = vpop.f32.mrf.mxu0
        %1277 = vdwg.mxu0
        %v1278 = vadd.f32 %v180, %v1273
        %1279 = vst [vmem:[#allocation2] sm:$0x3] %v1278
        %p1280 = scmp.eq.s32.totalorder %s15, 15
        // Predicated region
        $region37: #{net_depthwise_forward.7} parent=31 // pred_check
          %p1281 = pneg %p1280
        $region38: #{net_depthwise_forward.7} parent=31 // pred_check_branch
          %1283 = sbr.rel (%p1281) target = $region40
        $region39: #{net_depthwise_forward.7} parent=31 // pred_region
          %v1284 = vld [vmem:[#allocation2] sm:$0x3]
          %v1285 = vld [vmem:[%s2] sm:$0x1]
          %v1287 = vlaneseq
          %v1288 = vshrl.u32 %v1287, 7
          %v1289 = vsub.s32 0, %v1288
          %v1290 = vrot.slane %v1285, %v1289
          %v1292 = vadd.f32 %v1284, %v1290
          %1293 = vst [vmem:[#allocation2] sm:$0x3] %v1292
        $region40: #{net_depthwise_forward.7} parent=31 // pred_fallthru
          _
        // Predicated region
        $region41: #{net_depthwise_forward.7} parent=31 // pred_check
          %p1294 = pneg %p101
        $region42: #{net_depthwise_forward.7} parent=31 // pred_check_branch
          %1296 = sbr.rel (%p1294) target = $region44
        $region43: #{net_depthwise_forward.7} parent=31 // pred_region
          %s1298 = ssub.s32 32, 32
          %1299 = vsyncadd [#allocation3], %s1298
          %s1301 = sshll.u32 [#allocation2], 4
          %s1302 = int_to_ptr.vmem [resolvable:$true] %s1301
          %1304 = dma.vmem_to_hbm [thread:$0]  %s1302, 32, %s3, [#allocation3]
        $region44: #{net_depthwise_forward.7} parent=31 // pred_fallthru
          _
        // Predicated region
        $region45: #{net_depthwise_forward.7} parent=31 // pred_check
          %p1305 = pneg %p101
        $region46: #{net_depthwise_forward.7} parent=31 // pred_check_branch
          %1307 = sbr.rel (%p1305) target = $region48
        $region47: #{net_depthwise_forward.7} parent=31 // pred_region
          %1308 = dma.done [#allocation3], 32
        $region48: #{net_depthwise_forward.7} parent=31 // pred_fallthru
          _
      $region32: #{net_depthwise_forward.7} parent=5 // pred_fallthru
        _
      %p1309 = scmp.le.s32.totalorder 2, %s10
      // Predicated region
      $region49: #{net_depthwise_forward.7} parent=5 // pred_check
        %p1310 = pneg %p1309
      $region50: #{net_depthwise_forward.7} parent=5 // pred_check_branch
        %1312 = sbr.rel (%p1310) target = $region52
      $region51: #{net_depthwise_forward.7} parent=5 // pred_region
        %s1313 = ssub.s32 %s10, 2
      $region52: #{net_depthwise_forward.7} parent=5 // pred_fallthru
        _
    $region6: #{net_depthwise_forward.7} parent=1 // loop_footer
      %s14 = sadd.s32 1, %s10
    $region7: #{net_depthwise_forward.7} parent=1 // loop_footer_branch
      %9 = sbr.rel target = $region3
    $region8: #{net_depthwise_forward.7} parent=1 // loop_exit
      _
    %1314 = vsyncpa [#allocation3], 1
    %s1315 = scalar_lea.sflag [#allocation3], 1
    %1316 = vsyncpa %s1315, 1

</llo_original>
